<compile_context>
chip_gen: v5e
topology: v5e:2x2
jax: 0.10.0
libtpu: 0.0.40
codegen_flags: <defaults>
</compile_context>

<pallas_src>
import functools
import math

import jax
import jax.numpy as jnp
from jax.experimental import pallas as pl
from jax.experimental.pallas import tpu as pltpu


_VMEM_LIMIT = 48 * 1024 * 1024  # > default scoped limits, < v7x physical 64 MiB/TC


# ------------------------------- tiling utils -------------------------------


def _pick_tile(dim, preferred, align):
    """Largest multiple of `align` <= preferred that divides dim, else full dim."""
    if dim <= preferred:
        return dim
    t = (preferred // align) * align
    while t >= align:
        if dim % t == 0:
            return t
        t -= align
    # TODO(synk): ragged (non-aligned) dims fall back to the full extent; masked
    #             partial tiles are not implemented.
    return dim


# --------------------- fused QKV + RoPE kernel (group-tiled) -----------------


def _qkv_rope_kernel(x_ref, w_ref, cos_ref, sinf_ref,
                     q_ref, k_ref, v_ref, acc_ref,
                     *, n_rep, head_dim):
    kk = pl.program_id(2)

    @pl.when(kk == 0)
    def _init():
        acc_ref[...] = jnp.zeros_like(acc_ref)

    acc_ref[...] += jnp.dot(x_ref[...], w_ref[...],
                            preferred_element_type=jnp.float32)

    @pl.when(kk == pl.num_programs(2) - 1)
    def _finalize():
        acc = acc_ref[...]                       # (tm, (n_rep+2)*D), fp32
        cos = cos_ref[...]                       # (tm, D), fp32
        sinf = sinf_ref[...]                     # sign-folded sin: sin * [-1...,+1...]
        D = head_dim
        half = D // 2

        def rope(x2d):
            # rotate_half(x)*sin == roll(x, D/2) * (sign*sin); roll runs on the XLU.
            return x2d * cos + pltpu.roll(x2d, shift=half, axis=1) * sinf

        for r in range(n_rep):                   # q heads of this kv group
            q_ref[:, r * D:(r + 1) * D] = rope(acc[:, r * D:(r + 1) * D]).astype(q_ref.dtype)
        k_ref[...] = rope(acc[:, n_rep * D:(n_rep + 1) * D]).astype(k_ref.dtype)
        v_ref[...] = acc[:, (n_rep + 1) * D:].astype(v_ref.dtype)


def _qkv_proj_rope(x2d, w_qkv_grouped, cos2d, sinf2d, *,
                   num_kv_heads, n_rep, head_dim, out_dtype):
    """x2d: (M, K) bf16; w_qkv_grouped: (K, Hkv*(n_rep+2)*D) bf16 (group-blocked,
    q columns pre-scaled by 1/sqrt(D)); cos/sinf: (M, D) fp32."""
    M, K = x2d.shape
    D = head_dim
    Hkv = num_kv_heads
    GW = (n_rep + 2) * D
    assert w_qkv_grouped.shape == (K, Hkv * GW)

    tm = _pick_tile(M, 512, 16)
    tk = _pick_tile(K, 512, 128)
    grid = (M // tm, Hkv, K // tk)

    kern = functools.partial(_qkv_rope_kernel, n_rep=n_rep, head_dim=D)
    out_shape = (jax.ShapeDtypeStruct((M, Hkv * n_rep * D), out_dtype),
                 jax.ShapeDtypeStruct((M, Hkv * D), out_dtype),
                 jax.ShapeDtypeStruct((M, Hkv * D), out_dtype))
    return pl.pallas_call(
        kern,
        out_shape=out_shape,
        grid_spec=pltpu.PrefetchScalarGridSpec(
            num_scalar_prefetch=0,
            grid=grid,
            in_specs=[
                pl.BlockSpec((tm, tk), lambda i, g, k: (i, k)),
                pl.BlockSpec((tk, GW), lambda i, g, k: (k, g)),
                pl.BlockSpec((tm, D), lambda i, g, k: (i, 0)),
                pl.BlockSpec((tm, D), lambda i, g, k: (i, 0)),
            ],
            out_specs=(
                pl.BlockSpec((tm, n_rep * D), lambda i, g, k: (i, g)),
                pl.BlockSpec((tm, D), lambda i, g, k: (i, g)),
                pl.BlockSpec((tm, D), lambda i, g, k: (i, g)),
            ),
            scratch_shapes=[pltpu.VMEM((tm, GW), jnp.float32)],
        ),
        compiler_params=pltpu.CompilerParams(
            dimension_semantics=("parallel", "parallel", "arbitrary"),
            vmem_limit_bytes=_VMEM_LIMIT),
    )(x2d, w_qkv_grouped, cos2d, sinf2d)


# ----------------------------- tiled linear kernel ---------------------------


def _matmul_kernel(x_ref, w_ref, o_ref, acc_ref):
    @pl.when(pl.program_id(2) == 0)
    def _init():
        acc_ref[...] = jnp.zeros_like(acc_ref)

    acc_ref[...] += jnp.dot(x_ref[...], w_ref[...],
                            preferred_element_type=jnp.float32)

    @pl.when(pl.program_id(2) == pl.num_programs(2) - 1)
    def _finalize():
        o_ref[...] = acc_ref[...].astype(o_ref.dtype)


def _linear(x2d, w, *, out_dtype=None, tm=512, tn=512, tk=512):
    """x2d: (M, K), w: (K, N) -> (M, N), tiled with an fp32 VMEM accumulator."""
    M, K = x2d.shape
    N = w.shape[1]
    out_dtype = x2d.dtype if out_dtype is None else out_dtype
    tm = _pick_tile(M, tm, 16)
    tn = _pick_tile(N, tn, 128)
    tk = _pick_tile(K, tk, 128)
    grid = (M // tm, N // tn, K // tk)
    return pl.pallas_call(
        _matmul_kernel,
        out_shape=jax.ShapeDtypeStruct((M, N), out_dtype),
        grid_spec=pltpu.PrefetchScalarGridSpec(
            num_scalar_prefetch=0,
            grid=grid,
            in_specs=[
                pl.BlockSpec((tm, tk), lambda i, j, k: (i, k)),
                pl.BlockSpec((tk, tn), lambda i, j, k: (k, j)),
            ],
            out_specs=pl.BlockSpec((tm, tn), lambda i, j, k: (i, j)),
            scratch_shapes=[pltpu.VMEM((tm, tn), jnp.float32)],
        ),
        compiler_params=pltpu.CompilerParams(
            dimension_semantics=("parallel", "parallel", "arbitrary"),
            vmem_limit_bytes=_VMEM_LIMIT),
    )(x2d, w)


# --------------------------- flash attention kernel --------------------------


def _flash_attn_kernel(*refs, n_rep, head_dim, causal, tq, tkv):
    if causal:
        q_ref, k_ref, v_ref, o_ref, qs_ref, m_ref, l_ref, acc_ref = refs
        mask_ref = None
    else:
        q_ref, k_ref, v_ref, mask_ref, o_ref, qs_ref, m_ref, l_ref, acc_ref = refs
    qi = pl.program_id(2)
    ki = pl.program_id(3)
    D = head_dim

    @pl.when(ki == 0)
    def _init():
        m_ref[...] = jnp.full(m_ref.shape, -1e30, dtype=m_ref.dtype)
        l_ref[...] = jnp.zeros_like(l_ref)
        acc_ref[...] = jnp.zeros_like(acc_ref)
        # GQA q-head stacking hoisted out of the kv loop (q block is ki-invariant).
        for r in range(n_rep):
            qs_ref[r * tq:(r + 1) * tq, :] = q_ref[:, r * D:(r + 1) * D]

    def _compute():
        q = qs_ref[...]                    # (n_rep*tq, D), 1/sqrt(D) already folded in
        k = k_ref[...]
        v = v_ref[...]
        scores = jax.lax.dot_general(q, k, (((1,), (1,)), ((), ())),
                                     preferred_element_type=jnp.float32)
        if causal:
            # in-kernel causal mask: q_pos >= k_pos (no HBM mask traffic)
            rows = jax.lax.broadcasted_iota(jnp.int32, scores.shape, 0)
            cols = jax.lax.broadcasted_iota(jnp.int32, scores.shape, 1)
            q_pos = qi * tq + rows % tq
            k_pos = ki * tkv + cols
            scores = jnp.where(q_pos >= k_pos, scores, -1e30)
        else:
            # NOTE: assumes a finite additive mask (e.g. -1e9); -inf would NaN.
            bias = mask_ref[...].astype(jnp.float32)       # (tq, tkv)
            if n_rep > 1:
                # leading-dim broadcast add (no per-rep mask duplication)
                scores = (scores.reshape(n_rep, tq, tkv) + bias[None]
                          ).reshape(n_rep * tq, tkv)
            else:
                scores = scores + bias

        m_prev = m_ref[...]
        m_new = jnp.maximum(m_prev, jnp.max(scores, axis=-1, keepdims=True))
        alpha = jnp.exp(m_prev - m_new)
        p = jnp.exp(scores - m_new)
        l_ref[...] = alpha * l_ref[...] + jnp.sum(p, axis=-1, keepdims=True)
        acc_ref[...] = alpha * acc_ref[...] + jax.lax.dot_general(
            p.astype(v.dtype), v, (((1,), (0,)), ((), ())),
            preferred_element_type=jnp.float32)
        m_ref[...] = m_new

    if causal:
        # Skip kv tiles that are entirely in the future of this q tile.
        pl.when(ki * tkv <= qi * tq + tq - 1)(_compute)
    else:
        _compute()

    @pl.when(ki == pl.num_programs(3) - 1)
    def _finalize():
        inv_l = pl.reciprocal(l_ref[...], approx=True)     # EUP slot, nearly free
        out = (acc_ref[...] * inv_l).astype(o_ref.dtype)
        # write lane-dense (tq, n_rep*D) output block
        for r in range(n_rep):
            o_ref[:, r * D:(r + 1) * D] = out[r * tq:(r + 1) * tq, :]


def _flash_attention(q, k, v, mask, *, n_rep, head_dim, causal):
    """q: (B, S, H*D) post-RoPE/pre-scaled, k/v: (B, S, Hkv*D) post-RoPE.
    mask: (B, 1, S, S) additive (only used when causal=False).
    Returns o: (B, S, H*D) — already in the layout the output projection wants."""
    B, S, QD = q.shape
    D = head_dim
    assert D % 128 == 0, "flash path assumes lane-aligned head_dim (128/256 as in Gemma)"
    GD = n_rep * D
    Hkv = QD // GD

    tq = _pick_tile(S, 256, 16)
    tkv = _pick_tile(S, 256, 128)
    grid = (B, Hkv, S // tq, S // tkv)

    kern = functools.partial(_flash_attn_kernel, n_rep=n_rep, head_dim=D,
                             causal=causal, tq=tq, tkv=tkv)
    in_specs = [
        pl.BlockSpec((None, tq, GD), lambda b, g, qi, ki: (b, qi, g)),
        pl.BlockSpec((None, tkv, D), lambda b, g, qi, ki: (b, ki, g)),
        pl.BlockSpec((None, tkv, D), lambda b, g, qi, ki: (b, ki, g)),
    ]
    args = [q, k, v]
    if not causal:
        in_specs.append(pl.BlockSpec((None, None, tq, tkv),
                                     lambda b, g, qi, ki: (b, 0, qi, ki)))
        args.append(mask)

    return pl.pallas_call(
        kern,
        out_shape=jax.ShapeDtypeStruct((B, S, QD), q.dtype),
        grid_spec=pltpu.PrefetchScalarGridSpec(
            num_scalar_prefetch=0,
            grid=grid,
            in_specs=in_specs,
            out_specs=pl.BlockSpec((None, tq, GD), lambda b, g, qi, ki: (b, qi, g)),
            scratch_shapes=[
                pltpu.VMEM((n_rep * tq, D), q.dtype),       # stacked q (hoisted)
                pltpu.VMEM((n_rep * tq, 1), jnp.float32),   # m
                pltpu.VMEM((n_rep * tq, 1), jnp.float32),   # l
                pltpu.VMEM((n_rep * tq, D), jnp.float32),   # acc
            ],
        ),
        compiler_params=pltpu.CompilerParams(
            dimension_semantics=("parallel", "parallel", "parallel", "arbitrary"),
            vmem_limit_bytes=_VMEM_LIMIT),
    )(*args)


# --------------------------- GemmaAttention (JAX) ----------------------------


class GemmaAttentionPallas:
    def __init__(self, hidden_size, num_heads, num_kv_heads, head_dim,
                 rope_theta=10000.0, key=None, compute_dtype=jnp.bfloat16):
        assert hidden_size % num_heads == 0
        assert num_heads % num_kv_heads == 0
        self.hidden_size = hidden_size
        self.num_heads = num_heads
        self.num_kv_heads = num_kv_heads
        self.head_dim = head_dim
        self.n_rep = num_heads // num_kv_heads
        self.rope_theta = rope_theta
        self.compute_dtype = compute_dtype

        k0, k1, k2, k3 = jax.random.split(key, 4)
        scale = 0.02
        # Master weights in fp32, (in, out) layout so the kernel does x @ W.
        self.w_q = jax.random.normal(k0, (hidden_size, num_heads * head_dim),
                                     jnp.float32) * scale
        self.w_k = jax.random.normal(k1, (hidden_size, num_kv_heads * head_dim),
                                     jnp.float32) * scale
        self.w_v = jax.random.normal(k2, (hidden_size, num_kv_heads * head_dim),
                                     jnp.float32) * scale
        self.w_o = jax.random.normal(k3, (num_heads * head_dim, hidden_size),
                                     jnp.float32) * scale

        # Fused, group-blocked QKV weight (bf16):
        #   for each kv head g: [q heads g*n_rep..(g+1)*n_rep-1 | k head g | v head g]
        # with the 1/sqrt(D) softmax scale folded into the q columns (RoPE is linear).
        inv_sqrt_d = 1.0 / math.sqrt(head_dim)
        D = head_dim
        blocks = []
        for g in range(num_kv_heads):
            blocks.append(self.w_q[:, g * self.n_rep * D:(g + 1) * self.n_rep * D]
                          * inv_sqrt_d)
            blocks.append(self.w_k[:, g * D:(g + 1) * D])
            blocks.append(self.w_v[:, g * D:(g + 1) * D])
        self.w_qkv_grouped = jnp.concatenate(blocks, axis=1).astype(compute_dtype)
        self.w_o_c = self.w_o.astype(compute_dtype)

    def _rotary(self, position_ids):
        # GemmaRotaryEmbedding: inv_freq over even indices, emb = cat(freqs, freqs)
        d = self.head_dim
        inv_freq = 1.0 / (self.rope_theta ** (
            jnp.arange(0, d, 2, dtype=jnp.float32) / d))                  # (d/2,)
        freqs = position_ids.astype(jnp.float32)[:, :, None] * inv_freq[None, None, :]
        emb = jnp.concatenate([freqs, freqs], axis=-1)                    # (B, S, d)
        return jnp.cos(emb), jnp.sin(emb)

    def __call__(self, hidden_states, attention_mask=None, position_ids=None,
                 is_causal=False, return_attn_probs=False):
        B, S, _ = hidden_states.shape
        H, Hkv, D = self.num_heads, self.num_kv_heads, self.head_dim
        M = B * S
        in_dtype = hidden_states.dtype
        cdt = self.compute_dtype

        # rotary tables (glue, fp32) + sign-folded sin for the roll-based RoPE
        cos, sin = self._rotary(position_ids)                             # (B, S, D)
        half = D // 2
        sign = jnp.concatenate([-jnp.ones((half,), jnp.float32),
                                jnp.ones((half,), jnp.float32)])
        cos2d = cos.reshape(M, D)
        sinf2d = (sin * sign).reshape(M, D)

        # fused QKV projection + RoPE (bf16 MXU path, fp32 accumulation)
        x2d = hidden_states.reshape(M, self.hidden_size).astype(cdt)
        q2d, k2d, v2d = _qkv_proj_rope(
            x2d, self.w_qkv_grouped, cos2d, sinf2d,
            num_kv_heads=Hkv, n_rep=self.n_rep, head_dim=D, out_dtype=cdt)
        q = q2d.reshape(B, S, H * D)     # q heads contiguous per kv group
        k = k2d.reshape(B, S, Hkv * D)
        v = v2d.reshape(B, S, Hkv * D)

        mask_c = None
        if not is_causal:
            assert attention_mask is not None
            mask_c = attention_mask.astype(cdt)   # bf16 mask halves its DMA bytes

        # flash attention; output is already (B, S, H*D) — no transpose needed
        attn = _flash_attention(q, k, v, mask_c, n_rep=self.n_rep, head_dim=D,
                                causal=is_causal)

        out = _linear(attn.reshape(M, H * D), self.w_o_c, out_dtype=in_dtype)
        out = out.reshape(B, S, self.hidden_size)

        probs = None
        if return_attn_probs:
            # Debug-only path: materializes (B, H, S, S) in plain JAX (the Pallas
            # hot path never builds this tensor).  q already carries 1/sqrt(D).
            qh = q.astype(jnp.float32).reshape(B, S, H, D).transpose(0, 2, 1, 3)
            kh = k.astype(jnp.float32).reshape(B, S, Hkv, D).transpose(0, 2, 1, 3)
            kh = jnp.repeat(kh, self.n_rep, axis=1)
            sc = jnp.einsum("bhqd,bhkd->bhqk", qh, kh,
                            precision=jax.lax.Precision.HIGHEST)
            if attention_mask is not None:
                sc = sc + attention_mask
            else:
                cm = jnp.where(jnp.arange(S)[:, None] >= jnp.arange(S)[None, :],
                               0.0, -1e30)
                sc = sc + cm[None, None]
            probs = jax.nn.softmax(sc, axis=-1).astype(in_dtype)
        return out, probs


# ------------------------------ reference (JAX) ------------------------------


def _reference(mod, x, mask, pos_ids):
    B, S, _ = x.shape
    H, Hkv, D = mod.num_heads, mod.num_kv_heads, mod.head_dim
    q = (x.reshape(B * S, -1) @ mod.w_q).reshape(B, S, H, D).transpose(0, 2, 1, 3)
    k = (x.reshape(B * S, -1) @ mod.w_k).reshape(B, S, Hkv, D).transpose(0, 2, 1, 3)
    v = (x.reshape(B * S, -1) @ mod.w_v).reshape(B, S, Hkv, D).transpose(0, 2, 1, 3)
    cos, sin = mod._rotary(pos_ids)
    cos_ = cos[:, None]
    sin_ = sin[:, None]

    def rot(t):
        h = t.shape[-1] // 2
        return jnp.concatenate([-t[..., h:], t[..., :h]], axis=-1)

    q = q * cos_ + rot(q) * sin_
    k = k * cos_ + rot(k) * sin_
    k = jnp.repeat(k, mod.n_rep, axis=1)
    v = jnp.repeat(v, mod.n_rep, axis=1)
    s = jnp.einsum("bhqd,bhkd->bhqk", q, k) / math.sqrt(D) + mask
    p = jax.nn.softmax(s.astype(jnp.float32), axis=-1).astype(x.dtype)
    o = jnp.einsum("bhqk,bhkd->bhqd", p, v)
    o = o.transpose(0, 2, 1, 3).reshape(B * S, H * D) @ mod.w_o
    return o.reshape(B, S, -1), p


# ----------------------------------- main ------------------------------------


if __name__ == "__main__":
    # Small but layout-realistic shapes: head_dim lane-aligned (128), multiple
    # q/kv/K tiles so accumulators, online softmax and tile skipping are exercised.
    B, S, HIDDEN = 2, 512, 1024
    NUM_HEADS, NUM_KV_HEADS, HEAD_DIM = 4, 2, 128

    root = jax.random.PRNGKey(0)
    k_w, k_x = jax.random.split(root)

    mod = GemmaAttentionPallas(HIDDEN, NUM_HEADS, NUM_KV_HEADS, HEAD_DIM,
                               rope_theta=10000.0, key=k_w)

    hidden_states = jax.random.normal(k_x, (B, S, HIDDEN), jnp.float32)
    position_ids = jnp.broadcast_to(jnp.arange(S, dtype=jnp.int32)[None, :], (B, S))
    # additive causal mask: 0 where attended, large negative otherwise
    causal = jnp.tril(jnp.ones((S, S), jnp.float32))
    attention_mask = jnp.broadcast_to(
        jnp.where(causal[None, None] > 0, 0.0, -1e9).astype(jnp.float32),
        (B, 1, S, S))

    with jax.default_matmul_precision("highest"):
        ref_out, ref_probs = _reference(mod, hidden_states, attention_mask, position_ids)
        ref_out = jax.block_until_ready(ref_out)

    # Fast path 1: in-kernel causal masking + fully-masked-tile skipping.
    out_c, probs_c = mod(hidden_states, attention_mask, position_ids, is_causal=True)
    out_c = jax.block_until_ready(out_c)
    assert probs_c is None
    assert out_c.shape == (B, S, HIDDEN)
    err_c = float(jnp.max(jnp.abs(out_c - ref_out)))
    assert jnp.allclose(out_c, ref_out, rtol=2e-2, atol=2e-2), (
        "causal path max |out - ref| = %g" % err_c)

    # Fast path 2: arbitrary streamed additive mask (bf16), same result here.
    out_m, _ = mod(hidden_states, attention_mask, position_ids, is_causal=False)
    out_m = jax.block_until_ready(out_m)
    err_m = float(jnp.max(jnp.abs(out_m - ref_out)))
    assert jnp.allclose(out_m, ref_out, rtol=2e-2, atol=2e-2), (
        "mask path max |out - ref| = %g" % err_m)

    # Optional debug path that also returns the attention probabilities.
    out2, probs2 = mod(hidden_states, attention_mask, position_ids,
                       is_causal=True, return_attn_probs=True)
    probs2 = jax.block_until_ready(probs2)
    assert probs2.shape == (B, NUM_HEADS, S, S)
    assert jnp.allclose(probs2, ref_probs, rtol=2e-2, atol=2e-2)

    print("KERNEL_OK")
</pallas_src>

<mosaic_0001>
module attributes {stable_mosaic.version = 11 : i64} {
  func.func @_qkv_rope_kernel(%arg0: i32, %arg1: i32, %arg2: i32, %arg3: memref<512x512xbf16, #tpu.memory_space<vmem>>, %arg4: memref<512x512xbf16, #tpu.memory_space<vmem>>, %arg5: memref<512x128xf32, #tpu.memory_space<vmem>>, %arg6: memref<512x128xf32, #tpu.memory_space<vmem>>, %arg7: memref<512x256xbf16, #tpu.memory_space<vmem>>, %arg8: memref<512x128xbf16, #tpu.memory_space<vmem>>, %arg9: memref<512x128xbf16, #tpu.memory_space<vmem>>, %arg10: memref<512x512xf32, #tpu.memory_space<vmem>>) attributes {dimension_semantics = [#tpu.dimension_semantics<parallel>, #tpu.dimension_semantics<parallel>, #tpu.dimension_semantics<arbitrary>], iteration_bounds = array<i64: 2, 2, 2>, scalar_prefetch = 0 : i64, scratch_operands = 1 : i64, tpu.core_type = #tpu.core_type<tc>, window_params = [{transform_indices = @transform_0, window_bounds = array<i64: 512, 512>}, {transform_indices = @transform_1, window_bounds = array<i64: 512, 512>}, {transform_indices = @transform_2, window_bounds = array<i64: 512, 128>}, {transform_indices = @transform_3, window_bounds = array<i64: 512, 128>}, {transform_indices = @transform_4, window_bounds = array<i64: 512, 256>}, {transform_indices = @transform_5, window_bounds = array<i64: 512, 128>}, {transform_indices = @transform_6, window_bounds = array<i64: 512, 128>}]} {
    %c0_i32 = arith.constant 0 : i32
    %0 = arith.cmpi eq, %arg2, %c0_i32 : i32
    %1 = arith.extui %0 : i1 to i32
    %c0_i32_0 = arith.constant 0 : i32
    %2 = arith.cmpi ne, %1, %c0_i32_0 : i32
    scf.if %2 {
      %cst_9 = arith.constant 0.000000e+00 : f32
      %12 = vector.broadcast %cst_9 : f32 to vector<512x512xf32>
      %c0_10 = arith.constant 0 : index
      %c0_11 = arith.constant 0 : index
      %13 = vector.load %arg10[%c0_10, %c0_11] : memref<512x512xf32, #tpu.memory_space<vmem>>, vector<512x512xf32>
      tpu.vector_store %arg10[%c0_10, %c0_11], %12 {strides = array<i32>} : memref<512x512xf32, #tpu.memory_space<vmem>>, vector<512x512xf32>,
    } else {
    }
    %c0 = arith.constant 0 : index
    %c0_1 = arith.constant 0 : index
    %3 = vector.load %arg10[%c0, %c0_1] : memref<512x512xf32, #tpu.memory_space<vmem>>, vector<512x512xf32>
    %c0_2 = arith.constant 0 : index
    %c0_3 = arith.constant 0 : index
    %4 = vector.load %arg3[%c0_2, %c0_3] : memref<512x512xbf16, #tpu.memory_space<vmem>>, vector<512x512xbf16>
    %c0_4 = arith.constant 0 : index
    %c0_5 = arith.constant 0 : index
    %5 = vector.load %arg4[%c0_4, %c0_5] : memref<512x512xbf16, #tpu.memory_space<vmem>>, vector<512x512xbf16>
    %cst = arith.constant dense<0.000000e+00> : vector<512x512xf32>
    %6 = tpu.matmul %4, %5, %cst {dimension_numbers = #tpu.dot_dimension_numbers<[1], [0], [0], [1], [0, 0, 1, 1], [], []>} : vector<512x512xbf16>, vector<512x512xbf16>, vector<512x512xf32> -> vector<512x512xf32>
    %7 = arith.addf %3, %6 : vector<512x512xf32>
    %c0_6 = arith.constant 0 : index
    %c0_7 = arith.constant 0 : index
    %8 = vector.load %arg10[%c0_6, %c0_7] : memref<512x512xf32, #tpu.memory_space<vmem>>, vector<512x512xf32>
    tpu.vector_store %arg10[%c0_6, %c0_7], %7 {strides = array<i32>} : memref<512x512xf32, #tpu.memory_space<vmem>>, vector<512x512xf32>,
    %c1_i32 = arith.constant 1 : i32
    %9 = arith.cmpi eq, %arg2, %c1_i32 : i32
    %10 = arith.extui %9 : i1 to i32
    %c0_i32_8 = arith.constant 0 : i32
    %11 = arith.cmpi ne, %10, %c0_i32_8 : i32
    scf.if %11 {
      %c0_9 = arith.constant 0 : index
      %c0_10 = arith.constant 0 : index
      %12 = vector.load %arg10[%c0_9, %c0_10] : memref<512x512xf32, #tpu.memory_space<vmem>>, vector<512x512xf32>
      %c0_11 = arith.constant 0 : index
      %c0_12 = arith.constant 0 : index
      %13 = vector.load %arg5[%c0_11, %c0_12] : memref<512x128xf32, #tpu.memory_space<vmem>>, vector<512x128xf32>
      %c0_13 = arith.constant 0 : index
      %c0_14 = arith.constant 0 : index
      %14 = vector.load %arg6[%c0_13, %c0_14] : memref<512x128xf32, #tpu.memory_space<vmem>>, vector<512x128xf32>
      %15 = vector.extract_strided_slice %12 {offsets = [0, 0], sizes = [512, 128], strides = [1, 1]} : vector<512x512xf32> to vector<512x128xf32>
      %16 = arith.mulf %15, %13 : vector<512x128xf32>
      %c64_i32 = arith.constant 64 : i32
      %17 = tpu.dynamic_rotate %15 by %c64_i32 dim 1 : vector<512x128xf32>, i32 -> vector<512x128xf32>
      %18 = arith.mulf %17, %14 : vector<512x128xf32>
      %19 = arith.addf %16, %18 : vector<512x128xf32>
      %20 = arith.truncf %19 : vector<512x128xf32> to vector<512x128xbf16>
      %c0_15 = arith.constant 0 : index
      %c0_16 = arith.constant 0 : index
      %21 = vector.load %arg7[%c0_15, %c0_16] : memref<512x256xbf16, #tpu.memory_space<vmem>>, vector<512x128xbf16>
      tpu.vector_store %arg7[%c0_15, %c0_16], %20 {strides = array<i32>} : memref<512x256xbf16, #tpu.memory_space<vmem>>, vector<512x128xbf16>,
      %22 = vector.extract_strided_slice %12 {offsets = [0, 128], sizes = [512, 128], strides = [1, 1]} : vector<512x512xf32> to vector<512x128xf32>
      %23 = arith.mulf %22, %13 : vector<512x128xf32>
      %c64_i32_17 = arith.constant 64 : i32
      %24 = tpu.dynamic_rotate %22 by %c64_i32_17 dim 1 : vector<512x128xf32>, i32 -> vector<512x128xf32>
      %25 = arith.mulf %24, %14 : vector<512x128xf32>
      %26 = arith.addf %23, %25 : vector<512x128xf32>
      %27 = arith.truncf %26 : vector<512x128xf32> to vector<512x128xbf16>
      %c0_18 = arith.constant 0 : index
      %c128 = arith.constant 128 : index
      %28 = vector.load %arg7[%c0_18, %c128] : memref<512x256xbf16, #tpu.memory_space<vmem>>, vector<512x128xbf16>
      tpu.vector_store %arg7[%c0_18, %c128], %27 {strides = array<i32>} : memref<512x256xbf16, #tpu.memory_space<vmem>>, vector<512x128xbf16>,
      %29 = vector.extract_strided_slice %12 {offsets = [0, 256], sizes = [512, 128], strides = [1, 1]} : vector<512x512xf32> to vector<512x128xf32>
      %30 = arith.mulf %29, %13 : vector<512x128xf32>
      %c64_i32_19 = arith.constant 64 : i32
      %31 = tpu.dynamic_rotate %29 by %c64_i32_19 dim 1 : vector<512x128xf32>, i32 -> vector<512x128xf32>
      %32 = arith.mulf %31, %14 : vector<512x128xf32>
      %33 = arith.addf %30, %32 : vector<512x128xf32>
      %34 = arith.truncf %33 : vector<512x128xf32> to vector<512x128xbf16>
      %c0_20 = arith.constant 0 : index
      %c0_21 = arith.constant 0 : index
      %35 = vector.load %arg8[%c0_20, %c0_21] : memref<512x128xbf16, #tpu.memory_space<vmem>>, vector<512x128xbf16>
      tpu.vector_store %arg8[%c0_20, %c0_21], %34 {strides = array<i32>} : memref<512x128xbf16, #tpu.memory_space<vmem>>, vector<512x128xbf16>,
      %36 = vector.extract_strided_slice %12 {offsets = [0, 384], sizes = [512, 128], strides = [1, 1]} : vector<512x512xf32> to vector<512x128xf32>
      %37 = arith.truncf %36 : vector<512x128xf32> to vector<512x128xbf16>
      %c0_22 = arith.constant 0 : index
      %c0_23 = arith.constant 0 : index
      %38 = vector.load %arg9[%c0_22, %c0_23] : memref<512x128xbf16, #tpu.memory_space<vmem>>, vector<512x128xbf16>
      tpu.vector_store %arg9[%c0_22, %c0_23], %37 {strides = array<i32>} : memref<512x128xbf16, #tpu.memory_space<vmem>>, vector<512x128xbf16>,
    } else {
    }
    return
  }
  func.func @transform_0(%arg0: i32, %arg1: i32, %arg2: i32) -> (i32, i32) {
    %c0_i32 = arith.constant 0 : i32
    return %arg0, %arg2 : i32, i32
  }
  func.func @transform_1(%arg0: i32, %arg1: i32, %arg2: i32) -> (i32, i32) {
    %c0_i32 = arith.constant 0 : i32
    return %arg2, %arg1 : i32, i32
  }
  func.func @transform_2(%arg0: i32, %arg1: i32, %arg2: i32) -> (i32, i32) {
    %c0_i32 = arith.constant 0 : i32
    %c0_i32_0 = arith.constant 0 : i32
    return %arg0, %c0_i32 : i32, i32
  }
  func.func @transform_3(%arg0: i32, %arg1: i32, %arg2: i32) -> (i32, i32) {
    %c0_i32 = arith.constant 0 : i32
    %c0_i32_0 = arith.constant 0 : i32
    return %arg0, %c0_i32 : i32, i32
  }
  func.func @transform_4(%arg0: i32, %arg1: i32, %arg2: i32) -> (i32, i32) {
    %c0_i32 = arith.constant 0 : i32
    return %arg0, %arg1 : i32, i32
  }
  func.func @transform_5(%arg0: i32, %arg1: i32, %arg2: i32) -> (i32, i32) {
    %c0_i32 = arith.constant 0 : i32
    return %arg0, %arg1 : i32, i32
  }
  func.func @transform_6(%arg0: i32, %arg1: i32, %arg2: i32) -> (i32, i32) {
    %c0_i32 = arith.constant 0 : i32
    return %arg0, %arg1 : i32, i32
  }
}

</mosaic_0001>

<llo_original>
// kernel: tpu_custom_call.1
$region0: #{tpu_custom_call.1}
  #allocation0 [shape = 'u32[]', space=smem, size = 0x4, offset = 0x4, fixed_abs, tag = 'smem constant byte address 0x4 - core index']
  #allocation1 [shape = 'u32[72,128]{1,0:T(1,128)}', space=vmem, size = 0x9000, scoped, tag = 'internal scratch']
  #allocation2 [shape = 'f32[512,512]{1,0:T(8,128)}', space=vmem, size = 0x100000, scoped, tag = 'scratch operand']
  %s0 = inlined_call_operand.hbm [shape: bf16[1024,1024], index: 0, kind: input, shape index: {}]
  %s1 = inlined_call_operand.hbm [shape: bf16[1024,1024], index: 1, kind: input, shape index: {}]
  %s2 = inlined_call_operand.hbm [shape: f32[1024,128], index: 2, kind: input, shape index: {}]
  %s3 = inlined_call_operand.hbm [shape: f32[1024,128], index: 3, kind: input, shape index: {}]
  %s4 = inlined_call_operand.hbm [shape: bf16[1024,512], index: 4, kind: output, shape index: {0}]
  %s5 = inlined_call_operand.hbm [shape: bf16[1024,256], index: 5, kind: output, shape index: {1}]
  %s6 = inlined_call_operand.hbm [shape: bf16[1024,256], index: 6, kind: output, shape index: {2}]
  %7 = xla_tuple %s4, %s5, %s6
  %s8 = sld [smem:[#allocation0]]
  $region89: #{tpu_custom_call.1} parent=0
    _
  %s10 = ssub.s32 1, %s8
  %s11 = scalar_select 0, %s10, %s8
  $region1: #{tpu_custom_call.1} parent=0
    #allocation3 [shape = 'u8[1048576]{0}', space=vmem, size = 0x100000, scoped, tag = 'input window, operand 0']
    #allocation4 [shape = 's32[2]{0}', space=sflag, size = 0x8, scoped, tag = 'scoped memory for tpu_custom_call.1']
    #allocation5 [shape = 's32[2]{0}', space=sflag, size = 0x8, scoped, tag = 'scoped memory for tpu_custom_call.1']
    #allocation6 [shape = 'u8[1048576]{0}', space=vmem, size = 0x100000, scoped, tag = 'input window, operand 1']
    #allocation7 [shape = 's32[2]{0}', space=sflag, size = 0x8, scoped, tag = 'scoped memory for tpu_custom_call.1']
    #allocation8 [shape = 'u8[524288]{0}', space=vmem, size = 0x80000, scoped, tag = 'input window, operand 2']
    #allocation9 [shape = 'u8[524288]{0}', space=vmem, size = 0x80000, scoped, tag = 'input window, operand 3']
    #allocation10 [shape = 's32[2]{0}', space=sflag, size = 0x8, scoped, tag = 'scoped memory for tpu_custom_call.1']
    #allocation11 [shape = 'u8[524288]{0}', space=vmem, size = 0x80000, scoped, tag = 'output window, operand 0']
    #allocation12 [shape = 'u8[262144]{0}', space=vmem, size = 0x40000, scoped, tag = 'output window, operand 1']
    #allocation13 [shape = 's32[2]{0}', space=sflag, size = 0x8, scoped, tag = 'scoped memory for tpu_custom_call.1']
    #allocation14 [shape = 'u8[262144]{0}', space=vmem, size = 0x40000, scoped, tag = 'output window, operand 2']
    %12 = vsyncpa [#allocation4], 0
    %s13 = scalar_lea.sflag [#allocation4], 1
    %14 = vsyncpa %s13, 0
    %15 = vsyncpa [#allocation7], 0
    %s16 = scalar_lea.sflag [#allocation7], 1
    %17 = vsyncpa %s16, 0
    %18 = vsyncpa [#allocation10], 0
    %s19 = scalar_lea.sflag [#allocation10], 1
    %20 = vsyncpa %s19, 0
    %21 = vsyncpa [#allocation5], 0
    %s22 = scalar_lea.sflag [#allocation5], 1
    %23 = vsyncpa %s22, 0
    %24 = vsyncpa [#allocation13], 0
    %s25 = scalar_lea.sflag [#allocation13], 1
    %26 = vsyncpa %s25, 0
    loop: start=0, step=1, limit=10
    $region2: #{tpu_custom_call.1} parent=1 // loop_pre_header
      _
    $region3: #{tpu_custom_call.1} parent=1 // loop_header
      %s28 = sphi 0, %s32
      %p29 = scmp.ge.s32.totalorder %s28, 10
      %s35 = sphi 0, %s54
      %s36 = sphi 0, %s50
      %s37 = sphi 0, %s46
      %s38 = sphi 0, %s35
      %s39 = sphi 0, %s36
      %s40 = sphi 0, %s37
      %s41 = sphi 0, %s38
      %s42 = sphi 0, %s39
      %s43 = sphi 0, %s40
      %s59 = sphi 0, %s61
      %s62 = sphi 0, %s59
      %s63 = sphi 0, %s62
      %s79 = sphi 0, %s63
      %s87 = sphi 0, %s89
      %s90 = sphi 0, %s87
      %s91 = sphi 0, %s90
      %s107 = sphi 0, %s91
      %s113 = sphi 0, %s115
      %s116 = sphi 0, %s113
      %s117 = sphi 0, %s116
      %s133 = sphi 0, %s117
      %s139 = sphi 0, %s141
      %s142 = sphi 0, %s139
      %s143 = sphi 0, %s142
      %s159 = sphi 0, %s143
      %s167 = sphi 0, %s169
      %s170 = sphi 0, %s167
      %s171 = sphi 0, %s170
      %s187 = sphi 0, %s171
      %s195 = sphi 0, %s197
      %s198 = sphi 0, %s195
      %s199 = sphi 0, %s198
      %s215 = sphi 0, %s199
      %s223 = sphi 0, %s225
      %s226 = sphi 0, %s223
      %s227 = sphi 0, %s226
      %s243 = sphi 0, %s227
    $region4: #{tpu_custom_call.1} parent=1 // loop_header_branch
      %31 = sbr.rel (%p29) target = $region8
    $region5: #{tpu_custom_call.1} parent=1 // loop_body
      %s33 = ssub.s32 %s28, 1
      %s34 = ssub.s32 %s28, 2
      %s44 = sadd.s32 1, %s37
      %p45 = scmp.ge.s32.totalorder %s44, 2
      %s46 = scalar_select %p45, 0, %s44
      %s47 = sadd.s32 1, %s36
      %s48 = scalar_select %p45, %s47, %s36
      %p49 = scmp.ge.s32.totalorder %s48, 2
      %s50 = scalar_select %p49, 0, %s48
      %s51 = sadd.s32 1, %s35
      %s52 = scalar_select %p49, %s51, %s35
      %p53 = scmp.ge.s32.totalorder %s52, 2
      %s54 = scalar_select %p53, 0, %s52
      %s55 = ssub.s32 %s35, %s54
      %s56 = ssub.s32 %s37, %s46
      %s57 = sor.u32 %s55, %s56
      %p58 = scmp.eq.s32.totalorder %s57, 0
      %s60 = sadd.s32 %s59, 1
      %s61 = scalar_select %p58, %s59, %s60
      %p64 = pneg %p58
      %p65 = scmp.eq.s32.totalorder %s28, 7
      %p66 = por %p64, %p65
      %p67 = scmp.ne.s32.totalorder %s59, %s62
      %p68 = scmp.eq.s32.totalorder %s28, 0
      %p69 = por %p67, %p68
      %p70 = scmp.ne.s32.totalorder %s59, %s62
      %p71 = scmp.eq.s32.totalorder %s33, 7
      %p72 = por %p70, %p71
      %p73 = scmp.ne.s32.totalorder %s62, %s63
      %p74 = scmp.eq.s32.totalorder %s33, 0
      %p75 = por %p73, %p74
      %p76 = scmp.ne.s32.totalorder %s62, %s63
      %p77 = scmp.eq.s32.totalorder %s34, 7
      %p78 = por %p76, %p77
      %p80 = scmp.ne.s32.totalorder %s63, %s79
      %p81 = scmp.eq.s32.totalorder %s34, 0
      %p82 = por %p80, %p81
      %s83 = ssub.s32 %s37, %s46
      %s84 = ssub.s32 %s36, %s50
      %s85 = sor.u32 %s83, %s84
      %p86 = scmp.eq.s32.totalorder %s85, 0
      %s88 = sadd.s32 %s87, 1
      %s89 = scalar_select %p86, %s87, %s88
      %p92 = pneg %p86
      %p93 = scmp.eq.s32.totalorder %s28, 7
      %p94 = por %p92, %p93
      %p95 = scmp.ne.s32.totalorder %s87, %s90
      %p96 = scmp.eq.s32.totalorder %s28, 0
      %p97 = por %p95, %p96
      %p98 = scmp.ne.s32.totalorder %s87, %s90
      %p99 = scmp.eq.s32.totalorder %s33, 7
      %p100 = por %p98, %p99
      %p101 = scmp.ne.s32.totalorder %s90, %s91
      %p102 = scmp.eq.s32.totalorder %s33, 0
      %p103 = por %p101, %p102
      %p104 = scmp.ne.s32.totalorder %s90, %s91
      %p105 = scmp.eq.s32.totalorder %s34, 7
      %p106 = por %p104, %p105
      %p108 = scmp.ne.s32.totalorder %s91, %s107
      %p109 = scmp.eq.s32.totalorder %s34, 0
      %p110 = por %p108, %p109
      %s111 = ssub.s32 %s35, %s54
      %p112 = scmp.eq.s32.totalorder %s111, 0
      %s114 = sadd.s32 %s113, 1
      %s115 = scalar_select %p112, %s113, %s114
      %p118 = pneg %p112
      %p119 = scmp.eq.s32.totalorder %s28, 7
      %p120 = por %p118, %p119
      %p121 = scmp.ne.s32.totalorder %s113, %s116
      %p122 = scmp.eq.s32.totalorder %s28, 0
      %p123 = por %p121, %p122
      %p124 = scmp.ne.s32.totalorder %s113, %s116
      %p125 = scmp.eq.s32.totalorder %s33, 7
      %p126 = por %p124, %p125
      %p127 = scmp.ne.s32.totalorder %s116, %s117
      %p128 = scmp.eq.s32.totalorder %s33, 0
      %p129 = por %p127, %p128
      %p130 = scmp.ne.s32.totalorder %s116, %s117
      %p131 = scmp.eq.s32.totalorder %s34, 7
      %p132 = por %p130, %p131
      %p134 = scmp.ne.s32.totalorder %s117, %s133
      %p135 = scmp.eq.s32.totalorder %s34, 0
      %p136 = por %p134, %p135
      %s137 = ssub.s32 %s35, %s54
      %p138 = scmp.eq.s32.totalorder %s137, 0
      %s140 = sadd.s32 %s139, 1
      %s141 = scalar_select %p138, %s139, %s140
      %p144 = pneg %p138
      %p145 = scmp.eq.s32.totalorder %s28, 7
      %p146 = por %p144, %p145
      %p147 = scmp.ne.s32.totalorder %s139, %s142
      %p148 = scmp.eq.s32.totalorder %s28, 0
      %p149 = por %p147, %p148
      %p150 = scmp.ne.s32.totalorder %s139, %s142
      %p151 = scmp.eq.s32.totalorder %s33, 7
      %p152 = por %p150, %p151
      %p153 = scmp.ne.s32.totalorder %s142, %s143
      %p154 = scmp.eq.s32.totalorder %s33, 0
      %p155 = por %p153, %p154
      %p156 = scmp.ne.s32.totalorder %s142, %s143
      %p157 = scmp.eq.s32.totalorder %s34, 7
      %p158 = por %p156, %p157
      %p160 = scmp.ne.s32.totalorder %s143, %s159
      %p161 = scmp.eq.s32.totalorder %s34, 0
      %p162 = por %p160, %p161
      %s163 = ssub.s32 %s35, %s54
      %s164 = ssub.s32 %s36, %s50
      %s165 = sor.u32 %s163, %s164
      %p166 = scmp.eq.s32.totalorder %s165, 0
      %s168 = sadd.s32 %s167, 1
      %s169 = scalar_select %p166, %s167, %s168
      %p172 = pneg %p166
      %p173 = scmp.eq.s32.totalorder %s28, 7
      %p174 = por %p172, %p173
      %p175 = scmp.ne.s32.totalorder %s167, %s170
      %p176 = scmp.eq.s32.totalorder %s28, 0
      %p177 = por %p175, %p176
      %p178 = scmp.ne.s32.totalorder %s167, %s170
      %p179 = scmp.eq.s32.totalorder %s33, 7
      %p180 = por %p178, %p179
      %p181 = scmp.ne.s32.totalorder %s170, %s171
      %p182 = scmp.eq.s32.totalorder %s33, 0
      %p183 = por %p181, %p182
      %p184 = scmp.ne.s32.totalorder %s170, %s171
      %p185 = scmp.eq.s32.totalorder %s34, 7
      %p186 = por %p184, %p185
      %p188 = scmp.ne.s32.totalorder %s171, %s187
      %p189 = scmp.eq.s32.totalorder %s34, 0
      %p190 = por %p188, %p189
      %s191 = ssub.s32 %s35, %s54
      %s192 = ssub.s32 %s36, %s50
      %s193 = sor.u32 %s191, %s192
      %p194 = scmp.eq.s32.totalorder %s193, 0
      %s196 = sadd.s32 %s195, 1
      %s197 = scalar_select %p194, %s195, %s196
      %p200 = pneg %p194
      %p201 = scmp.eq.s32.totalorder %s28, 7
      %p202 = por %p200, %p201
      %p203 = scmp.ne.s32.totalorder %s195, %s198
      %p204 = scmp.eq.s32.totalorder %s28, 0
      %p205 = por %p203, %p204
      %p206 = scmp.ne.s32.totalorder %s195, %s198
      %p207 = scmp.eq.s32.totalorder %s33, 7
      %p208 = por %p206, %p207
      %p209 = scmp.ne.s32.totalorder %s198, %s199
      %p210 = scmp.eq.s32.totalorder %s33, 0
      %p211 = por %p209, %p210
      %p212 = scmp.ne.s32.totalorder %s198, %s199
      %p213 = scmp.eq.s32.totalorder %s34, 7
      %p214 = por %p212, %p213
      %p216 = scmp.ne.s32.totalorder %s199, %s215
      %p217 = scmp.eq.s32.totalorder %s34, 0
      %p218 = por %p216, %p217
      %s219 = ssub.s32 %s35, %s54
      %s220 = ssub.s32 %s36, %s50
      %s221 = sor.u32 %s219, %s220
      %p222 = scmp.eq.s32.totalorder %s221, 0
      %s224 = sadd.s32 %s223, 1
      %s225 = scalar_select %p222, %s223, %s224
      %p228 = pneg %p222
      %p229 = scmp.eq.s32.totalorder %s28, 7
      %p230 = por %p228, %p229
      %p231 = scmp.ne.s32.totalorder %s223, %s226
      %p232 = scmp.eq.s32.totalorder %s28, 0
      %p233 = por %p231, %p232
      %p234 = scmp.ne.s32.totalorder %s223, %s226
      %p235 = scmp.eq.s32.totalorder %s33, 7
      %p236 = por %p234, %p235
      %p237 = scmp.ne.s32.totalorder %s226, %s227
      %p238 = scmp.eq.s32.totalorder %s33, 0
      %p239 = por %p237, %p238
      %p240 = scmp.ne.s32.totalorder %s226, %s227
      %p241 = scmp.eq.s32.totalorder %s34, 7
      %p242 = por %p240, %p241
      %p244 = scmp.ne.s32.totalorder %s227, %s243
      %p245 = scmp.eq.s32.totalorder %s34, 0
      %p246 = por %p244, %p245
      %p247 = scmp.le.s32.totalorder 1, %s28
      %p248 = scmp.lt.s32.totalorder %s28, 9
      %p249 = pnand %p247, %p248
      %p250 = pneg %p249
      // Predicated region
      $region9: #{tpu_custom_call.1} parent=5 // pred_check
        _
      $region10: #{tpu_custom_call.1} parent=5 // pred_check_branch
        %252 = sbr.rel (%p249) target = $region12
      $region11: #{tpu_custom_call.1} parent=5 // pred_region
        %s253 = ssub.s32 %s28, 1
      $region12: #{tpu_custom_call.1} parent=5 // pred_fallthru
        _
      %p254 = scmp.lt.s32.totalorder %s28, 8
      // Predicated region
      $region13: #{tpu_custom_call.1} parent=5 // pred_check
        %p255 = pneg %p254
      $region14: #{tpu_custom_call.1} parent=5 // pred_check_branch
        %257 = sbr.rel (%p255) target = $region16
      $region15: #{tpu_custom_call.1} parent=5 // pred_region
        // Predicated region
        $region17: #{tpu_custom_call.1} parent=15 // pred_check
          %p258 = pneg %p69
        $region18: #{tpu_custom_call.1} parent=15 // pred_check_branch
          %260 = sbr.rel (%p258) target = $region20
        $region19: #{tpu_custom_call.1} parent=15 // pred_region
          %s261 = sand.u32 %s59, 1
          %s262 = scalar_lea.sflag [#allocation4], %s261
          %s263 = sand.u32 %s59, 1
          %s264 = smul.addr %s263, 1024
          %s265 = scalar_lea.vmem [#allocation3], %s264
          %s266 = smul.u32 64, %s35
          %s267 = smul.u32 4, %s37
          %269 = vsyncadd %s262, 0
          %s270 = smul.addr %s266, 8
          %s271 = sadd.s32 %s267, %s270
          %s272 = smul.addr %s271, 4
          %s273 = scalar_lea.hbm %s0, %s272
          %s274 = sshll.u32 %s273, 4
          %s275 = int_to_ptr.hbm [resolvable:$true] %s274
          %s276 = sshll.u32 %s265, 4
          %s277 = int_to_ptr.vmem [resolvable:$true] %s276
          %282 = dma.hbm_to_vmem [thread:$0]  %s275, 16384, %s277, %s262, 512, 256, 16
        $region20: #{tpu_custom_call.1} parent=15 // pred_fallthru
          _
        // Predicated region
        $region21: #{tpu_custom_call.1} parent=15 // pred_check
          %p283 = pneg %p97
        $region22: #{tpu_custom_call.1} parent=15 // pred_check_branch
          %285 = sbr.rel (%p283) target = $region24
        $region23: #{tpu_custom_call.1} parent=15 // pred_region
          %s286 = sand.u32 %s28, 1
          %s287 = scalar_lea.sflag [#allocation7], %s286
          %s288 = sand.u32 %s87, 1
          %s289 = smul.addr %s288, 1024
          %s290 = scalar_lea.vmem [#allocation6], %s289
          %s291 = smul.u32 64, %s37
          %s292 = smul.u32 4, %s36
          %294 = vsyncadd %s287, 0
          %s295 = smul.addr %s291, 8
          %s296 = sadd.s32 %s292, %s295
          %s297 = smul.addr %s296, 4
          %s298 = scalar_lea.hbm %s1, %s297
          %s299 = sshll.u32 %s298, 4
          %s300 = int_to_ptr.hbm [resolvable:$true] %s299
          %s301 = sshll.u32 %s290, 4
          %s302 = int_to_ptr.vmem [resolvable:$true] %s301
          %307 = dma.hbm_to_vmem [thread:$0]  %s300, 16384, %s302, %s287, 512, 256, 16
        $region24: #{tpu_custom_call.1} parent=15 // pred_fallthru
          _
        // Predicated region
        $region25: #{tpu_custom_call.1} parent=15 // pred_check
          %p308 = pneg %p123
        $region26: #{tpu_custom_call.1} parent=15 // pred_check_branch
          %310 = sbr.rel (%p308) target = $region28
        $region27: #{tpu_custom_call.1} parent=15 // pred_region
          %s311 = sand.u32 %s28, 1
          %s312 = scalar_lea.sflag [#allocation7], %s311
          %s313 = sand.u32 %s113, 1
          %s314 = smul.addr %s313, 512
          %s315 = scalar_lea.vmem [#allocation8], %s314
          %s316 = smul.u32 64, %s35
          %318 = vsyncadd %s312, 0
          %s319 = smul.addr %s316, 8
          %s320 = scalar_lea.hbm %s2, %s319
          %s321 = sshll.u32 %s320, 4
          %s322 = int_to_ptr.hbm [resolvable:$true] %s321
          %s323 = sshll.u32 %s315, 4
          %s324 = int_to_ptr.vmem [resolvable:$true] %s323
          %329 = dma.hbm_to_vmem [thread:$0]  %s322, 8192, %s324, %s312, 128, 128, 8
        $region28: #{tpu_custom_call.1} parent=15 // pred_fallthru
          _
        // Predicated region
        $region29: #{tpu_custom_call.1} parent=15 // pred_check
          %p330 = pneg %p149
        $region30: #{tpu_custom_call.1} parent=15 // pred_check_branch
          %332 = sbr.rel (%p330) target = $region32
        $region31: #{tpu_custom_call.1} parent=15 // pred_region
          %s333 = sand.u32 %s139, 1
          %s334 = scalar_lea.sflag [#allocation10], %s333
          %s335 = sand.u32 %s139, 1
          %s336 = smul.addr %s335, 512
          %s337 = scalar_lea.vmem [#allocation9], %s336
          %s338 = smul.u32 64, %s35
          %340 = vsyncadd %s334, 0
          %s341 = smul.addr %s338, 8
          %s342 = scalar_lea.hbm %s3, %s341
          %s343 = sshll.u32 %s342, 4
          %s344 = int_to_ptr.hbm [resolvable:$true] %s343
          %s345 = sshll.u32 %s337, 4
          %s346 = int_to_ptr.vmem [resolvable:$true] %s345
          %351 = dma.hbm_to_vmem [thread:$0]  %s344, 8192, %s346, %s334, 128, 128, 8
        $region32: #{tpu_custom_call.1} parent=15 // pred_fallthru
          _
      $region16: #{tpu_custom_call.1} parent=5 // pred_fallthru
        _
      %p352 = scmp.le.s32.totalorder 1, %s28
      %p353 = scmp.lt.s32.totalorder %s28, 9
      %p354 = pnand %p352, %p353
      %p355 = pneg %p354
      // Predicated region
      $region33: #{tpu_custom_call.1} parent=5 // pred_check
        _
      $region34: #{tpu_custom_call.1} parent=5 // pred_check_branch
        %357 = sbr.rel (%p354) target = $region36
      $region35: #{tpu_custom_call.1} parent=5 // pred_region
        %s358 = ssub.s32 %s28, 1
        %s359 = sand.u32 %s62, 1
        %s360 = scalar_lea.sflag [#allocation4], %s359
        %s361 = sand.u32 %s62, 1
        %s362 = smul.addr %s361, 1024
        %s363 = scalar_lea.vmem [#allocation3], %s362
        // Predicated region
        $region37: #{tpu_custom_call.1} parent=35 // pred_check
          %p364 = pneg %p75
        $region38: #{tpu_custom_call.1} parent=35 // pred_check_branch
          %366 = sbr.rel (%p364) target = $region40
        $region39: #{tpu_custom_call.1} parent=35 // pred_region
          %368 = dma.done %s360, 16384
        $region40: #{tpu_custom_call.1} parent=35 // pred_fallthru
          _
        %s369 = sand.u32 %s33, 1
        %s370 = scalar_lea.sflag [#allocation7], %s369
        %s371 = sand.u32 %s90, 1
        %s372 = smul.addr %s371, 1024
        %s373 = scalar_lea.vmem [#allocation6], %s372
        // Predicated region
        $region41: #{tpu_custom_call.1} parent=35 // pred_check
          %p374 = pneg %p103
        $region42: #{tpu_custom_call.1} parent=35 // pred_check_branch
          %376 = sbr.rel (%p374) target = $region44
        $region43: #{tpu_custom_call.1} parent=35 // pred_region
          %378 = dma.done %s370, 16384
        $region44: #{tpu_custom_call.1} parent=35 // pred_fallthru
          _
        %s379 = sand.u32 %s33, 1
        %s380 = scalar_lea.sflag [#allocation7], %s379
        %s381 = sand.u32 %s116, 1
        %s382 = smul.addr %s381, 512
        %s383 = scalar_lea.vmem [#allocation8], %s382
        // Predicated region
        $region45: #{tpu_custom_call.1} parent=35 // pred_check
          %p384 = pneg %p129
        $region46: #{tpu_custom_call.1} parent=35 // pred_check_branch
          %386 = sbr.rel (%p384) target = $region48
        $region47: #{tpu_custom_call.1} parent=35 // pred_region
          %388 = dma.done %s380, 8192
        $region48: #{tpu_custom_call.1} parent=35 // pred_fallthru
          _
        %s389 = sand.u32 %s142, 1
        %s390 = scalar_lea.sflag [#allocation10], %s389
        %s391 = sand.u32 %s142, 1
        %s392 = smul.addr %s391, 512
        %s393 = scalar_lea.vmem [#allocation9], %s392
        // Predicated region
        $region49: #{tpu_custom_call.1} parent=35 // pred_check
          %p394 = pneg %p155
        $region50: #{tpu_custom_call.1} parent=35 // pred_check_branch
          %396 = sbr.rel (%p394) target = $region52
        $region51: #{tpu_custom_call.1} parent=35 // pred_region
          %398 = dma.done %s390, 8192
        $region52: #{tpu_custom_call.1} parent=35 // pred_fallthru
          _
        %s399 = sand.u32 %s62, 1
        %s400 = scalar_lea.sflag [#allocation4], %s399
        %s401 = sand.u32 %s62, 1
        %s402 = smul.addr %s401, 1024
        %s403 = scalar_lea.vmem [#allocation3], %s402
        %p404 = pneg %p75
        %p405 = pneg %p72
        %s406 = sand.u32 %s33, 1
        %s407 = scalar_lea.sflag [#allocation7], %s406
        %s408 = sand.u32 %s90, 1
        %s409 = smul.addr %s408, 1024
        %s410 = scalar_lea.vmem [#allocation6], %s409
        %p411 = pneg %p103
        %p412 = pneg %p100
        %s413 = sand.u32 %s33, 1
        %s414 = scalar_lea.sflag [#allocation7], %s413
        %s415 = sand.u32 %s116, 1
        %s416 = smul.addr %s415, 512
        %s417 = scalar_lea.vmem [#allocation8], %s416
        %p418 = pneg %p129
        %p419 = pneg %p126
        %s420 = sand.u32 %s142, 1
        %s421 = scalar_lea.sflag [#allocation10], %s420
        %s422 = sand.u32 %s142, 1
        %s423 = smul.addr %s422, 512
        %s424 = scalar_lea.vmem [#allocation9], %s423
        %p425 = pneg %p155
        %p426 = pneg %p152
        %p427 = pneg %p183
        %p428 = pneg %p180
        %s429 = sand.u32 %s170, 1
        %s430 = scalar_lea.sflag [#allocation5], %s429
        %s431 = sand.u32 %s170, 1
        %s432 = smul.addr %s431, 512
        %s433 = scalar_lea.vmem [#allocation11], %s432
        %p434 = pneg %p211
        %p435 = pneg %p208
        %s436 = sand.u32 %s33, 1
        %s437 = scalar_lea.sflag [#allocation13], %s436
        %s438 = sand.u32 %s198, 1
        %s439 = smul.addr %s438, 256
        %s440 = scalar_lea.vmem [#allocation12], %s439
        %p441 = pneg %p239
        %p442 = pneg %p236
        %s443 = sand.u32 %s33, 1
        %s444 = scalar_lea.sflag [#allocation13], %s443
        %s445 = sand.u32 %s226, 1
        %s446 = smul.addr %s445, 256
        %s447 = scalar_lea.vmem [#allocation14], %s446
        %s448 = smul.u32 64, %s38
        %s449 = smul.u32 4, %s40
        %s450 = smul.u32 64, %s40
        %s451 = smul.u32 4, %s39
        %s452 = smul.u32 64, %s38
        %s453 = smul.u32 64, %s38
        %s454 = smul.u32 64, %s38
        %s455 = smul.u32 2, %s39
        %s456 = smul.u32 64, %s38
        %s457 = smul.u32 64, %s38
        %p458 = scmp.eq.s32.totalorder %s40, 0
        // Predicated region
        $region53: #{tpu_custom_call.1} parent=35 // pred_check
          %p459 = pneg %p458
        $region54: #{tpu_custom_call.1} parent=35 // pred_check_branch
          %461 = sbr.rel (%p459) target = $region56
        $region55: #{tpu_custom_call.1} parent=35 // pred_region
          %462 = vst [vmem:[#allocation2] sm:$0xff] 0.0
          %463 = vst [vmem:[#allocation2 + $0x8] sm:$0xff] 0.0
          %464 = vst [vmem:[#allocation2 + $0x10] sm:$0xff] 0.0
          %465 = vst [vmem:[#allocation2 + $0x18] sm:$0xff] 0.0
          %466 = vst [vmem:[#allocation2 + $0x20] sm:$0xff] 0.0
          %467 = vst [vmem:[#allocation2 + $0x28] sm:$0xff] 0.0
          %468 = vst [vmem:[#allocation2 + $0x30] sm:$0xff] 0.0
          %469 = vst [vmem:[#allocation2 + $0x38] sm:$0xff] 0.0
          %470 = vst [vmem:[#allocation2 + $0x40] sm:$0xff] 0.0
          %471 = vst [vmem:[#allocation2 + $0x48] sm:$0xff] 0.0
          %472 = vst [vmem:[#allocation2 + $0x50] sm:$0xff] 0.0
          %473 = vst [vmem:[#allocation2 + $0x58] sm:$0xff] 0.0
          %474 = vst [vmem:[#allocation2 + $0x60] sm:$0xff] 0.0
          %475 = vst [vmem:[#allocation2 + $0x68] sm:$0xff] 0.0
          %476 = vst [vmem:[#allocation2 + $0x70] sm:$0xff] 0.0
          %477 = vst [vmem:[#allocation2 + $0x78] sm:$0xff] 0.0
          %478 = vst [vmem:[#allocation2 + $0x80] sm:$0xff] 0.0
          %479 = vst [vmem:[#allocation2 + $0x88] sm:$0xff] 0.0
          %480 = vst [vmem:[#allocation2 + $0x90] sm:$0xff] 0.0
          %481 = vst [vmem:[#allocation2 + $0x98] sm:$0xff] 0.0
          %482 = vst [vmem:[#allocation2 + $0xa0] sm:$0xff] 0.0
          %483 = vst [vmem:[#allocation2 + $0xa8] sm:$0xff] 0.0
          %484 = vst [vmem:[#allocation2 + $0xb0] sm:$0xff] 0.0
          %485 = vst [vmem:[#allocation2 + $0xb8] sm:$0xff] 0.0
          %486 = vst [vmem:[#allocation2 + $0xc0] sm:$0xff] 0.0
          %487 = vst [vmem:[#allocation2 + $0xc8] sm:$0xff] 0.0
          %488 = vst [vmem:[#allocation2 + $0xd0] sm:$0xff] 0.0
          %489 = vst [vmem:[#allocation2 + $0xd8] sm:$0xff] 0.0
          %490 = vst [vmem:[#allocation2 + $0xe0] sm:$0xff] 0.0
          %491 = vst [vmem:[#allocation2 + $0xe8] sm:$0xff] 0.0
          %492 = vst [vmem:[#allocation2 + $0xf0] sm:$0xff] 0.0
          %493 = vst [vmem:[#allocation2 + $0xf8] sm:$0xff] 0.0
          %494 = vst [vmem:[#allocation2 + $0x100] sm:$0xff] 0.0
          %495 = vst [vmem:[#allocation2 + $0x108] sm:$0xff] 0.0
          %496 = vst [vmem:[#allocation2 + $0x110] sm:$0xff] 0.0
          %497 = vst [vmem:[#allocation2 + $0x118] sm:$0xff] 0.0
          %498 = vst [vmem:[#allocation2 + $0x120] sm:$0xff] 0.0
          %499 = vst [vmem:[#allocation2 + $0x128] sm:$0xff] 0.0
          %500 = vst [vmem:[#allocation2 + $0x130] sm:$0xff] 0.0
          %501 = vst [vmem:[#allocation2 + $0x138] sm:$0xff] 0.0
          %502 = vst [vmem:[#allocation2 + $0x140] sm:$0xff] 0.0
          %503 = vst [vmem:[#allocation2 + $0x148] sm:$0xff] 0.0
          %504 = vst [vmem:[#allocation2 + $0x150] sm:$0xff] 0.0
          %505 = vst [vmem:[#allocation2 + $0x158] sm:$0xff] 0.0
          %506 = vst [vmem:[#allocation2 + $0x160] sm:$0xff] 0.0
          %507 = vst [vmem:[#allocation2 + $0x168] sm:$0xff] 0.0
          %508 = vst [vmem:[#allocation2 + $0x170] sm:$0xff] 0.0
          %509 = vst [vmem:[#allocation2 + $0x178] sm:$0xff] 0.0
          %510 = vst [vmem:[#allocation2 + $0x180] sm:$0xff] 0.0
          %511 = vst [vmem:[#allocation2 + $0x188] sm:$0xff] 0.0
          %512 = vst [vmem:[#allocation2 + $0x190] sm:$0xff] 0.0
          %513 = vst [vmem:[#allocation2 + $0x198] sm:$0xff] 0.0
          %514 = vst [vmem:[#allocation2 + $0x1a0] sm:$0xff] 0.0
          %515 = vst [vmem:[#allocation2 + $0x1a8] sm:$0xff] 0.0
          %516 = vst [vmem:[#allocation2 + $0x1b0] sm:$0xff] 0.0
          %517 = vst [vmem:[#allocation2 + $0x1b8] sm:$0xff] 0.0
          %518 = vst [vmem:[#allocation2 + $0x1c0] sm:$0xff] 0.0
          %519 = vst [vmem:[#allocation2 + $0x1c8] sm:$0xff] 0.0
          %520 = vst [vmem:[#allocation2 + $0x1d0] sm:$0xff] 0.0
          %521 = vst [vmem:[#allocation2 + $0x1d8] sm:$0xff] 0.0
          %522 = vst [vmem:[#allocation2 + $0x1e0] sm:$0xff] 0.0
          %523 = vst [vmem:[#allocation2 + $0x1e8] sm:$0xff] 0.0
          %524 = vst [vmem:[#allocation2 + $0x1f0] sm:$0xff] 0.0
          %525 = vst [vmem:[#allocation2 + $0x1f8] sm:$0xff] 0.0
          %526 = vst [vmem:[#allocation2 + $0x200] sm:$0xff] 0.0
          %527 = vst [vmem:[#allocation2 + $0x208] sm:$0xff] 0.0
          %528 = vst [vmem:[#allocation2 + $0x210] sm:$0xff] 0.0
          %529 = vst [vmem:[#allocation2 + $0x218] sm:$0xff] 0.0
          %530 = vst [vmem:[#allocation2 + $0x220] sm:$0xff] 0.0
          %531 = vst [vmem:[#allocation2 + $0x228] sm:$0xff] 0.0
          %532 = vst [vmem:[#allocation2 + $0x230] sm:$0xff] 0.0
          %533 = vst [vmem:[#allocation2 + $0x238] sm:$0xff] 0.0
          %534 = vst [vmem:[#allocation2 + $0x240] sm:$0xff] 0.0
          %535 = vst [vmem:[#allocation2 + $0x248] sm:$0xff] 0.0
          %536 = vst [vmem:[#allocation2 + $0x250] sm:$0xff] 0.0
          %537 = vst [vmem:[#allocation2 + $0x258] sm:$0xff] 0.0
          %538 = vst [vmem:[#allocation2 + $0x260] sm:$0xff] 0.0
          %539 = vst [vmem:[#allocation2 + $0x268] sm:$0xff] 0.0
          %540 = vst [vmem:[#allocation2 + $0x270] sm:$0xff] 0.0
          %541 = vst [vmem:[#allocation2 + $0x278] sm:$0xff] 0.0
          %542 = vst [vmem:[#allocation2 + $0x280] sm:$0xff] 0.0
          %543 = vst [vmem:[#allocation2 + $0x288] sm:$0xff] 0.0
          %544 = vst [vmem:[#allocation2 + $0x290] sm:$0xff] 0.0
          %545 = vst [vmem:[#allocation2 + $0x298] sm:$0xff] 0.0
          %546 = vst [vmem:[#allocation2 + $0x2a0] sm:$0xff] 0.0
          %547 = vst [vmem:[#allocation2 + $0x2a8] sm:$0xff] 0.0
          %548 = vst [vmem:[#allocation2 + $0x2b0] sm:$0xff] 0.0
          %549 = vst [vmem:[#allocation2 + $0x2b8] sm:$0xff] 0.0
          %550 = vst [vmem:[#allocation2 + $0x2c0] sm:$0xff] 0.0
          %551 = vst [vmem:[#allocation2 + $0x2c8] sm:$0xff] 0.0
          %552 = vst [vmem:[#allocation2 + $0x2d0] sm:$0xff] 0.0
          %553 = vst [vmem:[#allocation2 + $0x2d8] sm:$0xff] 0.0
          %554 = vst [vmem:[#allocation2 + $0x2e0] sm:$0xff] 0.0
          %555 = vst [vmem:[#allocation2 + $0x2e8] sm:$0xff] 0.0
          %556 = vst [vmem:[#allocation2 + $0x2f0] sm:$0xff] 0.0
          %557 = vst [vmem:[#allocation2 + $0x2f8] sm:$0xff] 0.0
          %558 = vst [vmem:[#allocation2 + $0x300] sm:$0xff] 0.0
          %559 = vst [vmem:[#allocation2 + $0x308] sm:$0xff] 0.0
          %560 = vst [vmem:[#allocation2 + $0x310] sm:$0xff] 0.0
          %561 = vst [vmem:[#allocation2 + $0x318] sm:$0xff] 0.0
          %562 = vst [vmem:[#allocation2 + $0x320] sm:$0xff] 0.0
          %563 = vst [vmem:[#allocation2 + $0x328] sm:$0xff] 0.0
          %564 = vst [vmem:[#allocation2 + $0x330] sm:$0xff] 0.0
          %565 = vst [vmem:[#allocation2 + $0x338] sm:$0xff] 0.0
          %566 = vst [vmem:[#allocation2 + $0x340] sm:$0xff] 0.0
          %567 = vst [vmem:[#allocation2 + $0x348] sm:$0xff] 0.0
          %568 = vst [vmem:[#allocation2 + $0x350] sm:$0xff] 0.0
          %569 = vst [vmem:[#allocation2 + $0x358] sm:$0xff] 0.0
          %570 = vst [vmem:[#allocation2 + $0x360] sm:$0xff] 0.0
          %571 = vst [vmem:[#allocation2 + $0x368] sm:$0xff] 0.0
          %572 = vst [vmem:[#allocation2 + $0x370] sm:$0xff] 0.0
          %573 = vst [vmem:[#allocation2 + $0x378] sm:$0xff] 0.0
          %574 = vst [vmem:[#allocation2 + $0x380] sm:$0xff] 0.0
          %575 = vst [vmem:[#allocation2 + $0x388] sm:$0xff] 0.0
          %576 = vst [vmem:[#allocation2 + $0x390] sm:$0xff] 0.0
          %577 = vst [vmem:[#allocation2 + $0x398] sm:$0xff] 0.0
          %578 = vst [vmem:[#allocation2 + $0x3a0] sm:$0xff] 0.0
          %579 = vst [vmem:[#allocation2 + $0x3a8] sm:$0xff] 0.0
          %580 = vst [vmem:[#allocation2 + $0x3b0] sm:$0xff] 0.0
          %581 = vst [vmem:[#allocation2 + $0x3b8] sm:$0xff] 0.0
          %582 = vst [vmem:[#allocation2 + $0x3c0] sm:$0xff] 0.0
          %583 = vst [vmem:[#allocation2 + $0x3c8] sm:$0xff] 0.0
          %584 = vst [vmem:[#allocation2 + $0x3d0] sm:$0xff] 0.0
          %585 = vst [vmem:[#allocation2 + $0x3d8] sm:$0xff] 0.0
          %586 = vst [vmem:[#allocation2 + $0x3e0] sm:$0xff] 0.0
          %587 = vst [vmem:[#allocation2 + $0x3e8] sm:$0xff] 0.0
          %588 = vst [vmem:[#allocation2 + $0x3f0] sm:$0xff] 0.0
          %589 = vst [vmem:[#allocation2 + $0x3f8] sm:$0xff] 0.0
          %590 = vst [vmem:[#allocation2 + $0x400] sm:$0xff] 0.0
          %591 = vst [vmem:[#allocation2 + $0x408] sm:$0xff] 0.0
          %592 = vst [vmem:[#allocation2 + $0x410] sm:$0xff] 0.0
          %593 = vst [vmem:[#allocation2 + $0x418] sm:$0xff] 0.0
          %594 = vst [vmem:[#allocation2 + $0x420] sm:$0xff] 0.0
          %595 = vst [vmem:[#allocation2 + $0x428] sm:$0xff] 0.0
          %596 = vst [vmem:[#allocation2 + $0x430] sm:$0xff] 0.0
          %597 = vst [vmem:[#allocation2 + $0x438] sm:$0xff] 0.0
          %598 = vst [vmem:[#allocation2 + $0x440] sm:$0xff] 0.0
          %599 = vst [vmem:[#allocation2 + $0x448] sm:$0xff] 0.0
          %600 = vst [vmem:[#allocation2 + $0x450] sm:$0xff] 0.0
          %601 = vst [vmem:[#allocation2 + $0x458] sm:$0xff] 0.0
          %602 = vst [vmem:[#allocation2 + $0x460] sm:$0xff] 0.0
          %603 = vst [vmem:[#allocation2 + $0x468] sm:$0xff] 0.0
          %604 = vst [vmem:[#allocation2 + $0x470] sm:$0xff] 0.0
          %605 = vst [vmem:[#allocation2 + $0x478] sm:$0xff] 0.0
          %606 = vst [vmem:[#allocation2 + $0x480] sm:$0xff] 0.0
          %607 = vst [vmem:[#allocation2 + $0x488] sm:$0xff] 0.0
          %608 = vst [vmem:[#allocation2 + $0x490] sm:$0xff] 0.0
          %609 = vst [vmem:[#allocation2 + $0x498] sm:$0xff] 0.0
          %610 = vst [vmem:[#allocation2 + $0x4a0] sm:$0xff] 0.0
          %611 = vst [vmem:[#allocation2 + $0x4a8] sm:$0xff] 0.0
          %612 = vst [vmem:[#allocation2 + $0x4b0] sm:$0xff] 0.0
          %613 = vst [vmem:[#allocation2 + $0x4b8] sm:$0xff] 0.0
          %614 = vst [vmem:[#allocation2 + $0x4c0] sm:$0xff] 0.0
          %615 = vst [vmem:[#allocation2 + $0x4c8] sm:$0xff] 0.0
          %616 = vst [vmem:[#allocation2 + $0x4d0] sm:$0xff] 0.0
          %617 = vst [vmem:[#allocation2 + $0x4d8] sm:$0xff] 0.0
          %618 = vst [vmem:[#allocation2 + $0x4e0] sm:$0xff] 0.0
          %619 = vst [vmem:[#allocation2 + $0x4e8] sm:$0xff] 0.0
          %620 = vst [vmem:[#allocation2 + $0x4f0] sm:$0xff] 0.0
          %621 = vst [vmem:[#allocation2 + $0x4f8] sm:$0xff] 0.0
          %622 = vst [vmem:[#allocation2 + $0x500] sm:$0xff] 0.0
          %623 = vst [vmem:[#allocation2 + $0x508] sm:$0xff] 0.0
          %624 = vst [vmem:[#allocation2 + $0x510] sm:$0xff] 0.0
          %625 = vst [vmem:[#allocation2 + $0x518] sm:$0xff] 0.0
          %626 = vst [vmem:[#allocation2 + $0x520] sm:$0xff] 0.0
          %627 = vst [vmem:[#allocation2 + $0x528] sm:$0xff] 0.0
          %628 = vst [vmem:[#allocation2 + $0x530] sm:$0xff] 0.0
          %629 = vst [vmem:[#allocation2 + $0x538] sm:$0xff] 0.0
          %630 = vst [vmem:[#allocation2 + $0x540] sm:$0xff] 0.0
          %631 = vst [vmem:[#allocation2 + $0x548] sm:$0xff] 0.0
          %632 = vst [vmem:[#allocation2 + $0x550] sm:$0xff] 0.0
          %633 = vst [vmem:[#allocation2 + $0x558] sm:$0xff] 0.0
          %634 = vst [vmem:[#allocation2 + $0x560] sm:$0xff] 0.0
          %635 = vst [vmem:[#allocation2 + $0x568] sm:$0xff] 0.0
          %636 = vst [vmem:[#allocation2 + $0x570] sm:$0xff] 0.0
          %637 = vst [vmem:[#allocation2 + $0x578] sm:$0xff] 0.0
          %638 = vst [vmem:[#allocation2 + $0x580] sm:$0xff] 0.0
          %639 = vst [vmem:[#allocation2 + $0x588] sm:$0xff] 0.0
          %640 = vst [vmem:[#allocation2 + $0x590] sm:$0xff] 0.0
          %641 = vst [vmem:[#allocation2 + $0x598] sm:$0xff] 0.0
          %642 = vst [vmem:[#allocation2 + $0x5a0] sm:$0xff] 0.0
          %643 = vst [vmem:[#allocation2 + $0x5a8] sm:$0xff] 0.0
          %644 = vst [vmem:[#allocation2 + $0x5b0] sm:$0xff] 0.0
          %645 = vst [vmem:[#allocation2 + $0x5b8] sm:$0xff] 0.0
          %646 = vst [vmem:[#allocation2 + $0x5c0] sm:$0xff] 0.0
          %647 = vst [vmem:[#allocation2 + $0x5c8] sm:$0xff] 0.0
          %648 = vst [vmem:[#allocation2 + $0x5d0] sm:$0xff] 0.0
          %649 = vst [vmem:[#allocation2 + $0x5d8] sm:$0xff] 0.0
          %650 = vst [vmem:[#allocation2 + $0x5e0] sm:$0xff] 0.0
          %651 = vst [vmem:[#allocation2 + $0x5e8] sm:$0xff] 0.0
          %652 = vst [vmem:[#allocation2 + $0x5f0] sm:$0xff] 0.0
          %653 = vst [vmem:[#allocation2 + $0x5f8] sm:$0xff] 0.0
          %654 = vst [vmem:[#allocation2 + $0x600] sm:$0xff] 0.0
          %655 = vst [vmem:[#allocation2 + $0x608] sm:$0xff] 0.0
          %656 = vst [vmem:[#allocation2 + $0x610] sm:$0xff] 0.0
          %657 = vst [vmem:[#allocation2 + $0x618] sm:$0xff] 0.0
          %658 = vst [vmem:[#allocation2 + $0x620] sm:$0xff] 0.0
          %659 = vst [vmem:[#allocation2 + $0x628] sm:$0xff] 0.0
          %660 = vst [vmem:[#allocation2 + $0x630] sm:$0xff] 0.0
          %661 = vst [vmem:[#allocation2 + $0x638] sm:$0xff] 0.0
          %662 = vst [vmem:[#allocation2 + $0x640] sm:$0xff] 0.0
          %663 = vst [vmem:[#allocation2 + $0x648] sm:$0xff] 0.0
          %664 = vst [vmem:[#allocation2 + $0x650] sm:$0xff] 0.0
          %665 = vst [vmem:[#allocation2 + $0x658] sm:$0xff] 0.0
          %666 = vst [vmem:[#allocation2 + $0x660] sm:$0xff] 0.0
          %667 = vst [vmem:[#allocation2 + $0x668] sm:$0xff] 0.0
          %668 = vst [vmem:[#allocation2 + $0x670] sm:$0xff] 0.0
          %669 = vst [vmem:[#allocation2 + $0x678] sm:$0xff] 0.0
          %670 = vst [vmem:[#allocation2 + $0x680] sm:$0xff] 0.0
          %671 = vst [vmem:[#allocation2 + $0x688] sm:$0xff] 0.0
          %672 = vst [vmem:[#allocation2 + $0x690] sm:$0xff] 0.0
          %673 = vst [vmem:[#allocation2 + $0x698] sm:$0xff] 0.0
          %674 = vst [vmem:[#allocation2 + $0x6a0] sm:$0xff] 0.0
          %675 = vst [vmem:[#allocation2 + $0x6a8] sm:$0xff] 0.0
          %676 = vst [vmem:[#allocation2 + $0x6b0] sm:$0xff] 0.0
          %677 = vst [vmem:[#allocation2 + $0x6b8] sm:$0xff] 0.0
          %678 = vst [vmem:[#allocation2 + $0x6c0] sm:$0xff] 0.0
          %679 = vst [vmem:[#allocation2 + $0x6c8] sm:$0xff] 0.0
          %680 = vst [vmem:[#allocation2 + $0x6d0] sm:$0xff] 0.0
          %681 = vst [vmem:[#allocation2 + $0x6d8] sm:$0xff] 0.0
          %682 = vst [vmem:[#allocation2 + $0x6e0] sm:$0xff] 0.0
          %683 = vst [vmem:[#allocation2 + $0x6e8] sm:$0xff] 0.0
          %684 = vst [vmem:[#allocation2 + $0x6f0] sm:$0xff] 0.0
          %685 = vst [vmem:[#allocation2 + $0x6f8] sm:$0xff] 0.0
          %686 = vst [vmem:[#allocation2 + $0x700] sm:$0xff] 0.0
          %687 = vst [vmem:[#allocation2 + $0x708] sm:$0xff] 0.0
          %688 = vst [vmem:[#allocation2 + $0x710] sm:$0xff] 0.0
          %689 = vst [vmem:[#allocation2 + $0x718] sm:$0xff] 0.0
          %690 = vst [vmem:[#allocation2 + $0x720] sm:$0xff] 0.0
          %691 = vst [vmem:[#allocation2 + $0x728] sm:$0xff] 0.0
          %692 = vst [vmem:[#allocation2 + $0x730] sm:$0xff] 0.0
          %693 = vst [vmem:[#allocation2 + $0x738] sm:$0xff] 0.0
          %694 = vst [vmem:[#allocation2 + $0x740] sm:$0xff] 0.0
          %695 = vst [vmem:[#allocation2 + $0x748] sm:$0xff] 0.0
          %696 = vst [vmem:[#allocation2 + $0x750] sm:$0xff] 0.0
          %697 = vst [vmem:[#allocation2 + $0x758] sm:$0xff] 0.0
          %698 = vst [vmem:[#allocation2 + $0x760] sm:$0xff] 0.0
          %699 = vst [vmem:[#allocation2 + $0x768] sm:$0xff] 0.0
          %700 = vst [vmem:[#allocation2 + $0x770] sm:$0xff] 0.0
          %701 = vst [vmem:[#allocation2 + $0x778] sm:$0xff] 0.0
          %702 = vst [vmem:[#allocation2 + $0x780] sm:$0xff] 0.0
          %703 = vst [vmem:[#allocation2 + $0x788] sm:$0xff] 0.0
          %704 = vst [vmem:[#allocation2 + $0x790] sm:$0xff] 0.0
          %705 = vst [vmem:[#allocation2 + $0x798] sm:$0xff] 0.0
          %706 = vst [vmem:[#allocation2 + $0x7a0] sm:$0xff] 0.0
          %707 = vst [vmem:[#allocation2 + $0x7a8] sm:$0xff] 0.0
          %708 = vst [vmem:[#allocation2 + $0x7b0] sm:$0xff] 0.0
          %709 = vst [vmem:[#allocation2 + $0x7b8] sm:$0xff] 0.0
          %710 = vst [vmem:[#allocation2 + $0x7c0] sm:$0xff] 0.0
          %711 = vst [vmem:[#allocation2 + $0x7c8] sm:$0xff] 0.0
          %712 = vst [vmem:[#allocation2 + $0x7d0] sm:$0xff] 0.0
          %713 = vst [vmem:[#allocation2 + $0x7d8] sm:$0xff] 0.0
          %714 = vst [vmem:[#allocation2 + $0x7e0] sm:$0xff] 0.0
          %715 = vst [vmem:[#allocation2 + $0x7e8] sm:$0xff] 0.0
          %716 = vst [vmem:[#allocation2 + $0x7f0] sm:$0xff] 0.0
          %717 = vst [vmem:[#allocation2 + $0x7f8] sm:$0xff] 0.0
        $region56: #{tpu_custom_call.1} parent=35 // pred_fallthru
          _
        %v718 = vld [vmem:[#allocation2] sm:$0xff]
        %v719 = vld [vmem:[#allocation2 + $0x8] sm:$0xff]
        %v720 = vld [vmem:[#allocation2 + $0x10] sm:$0xff]
        %v721 = vld [vmem:[#allocation2 + $0x18] sm:$0xff]
        %v722 = vld [vmem:[#allocation2 + $0x20] sm:$0xff]
        %v723 = vld [vmem:[#allocation2 + $0x28] sm:$0xff]
        %v724 = vld [vmem:[#allocation2 + $0x30] sm:$0xff]
        %v725 = vld [vmem:[#allocation2 + $0x38] sm:$0xff]
        %v726 = vld [vmem:[#allocation2 + $0x40] sm:$0xff]
        %v727 = vld [vmem:[#allocation2 + $0x48] sm:$0xff]
        %v728 = vld [vmem:[#allocation2 + $0x50] sm:$0xff]
        %v729 = vld [vmem:[#allocation2 + $0x58] sm:$0xff]
        %v730 = vld [vmem:[#allocation2 + $0x60] sm:$0xff]
        %v731 = vld [vmem:[#allocation2 + $0x68] sm:$0xff]
        %v732 = vld [vmem:[#allocation2 + $0x70] sm:$0xff]
        %v733 = vld [vmem:[#allocation2 + $0x78] sm:$0xff]
        %v734 = vld [vmem:[#allocation2 + $0x80] sm:$0xff]
        %v735 = vld [vmem:[#allocation2 + $0x88] sm:$0xff]
        %v736 = vld [vmem:[#allocation2 + $0x90] sm:$0xff]
        %v737 = vld [vmem:[#allocation2 + $0x98] sm:$0xff]
        %v738 = vld [vmem:[#allocation2 + $0xa0] sm:$0xff]
        %v739 = vld [vmem:[#allocation2 + $0xa8] sm:$0xff]
        %v740 = vld [vmem:[#allocation2 + $0xb0] sm:$0xff]
        %v741 = vld [vmem:[#allocation2 + $0xb8] sm:$0xff]
        %v742 = vld [vmem:[#allocation2 + $0xc0] sm:$0xff]
        %v743 = vld [vmem:[#allocation2 + $0xc8] sm:$0xff]
        %v744 = vld [vmem:[#allocation2 + $0xd0] sm:$0xff]
        %v745 = vld [vmem:[#allocation2 + $0xd8] sm:$0xff]
        %v746 = vld [vmem:[#allocation2 + $0xe0] sm:$0xff]
        %v747 = vld [vmem:[#allocation2 + $0xe8] sm:$0xff]
        %v748 = vld [vmem:[#allocation2 + $0xf0] sm:$0xff]
        %v749 = vld [vmem:[#allocation2 + $0xf8] sm:$0xff]
        %v750 = vld [vmem:[#allocation2 + $0x100] sm:$0xff]
        %v751 = vld [vmem:[#allocation2 + $0x108] sm:$0xff]
        %v752 = vld [vmem:[#allocation2 + $0x110] sm:$0xff]
        %v753 = vld [vmem:[#allocation2 + $0x118] sm:$0xff]
        %v754 = vld [vmem:[#allocation2 + $0x120] sm:$0xff]
        %v755 = vld [vmem:[#allocation2 + $0x128] sm:$0xff]
        %v756 = vld [vmem:[#allocation2 + $0x130] sm:$0xff]
        %v757 = vld [vmem:[#allocation2 + $0x138] sm:$0xff]
        %v758 = vld [vmem:[#allocation2 + $0x140] sm:$0xff]
        %v759 = vld [vmem:[#allocation2 + $0x148] sm:$0xff]
        %v760 = vld [vmem:[#allocation2 + $0x150] sm:$0xff]
        %v761 = vld [vmem:[#allocation2 + $0x158] sm:$0xff]
        %v762 = vld [vmem:[#allocation2 + $0x160] sm:$0xff]
        %v763 = vld [vmem:[#allocation2 + $0x168] sm:$0xff]
        %v764 = vld [vmem:[#allocation2 + $0x170] sm:$0xff]
        %v765 = vld [vmem:[#allocation2 + $0x178] sm:$0xff]
        %v766 = vld [vmem:[#allocation2 + $0x180] sm:$0xff]
        %v767 = vld [vmem:[#allocation2 + $0x188] sm:$0xff]
        %v768 = vld [vmem:[#allocation2 + $0x190] sm:$0xff]
        %v769 = vld [vmem:[#allocation2 + $0x198] sm:$0xff]
        %v770 = vld [vmem:[#allocation2 + $0x1a0] sm:$0xff]
        %v771 = vld [vmem:[#allocation2 + $0x1a8] sm:$0xff]
        %v772 = vld [vmem:[#allocation2 + $0x1b0] sm:$0xff]
        %v773 = vld [vmem:[#allocation2 + $0x1b8] sm:$0xff]
        %v774 = vld [vmem:[#allocation2 + $0x1c0] sm:$0xff]
        %v775 = vld [vmem:[#allocation2 + $0x1c8] sm:$0xff]
        %v776 = vld [vmem:[#allocation2 + $0x1d0] sm:$0xff]
        %v777 = vld [vmem:[#allocation2 + $0x1d8] sm:$0xff]
        %v778 = vld [vmem:[#allocation2 + $0x1e0] sm:$0xff]
        %v779 = vld [vmem:[#allocation2 + $0x1e8] sm:$0xff]
        %v780 = vld [vmem:[#allocation2 + $0x1f0] sm:$0xff]
        %v781 = vld [vmem:[#allocation2 + $0x1f8] sm:$0xff]
        %v782 = vld [vmem:[#allocation2 + $0x200] sm:$0xff]
        %v783 = vld [vmem:[#allocation2 + $0x208] sm:$0xff]
        %v784 = vld [vmem:[#allocation2 + $0x210] sm:$0xff]
        %v785 = vld [vmem:[#allocation2 + $0x218] sm:$0xff]
        %v786 = vld [vmem:[#allocation2 + $0x220] sm:$0xff]
        %v787 = vld [vmem:[#allocation2 + $0x228] sm:$0xff]
        %v788 = vld [vmem:[#allocation2 + $0x230] sm:$0xff]
        %v789 = vld [vmem:[#allocation2 + $0x238] sm:$0xff]
        %v790 = vld [vmem:[#allocation2 + $0x240] sm:$0xff]
        %v791 = vld [vmem:[#allocation2 + $0x248] sm:$0xff]
        %v792 = vld [vmem:[#allocation2 + $0x250] sm:$0xff]
        %v793 = vld [vmem:[#allocation2 + $0x258] sm:$0xff]
        %v794 = vld [vmem:[#allocation2 + $0x260] sm:$0xff]
        %v795 = vld [vmem:[#allocation2 + $0x268] sm:$0xff]
        %v796 = vld [vmem:[#allocation2 + $0x270] sm:$0xff]
        %v797 = vld [vmem:[#allocation2 + $0x278] sm:$0xff]
        %v798 = vld [vmem:[#allocation2 + $0x280] sm:$0xff]
        %v799 = vld [vmem:[#allocation2 + $0x288] sm:$0xff]
        %v800 = vld [vmem:[#allocation2 + $0x290] sm:$0xff]
        %v801 = vld [vmem:[#allocation2 + $0x298] sm:$0xff]
        %v802 = vld [vmem:[#allocation2 + $0x2a0] sm:$0xff]
        %v803 = vld [vmem:[#allocation2 + $0x2a8] sm:$0xff]
        %v804 = vld [vmem:[#allocation2 + $0x2b0] sm:$0xff]
        %v805 = vld [vmem:[#allocation2 + $0x2b8] sm:$0xff]
        %v806 = vld [vmem:[#allocation2 + $0x2c0] sm:$0xff]
        %v807 = vld [vmem:[#allocation2 + $0x2c8] sm:$0xff]
        %v808 = vld [vmem:[#allocation2 + $0x2d0] sm:$0xff]
        %v809 = vld [vmem:[#allocation2 + $0x2d8] sm:$0xff]
        %v810 = vld [vmem:[#allocation2 + $0x2e0] sm:$0xff]
        %v811 = vld [vmem:[#allocation2 + $0x2e8] sm:$0xff]
        %v812 = vld [vmem:[#allocation2 + $0x2f0] sm:$0xff]
        %v813 = vld [vmem:[#allocation2 + $0x2f8] sm:$0xff]
        %v814 = vld [vmem:[#allocation2 + $0x300] sm:$0xff]
        %v815 = vld [vmem:[#allocation2 + $0x308] sm:$0xff]
        %v816 = vld [vmem:[#allocation2 + $0x310] sm:$0xff]
        %v817 = vld [vmem:[#allocation2 + $0x318] sm:$0xff]
        %v818 = vld [vmem:[#allocation2 + $0x320] sm:$0xff]
        %v819 = vld [vmem:[#allocation2 + $0x328] sm:$0xff]
        %v820 = vld [vmem:[#allocation2 + $0x330] sm:$0xff]
        %v821 = vld [vmem:[#allocation2 + $0x338] sm:$0xff]
        %v822 = vld [vmem:[#allocation2 + $0x340] sm:$0xff]
        %v823 = vld [vmem:[#allocation2 + $0x348] sm:$0xff]
        %v824 = vld [vmem:[#allocation2 + $0x350] sm:$0xff]
        %v825 = vld [vmem:[#allocation2 + $0x358] sm:$0xff]
        %v826 = vld [vmem:[#allocation2 + $0x360] sm:$0xff]
        %v827 = vld [vmem:[#allocation2 + $0x368] sm:$0xff]
        %v828 = vld [vmem:[#allocation2 + $0x370] sm:$0xff]
        %v829 = vld [vmem:[#allocation2 + $0x378] sm:$0xff]
        %v830 = vld [vmem:[#allocation2 + $0x380] sm:$0xff]
        %v831 = vld [vmem:[#allocation2 + $0x388] sm:$0xff]
        %v832 = vld [vmem:[#allocation2 + $0x390] sm:$0xff]
        %v833 = vld [vmem:[#allocation2 + $0x398] sm:$0xff]
        %v834 = vld [vmem:[#allocation2 + $0x3a0] sm:$0xff]
        %v835 = vld [vmem:[#allocation2 + $0x3a8] sm:$0xff]
        %v836 = vld [vmem:[#allocation2 + $0x3b0] sm:$0xff]
        %v837 = vld [vmem:[#allocation2 + $0x3b8] sm:$0xff]
        %v838 = vld [vmem:[#allocation2 + $0x3c0] sm:$0xff]
        %v839 = vld [vmem:[#allocation2 + $0x3c8] sm:$0xff]
        %v840 = vld [vmem:[#allocation2 + $0x3d0] sm:$0xff]
        %v841 = vld [vmem:[#allocation2 + $0x3d8] sm:$0xff]
        %v842 = vld [vmem:[#allocation2 + $0x3e0] sm:$0xff]
        %v843 = vld [vmem:[#allocation2 + $0x3e8] sm:$0xff]
        %v844 = vld [vmem:[#allocation2 + $0x3f0] sm:$0xff]
        %v845 = vld [vmem:[#allocation2 + $0x3f8] sm:$0xff]
        %v846 = vld [vmem:[#allocation2 + $0x400] sm:$0xff]
        %v847 = vld [vmem:[#allocation2 + $0x408] sm:$0xff]
        %v848 = vld [vmem:[#allocation2 + $0x410] sm:$0xff]
        %v849 = vld [vmem:[#allocation2 + $0x418] sm:$0xff]
        %v850 = vld [vmem:[#allocation2 + $0x420] sm:$0xff]
        %v851 = vld [vmem:[#allocation2 + $0x428] sm:$0xff]
        %v852 = vld [vmem:[#allocation2 + $0x430] sm:$0xff]
        %v853 = vld [vmem:[#allocation2 + $0x438] sm:$0xff]
        %v854 = vld [vmem:[#allocation2 + $0x440] sm:$0xff]
        %v855 = vld [vmem:[#allocation2 + $0x448] sm:$0xff]
        %v856 = vld [vmem:[#allocation2 + $0x450] sm:$0xff]
        %v857 = vld [vmem:[#allocation2 + $0x458] sm:$0xff]
        %v858 = vld [vmem:[#allocation2 + $0x460] sm:$0xff]
        %v859 = vld [vmem:[#allocation2 + $0x468] sm:$0xff]
        %v860 = vld [vmem:[#allocation2 + $0x470] sm:$0xff]
        %v861 = vld [vmem:[#allocation2 + $0x478] sm:$0xff]
        %v862 = vld [vmem:[#allocation2 + $0x480] sm:$0xff]
        %v863 = vld [vmem:[#allocation2 + $0x488] sm:$0xff]
        %v864 = vld [vmem:[#allocation2 + $0x490] sm:$0xff]
        %v865 = vld [vmem:[#allocation2 + $0x498] sm:$0xff]
        %v866 = vld [vmem:[#allocation2 + $0x4a0] sm:$0xff]
        %v867 = vld [vmem:[#allocation2 + $0x4a8] sm:$0xff]
        %v868 = vld [vmem:[#allocation2 + $0x4b0] sm:$0xff]
        %v869 = vld [vmem:[#allocation2 + $0x4b8] sm:$0xff]
        %v870 = vld [vmem:[#allocation2 + $0x4c0] sm:$0xff]
        %v871 = vld [vmem:[#allocation2 + $0x4c8] sm:$0xff]
        %v872 = vld [vmem:[#allocation2 + $0x4d0] sm:$0xff]
        %v873 = vld [vmem:[#allocation2 + $0x4d8] sm:$0xff]
        %v874 = vld [vmem:[#allocation2 + $0x4e0] sm:$0xff]
        %v875 = vld [vmem:[#allocation2 + $0x4e8] sm:$0xff]
        %v876 = vld [vmem:[#allocation2 + $0x4f0] sm:$0xff]
        %v877 = vld [vmem:[#allocation2 + $0x4f8] sm:$0xff]
        %v878 = vld [vmem:[#allocation2 + $0x500] sm:$0xff]
        %v879 = vld [vmem:[#allocation2 + $0x508] sm:$0xff]
        %v880 = vld [vmem:[#allocation2 + $0x510] sm:$0xff]
        %v881 = vld [vmem:[#allocation2 + $0x518] sm:$0xff]
        %v882 = vld [vmem:[#allocation2 + $0x520] sm:$0xff]
        %v883 = vld [vmem:[#allocation2 + $0x528] sm:$0xff]
        %v884 = vld [vmem:[#allocation2 + $0x530] sm:$0xff]
        %v885 = vld [vmem:[#allocation2 + $0x538] sm:$0xff]
        %v886 = vld [vmem:[#allocation2 + $0x540] sm:$0xff]
        %v887 = vld [vmem:[#allocation2 + $0x548] sm:$0xff]
        %v888 = vld [vmem:[#allocation2 + $0x550] sm:$0xff]
        %v889 = vld [vmem:[#allocation2 + $0x558] sm:$0xff]
        %v890 = vld [vmem:[#allocation2 + $0x560] sm:$0xff]
        %v891 = vld [vmem:[#allocation2 + $0x568] sm:$0xff]
        %v892 = vld [vmem:[#allocation2 + $0x570] sm:$0xff]
        %v893 = vld [vmem:[#allocation2 + $0x578] sm:$0xff]
        %v894 = vld [vmem:[#allocation2 + $0x580] sm:$0xff]
        %v895 = vld [vmem:[#allocation2 + $0x588] sm:$0xff]
        %v896 = vld [vmem:[#allocation2 + $0x590] sm:$0xff]
        %v897 = vld [vmem:[#allocation2 + $0x598] sm:$0xff]
        %v898 = vld [vmem:[#allocation2 + $0x5a0] sm:$0xff]
        %v899 = vld [vmem:[#allocation2 + $0x5a8] sm:$0xff]
        %v900 = vld [vmem:[#allocation2 + $0x5b0] sm:$0xff]
        %v901 = vld [vmem:[#allocation2 + $0x5b8] sm:$0xff]
        %v902 = vld [vmem:[#allocation2 + $0x5c0] sm:$0xff]
        %v903 = vld [vmem:[#allocation2 + $0x5c8] sm:$0xff]
        %v904 = vld [vmem:[#allocation2 + $0x5d0] sm:$0xff]
        %v905 = vld [vmem:[#allocation2 + $0x5d8] sm:$0xff]
        %v906 = vld [vmem:[#allocation2 + $0x5e0] sm:$0xff]
        %v907 = vld [vmem:[#allocation2 + $0x5e8] sm:$0xff]
        %v908 = vld [vmem:[#allocation2 + $0x5f0] sm:$0xff]
        %v909 = vld [vmem:[#allocation2 + $0x5f8] sm:$0xff]
        %v910 = vld [vmem:[#allocation2 + $0x600] sm:$0xff]
        %v911 = vld [vmem:[#allocation2 + $0x608] sm:$0xff]
        %v912 = vld [vmem:[#allocation2 + $0x610] sm:$0xff]
        %v913 = vld [vmem:[#allocation2 + $0x618] sm:$0xff]
        %v914 = vld [vmem:[#allocation2 + $0x620] sm:$0xff]
        %v915 = vld [vmem:[#allocation2 + $0x628] sm:$0xff]
        %v916 = vld [vmem:[#allocation2 + $0x630] sm:$0xff]
        %v917 = vld [vmem:[#allocation2 + $0x638] sm:$0xff]
        %v918 = vld [vmem:[#allocation2 + $0x640] sm:$0xff]
        %v919 = vld [vmem:[#allocation2 + $0x648] sm:$0xff]
        %v920 = vld [vmem:[#allocation2 + $0x650] sm:$0xff]
        %v921 = vld [vmem:[#allocation2 + $0x658] sm:$0xff]
        %v922 = vld [vmem:[#allocation2 + $0x660] sm:$0xff]
        %v923 = vld [vmem:[#allocation2 + $0x668] sm:$0xff]
        %v924 = vld [vmem:[#allocation2 + $0x670] sm:$0xff]
        %v925 = vld [vmem:[#allocation2 + $0x678] sm:$0xff]
        %v926 = vld [vmem:[#allocation2 + $0x680] sm:$0xff]
        %v927 = vld [vmem:[#allocation2 + $0x688] sm:$0xff]
        %v928 = vld [vmem:[#allocation2 + $0x690] sm:$0xff]
        %v929 = vld [vmem:[#allocation2 + $0x698] sm:$0xff]
        %v930 = vld [vmem:[#allocation2 + $0x6a0] sm:$0xff]
        %v931 = vld [vmem:[#allocation2 + $0x6a8] sm:$0xff]
        %v932 = vld [vmem:[#allocation2 + $0x6b0] sm:$0xff]
        %v933 = vld [vmem:[#allocation2 + $0x6b8] sm:$0xff]
        %v934 = vld [vmem:[#allocation2 + $0x6c0] sm:$0xff]
        %v935 = vld [vmem:[#allocation2 + $0x6c8] sm:$0xff]
        %v936 = vld [vmem:[#allocation2 + $0x6d0] sm:$0xff]
        %v937 = vld [vmem:[#allocation2 + $0x6d8] sm:$0xff]
        %v938 = vld [vmem:[#allocation2 + $0x6e0] sm:$0xff]
        %v939 = vld [vmem:[#allocation2 + $0x6e8] sm:$0xff]
        %v940 = vld [vmem:[#allocation2 + $0x6f0] sm:$0xff]
        %v941 = vld [vmem:[#allocation2 + $0x6f8] sm:$0xff]
        %v942 = vld [vmem:[#allocation2 + $0x700] sm:$0xff]
        %v943 = vld [vmem:[#allocation2 + $0x708] sm:$0xff]
        %v944 = vld [vmem:[#allocation2 + $0x710] sm:$0xff]
        %v945 = vld [vmem:[#allocation2 + $0x718] sm:$0xff]
        %v946 = vld [vmem:[#allocation2 + $0x720] sm:$0xff]
        %v947 = vld [vmem:[#allocation2 + $0x728] sm:$0xff]
        %v948 = vld [vmem:[#allocation2 + $0x730] sm:$0xff]
        %v949 = vld [vmem:[#allocation2 + $0x738] sm:$0xff]
        %v950 = vld [vmem:[#allocation2 + $0x740] sm:$0xff]
        %v951 = vld [vmem:[#allocation2 + $0x748] sm:$0xff]
        %v952 = vld [vmem:[#allocation2 + $0x750] sm:$0xff]
        %v953 = vld [vmem:[#allocation2 + $0x758] sm:$0xff]
        %v954 = vld [vmem:[#allocation2 + $0x760] sm:$0xff]
        %v955 = vld [vmem:[#allocation2 + $0x768] sm:$0xff]
        %v956 = vld [vmem:[#allocation2 + $0x770] sm:$0xff]
        %v957 = vld [vmem:[#allocation2 + $0x778] sm:$0xff]
        %v958 = vld [vmem:[#allocation2 + $0x780] sm:$0xff]
        %v959 = vld [vmem:[#allocation2 + $0x788] sm:$0xff]
        %v960 = vld [vmem:[#allocation2 + $0x790] sm:$0xff]
        %v961 = vld [vmem:[#allocation2 + $0x798] sm:$0xff]
        %v962 = vld [vmem:[#allocation2 + $0x7a0] sm:$0xff]
        %v963 = vld [vmem:[#allocation2 + $0x7a8] sm:$0xff]
        %v964 = vld [vmem:[#allocation2 + $0x7b0] sm:$0xff]
        %v965 = vld [vmem:[#allocation2 + $0x7b8] sm:$0xff]
        %v966 = vld [vmem:[#allocation2 + $0x7c0] sm:$0xff]
        %v967 = vld [vmem:[#allocation2 + $0x7c8] sm:$0xff]
        %v968 = vld [vmem:[#allocation2 + $0x7d0] sm:$0xff]
        %v969 = vld [vmem:[#allocation2 + $0x7d8] sm:$0xff]
        %v970 = vld [vmem:[#allocation2 + $0x7e0] sm:$0xff]
        %v971 = vld [vmem:[#allocation2 + $0x7e8] sm:$0xff]
        %v972 = vld [vmem:[#allocation2 + $0x7f0] sm:$0xff]
        %v973 = vld [vmem:[#allocation2 + $0x7f8] sm:$0xff]
        %v974 = vld [vmem:[%s363] sm:$0xff]
        %v975 = vld [vmem:[%s363 + $0x8] sm:$0xff]
        %v976 = vld [vmem:[%s363 + $0x10] sm:$0xff]
        %v977 = vld [vmem:[%s363 + $0x18] sm:$0xff]
        %v978 = vld [vmem:[%s363 + $0x20] sm:$0xff]
        %v979 = vld [vmem:[%s363 + $0x28] sm:$0xff]
        %v980 = vld [vmem:[%s363 + $0x30] sm:$0xff]
        %v981 = vld [vmem:[%s363 + $0x38] sm:$0xff]
        %v982 = vld [vmem:[%s363 + $0x40] sm:$0xff]
        %v983 = vld [vmem:[%s363 + $0x48] sm:$0xff]
        %v984 = vld [vmem:[%s363 + $0x50] sm:$0xff]
        %v985 = vld [vmem:[%s363 + $0x58] sm:$0xff]
        %v986 = vld [vmem:[%s363 + $0x60] sm:$0xff]
        %v987 = vld [vmem:[%s363 + $0x68] sm:$0xff]
        %v988 = vld [vmem:[%s363 + $0x70] sm:$0xff]
        %v989 = vld [vmem:[%s363 + $0x78] sm:$0xff]
        %v990 = vld [vmem:[%s363 + $0x80] sm:$0xff]
        %v991 = vld [vmem:[%s363 + $0x88] sm:$0xff]
        %v992 = vld [vmem:[%s363 + $0x90] sm:$0xff]
        %v993 = vld [vmem:[%s363 + $0x98] sm:$0xff]
        %v994 = vld [vmem:[%s363 + $0xa0] sm:$0xff]
        %v995 = vld [vmem:[%s363 + $0xa8] sm:$0xff]
        %v996 = vld [vmem:[%s363 + $0xb0] sm:$0xff]
        %v997 = vld [vmem:[%s363 + $0xb8] sm:$0xff]
        %v998 = vld [vmem:[%s363 + $0xc0] sm:$0xff]
        %v999 = vld [vmem:[%s363 + $0xc8] sm:$0xff]
        %v1000 = vld [vmem:[%s363 + $0xd0] sm:$0xff]
        %v1001 = vld [vmem:[%s363 + $0xd8] sm:$0xff]
        %v1002 = vld [vmem:[%s363 + $0xe0] sm:$0xff]
        %v1003 = vld [vmem:[%s363 + $0xe8] sm:$0xff]
        %v1004 = vld [vmem:[%s363 + $0xf0] sm:$0xff]
        %v1005 = vld [vmem:[%s363 + $0xf8] sm:$0xff]
        %v1006 = vld [vmem:[%s363 + $0x100] sm:$0xff]
        %v1007 = vld [vmem:[%s363 + $0x108] sm:$0xff]
        %v1008 = vld [vmem:[%s363 + $0x110] sm:$0xff]
        %v1009 = vld [vmem:[%s363 + $0x118] sm:$0xff]
        %v1010 = vld [vmem:[%s363 + $0x120] sm:$0xff]
        %v1011 = vld [vmem:[%s363 + $0x128] sm:$0xff]
        %v1012 = vld [vmem:[%s363 + $0x130] sm:$0xff]
        %v1013 = vld [vmem:[%s363 + $0x138] sm:$0xff]
        %v1014 = vld [vmem:[%s363 + $0x140] sm:$0xff]
        %v1015 = vld [vmem:[%s363 + $0x148] sm:$0xff]
        %v1016 = vld [vmem:[%s363 + $0x150] sm:$0xff]
        %v1017 = vld [vmem:[%s363 + $0x158] sm:$0xff]
        %v1018 = vld [vmem:[%s363 + $0x160] sm:$0xff]
        %v1019 = vld [vmem:[%s363 + $0x168] sm:$0xff]
        %v1020 = vld [vmem:[%s363 + $0x170] sm:$0xff]
        %v1021 = vld [vmem:[%s363 + $0x178] sm:$0xff]
        %v1022 = vld [vmem:[%s363 + $0x180] sm:$0xff]
        %v1023 = vld [vmem:[%s363 + $0x188] sm:$0xff]
        %v1024 = vld [vmem:[%s363 + $0x190] sm:$0xff]
        %v1025 = vld [vmem:[%s363 + $0x198] sm:$0xff]
        %v1026 = vld [vmem:[%s363 + $0x1a0] sm:$0xff]
        %v1027 = vld [vmem:[%s363 + $0x1a8] sm:$0xff]
        %v1028 = vld [vmem:[%s363 + $0x1b0] sm:$0xff]
        %v1029 = vld [vmem:[%s363 + $0x1b8] sm:$0xff]
        %v1030 = vld [vmem:[%s363 + $0x1c0] sm:$0xff]
        %v1031 = vld [vmem:[%s363 + $0x1c8] sm:$0xff]
        %v1032 = vld [vmem:[%s363 + $0x1d0] sm:$0xff]
        %v1033 = vld [vmem:[%s363 + $0x1d8] sm:$0xff]
        %v1034 = vld [vmem:[%s363 + $0x1e0] sm:$0xff]
        %v1035 = vld [vmem:[%s363 + $0x1e8] sm:$0xff]
        %v1036 = vld [vmem:[%s363 + $0x1f0] sm:$0xff]
        %v1037 = vld [vmem:[%s363 + $0x1f8] sm:$0xff]
        %v1038 = vld [vmem:[%s363 + $0x200] sm:$0xff]
        %v1039 = vld [vmem:[%s363 + $0x208] sm:$0xff]
        %v1040 = vld [vmem:[%s363 + $0x210] sm:$0xff]
        %v1041 = vld [vmem:[%s363 + $0x218] sm:$0xff]
        %v1042 = vld [vmem:[%s363 + $0x220] sm:$0xff]
        %v1043 = vld [vmem:[%s363 + $0x228] sm:$0xff]
        %v1044 = vld [vmem:[%s363 + $0x230] sm:$0xff]
        %v1045 = vld [vmem:[%s363 + $0x238] sm:$0xff]
        %v1046 = vld [vmem:[%s363 + $0x240] sm:$0xff]
        %v1047 = vld [vmem:[%s363 + $0x248] sm:$0xff]
        %v1048 = vld [vmem:[%s363 + $0x250] sm:$0xff]
        %v1049 = vld [vmem:[%s363 + $0x258] sm:$0xff]
        %v1050 = vld [vmem:[%s363 + $0x260] sm:$0xff]
        %v1051 = vld [vmem:[%s363 + $0x268] sm:$0xff]
        %v1052 = vld [vmem:[%s363 + $0x270] sm:$0xff]
        %v1053 = vld [vmem:[%s363 + $0x278] sm:$0xff]
        %v1054 = vld [vmem:[%s363 + $0x280] sm:$0xff]
        %v1055 = vld [vmem:[%s363 + $0x288] sm:$0xff]
        %v1056 = vld [vmem:[%s363 + $0x290] sm:$0xff]
        %v1057 = vld [vmem:[%s363 + $0x298] sm:$0xff]
        %v1058 = vld [vmem:[%s363 + $0x2a0] sm:$0xff]
        %v1059 = vld [vmem:[%s363 + $0x2a8] sm:$0xff]
        %v1060 = vld [vmem:[%s363 + $0x2b0] sm:$0xff]
        %v1061 = vld [vmem:[%s363 + $0x2b8] sm:$0xff]
        %v1062 = vld [vmem:[%s363 + $0x2c0] sm:$0xff]
        %v1063 = vld [vmem:[%s363 + $0x2c8] sm:$0xff]
        %v1064 = vld [vmem:[%s363 + $0x2d0] sm:$0xff]
        %v1065 = vld [vmem:[%s363 + $0x2d8] sm:$0xff]
        %v1066 = vld [vmem:[%s363 + $0x2e0] sm:$0xff]
        %v1067 = vld [vmem:[%s363 + $0x2e8] sm:$0xff]
        %v1068 = vld [vmem:[%s363 + $0x2f0] sm:$0xff]
        %v1069 = vld [vmem:[%s363 + $0x2f8] sm:$0xff]
        %v1070 = vld [vmem:[%s363 + $0x300] sm:$0xff]
        %v1071 = vld [vmem:[%s363 + $0x308] sm:$0xff]
        %v1072 = vld [vmem:[%s363 + $0x310] sm:$0xff]
        %v1073 = vld [vmem:[%s363 + $0x318] sm:$0xff]
        %v1074 = vld [vmem:[%s363 + $0x320] sm:$0xff]
        %v1075 = vld [vmem:[%s363 + $0x328] sm:$0xff]
        %v1076 = vld [vmem:[%s363 + $0x330] sm:$0xff]
        %v1077 = vld [vmem:[%s363 + $0x338] sm:$0xff]
        %v1078 = vld [vmem:[%s363 + $0x340] sm:$0xff]
        %v1079 = vld [vmem:[%s363 + $0x348] sm:$0xff]
        %v1080 = vld [vmem:[%s363 + $0x350] sm:$0xff]
        %v1081 = vld [vmem:[%s363 + $0x358] sm:$0xff]
        %v1082 = vld [vmem:[%s363 + $0x360] sm:$0xff]
        %v1083 = vld [vmem:[%s363 + $0x368] sm:$0xff]
        %v1084 = vld [vmem:[%s363 + $0x370] sm:$0xff]
        %v1085 = vld [vmem:[%s363 + $0x378] sm:$0xff]
        %v1086 = vld [vmem:[%s363 + $0x380] sm:$0xff]
        %v1087 = vld [vmem:[%s363 + $0x388] sm:$0xff]
        %v1088 = vld [vmem:[%s363 + $0x390] sm:$0xff]
        %v1089 = vld [vmem:[%s363 + $0x398] sm:$0xff]
        %v1090 = vld [vmem:[%s363 + $0x3a0] sm:$0xff]
        %v1091 = vld [vmem:[%s363 + $0x3a8] sm:$0xff]
        %v1092 = vld [vmem:[%s363 + $0x3b0] sm:$0xff]
        %v1093 = vld [vmem:[%s363 + $0x3b8] sm:$0xff]
        %v1094 = vld [vmem:[%s363 + $0x3c0] sm:$0xff]
        %v1095 = vld [vmem:[%s363 + $0x3c8] sm:$0xff]
        %v1096 = vld [vmem:[%s363 + $0x3d0] sm:$0xff]
        %v1097 = vld [vmem:[%s363 + $0x3d8] sm:$0xff]
        %v1098 = vld [vmem:[%s363 + $0x3e0] sm:$0xff]
        %v1099 = vld [vmem:[%s363 + $0x3e8] sm:$0xff]
        %v1100 = vld [vmem:[%s363 + $0x3f0] sm:$0xff]
        %v1101 = vld [vmem:[%s363 + $0x3f8] sm:$0xff]
        %v1102 = vld [vmem:[%s373] sm:$0xff]
        %v1103 = vld [vmem:[%s373 + $0x8] sm:$0xff]
        %v1104 = vld [vmem:[%s373 + $0x10] sm:$0xff]
        %v1105 = vld [vmem:[%s373 + $0x18] sm:$0xff]
        %v1106 = vld [vmem:[%s373 + $0x20] sm:$0xff]
        %v1107 = vld [vmem:[%s373 + $0x28] sm:$0xff]
        %v1108 = vld [vmem:[%s373 + $0x30] sm:$0xff]
        %v1109 = vld [vmem:[%s373 + $0x38] sm:$0xff]
        %v1110 = vld [vmem:[%s373 + $0x40] sm:$0xff]
        %v1111 = vld [vmem:[%s373 + $0x48] sm:$0xff]
        %v1112 = vld [vmem:[%s373 + $0x50] sm:$0xff]
        %v1113 = vld [vmem:[%s373 + $0x58] sm:$0xff]
        %v1114 = vld [vmem:[%s373 + $0x60] sm:$0xff]
        %v1115 = vld [vmem:[%s373 + $0x68] sm:$0xff]
        %v1116 = vld [vmem:[%s373 + $0x70] sm:$0xff]
        %v1117 = vld [vmem:[%s373 + $0x78] sm:$0xff]
        %v1118 = vld [vmem:[%s373 + $0x80] sm:$0xff]
        %v1119 = vld [vmem:[%s373 + $0x88] sm:$0xff]
        %v1120 = vld [vmem:[%s373 + $0x90] sm:$0xff]
        %v1121 = vld [vmem:[%s373 + $0x98] sm:$0xff]
        %v1122 = vld [vmem:[%s373 + $0xa0] sm:$0xff]
        %v1123 = vld [vmem:[%s373 + $0xa8] sm:$0xff]
        %v1124 = vld [vmem:[%s373 + $0xb0] sm:$0xff]
        %v1125 = vld [vmem:[%s373 + $0xb8] sm:$0xff]
        %v1126 = vld [vmem:[%s373 + $0xc0] sm:$0xff]
        %v1127 = vld [vmem:[%s373 + $0xc8] sm:$0xff]
        %v1128 = vld [vmem:[%s373 + $0xd0] sm:$0xff]
        %v1129 = vld [vmem:[%s373 + $0xd8] sm:$0xff]
        %v1130 = vld [vmem:[%s373 + $0xe0] sm:$0xff]
        %v1131 = vld [vmem:[%s373 + $0xe8] sm:$0xff]
        %v1132 = vld [vmem:[%s373 + $0xf0] sm:$0xff]
        %v1133 = vld [vmem:[%s373 + $0xf8] sm:$0xff]
        %v1134 = vld [vmem:[%s373 + $0x100] sm:$0xff]
        %v1135 = vld [vmem:[%s373 + $0x108] sm:$0xff]
        %v1136 = vld [vmem:[%s373 + $0x110] sm:$0xff]
        %v1137 = vld [vmem:[%s373 + $0x118] sm:$0xff]
        %v1138 = vld [vmem:[%s373 + $0x120] sm:$0xff]
        %v1139 = vld [vmem:[%s373 + $0x128] sm:$0xff]
        %v1140 = vld [vmem:[%s373 + $0x130] sm:$0xff]
        %v1141 = vld [vmem:[%s373 + $0x138] sm:$0xff]
        %v1142 = vld [vmem:[%s373 + $0x140] sm:$0xff]
        %v1143 = vld [vmem:[%s373 + $0x148] sm:$0xff]
        %v1144 = vld [vmem:[%s373 + $0x150] sm:$0xff]
        %v1145 = vld [vmem:[%s373 + $0x158] sm:$0xff]
        %v1146 = vld [vmem:[%s373 + $0x160] sm:$0xff]
        %v1147 = vld [vmem:[%s373 + $0x168] sm:$0xff]
        %v1148 = vld [vmem:[%s373 + $0x170] sm:$0xff]
        %v1149 = vld [vmem:[%s373 + $0x178] sm:$0xff]
        %v1150 = vld [vmem:[%s373 + $0x180] sm:$0xff]
        %v1151 = vld [vmem:[%s373 + $0x188] sm:$0xff]
        %v1152 = vld [vmem:[%s373 + $0x190] sm:$0xff]
        %v1153 = vld [vmem:[%s373 + $0x198] sm:$0xff]
        %v1154 = vld [vmem:[%s373 + $0x1a0] sm:$0xff]
        %v1155 = vld [vmem:[%s373 + $0x1a8] sm:$0xff]
        %v1156 = vld [vmem:[%s373 + $0x1b0] sm:$0xff]
        %v1157 = vld [vmem:[%s373 + $0x1b8] sm:$0xff]
        %v1158 = vld [vmem:[%s373 + $0x1c0] sm:$0xff]
        %v1159 = vld [vmem:[%s373 + $0x1c8] sm:$0xff]
        %v1160 = vld [vmem:[%s373 + $0x1d0] sm:$0xff]
        %v1161 = vld [vmem:[%s373 + $0x1d8] sm:$0xff]
        %v1162 = vld [vmem:[%s373 + $0x1e0] sm:$0xff]
        %v1163 = vld [vmem:[%s373 + $0x1e8] sm:$0xff]
        %v1164 = vld [vmem:[%s373 + $0x1f0] sm:$0xff]
        %v1165 = vld [vmem:[%s373 + $0x1f8] sm:$0xff]
        %v1166 = vld [vmem:[%s373 + $0x200] sm:$0xff]
        %v1167 = vld [vmem:[%s373 + $0x208] sm:$0xff]
        %v1168 = vld [vmem:[%s373 + $0x210] sm:$0xff]
        %v1169 = vld [vmem:[%s373 + $0x218] sm:$0xff]
        %v1170 = vld [vmem:[%s373 + $0x220] sm:$0xff]
        %v1171 = vld [vmem:[%s373 + $0x228] sm:$0xff]
        %v1172 = vld [vmem:[%s373 + $0x230] sm:$0xff]
        %v1173 = vld [vmem:[%s373 + $0x238] sm:$0xff]
        %v1174 = vld [vmem:[%s373 + $0x240] sm:$0xff]
        %v1175 = vld [vmem:[%s373 + $0x248] sm:$0xff]
        %v1176 = vld [vmem:[%s373 + $0x250] sm:$0xff]
        %v1177 = vld [vmem:[%s373 + $0x258] sm:$0xff]
        %v1178 = vld [vmem:[%s373 + $0x260] sm:$0xff]
        %v1179 = vld [vmem:[%s373 + $0x268] sm:$0xff]
        %v1180 = vld [vmem:[%s373 + $0x270] sm:$0xff]
        %v1181 = vld [vmem:[%s373 + $0x278] sm:$0xff]
        %v1182 = vld [vmem:[%s373 + $0x280] sm:$0xff]
        %v1183 = vld [vmem:[%s373 + $0x288] sm:$0xff]
        %v1184 = vld [vmem:[%s373 + $0x290] sm:$0xff]
        %v1185 = vld [vmem:[%s373 + $0x298] sm:$0xff]
        %v1186 = vld [vmem:[%s373 + $0x2a0] sm:$0xff]
        %v1187 = vld [vmem:[%s373 + $0x2a8] sm:$0xff]
        %v1188 = vld [vmem:[%s373 + $0x2b0] sm:$0xff]
        %v1189 = vld [vmem:[%s373 + $0x2b8] sm:$0xff]
        %v1190 = vld [vmem:[%s373 + $0x2c0] sm:$0xff]
        %v1191 = vld [vmem:[%s373 + $0x2c8] sm:$0xff]
        %v1192 = vld [vmem:[%s373 + $0x2d0] sm:$0xff]
        %v1193 = vld [vmem:[%s373 + $0x2d8] sm:$0xff]
        %v1194 = vld [vmem:[%s373 + $0x2e0] sm:$0xff]
        %v1195 = vld [vmem:[%s373 + $0x2e8] sm:$0xff]
        %v1196 = vld [vmem:[%s373 + $0x2f0] sm:$0xff]
        %v1197 = vld [vmem:[%s373 + $0x2f8] sm:$0xff]
        %v1198 = vld [vmem:[%s373 + $0x300] sm:$0xff]
        %v1199 = vld [vmem:[%s373 + $0x308] sm:$0xff]
        %v1200 = vld [vmem:[%s373 + $0x310] sm:$0xff]
        %v1201 = vld [vmem:[%s373 + $0x318] sm:$0xff]
        %v1202 = vld [vmem:[%s373 + $0x320] sm:$0xff]
        %v1203 = vld [vmem:[%s373 + $0x328] sm:$0xff]
        %v1204 = vld [vmem:[%s373 + $0x330] sm:$0xff]
        %v1205 = vld [vmem:[%s373 + $0x338] sm:$0xff]
        %v1206 = vld [vmem:[%s373 + $0x340] sm:$0xff]
        %v1207 = vld [vmem:[%s373 + $0x348] sm:$0xff]
        %v1208 = vld [vmem:[%s373 + $0x350] sm:$0xff]
        %v1209 = vld [vmem:[%s373 + $0x358] sm:$0xff]
        %v1210 = vld [vmem:[%s373 + $0x360] sm:$0xff]
        %v1211 = vld [vmem:[%s373 + $0x368] sm:$0xff]
        %v1212 = vld [vmem:[%s373 + $0x370] sm:$0xff]
        %v1213 = vld [vmem:[%s373 + $0x378] sm:$0xff]
        %v1214 = vld [vmem:[%s373 + $0x380] sm:$0xff]
        %v1215 = vld [vmem:[%s373 + $0x388] sm:$0xff]
        %v1216 = vld [vmem:[%s373 + $0x390] sm:$0xff]
        %v1217 = vld [vmem:[%s373 + $0x398] sm:$0xff]
        %v1218 = vld [vmem:[%s373 + $0x3a0] sm:$0xff]
        %v1219 = vld [vmem:[%s373 + $0x3a8] sm:$0xff]
        %v1220 = vld [vmem:[%s373 + $0x3b0] sm:$0xff]
        %v1221 = vld [vmem:[%s373 + $0x3b8] sm:$0xff]
        %v1222 = vld [vmem:[%s373 + $0x3c0] sm:$0xff]
        %v1223 = vld [vmem:[%s373 + $0x3c8] sm:$0xff]
        %v1224 = vld [vmem:[%s373 + $0x3d0] sm:$0xff]
        %v1225 = vld [vmem:[%s373 + $0x3d8] sm:$0xff]
        %v1226 = vld [vmem:[%s373 + $0x3e0] sm:$0xff]
        %v1227 = vld [vmem:[%s373 + $0x3e8] sm:$0xff]
        %v1228 = vld [vmem:[%s373 + $0x3f0] sm:$0xff]
        %v1229 = vld [vmem:[%s373 + $0x3f8] sm:$0xff]
        %v1358 = vunpack.c.l.b16 %v974
        %v1359 = vunpack.c.h.b16 %v974
        %v1360 = vunpack.c.l.b16 %v975
        %v1361 = vunpack.c.h.b16 %v975
        %v1362 = vunpack.c.l.b16 %v976
        %v1363 = vunpack.c.h.b16 %v976
        %v1364 = vunpack.c.l.b16 %v977
        %v1365 = vunpack.c.h.b16 %v977
        %v1366 = vunpack.c.l.b16 %v978
        %v1367 = vunpack.c.h.b16 %v978
        %v1368 = vunpack.c.l.b16 %v979
        %v1369 = vunpack.c.h.b16 %v979
        %v1370 = vunpack.c.l.b16 %v980
        %v1371 = vunpack.c.h.b16 %v980
        %v1372 = vunpack.c.l.b16 %v981
        %v1373 = vunpack.c.h.b16 %v981
        %v1374 = vunpack.c.l.b16 %v982
        %v1375 = vunpack.c.h.b16 %v982
        %v1376 = vunpack.c.l.b16 %v983
        %v1377 = vunpack.c.h.b16 %v983
        %v1378 = vunpack.c.l.b16 %v984
        %v1379 = vunpack.c.h.b16 %v984
        %v1380 = vunpack.c.l.b16 %v985
        %v1381 = vunpack.c.h.b16 %v985
        %v1382 = vunpack.c.l.b16 %v986
        %v1383 = vunpack.c.h.b16 %v986
        %v1384 = vunpack.c.l.b16 %v987
        %v1385 = vunpack.c.h.b16 %v987
        %v1386 = vunpack.c.l.b16 %v988
        %v1387 = vunpack.c.h.b16 %v988
        %v1388 = vunpack.c.l.b16 %v989
        %v1389 = vunpack.c.h.b16 %v989
        %v1390 = vunpack.c.l.b16 %v990
        %v1391 = vunpack.c.h.b16 %v990
        %v1392 = vunpack.c.l.b16 %v991
        %v1393 = vunpack.c.h.b16 %v991
        %v1394 = vunpack.c.l.b16 %v992
        %v1395 = vunpack.c.h.b16 %v992
        %v1396 = vunpack.c.l.b16 %v993
        %v1397 = vunpack.c.h.b16 %v993
        %v1398 = vunpack.c.l.b16 %v994
        %v1399 = vunpack.c.h.b16 %v994
        %v1400 = vunpack.c.l.b16 %v995
        %v1401 = vunpack.c.h.b16 %v995
        %v1402 = vunpack.c.l.b16 %v996
        %v1403 = vunpack.c.h.b16 %v996
        %v1404 = vunpack.c.l.b16 %v997
        %v1405 = vunpack.c.h.b16 %v997
        %v1406 = vunpack.c.l.b16 %v998
        %v1407 = vunpack.c.h.b16 %v998
        %v1408 = vunpack.c.l.b16 %v999
        %v1409 = vunpack.c.h.b16 %v999
        %v1410 = vunpack.c.l.b16 %v1000
        %v1411 = vunpack.c.h.b16 %v1000
        %v1412 = vunpack.c.l.b16 %v1001
        %v1413 = vunpack.c.h.b16 %v1001
        %v1414 = vunpack.c.l.b16 %v1002
        %v1415 = vunpack.c.h.b16 %v1002
        %v1416 = vunpack.c.l.b16 %v1003
        %v1417 = vunpack.c.h.b16 %v1003
        %v1418 = vunpack.c.l.b16 %v1004
        %v1419 = vunpack.c.h.b16 %v1004
        %v1420 = vunpack.c.l.b16 %v1005
        %v1421 = vunpack.c.h.b16 %v1005
        %v1422 = vunpack.c.l.b16 %v1006
        %v1423 = vunpack.c.h.b16 %v1006
        %v1424 = vunpack.c.l.b16 %v1007
        %v1425 = vunpack.c.h.b16 %v1007
        %v1426 = vunpack.c.l.b16 %v1008
        %v1427 = vunpack.c.h.b16 %v1008
        %v1428 = vunpack.c.l.b16 %v1009
        %v1429 = vunpack.c.h.b16 %v1009
        %v1430 = vunpack.c.l.b16 %v1010
        %v1431 = vunpack.c.h.b16 %v1010
        %v1432 = vunpack.c.l.b16 %v1011
        %v1433 = vunpack.c.h.b16 %v1011
        %v1434 = vunpack.c.l.b16 %v1012
        %v1435 = vunpack.c.h.b16 %v1012
        %v1436 = vunpack.c.l.b16 %v1013
        %v1437 = vunpack.c.h.b16 %v1013
        %v1438 = vunpack.c.l.b16 %v1014
        %v1439 = vunpack.c.h.b16 %v1014
        %v1440 = vunpack.c.l.b16 %v1015
        %v1441 = vunpack.c.h.b16 %v1015
        %v1442 = vunpack.c.l.b16 %v1016
        %v1443 = vunpack.c.h.b16 %v1016
        %v1444 = vunpack.c.l.b16 %v1017
        %v1445 = vunpack.c.h.b16 %v1017
        %v1446 = vunpack.c.l.b16 %v1018
        %v1447 = vunpack.c.h.b16 %v1018
        %v1448 = vunpack.c.l.b16 %v1019
        %v1449 = vunpack.c.h.b16 %v1019
        %v1450 = vunpack.c.l.b16 %v1020
        %v1451 = vunpack.c.h.b16 %v1020
        %v1452 = vunpack.c.l.b16 %v1021
        %v1453 = vunpack.c.h.b16 %v1021
        %v1454 = vunpack.c.l.b16 %v1022
        %v1455 = vunpack.c.h.b16 %v1022
        %v1456 = vunpack.c.l.b16 %v1023
        %v1457 = vunpack.c.h.b16 %v1023
        %v1458 = vunpack.c.l.b16 %v1024
        %v1459 = vunpack.c.h.b16 %v1024
        %v1460 = vunpack.c.l.b16 %v1025
        %v1461 = vunpack.c.h.b16 %v1025
        %v1462 = vunpack.c.l.b16 %v1026
        %v1463 = vunpack.c.h.b16 %v1026
        %v1464 = vunpack.c.l.b16 %v1027
        %v1465 = vunpack.c.h.b16 %v1027
        %v1466 = vunpack.c.l.b16 %v1028
        %v1467 = vunpack.c.h.b16 %v1028
        %v1468 = vunpack.c.l.b16 %v1029
        %v1469 = vunpack.c.h.b16 %v1029
        %v1470 = vunpack.c.l.b16 %v1030
        %v1471 = vunpack.c.h.b16 %v1030
        %v1472 = vunpack.c.l.b16 %v1031
        %v1473 = vunpack.c.h.b16 %v1031
        %v1474 = vunpack.c.l.b16 %v1032
        %v1475 = vunpack.c.h.b16 %v1032
        %v1476 = vunpack.c.l.b16 %v1033
        %v1477 = vunpack.c.h.b16 %v1033
        %v1478 = vunpack.c.l.b16 %v1034
        %v1479 = vunpack.c.h.b16 %v1034
        %v1480 = vunpack.c.l.b16 %v1035
        %v1481 = vunpack.c.h.b16 %v1035
        %v1482 = vunpack.c.l.b16 %v1036
        %v1483 = vunpack.c.h.b16 %v1036
        %v1484 = vunpack.c.l.b16 %v1037
        %v1485 = vunpack.c.h.b16 %v1037
        %v1486 = vunpack.c.l.b16 %v1038
        %v1487 = vunpack.c.h.b16 %v1038
        %v1488 = vunpack.c.l.b16 %v1039
        %v1489 = vunpack.c.h.b16 %v1039
        %v1490 = vunpack.c.l.b16 %v1040
        %v1491 = vunpack.c.h.b16 %v1040
        %v1492 = vunpack.c.l.b16 %v1041
        %v1493 = vunpack.c.h.b16 %v1041
        %v1494 = vunpack.c.l.b16 %v1042
        %v1495 = vunpack.c.h.b16 %v1042
        %v1496 = vunpack.c.l.b16 %v1043
        %v1497 = vunpack.c.h.b16 %v1043
        %v1498 = vunpack.c.l.b16 %v1044
        %v1499 = vunpack.c.h.b16 %v1044
        %v1500 = vunpack.c.l.b16 %v1045
        %v1501 = vunpack.c.h.b16 %v1045
        %v1502 = vunpack.c.l.b16 %v1046
        %v1503 = vunpack.c.h.b16 %v1046
        %v1504 = vunpack.c.l.b16 %v1047
        %v1505 = vunpack.c.h.b16 %v1047
        %v1506 = vunpack.c.l.b16 %v1048
        %v1507 = vunpack.c.h.b16 %v1048
        %v1508 = vunpack.c.l.b16 %v1049
        %v1509 = vunpack.c.h.b16 %v1049
        %v1510 = vunpack.c.l.b16 %v1050
        %v1511 = vunpack.c.h.b16 %v1050
        %v1512 = vunpack.c.l.b16 %v1051
        %v1513 = vunpack.c.h.b16 %v1051
        %v1514 = vunpack.c.l.b16 %v1052
        %v1515 = vunpack.c.h.b16 %v1052
        %v1516 = vunpack.c.l.b16 %v1053
        %v1517 = vunpack.c.h.b16 %v1053
        %v1518 = vunpack.c.l.b16 %v1054
        %v1519 = vunpack.c.h.b16 %v1054
        %v1520 = vunpack.c.l.b16 %v1055
        %v1521 = vunpack.c.h.b16 %v1055
        %v1522 = vunpack.c.l.b16 %v1056
        %v1523 = vunpack.c.h.b16 %v1056
        %v1524 = vunpack.c.l.b16 %v1057
        %v1525 = vunpack.c.h.b16 %v1057
        %v1526 = vunpack.c.l.b16 %v1058
        %v1527 = vunpack.c.h.b16 %v1058
        %v1528 = vunpack.c.l.b16 %v1059
        %v1529 = vunpack.c.h.b16 %v1059
        %v1530 = vunpack.c.l.b16 %v1060
        %v1531 = vunpack.c.h.b16 %v1060
        %v1532 = vunpack.c.l.b16 %v1061
        %v1533 = vunpack.c.h.b16 %v1061
        %v1534 = vunpack.c.l.b16 %v1062
        %v1535 = vunpack.c.h.b16 %v1062
        %v1536 = vunpack.c.l.b16 %v1063
        %v1537 = vunpack.c.h.b16 %v1063
        %v1538 = vunpack.c.l.b16 %v1064
        %v1539 = vunpack.c.h.b16 %v1064
        %v1540 = vunpack.c.l.b16 %v1065
        %v1541 = vunpack.c.h.b16 %v1065
        %v1542 = vunpack.c.l.b16 %v1066
        %v1543 = vunpack.c.h.b16 %v1066
        %v1544 = vunpack.c.l.b16 %v1067
        %v1545 = vunpack.c.h.b16 %v1067
        %v1546 = vunpack.c.l.b16 %v1068
        %v1547 = vunpack.c.h.b16 %v1068
        %v1548 = vunpack.c.l.b16 %v1069
        %v1549 = vunpack.c.h.b16 %v1069
        %v1550 = vunpack.c.l.b16 %v1070
        %v1551 = vunpack.c.h.b16 %v1070
        %v1552 = vunpack.c.l.b16 %v1071
        %v1553 = vunpack.c.h.b16 %v1071
        %v1554 = vunpack.c.l.b16 %v1072
        %v1555 = vunpack.c.h.b16 %v1072
        %v1556 = vunpack.c.l.b16 %v1073
        %v1557 = vunpack.c.h.b16 %v1073
        %v1558 = vunpack.c.l.b16 %v1074
        %v1559 = vunpack.c.h.b16 %v1074
        %v1560 = vunpack.c.l.b16 %v1075
        %v1561 = vunpack.c.h.b16 %v1075
        %v1562 = vunpack.c.l.b16 %v1076
        %v1563 = vunpack.c.h.b16 %v1076
        %v1564 = vunpack.c.l.b16 %v1077
        %v1565 = vunpack.c.h.b16 %v1077
        %v1566 = vunpack.c.l.b16 %v1078
        %v1567 = vunpack.c.h.b16 %v1078
        %v1568 = vunpack.c.l.b16 %v1079
        %v1569 = vunpack.c.h.b16 %v1079
        %v1570 = vunpack.c.l.b16 %v1080
        %v1571 = vunpack.c.h.b16 %v1080
        %v1572 = vunpack.c.l.b16 %v1081
        %v1573 = vunpack.c.h.b16 %v1081
        %v1574 = vunpack.c.l.b16 %v1082
        %v1575 = vunpack.c.h.b16 %v1082
        %v1576 = vunpack.c.l.b16 %v1083
        %v1577 = vunpack.c.h.b16 %v1083
        %v1578 = vunpack.c.l.b16 %v1084
        %v1579 = vunpack.c.h.b16 %v1084
        %v1580 = vunpack.c.l.b16 %v1085
        %v1581 = vunpack.c.h.b16 %v1085
        %v1582 = vunpack.c.l.b16 %v1086
        %v1583 = vunpack.c.h.b16 %v1086
        %v1584 = vunpack.c.l.b16 %v1087
        %v1585 = vunpack.c.h.b16 %v1087
        %v1586 = vunpack.c.l.b16 %v1088
        %v1587 = vunpack.c.h.b16 %v1088
        %v1588 = vunpack.c.l.b16 %v1089
        %v1589 = vunpack.c.h.b16 %v1089
        %v1590 = vunpack.c.l.b16 %v1090
        %v1591 = vunpack.c.h.b16 %v1090
        %v1592 = vunpack.c.l.b16 %v1091
        %v1593 = vunpack.c.h.b16 %v1091
        %v1594 = vunpack.c.l.b16 %v1092
        %v1595 = vunpack.c.h.b16 %v1092
        %v1596 = vunpack.c.l.b16 %v1093
        %v1597 = vunpack.c.h.b16 %v1093
        %v1598 = vunpack.c.l.b16 %v1094
        %v1599 = vunpack.c.h.b16 %v1094
        %v1600 = vunpack.c.l.b16 %v1095
        %v1601 = vunpack.c.h.b16 %v1095
        %v1602 = vunpack.c.l.b16 %v1096
        %v1603 = vunpack.c.h.b16 %v1096
        %v1604 = vunpack.c.l.b16 %v1097
        %v1605 = vunpack.c.h.b16 %v1097
        %v1606 = vunpack.c.l.b16 %v1098
        %v1607 = vunpack.c.h.b16 %v1098
        %v1608 = vunpack.c.l.b16 %v1099
        %v1609 = vunpack.c.h.b16 %v1099
        %v1610 = vunpack.c.l.b16 %v1100
        %v1611 = vunpack.c.h.b16 %v1100
        %v1612 = vunpack.c.l.b16 %v1101
        %v1613 = vunpack.c.h.b16 %v1101
        %v1614 = vpack.c.b16 %v1362, %v1358
        %v1615 = vpack.c.b16 %v1363, %v1359
        %v1616 = vpack.c.b16 %v1364, %v1360
        %v1617 = vpack.c.b16 %v1365, %v1361
        %v1618 = vpack.c.b16 %v1370, %v1366
        %v1619 = vpack.c.b16 %v1371, %v1367
        %v1620 = vpack.c.b16 %v1372, %v1368
        %v1621 = vpack.c.b16 %v1373, %v1369
        %v1622 = vpack.c.b16 %v1378, %v1374
        %v1623 = vpack.c.b16 %v1379, %v1375
        %v1624 = vpack.c.b16 %v1380, %v1376
        %v1625 = vpack.c.b16 %v1381, %v1377
        %v1626 = vpack.c.b16 %v1386, %v1382
        %v1627 = vpack.c.b16 %v1387, %v1383
        %v1628 = vpack.c.b16 %v1388, %v1384
        %v1629 = vpack.c.b16 %v1389, %v1385
        %v1630 = vpack.c.b16 %v1394, %v1390
        %v1631 = vpack.c.b16 %v1395, %v1391
        %v1632 = vpack.c.b16 %v1396, %v1392
        %v1633 = vpack.c.b16 %v1397, %v1393
        %v1634 = vpack.c.b16 %v1402, %v1398
        %v1635 = vpack.c.b16 %v1403, %v1399
        %v1636 = vpack.c.b16 %v1404, %v1400
        %v1637 = vpack.c.b16 %v1405, %v1401
        %v1638 = vpack.c.b16 %v1410, %v1406
        %v1639 = vpack.c.b16 %v1411, %v1407
        %v1640 = vpack.c.b16 %v1412, %v1408
        %v1641 = vpack.c.b16 %v1413, %v1409
        %v1642 = vpack.c.b16 %v1418, %v1414
        %v1643 = vpack.c.b16 %v1419, %v1415
        %v1644 = vpack.c.b16 %v1420, %v1416
        %v1645 = vpack.c.b16 %v1421, %v1417
        %v1646 = vpack.c.b16 %v1426, %v1422
        %v1647 = vpack.c.b16 %v1427, %v1423
        %v1648 = vpack.c.b16 %v1428, %v1424
        %v1649 = vpack.c.b16 %v1429, %v1425
        %v1650 = vpack.c.b16 %v1434, %v1430
        %v1651 = vpack.c.b16 %v1435, %v1431
        %v1652 = vpack.c.b16 %v1436, %v1432
        %v1653 = vpack.c.b16 %v1437, %v1433
        %v1654 = vpack.c.b16 %v1442, %v1438
        %v1655 = vpack.c.b16 %v1443, %v1439
        %v1656 = vpack.c.b16 %v1444, %v1440
        %v1657 = vpack.c.b16 %v1445, %v1441
        %v1658 = vpack.c.b16 %v1450, %v1446
        %v1659 = vpack.c.b16 %v1451, %v1447
        %v1660 = vpack.c.b16 %v1452, %v1448
        %v1661 = vpack.c.b16 %v1453, %v1449
        %v1662 = vpack.c.b16 %v1458, %v1454
        %v1663 = vpack.c.b16 %v1459, %v1455
        %v1664 = vpack.c.b16 %v1460, %v1456
        %v1665 = vpack.c.b16 %v1461, %v1457
        %v1666 = vpack.c.b16 %v1466, %v1462
        %v1667 = vpack.c.b16 %v1467, %v1463
        %v1668 = vpack.c.b16 %v1468, %v1464
        %v1669 = vpack.c.b16 %v1469, %v1465
        %v1670 = vpack.c.b16 %v1474, %v1470
        %v1671 = vpack.c.b16 %v1475, %v1471
        %v1672 = vpack.c.b16 %v1476, %v1472
        %v1673 = vpack.c.b16 %v1477, %v1473
        %v1674 = vpack.c.b16 %v1482, %v1478
        %v1675 = vpack.c.b16 %v1483, %v1479
        %v1676 = vpack.c.b16 %v1484, %v1480
        %v1677 = vpack.c.b16 %v1485, %v1481
        %v1678 = vpack.c.b16 %v1490, %v1486
        %v1679 = vpack.c.b16 %v1491, %v1487
        %v1680 = vpack.c.b16 %v1492, %v1488
        %v1681 = vpack.c.b16 %v1493, %v1489
        %v1682 = vpack.c.b16 %v1498, %v1494
        %v1683 = vpack.c.b16 %v1499, %v1495
        %v1684 = vpack.c.b16 %v1500, %v1496
        %v1685 = vpack.c.b16 %v1501, %v1497
        %v1686 = vpack.c.b16 %v1506, %v1502
        %v1687 = vpack.c.b16 %v1507, %v1503
        %v1688 = vpack.c.b16 %v1508, %v1504
        %v1689 = vpack.c.b16 %v1509, %v1505
        %v1690 = vpack.c.b16 %v1514, %v1510
        %v1691 = vpack.c.b16 %v1515, %v1511
        %v1692 = vpack.c.b16 %v1516, %v1512
        %v1693 = vpack.c.b16 %v1517, %v1513
        %v1694 = vpack.c.b16 %v1522, %v1518
        %v1695 = vpack.c.b16 %v1523, %v1519
        %v1696 = vpack.c.b16 %v1524, %v1520
        %v1697 = vpack.c.b16 %v1525, %v1521
        %v1698 = vpack.c.b16 %v1530, %v1526
        %v1699 = vpack.c.b16 %v1531, %v1527
        %v1700 = vpack.c.b16 %v1532, %v1528
        %v1701 = vpack.c.b16 %v1533, %v1529
        %v1702 = vpack.c.b16 %v1538, %v1534
        %v1703 = vpack.c.b16 %v1539, %v1535
        %v1704 = vpack.c.b16 %v1540, %v1536
        %v1705 = vpack.c.b16 %v1541, %v1537
        %v1706 = vpack.c.b16 %v1546, %v1542
        %v1707 = vpack.c.b16 %v1547, %v1543
        %v1708 = vpack.c.b16 %v1548, %v1544
        %v1709 = vpack.c.b16 %v1549, %v1545
        %v1710 = vpack.c.b16 %v1554, %v1550
        %v1711 = vpack.c.b16 %v1555, %v1551
        %v1712 = vpack.c.b16 %v1556, %v1552
        %v1713 = vpack.c.b16 %v1557, %v1553
        %v1714 = vpack.c.b16 %v1562, %v1558
        %v1715 = vpack.c.b16 %v1563, %v1559
        %v1716 = vpack.c.b16 %v1564, %v1560
        %v1717 = vpack.c.b16 %v1565, %v1561
        %v1718 = vpack.c.b16 %v1570, %v1566
        %v1719 = vpack.c.b16 %v1571, %v1567
        %v1720 = vpack.c.b16 %v1572, %v1568
        %v1721 = vpack.c.b16 %v1573, %v1569
        %v1722 = vpack.c.b16 %v1578, %v1574
        %v1723 = vpack.c.b16 %v1579, %v1575
        %v1724 = vpack.c.b16 %v1580, %v1576
        %v1725 = vpack.c.b16 %v1581, %v1577
        %v1726 = vpack.c.b16 %v1586, %v1582
        %v1727 = vpack.c.b16 %v1587, %v1583
        %v1728 = vpack.c.b16 %v1588, %v1584
        %v1729 = vpack.c.b16 %v1589, %v1585
        %v1730 = vpack.c.b16 %v1594, %v1590
        %v1731 = vpack.c.b16 %v1595, %v1591
        %v1732 = vpack.c.b16 %v1596, %v1592
        %v1733 = vpack.c.b16 %v1597, %v1593
        %v1734 = vpack.c.b16 %v1602, %v1598
        %v1735 = vpack.c.b16 %v1603, %v1599
        %v1736 = vpack.c.b16 %v1604, %v1600
        %v1737 = vpack.c.b16 %v1605, %v1601
        %v1738 = vpack.c.b16 %v1610, %v1606
        %v1739 = vpack.c.b16 %v1611, %v1607
        %v1740 = vpack.c.b16 %v1612, %v1608
        %v1741 = vpack.c.b16 %v1613, %v1609
        %v1998 = vunpack.c.l.b16 %v1102
        %v1999 = vunpack.c.h.b16 %v1102
        %v2000 = vunpack.c.l.b16 %v1103
        %v2001 = vunpack.c.h.b16 %v1103
        %v2002 = vunpack.c.l.b16 %v1104
        %v2003 = vunpack.c.h.b16 %v1104
        %v2004 = vunpack.c.l.b16 %v1105
        %v2005 = vunpack.c.h.b16 %v1105
        %v2006 = vunpack.c.l.b16 %v1106
        %v2007 = vunpack.c.h.b16 %v1106
        %v2008 = vunpack.c.l.b16 %v1107
        %v2009 = vunpack.c.h.b16 %v1107
        %v2010 = vunpack.c.l.b16 %v1108
        %v2011 = vunpack.c.h.b16 %v1108
        %v2012 = vunpack.c.l.b16 %v1109
        %v2013 = vunpack.c.h.b16 %v1109
        %v2014 = vunpack.c.l.b16 %v1110
        %v2015 = vunpack.c.h.b16 %v1110
        %v2016 = vunpack.c.l.b16 %v1111
        %v2017 = vunpack.c.h.b16 %v1111
        %v2018 = vunpack.c.l.b16 %v1112
        %v2019 = vunpack.c.h.b16 %v1112
        %v2020 = vunpack.c.l.b16 %v1113
        %v2021 = vunpack.c.h.b16 %v1113
        %v2022 = vunpack.c.l.b16 %v1114
        %v2023 = vunpack.c.h.b16 %v1114
        %v2024 = vunpack.c.l.b16 %v1115
        %v2025 = vunpack.c.h.b16 %v1115
        %v2026 = vunpack.c.l.b16 %v1116
        %v2027 = vunpack.c.h.b16 %v1116
        %v2028 = vunpack.c.l.b16 %v1117
        %v2029 = vunpack.c.h.b16 %v1117
        %v2030 = vunpack.c.l.b16 %v1118
        %v2031 = vunpack.c.h.b16 %v1118
        %v2032 = vunpack.c.l.b16 %v1119
        %v2033 = vunpack.c.h.b16 %v1119
        %v2034 = vunpack.c.l.b16 %v1120
        %v2035 = vunpack.c.h.b16 %v1120
        %v2036 = vunpack.c.l.b16 %v1121
        %v2037 = vunpack.c.h.b16 %v1121
        %v2038 = vunpack.c.l.b16 %v1122
        %v2039 = vunpack.c.h.b16 %v1122
        %v2040 = vunpack.c.l.b16 %v1123
        %v2041 = vunpack.c.h.b16 %v1123
        %v2042 = vunpack.c.l.b16 %v1124
        %v2043 = vunpack.c.h.b16 %v1124
        %v2044 = vunpack.c.l.b16 %v1125
        %v2045 = vunpack.c.h.b16 %v1125
        %v2046 = vunpack.c.l.b16 %v1126
        %v2047 = vunpack.c.h.b16 %v1126
        %v2048 = vunpack.c.l.b16 %v1127
        %v2049 = vunpack.c.h.b16 %v1127
        %v2050 = vunpack.c.l.b16 %v1128
        %v2051 = vunpack.c.h.b16 %v1128
        %v2052 = vunpack.c.l.b16 %v1129
        %v2053 = vunpack.c.h.b16 %v1129
        %v2054 = vunpack.c.l.b16 %v1130
        %v2055 = vunpack.c.h.b16 %v1130
        %v2056 = vunpack.c.l.b16 %v1131
        %v2057 = vunpack.c.h.b16 %v1131
        %v2058 = vunpack.c.l.b16 %v1132
        %v2059 = vunpack.c.h.b16 %v1132
        %v2060 = vunpack.c.l.b16 %v1133
        %v2061 = vunpack.c.h.b16 %v1133
        %v2062 = vunpack.c.l.b16 %v1134
        %v2063 = vunpack.c.h.b16 %v1134
        %v2064 = vunpack.c.l.b16 %v1135
        %v2065 = vunpack.c.h.b16 %v1135
        %v2066 = vunpack.c.l.b16 %v1136
        %v2067 = vunpack.c.h.b16 %v1136
        %v2068 = vunpack.c.l.b16 %v1137
        %v2069 = vunpack.c.h.b16 %v1137
        %v2070 = vunpack.c.l.b16 %v1138
        %v2071 = vunpack.c.h.b16 %v1138
        %v2072 = vunpack.c.l.b16 %v1139
        %v2073 = vunpack.c.h.b16 %v1139
        %v2074 = vunpack.c.l.b16 %v1140
        %v2075 = vunpack.c.h.b16 %v1140
        %v2076 = vunpack.c.l.b16 %v1141
        %v2077 = vunpack.c.h.b16 %v1141
        %v2078 = vunpack.c.l.b16 %v1142
        %v2079 = vunpack.c.h.b16 %v1142
        %v2080 = vunpack.c.l.b16 %v1143
        %v2081 = vunpack.c.h.b16 %v1143
        %v2082 = vunpack.c.l.b16 %v1144
        %v2083 = vunpack.c.h.b16 %v1144
        %v2084 = vunpack.c.l.b16 %v1145
        %v2085 = vunpack.c.h.b16 %v1145
        %v2086 = vunpack.c.l.b16 %v1146
        %v2087 = vunpack.c.h.b16 %v1146
        %v2088 = vunpack.c.l.b16 %v1147
        %v2089 = vunpack.c.h.b16 %v1147
        %v2090 = vunpack.c.l.b16 %v1148
        %v2091 = vunpack.c.h.b16 %v1148
        %v2092 = vunpack.c.l.b16 %v1149
        %v2093 = vunpack.c.h.b16 %v1149
        %v2094 = vunpack.c.l.b16 %v1150
        %v2095 = vunpack.c.h.b16 %v1150
        %v2096 = vunpack.c.l.b16 %v1151
        %v2097 = vunpack.c.h.b16 %v1151
        %v2098 = vunpack.c.l.b16 %v1152
        %v2099 = vunpack.c.h.b16 %v1152
        %v2100 = vunpack.c.l.b16 %v1153
        %v2101 = vunpack.c.h.b16 %v1153
        %v2102 = vunpack.c.l.b16 %v1154
        %v2103 = vunpack.c.h.b16 %v1154
        %v2104 = vunpack.c.l.b16 %v1155
        %v2105 = vunpack.c.h.b16 %v1155
        %v2106 = vunpack.c.l.b16 %v1156
        %v2107 = vunpack.c.h.b16 %v1156
        %v2108 = vunpack.c.l.b16 %v1157
        %v2109 = vunpack.c.h.b16 %v1157
        %v2110 = vunpack.c.l.b16 %v1158
        %v2111 = vunpack.c.h.b16 %v1158
        %v2112 = vunpack.c.l.b16 %v1159
        %v2113 = vunpack.c.h.b16 %v1159
        %v2114 = vunpack.c.l.b16 %v1160
        %v2115 = vunpack.c.h.b16 %v1160
        %v2116 = vunpack.c.l.b16 %v1161
        %v2117 = vunpack.c.h.b16 %v1161
        %v2118 = vunpack.c.l.b16 %v1162
        %v2119 = vunpack.c.h.b16 %v1162
        %v2120 = vunpack.c.l.b16 %v1163
        %v2121 = vunpack.c.h.b16 %v1163
        %v2122 = vunpack.c.l.b16 %v1164
        %v2123 = vunpack.c.h.b16 %v1164
        %v2124 = vunpack.c.l.b16 %v1165
        %v2125 = vunpack.c.h.b16 %v1165
        %v2126 = vunpack.c.l.b16 %v1166
        %v2127 = vunpack.c.h.b16 %v1166
        %v2128 = vunpack.c.l.b16 %v1167
        %v2129 = vunpack.c.h.b16 %v1167
        %v2130 = vunpack.c.l.b16 %v1168
        %v2131 = vunpack.c.h.b16 %v1168
        %v2132 = vunpack.c.l.b16 %v1169
        %v2133 = vunpack.c.h.b16 %v1169
        %v2134 = vunpack.c.l.b16 %v1170
        %v2135 = vunpack.c.h.b16 %v1170
        %v2136 = vunpack.c.l.b16 %v1171
        %v2137 = vunpack.c.h.b16 %v1171
        %v2138 = vunpack.c.l.b16 %v1172
        %v2139 = vunpack.c.h.b16 %v1172
        %v2140 = vunpack.c.l.b16 %v1173
        %v2141 = vunpack.c.h.b16 %v1173
        %v2142 = vunpack.c.l.b16 %v1174
        %v2143 = vunpack.c.h.b16 %v1174
        %v2144 = vunpack.c.l.b16 %v1175
        %v2145 = vunpack.c.h.b16 %v1175
        %v2146 = vunpack.c.l.b16 %v1176
        %v2147 = vunpack.c.h.b16 %v1176
        %v2148 = vunpack.c.l.b16 %v1177
        %v2149 = vunpack.c.h.b16 %v1177
        %v2150 = vunpack.c.l.b16 %v1178
        %v2151 = vunpack.c.h.b16 %v1178
        %v2152 = vunpack.c.l.b16 %v1179
        %v2153 = vunpack.c.h.b16 %v1179
        %v2154 = vunpack.c.l.b16 %v1180
        %v2155 = vunpack.c.h.b16 %v1180
        %v2156 = vunpack.c.l.b16 %v1181
        %v2157 = vunpack.c.h.b16 %v1181
        %v2158 = vunpack.c.l.b16 %v1182
        %v2159 = vunpack.c.h.b16 %v1182
        %v2160 = vunpack.c.l.b16 %v1183
        %v2161 = vunpack.c.h.b16 %v1183
        %v2162 = vunpack.c.l.b16 %v1184
        %v2163 = vunpack.c.h.b16 %v1184
        %v2164 = vunpack.c.l.b16 %v1185
        %v2165 = vunpack.c.h.b16 %v1185
        %v2166 = vunpack.c.l.b16 %v1186
        %v2167 = vunpack.c.h.b16 %v1186
        %v2168 = vunpack.c.l.b16 %v1187
        %v2169 = vunpack.c.h.b16 %v1187
        %v2170 = vunpack.c.l.b16 %v1188
        %v2171 = vunpack.c.h.b16 %v1188
        %v2172 = vunpack.c.l.b16 %v1189
        %v2173 = vunpack.c.h.b16 %v1189
        %v2174 = vunpack.c.l.b16 %v1190
        %v2175 = vunpack.c.h.b16 %v1190
        %v2176 = vunpack.c.l.b16 %v1191
        %v2177 = vunpack.c.h.b16 %v1191
        %v2178 = vunpack.c.l.b16 %v1192
        %v2179 = vunpack.c.h.b16 %v1192
        %v2180 = vunpack.c.l.b16 %v1193
        %v2181 = vunpack.c.h.b16 %v1193
        %v2182 = vunpack.c.l.b16 %v1194
        %v2183 = vunpack.c.h.b16 %v1194
        %v2184 = vunpack.c.l.b16 %v1195
        %v2185 = vunpack.c.h.b16 %v1195
        %v2186 = vunpack.c.l.b16 %v1196
        %v2187 = vunpack.c.h.b16 %v1196
        %v2188 = vunpack.c.l.b16 %v1197
        %v2189 = vunpack.c.h.b16 %v1197
        %v2190 = vunpack.c.l.b16 %v1198
        %v2191 = vunpack.c.h.b16 %v1198
        %v2192 = vunpack.c.l.b16 %v1199
        %v2193 = vunpack.c.h.b16 %v1199
        %v2194 = vunpack.c.l.b16 %v1200
        %v2195 = vunpack.c.h.b16 %v1200
        %v2196 = vunpack.c.l.b16 %v1201
        %v2197 = vunpack.c.h.b16 %v1201
        %v2198 = vunpack.c.l.b16 %v1202
        %v2199 = vunpack.c.h.b16 %v1202
        %v2200 = vunpack.c.l.b16 %v1203
        %v2201 = vunpack.c.h.b16 %v1203
        %v2202 = vunpack.c.l.b16 %v1204
        %v2203 = vunpack.c.h.b16 %v1204
        %v2204 = vunpack.c.l.b16 %v1205
        %v2205 = vunpack.c.h.b16 %v1205
        %v2206 = vunpack.c.l.b16 %v1206
        %v2207 = vunpack.c.h.b16 %v1206
        %v2208 = vunpack.c.l.b16 %v1207
        %v2209 = vunpack.c.h.b16 %v1207
        %v2210 = vunpack.c.l.b16 %v1208
        %v2211 = vunpack.c.h.b16 %v1208
        %v2212 = vunpack.c.l.b16 %v1209
        %v2213 = vunpack.c.h.b16 %v1209
        %v2214 = vunpack.c.l.b16 %v1210
        %v2215 = vunpack.c.h.b16 %v1210
        %v2216 = vunpack.c.l.b16 %v1211
        %v2217 = vunpack.c.h.b16 %v1211
        %v2218 = vunpack.c.l.b16 %v1212
        %v2219 = vunpack.c.h.b16 %v1212
        %v2220 = vunpack.c.l.b16 %v1213
        %v2221 = vunpack.c.h.b16 %v1213
        %v2222 = vunpack.c.l.b16 %v1214
        %v2223 = vunpack.c.h.b16 %v1214
        %v2224 = vunpack.c.l.b16 %v1215
        %v2225 = vunpack.c.h.b16 %v1215
        %v2226 = vunpack.c.l.b16 %v1216
        %v2227 = vunpack.c.h.b16 %v1216
        %v2228 = vunpack.c.l.b16 %v1217
        %v2229 = vunpack.c.h.b16 %v1217
        %v2230 = vunpack.c.l.b16 %v1218
        %v2231 = vunpack.c.h.b16 %v1218
        %v2232 = vunpack.c.l.b16 %v1219
        %v2233 = vunpack.c.h.b16 %v1219
        %v2234 = vunpack.c.l.b16 %v1220
        %v2235 = vunpack.c.h.b16 %v1220
        %v2236 = vunpack.c.l.b16 %v1221
        %v2237 = vunpack.c.h.b16 %v1221
        %v2238 = vunpack.c.l.b16 %v1222
        %v2239 = vunpack.c.h.b16 %v1222
        %v2240 = vunpack.c.l.b16 %v1223
        %v2241 = vunpack.c.h.b16 %v1223
        %v2242 = vunpack.c.l.b16 %v1224
        %v2243 = vunpack.c.h.b16 %v1224
        %v2244 = vunpack.c.l.b16 %v1225
        %v2245 = vunpack.c.h.b16 %v1225
        %v2246 = vunpack.c.l.b16 %v1226
        %v2247 = vunpack.c.h.b16 %v1226
        %v2248 = vunpack.c.l.b16 %v1227
        %v2249 = vunpack.c.h.b16 %v1227
        %v2250 = vunpack.c.l.b16 %v1228
        %v2251 = vunpack.c.h.b16 %v1228
        %v2252 = vunpack.c.l.b16 %v1229
        %v2253 = vunpack.c.h.b16 %v1229
        %v2254 = vpack.c.b16 %v2002, %v1998
        %v2255 = vpack.c.b16 %v2003, %v1999
        %v2256 = vpack.c.b16 %v2004, %v2000
        %v2257 = vpack.c.b16 %v2005, %v2001
        %v2258 = vpack.c.b16 %v2010, %v2006
        %v2259 = vpack.c.b16 %v2011, %v2007
        %v2260 = vpack.c.b16 %v2012, %v2008
        %v2261 = vpack.c.b16 %v2013, %v2009
        %v2262 = vpack.c.b16 %v2018, %v2014
        %v2263 = vpack.c.b16 %v2019, %v2015
        %v2264 = vpack.c.b16 %v2020, %v2016
        %v2265 = vpack.c.b16 %v2021, %v2017
        %v2266 = vpack.c.b16 %v2026, %v2022
        %v2267 = vpack.c.b16 %v2027, %v2023
        %v2268 = vpack.c.b16 %v2028, %v2024
        %v2269 = vpack.c.b16 %v2029, %v2025
        %v2270 = vpack.c.b16 %v2034, %v2030
        %v2271 = vpack.c.b16 %v2035, %v2031
        %v2272 = vpack.c.b16 %v2036, %v2032
        %v2273 = vpack.c.b16 %v2037, %v2033
        %v2274 = vpack.c.b16 %v2042, %v2038
        %v2275 = vpack.c.b16 %v2043, %v2039
        %v2276 = vpack.c.b16 %v2044, %v2040
        %v2277 = vpack.c.b16 %v2045, %v2041
        %v2278 = vpack.c.b16 %v2050, %v2046
        %v2279 = vpack.c.b16 %v2051, %v2047
        %v2280 = vpack.c.b16 %v2052, %v2048
        %v2281 = vpack.c.b16 %v2053, %v2049
        %v2282 = vpack.c.b16 %v2058, %v2054
        %v2283 = vpack.c.b16 %v2059, %v2055
        %v2284 = vpack.c.b16 %v2060, %v2056
        %v2285 = vpack.c.b16 %v2061, %v2057
        %v2286 = vpack.c.b16 %v2066, %v2062
        %v2287 = vpack.c.b16 %v2067, %v2063
        %v2288 = vpack.c.b16 %v2068, %v2064
        %v2289 = vpack.c.b16 %v2069, %v2065
        %v2290 = vpack.c.b16 %v2074, %v2070
        %v2291 = vpack.c.b16 %v2075, %v2071
        %v2292 = vpack.c.b16 %v2076, %v2072
        %v2293 = vpack.c.b16 %v2077, %v2073
        %v2294 = vpack.c.b16 %v2082, %v2078
        %v2295 = vpack.c.b16 %v2083, %v2079
        %v2296 = vpack.c.b16 %v2084, %v2080
        %v2297 = vpack.c.b16 %v2085, %v2081
        %v2298 = vpack.c.b16 %v2090, %v2086
        %v2299 = vpack.c.b16 %v2091, %v2087
        %v2300 = vpack.c.b16 %v2092, %v2088
        %v2301 = vpack.c.b16 %v2093, %v2089
        %v2302 = vpack.c.b16 %v2098, %v2094
        %v2303 = vpack.c.b16 %v2099, %v2095
        %v2304 = vpack.c.b16 %v2100, %v2096
        %v2305 = vpack.c.b16 %v2101, %v2097
        %v2306 = vpack.c.b16 %v2106, %v2102
        %v2307 = vpack.c.b16 %v2107, %v2103
        %v2308 = vpack.c.b16 %v2108, %v2104
        %v2309 = vpack.c.b16 %v2109, %v2105
        %v2310 = vpack.c.b16 %v2114, %v2110
        %v2311 = vpack.c.b16 %v2115, %v2111
        %v2312 = vpack.c.b16 %v2116, %v2112
        %v2313 = vpack.c.b16 %v2117, %v2113
        %v2314 = vpack.c.b16 %v2122, %v2118
        %v2315 = vpack.c.b16 %v2123, %v2119
        %v2316 = vpack.c.b16 %v2124, %v2120
        %v2317 = vpack.c.b16 %v2125, %v2121
        %v2318 = vpack.c.b16 %v2130, %v2126
        %v2319 = vpack.c.b16 %v2131, %v2127
        %v2320 = vpack.c.b16 %v2132, %v2128
        %v2321 = vpack.c.b16 %v2133, %v2129
        %v2322 = vpack.c.b16 %v2138, %v2134
        %v2323 = vpack.c.b16 %v2139, %v2135
        %v2324 = vpack.c.b16 %v2140, %v2136
        %v2325 = vpack.c.b16 %v2141, %v2137
        %v2326 = vpack.c.b16 %v2146, %v2142
        %v2327 = vpack.c.b16 %v2147, %v2143
        %v2328 = vpack.c.b16 %v2148, %v2144
        %v2329 = vpack.c.b16 %v2149, %v2145
        %v2330 = vpack.c.b16 %v2154, %v2150
        %v2331 = vpack.c.b16 %v2155, %v2151
        %v2332 = vpack.c.b16 %v2156, %v2152
        %v2333 = vpack.c.b16 %v2157, %v2153
        %v2334 = vpack.c.b16 %v2162, %v2158
        %v2335 = vpack.c.b16 %v2163, %v2159
        %v2336 = vpack.c.b16 %v2164, %v2160
        %v2337 = vpack.c.b16 %v2165, %v2161
        %v2338 = vpack.c.b16 %v2170, %v2166
        %v2339 = vpack.c.b16 %v2171, %v2167
        %v2340 = vpack.c.b16 %v2172, %v2168
        %v2341 = vpack.c.b16 %v2173, %v2169
        %v2342 = vpack.c.b16 %v2178, %v2174
        %v2343 = vpack.c.b16 %v2179, %v2175
        %v2344 = vpack.c.b16 %v2180, %v2176
        %v2345 = vpack.c.b16 %v2181, %v2177
        %v2346 = vpack.c.b16 %v2186, %v2182
        %v2347 = vpack.c.b16 %v2187, %v2183
        %v2348 = vpack.c.b16 %v2188, %v2184
        %v2349 = vpack.c.b16 %v2189, %v2185
        %v2350 = vpack.c.b16 %v2194, %v2190
        %v2351 = vpack.c.b16 %v2195, %v2191
        %v2352 = vpack.c.b16 %v2196, %v2192
        %v2353 = vpack.c.b16 %v2197, %v2193
        %v2354 = vpack.c.b16 %v2202, %v2198
        %v2355 = vpack.c.b16 %v2203, %v2199
        %v2356 = vpack.c.b16 %v2204, %v2200
        %v2357 = vpack.c.b16 %v2205, %v2201
        %v2358 = vpack.c.b16 %v2210, %v2206
        %v2359 = vpack.c.b16 %v2211, %v2207
        %v2360 = vpack.c.b16 %v2212, %v2208
        %v2361 = vpack.c.b16 %v2213, %v2209
        %v2362 = vpack.c.b16 %v2218, %v2214
        %v2363 = vpack.c.b16 %v2219, %v2215
        %v2364 = vpack.c.b16 %v2220, %v2216
        %v2365 = vpack.c.b16 %v2221, %v2217
        %v2366 = vpack.c.b16 %v2226, %v2222
        %v2367 = vpack.c.b16 %v2227, %v2223
        %v2368 = vpack.c.b16 %v2228, %v2224
        %v2369 = vpack.c.b16 %v2229, %v2225
        %v2370 = vpack.c.b16 %v2234, %v2230
        %v2371 = vpack.c.b16 %v2235, %v2231
        %v2372 = vpack.c.b16 %v2236, %v2232
        %v2373 = vpack.c.b16 %v2237, %v2233
        %v2374 = vpack.c.b16 %v2242, %v2238
        %v2375 = vpack.c.b16 %v2243, %v2239
        %v2376 = vpack.c.b16 %v2244, %v2240
        %v2377 = vpack.c.b16 %v2245, %v2241
        %v2378 = vpack.c.b16 %v2250, %v2246
        %v2379 = vpack.c.b16 %v2251, %v2247
        %v2380 = vpack.c.b16 %v2252, %v2248
        %v2381 = vpack.c.b16 %v2253, %v2249
        %2510 = vmatpush.bf16.msra.mxu0 %v2282
        %2511 = vmatpush.bf16.msra.mxu0 %v2278
        %2512 = vmatpush.bf16.msra.mxu0 %v2274
        %2513 = vmatpush.bf16.msra.mxu0 %v2270
        %2514 = vmatpush.bf16.msra.mxu0 %v2266
        %2515 = vmatpush.bf16.msra.mxu0 %v2262
        %2516 = vmatpush.bf16.msra.mxu0 %v2258
        %2517 = vmatpush.bf16.msra.mxu0 %v2254
        %2518 = vmatmul.bf16.gmra.mxu0 %v1614
        %v2519 = vpop.f32.mrf.mxu0
        %v2520 = vadd.f32 0.0, %v2519
        %v2521 = vpop.f32.mrf.mxu0
        %v2522 = vadd.f32 0.0, %v2521
        %2523 = vmatmul.bf16.gmra.mxu0 %v1618
        %v2524 = vpop.f32.mrf.mxu0
        %v2525 = vadd.f32 0.0, %v2524
        %v2526 = vpop.f32.mrf.mxu0
        %v2527 = vadd.f32 0.0, %v2526
        %2528 = vmatmul.bf16.gmra.mxu0 %v1622
        %v2529 = vpop.f32.mrf.mxu0
        %v2530 = vadd.f32 0.0, %v2529
        %v2531 = vpop.f32.mrf.mxu0
        %v2532 = vadd.f32 0.0, %v2531
        %2533 = vmatmul.bf16.gmra.mxu0 %v1626
        %v2534 = vpop.f32.mrf.mxu0
        %v2535 = vadd.f32 0.0, %v2534
        %v2536 = vpop.f32.mrf.mxu0
        %v2537 = vadd.f32 0.0, %v2536
        %2538 = vmatmul.bf16.gmra.mxu0 %v1630
        %v2539 = vpop.f32.mrf.mxu0
        %v2540 = vadd.f32 0.0, %v2539
        %v2541 = vpop.f32.mrf.mxu0
        %v2542 = vadd.f32 0.0, %v2541
        %2543 = vmatmul.bf16.gmra.mxu0 %v1634
        %v2544 = vpop.f32.mrf.mxu0
        %v2545 = vadd.f32 0.0, %v2544
        %v2546 = vpop.f32.mrf.mxu0
        %v2547 = vadd.f32 0.0, %v2546
        %2548 = vmatmul.bf16.gmra.mxu0 %v1638
        %v2549 = vpop.f32.mrf.mxu0
        %v2550 = vadd.f32 0.0, %v2549
        %v2551 = vpop.f32.mrf.mxu0
        %v2552 = vadd.f32 0.0, %v2551
        %2553 = vmatmul.bf16.gmra.mxu0 %v1642
        %v2554 = vpop.f32.mrf.mxu0
        %v2555 = vadd.f32 0.0, %v2554
        %v2556 = vpop.f32.mrf.mxu0
        %v2557 = vadd.f32 0.0, %v2556
        %2558 = vmatmul.bf16.gmra.mxu0 %v1646
        %v2559 = vpop.f32.mrf.mxu0
        %v2560 = vadd.f32 0.0, %v2559
        %v2561 = vpop.f32.mrf.mxu0
        %v2562 = vadd.f32 0.0, %v2561
        %2563 = vmatmul.bf16.gmra.mxu0 %v1650
        %v2564 = vpop.f32.mrf.mxu0
        %v2565 = vadd.f32 0.0, %v2564
        %v2566 = vpop.f32.mrf.mxu0
        %v2567 = vadd.f32 0.0, %v2566
        %2568 = vmatmul.bf16.gmra.mxu0 %v1654
        %v2569 = vpop.f32.mrf.mxu0
        %v2570 = vadd.f32 0.0, %v2569
        %v2571 = vpop.f32.mrf.mxu0
        %v2572 = vadd.f32 0.0, %v2571
        %2573 = vmatmul.bf16.gmra.mxu0 %v1658
        %v2574 = vpop.f32.mrf.mxu0
        %v2575 = vadd.f32 0.0, %v2574
        %v2576 = vpop.f32.mrf.mxu0
        %v2577 = vadd.f32 0.0, %v2576
        %2578 = vmatmul.bf16.gmra.mxu0 %v1662
        %v2579 = vpop.f32.mrf.mxu0
        %v2580 = vadd.f32 0.0, %v2579
        %v2581 = vpop.f32.mrf.mxu0
        %v2582 = vadd.f32 0.0, %v2581
        %2583 = vmatmul.bf16.gmra.mxu0 %v1666
        %v2584 = vpop.f32.mrf.mxu0
        %v2585 = vadd.f32 0.0, %v2584
        %v2586 = vpop.f32.mrf.mxu0
        %v2587 = vadd.f32 0.0, %v2586
        %2588 = vmatmul.bf16.gmra.mxu0 %v1670
        %v2589 = vpop.f32.mrf.mxu0
        %v2590 = vadd.f32 0.0, %v2589
        %v2591 = vpop.f32.mrf.mxu0
        %v2592 = vadd.f32 0.0, %v2591
        %2593 = vmatmul.bf16.gmra.mxu0 %v1674
        %v2594 = vpop.f32.mrf.mxu0
        %v2595 = vadd.f32 0.0, %v2594
        %v2596 = vpop.f32.mrf.mxu0
        %v2597 = vadd.f32 0.0, %v2596
        %2598 = vmatmul.bf16.gmra.mxu0 %v1678
        %v2599 = vpop.f32.mrf.mxu0
        %v2600 = vadd.f32 0.0, %v2599
        %v2601 = vpop.f32.mrf.mxu0
        %v2602 = vadd.f32 0.0, %v2601
        %2603 = vmatmul.bf16.gmra.mxu0 %v1682
        %v2604 = vpop.f32.mrf.mxu0
        %v2605 = vadd.f32 0.0, %v2604
        %v2606 = vpop.f32.mrf.mxu0
        %v2607 = vadd.f32 0.0, %v2606
        %2608 = vmatmul.bf16.gmra.mxu0 %v1686
        %v2609 = vpop.f32.mrf.mxu0
        %v2610 = vadd.f32 0.0, %v2609
        %v2611 = vpop.f32.mrf.mxu0
        %v2612 = vadd.f32 0.0, %v2611
        %2613 = vmatmul.bf16.gmra.mxu0 %v1690
        %v2614 = vpop.f32.mrf.mxu0
        %v2615 = vadd.f32 0.0, %v2614
        %v2616 = vpop.f32.mrf.mxu0
        %v2617 = vadd.f32 0.0, %v2616
        %2618 = vmatmul.bf16.gmra.mxu0 %v1694
        %v2619 = vpop.f32.mrf.mxu0
        %v2620 = vadd.f32 0.0, %v2619
        %v2621 = vpop.f32.mrf.mxu0
        %v2622 = vadd.f32 0.0, %v2621
        %2623 = vmatmul.bf16.gmra.mxu0 %v1698
        %v2624 = vpop.f32.mrf.mxu0
        %v2625 = vadd.f32 0.0, %v2624
        %v2626 = vpop.f32.mrf.mxu0
        %v2627 = vadd.f32 0.0, %v2626
        %2628 = vmatmul.bf16.gmra.mxu0 %v1702
        %v2629 = vpop.f32.mrf.mxu0
        %v2630 = vadd.f32 0.0, %v2629
        %v2631 = vpop.f32.mrf.mxu0
        %v2632 = vadd.f32 0.0, %v2631
        %2633 = vmatmul.bf16.gmra.mxu0 %v1706
        %v2634 = vpop.f32.mrf.mxu0
        %v2635 = vadd.f32 0.0, %v2634
        %v2636 = vpop.f32.mrf.mxu0
        %v2637 = vadd.f32 0.0, %v2636
        %2638 = vmatmul.bf16.gmra.mxu0 %v1710
        %v2639 = vpop.f32.mrf.mxu0
        %v2640 = vadd.f32 0.0, %v2639
        %v2641 = vpop.f32.mrf.mxu0
        %v2642 = vadd.f32 0.0, %v2641
        %2643 = vmatmul.bf16.gmra.mxu0 %v1714
        %v2644 = vpop.f32.mrf.mxu0
        %v2645 = vadd.f32 0.0, %v2644
        %v2646 = vpop.f32.mrf.mxu0
        %v2647 = vadd.f32 0.0, %v2646
        %2648 = vmatmul.bf16.gmra.mxu0 %v1718
        %v2649 = vpop.f32.mrf.mxu0
        %v2650 = vadd.f32 0.0, %v2649
        %v2651 = vpop.f32.mrf.mxu0
        %v2652 = vadd.f32 0.0, %v2651
        %2653 = vmatmul.bf16.gmra.mxu0 %v1722
        %v2654 = vpop.f32.mrf.mxu0
        %v2655 = vadd.f32 0.0, %v2654
        %v2656 = vpop.f32.mrf.mxu0
        %v2657 = vadd.f32 0.0, %v2656
        %2658 = vmatmul.bf16.gmra.mxu0 %v1726
        %v2659 = vpop.f32.mrf.mxu0
        %v2660 = vadd.f32 0.0, %v2659
        %v2661 = vpop.f32.mrf.mxu0
        %v2662 = vadd.f32 0.0, %v2661
        %2663 = vmatmul.bf16.gmra.mxu0 %v1730
        %v2664 = vpop.f32.mrf.mxu0
        %v2665 = vadd.f32 0.0, %v2664
        %v2666 = vpop.f32.mrf.mxu0
        %v2667 = vadd.f32 0.0, %v2666
        %2668 = vmatmul.bf16.gmra.mxu0 %v1734
        %v2669 = vpop.f32.mrf.mxu0
        %v2670 = vadd.f32 0.0, %v2669
        %v2671 = vpop.f32.mrf.mxu0
        %v2672 = vadd.f32 0.0, %v2671
        %2673 = vmatmul.bf16.gmra.mxu0 %v1738
        %v2674 = vpop.f32.mrf.mxu0
        %v2675 = vadd.f32 0.0, %v2674
        %v2676 = vpop.f32.mrf.mxu0
        %v2677 = vadd.f32 0.0, %v2676
        %2678 = vdwg.mxu0
        %2679 = vmatpush.bf16.msra.mxu0 %v2314
        %2680 = vmatpush.bf16.msra.mxu0 %v2310
        %2681 = vmatpush.bf16.msra.mxu0 %v2306
        %2682 = vmatpush.bf16.msra.mxu0 %v2302
        %2683 = vmatpush.bf16.msra.mxu0 %v2298
        %2684 = vmatpush.bf16.msra.mxu0 %v2294
        %2685 = vmatpush.bf16.msra.mxu0 %v2290
        %2686 = vmatpush.bf16.msra.mxu0 %v2286
        %2687 = vmatmul.bf16.gmra.mxu0 %v1615
        %v2688 = vpop.f32.mrf.mxu0
        %v2689 = vadd.f32 %v2520, %v2688
        %v2690 = vpop.f32.mrf.mxu0
        %v2691 = vadd.f32 %v2522, %v2690
        %2692 = vmatmul.bf16.gmra.mxu0 %v1619
        %v2693 = vpop.f32.mrf.mxu0
        %v2694 = vadd.f32 %v2525, %v2693
        %v2695 = vpop.f32.mrf.mxu0
        %v2696 = vadd.f32 %v2527, %v2695
        %2697 = vmatmul.bf16.gmra.mxu0 %v1623
        %v2698 = vpop.f32.mrf.mxu0
        %v2699 = vadd.f32 %v2530, %v2698
        %v2700 = vpop.f32.mrf.mxu0
        %v2701 = vadd.f32 %v2532, %v2700
        %2702 = vmatmul.bf16.gmra.mxu0 %v1627
        %v2703 = vpop.f32.mrf.mxu0
        %v2704 = vadd.f32 %v2535, %v2703
        %v2705 = vpop.f32.mrf.mxu0
        %v2706 = vadd.f32 %v2537, %v2705
        %2707 = vmatmul.bf16.gmra.mxu0 %v1631
        %v2708 = vpop.f32.mrf.mxu0
        %v2709 = vadd.f32 %v2540, %v2708
        %v2710 = vpop.f32.mrf.mxu0
        %v2711 = vadd.f32 %v2542, %v2710
        %2712 = vmatmul.bf16.gmra.mxu0 %v1635
        %v2713 = vpop.f32.mrf.mxu0
        %v2714 = vadd.f32 %v2545, %v2713
        %v2715 = vpop.f32.mrf.mxu0
        %v2716 = vadd.f32 %v2547, %v2715
        %2717 = vmatmul.bf16.gmra.mxu0 %v1639
        %v2718 = vpop.f32.mrf.mxu0
        %v2719 = vadd.f32 %v2550, %v2718
        %v2720 = vpop.f32.mrf.mxu0
        %v2721 = vadd.f32 %v2552, %v2720
        %2722 = vmatmul.bf16.gmra.mxu0 %v1643
        %v2723 = vpop.f32.mrf.mxu0
        %v2724 = vadd.f32 %v2555, %v2723
        %v2725 = vpop.f32.mrf.mxu0
        %v2726 = vadd.f32 %v2557, %v2725
        %2727 = vmatmul.bf16.gmra.mxu0 %v1647
        %v2728 = vpop.f32.mrf.mxu0
        %v2729 = vadd.f32 %v2560, %v2728
        %v2730 = vpop.f32.mrf.mxu0
        %v2731 = vadd.f32 %v2562, %v2730
        %2732 = vmatmul.bf16.gmra.mxu0 %v1651
        %v2733 = vpop.f32.mrf.mxu0
        %v2734 = vadd.f32 %v2565, %v2733
        %v2735 = vpop.f32.mrf.mxu0
        %v2736 = vadd.f32 %v2567, %v2735
        %2737 = vmatmul.bf16.gmra.mxu0 %v1655
        %v2738 = vpop.f32.mrf.mxu0
        %v2739 = vadd.f32 %v2570, %v2738
        %v2740 = vpop.f32.mrf.mxu0
        %v2741 = vadd.f32 %v2572, %v2740
        %2742 = vmatmul.bf16.gmra.mxu0 %v1659
        %v2743 = vpop.f32.mrf.mxu0
        %v2744 = vadd.f32 %v2575, %v2743
        %v2745 = vpop.f32.mrf.mxu0
        %v2746 = vadd.f32 %v2577, %v2745
        %2747 = vmatmul.bf16.gmra.mxu0 %v1663
        %v2748 = vpop.f32.mrf.mxu0
        %v2749 = vadd.f32 %v2580, %v2748
        %v2750 = vpop.f32.mrf.mxu0
        %v2751 = vadd.f32 %v2582, %v2750
        %2752 = vmatmul.bf16.gmra.mxu0 %v1667
        %v2753 = vpop.f32.mrf.mxu0
        %v2754 = vadd.f32 %v2585, %v2753
        %v2755 = vpop.f32.mrf.mxu0
        %v2756 = vadd.f32 %v2587, %v2755
        %2757 = vmatmul.bf16.gmra.mxu0 %v1671
        %v2758 = vpop.f32.mrf.mxu0
        %v2759 = vadd.f32 %v2590, %v2758
        %v2760 = vpop.f32.mrf.mxu0
        %v2761 = vadd.f32 %v2592, %v2760
        %2762 = vmatmul.bf16.gmra.mxu0 %v1675
        %v2763 = vpop.f32.mrf.mxu0
        %v2764 = vadd.f32 %v2595, %v2763
        %v2765 = vpop.f32.mrf.mxu0
        %v2766 = vadd.f32 %v2597, %v2765
        %2767 = vmatmul.bf16.gmra.mxu0 %v1679
        %v2768 = vpop.f32.mrf.mxu0
        %v2769 = vadd.f32 %v2600, %v2768
        %v2770 = vpop.f32.mrf.mxu0
        %v2771 = vadd.f32 %v2602, %v2770
        %2772 = vmatmul.bf16.gmra.mxu0 %v1683
        %v2773 = vpop.f32.mrf.mxu0
        %v2774 = vadd.f32 %v2605, %v2773
        %v2775 = vpop.f32.mrf.mxu0
        %v2776 = vadd.f32 %v2607, %v2775
        %2777 = vmatmul.bf16.gmra.mxu0 %v1687
        %v2778 = vpop.f32.mrf.mxu0
        %v2779 = vadd.f32 %v2610, %v2778
        %v2780 = vpop.f32.mrf.mxu0
        %v2781 = vadd.f32 %v2612, %v2780
        %2782 = vmatmul.bf16.gmra.mxu0 %v1691
        %v2783 = vpop.f32.mrf.mxu0
        %v2784 = vadd.f32 %v2615, %v2783
        %v2785 = vpop.f32.mrf.mxu0
        %v2786 = vadd.f32 %v2617, %v2785
        %2787 = vmatmul.bf16.gmra.mxu0 %v1695
        %v2788 = vpop.f32.mrf.mxu0
        %v2789 = vadd.f32 %v2620, %v2788
        %v2790 = vpop.f32.mrf.mxu0
        %v2791 = vadd.f32 %v2622, %v2790
        %2792 = vmatmul.bf16.gmra.mxu0 %v1699
        %v2793 = vpop.f32.mrf.mxu0
        %v2794 = vadd.f32 %v2625, %v2793
        %v2795 = vpop.f32.mrf.mxu0
        %v2796 = vadd.f32 %v2627, %v2795
        %2797 = vmatmul.bf16.gmra.mxu0 %v1703
        %v2798 = vpop.f32.mrf.mxu0
        %v2799 = vadd.f32 %v2630, %v2798
        %v2800 = vpop.f32.mrf.mxu0
        %v2801 = vadd.f32 %v2632, %v2800
        %2802 = vmatmul.bf16.gmra.mxu0 %v1707
        %v2803 = vpop.f32.mrf.mxu0
        %v2804 = vadd.f32 %v2635, %v2803
        %v2805 = vpop.f32.mrf.mxu0
        %v2806 = vadd.f32 %v2637, %v2805
        %2807 = vmatmul.bf16.gmra.mxu0 %v1711
        %v2808 = vpop.f32.mrf.mxu0
        %v2809 = vadd.f32 %v2640, %v2808
        %v2810 = vpop.f32.mrf.mxu0
        %v2811 = vadd.f32 %v2642, %v2810
        %2812 = vmatmul.bf16.gmra.mxu0 %v1715
        %v2813 = vpop.f32.mrf.mxu0
        %v2814 = vadd.f32 %v2645, %v2813
        %v2815 = vpop.f32.mrf.mxu0
        %v2816 = vadd.f32 %v2647, %v2815
        %2817 = vmatmul.bf16.gmra.mxu0 %v1719
        %v2818 = vpop.f32.mrf.mxu0
        %v2819 = vadd.f32 %v2650, %v2818
        %v2820 = vpop.f32.mrf.mxu0
        %v2821 = vadd.f32 %v2652, %v2820
        %2822 = vmatmul.bf16.gmra.mxu0 %v1723
        %v2823 = vpop.f32.mrf.mxu0
        %v2824 = vadd.f32 %v2655, %v2823
        %v2825 = vpop.f32.mrf.mxu0
        %v2826 = vadd.f32 %v2657, %v2825
        %2827 = vmatmul.bf16.gmra.mxu0 %v1727
        %v2828 = vpop.f32.mrf.mxu0
        %v2829 = vadd.f32 %v2660, %v2828
        %v2830 = vpop.f32.mrf.mxu0
        %v2831 = vadd.f32 %v2662, %v2830
        %2832 = vmatmul.bf16.gmra.mxu0 %v1731
        %v2833 = vpop.f32.mrf.mxu0
        %v2834 = vadd.f32 %v2665, %v2833
        %v2835 = vpop.f32.mrf.mxu0
        %v2836 = vadd.f32 %v2667, %v2835
        %2837 = vmatmul.bf16.gmra.mxu0 %v1735
        %v2838 = vpop.f32.mrf.mxu0
        %v2839 = vadd.f32 %v2670, %v2838
        %v2840 = vpop.f32.mrf.mxu0
        %v2841 = vadd.f32 %v2672, %v2840
        %2842 = vmatmul.bf16.gmra.mxu0 %v1739
        %v2843 = vpop.f32.mrf.mxu0
        %v2844 = vadd.f32 %v2675, %v2843
        %v2845 = vpop.f32.mrf.mxu0
        %v2846 = vadd.f32 %v2677, %v2845
        %2847 = vdwg.mxu0
        %2848 = vmatpush.bf16.msra.mxu0 %v2346
        %2849 = vmatpush.bf16.msra.mxu0 %v2342
        %2850 = vmatpush.bf16.msra.mxu0 %v2338
        %2851 = vmatpush.bf16.msra.mxu0 %v2334
        %2852 = vmatpush.bf16.msra.mxu0 %v2330
        %2853 = vmatpush.bf16.msra.mxu0 %v2326
        %2854 = vmatpush.bf16.msra.mxu0 %v2322
        %2855 = vmatpush.bf16.msra.mxu0 %v2318
        %2856 = vmatmul.bf16.gmra.mxu0 %v1616
        %v2857 = vpop.f32.mrf.mxu0
        %v2858 = vadd.f32 %v2689, %v2857
        %v2859 = vpop.f32.mrf.mxu0
        %v2860 = vadd.f32 %v2691, %v2859
        %2861 = vmatmul.bf16.gmra.mxu0 %v1620
        %v2862 = vpop.f32.mrf.mxu0
        %v2863 = vadd.f32 %v2694, %v2862
        %v2864 = vpop.f32.mrf.mxu0
        %v2865 = vadd.f32 %v2696, %v2864
        %2866 = vmatmul.bf16.gmra.mxu0 %v1624
        %v2867 = vpop.f32.mrf.mxu0
        %v2868 = vadd.f32 %v2699, %v2867
        %v2869 = vpop.f32.mrf.mxu0
        %v2870 = vadd.f32 %v2701, %v2869
        %2871 = vmatmul.bf16.gmra.mxu0 %v1628
        %v2872 = vpop.f32.mrf.mxu0
        %v2873 = vadd.f32 %v2704, %v2872
        %v2874 = vpop.f32.mrf.mxu0
        %v2875 = vadd.f32 %v2706, %v2874
        %2876 = vmatmul.bf16.gmra.mxu0 %v1632
        %v2877 = vpop.f32.mrf.mxu0
        %v2878 = vadd.f32 %v2709, %v2877
        %v2879 = vpop.f32.mrf.mxu0
        %v2880 = vadd.f32 %v2711, %v2879
        %2881 = vmatmul.bf16.gmra.mxu0 %v1636
        %v2882 = vpop.f32.mrf.mxu0
        %v2883 = vadd.f32 %v2714, %v2882
        %v2884 = vpop.f32.mrf.mxu0
        %v2885 = vadd.f32 %v2716, %v2884
        %2886 = vmatmul.bf16.gmra.mxu0 %v1640
        %v2887 = vpop.f32.mrf.mxu0
        %v2888 = vadd.f32 %v2719, %v2887
        %v2889 = vpop.f32.mrf.mxu0
        %v2890 = vadd.f32 %v2721, %v2889
        %2891 = vmatmul.bf16.gmra.mxu0 %v1644
        %v2892 = vpop.f32.mrf.mxu0
        %v2893 = vadd.f32 %v2724, %v2892
        %v2894 = vpop.f32.mrf.mxu0
        %v2895 = vadd.f32 %v2726, %v2894
        %2896 = vmatmul.bf16.gmra.mxu0 %v1648
        %v2897 = vpop.f32.mrf.mxu0
        %v2898 = vadd.f32 %v2729, %v2897
        %v2899 = vpop.f32.mrf.mxu0
        %v2900 = vadd.f32 %v2731, %v2899
        %2901 = vmatmul.bf16.gmra.mxu0 %v1652
        %v2902 = vpop.f32.mrf.mxu0
        %v2903 = vadd.f32 %v2734, %v2902
        %v2904 = vpop.f32.mrf.mxu0
        %v2905 = vadd.f32 %v2736, %v2904
        %2906 = vmatmul.bf16.gmra.mxu0 %v1656
        %v2907 = vpop.f32.mrf.mxu0
        %v2908 = vadd.f32 %v2739, %v2907
        %v2909 = vpop.f32.mrf.mxu0
        %v2910 = vadd.f32 %v2741, %v2909
        %2911 = vmatmul.bf16.gmra.mxu0 %v1660
        %v2912 = vpop.f32.mrf.mxu0
        %v2913 = vadd.f32 %v2744, %v2912
        %v2914 = vpop.f32.mrf.mxu0
        %v2915 = vadd.f32 %v2746, %v2914
        %2916 = vmatmul.bf16.gmra.mxu0 %v1664
        %v2917 = vpop.f32.mrf.mxu0
        %v2918 = vadd.f32 %v2749, %v2917
        %v2919 = vpop.f32.mrf.mxu0
        %v2920 = vadd.f32 %v2751, %v2919
        %2921 = vmatmul.bf16.gmra.mxu0 %v1668
        %v2922 = vpop.f32.mrf.mxu0
        %v2923 = vadd.f32 %v2754, %v2922
        %v2924 = vpop.f32.mrf.mxu0
        %v2925 = vadd.f32 %v2756, %v2924
        %2926 = vmatmul.bf16.gmra.mxu0 %v1672
        %v2927 = vpop.f32.mrf.mxu0
        %v2928 = vadd.f32 %v2759, %v2927
        %v2929 = vpop.f32.mrf.mxu0
        %v2930 = vadd.f32 %v2761, %v2929
        %2931 = vmatmul.bf16.gmra.mxu0 %v1676
        %v2932 = vpop.f32.mrf.mxu0
        %v2933 = vadd.f32 %v2764, %v2932
        %v2934 = vpop.f32.mrf.mxu0
        %v2935 = vadd.f32 %v2766, %v2934
        %2936 = vmatmul.bf16.gmra.mxu0 %v1680
        %v2937 = vpop.f32.mrf.mxu0
        %v2938 = vadd.f32 %v2769, %v2937
        %v2939 = vpop.f32.mrf.mxu0
        %v2940 = vadd.f32 %v2771, %v2939
        %2941 = vmatmul.bf16.gmra.mxu0 %v1684
        %v2942 = vpop.f32.mrf.mxu0
        %v2943 = vadd.f32 %v2774, %v2942
        %v2944 = vpop.f32.mrf.mxu0
        %v2945 = vadd.f32 %v2776, %v2944
        %2946 = vmatmul.bf16.gmra.mxu0 %v1688
        %v2947 = vpop.f32.mrf.mxu0
        %v2948 = vadd.f32 %v2779, %v2947
        %v2949 = vpop.f32.mrf.mxu0
        %v2950 = vadd.f32 %v2781, %v2949
        %2951 = vmatmul.bf16.gmra.mxu0 %v1692
        %v2952 = vpop.f32.mrf.mxu0
        %v2953 = vadd.f32 %v2784, %v2952
        %v2954 = vpop.f32.mrf.mxu0
        %v2955 = vadd.f32 %v2786, %v2954
        %2956 = vmatmul.bf16.gmra.mxu0 %v1696
        %v2957 = vpop.f32.mrf.mxu0
        %v2958 = vadd.f32 %v2789, %v2957
        %v2959 = vpop.f32.mrf.mxu0
        %v2960 = vadd.f32 %v2791, %v2959
        %2961 = vmatmul.bf16.gmra.mxu0 %v1700
        %v2962 = vpop.f32.mrf.mxu0
        %v2963 = vadd.f32 %v2794, %v2962
        %v2964 = vpop.f32.mrf.mxu0
        %v2965 = vadd.f32 %v2796, %v2964
        %2966 = vmatmul.bf16.gmra.mxu0 %v1704
        %v2967 = vpop.f32.mrf.mxu0
        %v2968 = vadd.f32 %v2799, %v2967
        %v2969 = vpop.f32.mrf.mxu0
        %v2970 = vadd.f32 %v2801, %v2969
        %2971 = vmatmul.bf16.gmra.mxu0 %v1708
        %v2972 = vpop.f32.mrf.mxu0
        %v2973 = vadd.f32 %v2804, %v2972
        %v2974 = vpop.f32.mrf.mxu0
        %v2975 = vadd.f32 %v2806, %v2974
        %2976 = vmatmul.bf16.gmra.mxu0 %v1712
        %v2977 = vpop.f32.mrf.mxu0
        %v2978 = vadd.f32 %v2809, %v2977
        %v2979 = vpop.f32.mrf.mxu0
        %v2980 = vadd.f32 %v2811, %v2979
        %2981 = vmatmul.bf16.gmra.mxu0 %v1716
        %v2982 = vpop.f32.mrf.mxu0
        %v2983 = vadd.f32 %v2814, %v2982
        %v2984 = vpop.f32.mrf.mxu0
        %v2985 = vadd.f32 %v2816, %v2984
        %2986 = vmatmul.bf16.gmra.mxu0 %v1720
        %v2987 = vpop.f32.mrf.mxu0
        %v2988 = vadd.f32 %v2819, %v2987
        %v2989 = vpop.f32.mrf.mxu0
        %v2990 = vadd.f32 %v2821, %v2989
        %2991 = vmatmul.bf16.gmra.mxu0 %v1724
        %v2992 = vpop.f32.mrf.mxu0
        %v2993 = vadd.f32 %v2824, %v2992
        %v2994 = vpop.f32.mrf.mxu0
        %v2995 = vadd.f32 %v2826, %v2994
        %2996 = vmatmul.bf16.gmra.mxu0 %v1728
        %v2997 = vpop.f32.mrf.mxu0
        %v2998 = vadd.f32 %v2829, %v2997
        %v2999 = vpop.f32.mrf.mxu0
        %v3000 = vadd.f32 %v2831, %v2999
        %3001 = vmatmul.bf16.gmra.mxu0 %v1732
        %v3002 = vpop.f32.mrf.mxu0
        %v3003 = vadd.f32 %v2834, %v3002
        %v3004 = vpop.f32.mrf.mxu0
        %v3005 = vadd.f32 %v2836, %v3004
        %3006 = vmatmul.bf16.gmra.mxu0 %v1736
        %v3007 = vpop.f32.mrf.mxu0
        %v3008 = vadd.f32 %v2839, %v3007
        %v3009 = vpop.f32.mrf.mxu0
        %v3010 = vadd.f32 %v2841, %v3009
        %3011 = vmatmul.bf16.gmra.mxu0 %v1740
        %v3012 = vpop.f32.mrf.mxu0
        %v3013 = vadd.f32 %v2844, %v3012
        %v3014 = vpop.f32.mrf.mxu0
        %v3015 = vadd.f32 %v2846, %v3014
        %3016 = vdwg.mxu0
        %3017 = vmatpush.bf16.msra.mxu0 %v2378
        %3018 = vmatpush.bf16.msra.mxu0 %v2374
        %3019 = vmatpush.bf16.msra.mxu0 %v2370
        %3020 = vmatpush.bf16.msra.mxu0 %v2366
        %3021 = vmatpush.bf16.msra.mxu0 %v2362
        %3022 = vmatpush.bf16.msra.mxu0 %v2358
        %3023 = vmatpush.bf16.msra.mxu0 %v2354
        %3024 = vmatpush.bf16.msra.mxu0 %v2350
        %3025 = vmatmul.bf16.gmra.mxu0 %v1617
        %v3026 = vpop.f32.mrf.mxu0
        %v3027 = vadd.f32 %v2858, %v3026
        %v3028 = vpop.f32.mrf.mxu0
        %v3029 = vadd.f32 %v2860, %v3028
        %3030 = vmatmul.bf16.gmra.mxu0 %v1621
        %v3031 = vpop.f32.mrf.mxu0
        %v3032 = vadd.f32 %v2863, %v3031
        %v3033 = vpop.f32.mrf.mxu0
        %v3034 = vadd.f32 %v2865, %v3033
        %3035 = vmatmul.bf16.gmra.mxu0 %v1625
        %v3036 = vpop.f32.mrf.mxu0
        %v3037 = vadd.f32 %v2868, %v3036
        %v3038 = vpop.f32.mrf.mxu0
        %v3039 = vadd.f32 %v2870, %v3038
        %3040 = vmatmul.bf16.gmra.mxu0 %v1629
        %v3041 = vpop.f32.mrf.mxu0
        %v3042 = vadd.f32 %v2873, %v3041
        %v3043 = vpop.f32.mrf.mxu0
        %v3044 = vadd.f32 %v2875, %v3043
        %3045 = vmatmul.bf16.gmra.mxu0 %v1633
        %v3046 = vpop.f32.mrf.mxu0
        %v3047 = vadd.f32 %v2878, %v3046
        %v3048 = vpop.f32.mrf.mxu0
        %v3049 = vadd.f32 %v2880, %v3048
        %3050 = vmatmul.bf16.gmra.mxu0 %v1637
        %v3051 = vpop.f32.mrf.mxu0
        %v3052 = vadd.f32 %v2883, %v3051
        %v3053 = vpop.f32.mrf.mxu0
        %v3054 = vadd.f32 %v2885, %v3053
        %3055 = vmatmul.bf16.gmra.mxu0 %v1641
        %v3056 = vpop.f32.mrf.mxu0
        %v3057 = vadd.f32 %v2888, %v3056
        %v3058 = vpop.f32.mrf.mxu0
        %v3059 = vadd.f32 %v2890, %v3058
        %3060 = vmatmul.bf16.gmra.mxu0 %v1645
        %v3061 = vpop.f32.mrf.mxu0
        %v3062 = vadd.f32 %v2893, %v3061
        %v3063 = vpop.f32.mrf.mxu0
        %v3064 = vadd.f32 %v2895, %v3063
        %3065 = vmatmul.bf16.gmra.mxu0 %v1649
        %v3066 = vpop.f32.mrf.mxu0
        %v3067 = vadd.f32 %v2898, %v3066
        %v3068 = vpop.f32.mrf.mxu0
        %v3069 = vadd.f32 %v2900, %v3068
        %3070 = vmatmul.bf16.gmra.mxu0 %v1653
        %v3071 = vpop.f32.mrf.mxu0
        %v3072 = vadd.f32 %v2903, %v3071
        %v3073 = vpop.f32.mrf.mxu0
        %v3074 = vadd.f32 %v2905, %v3073
        %3075 = vmatmul.bf16.gmra.mxu0 %v1657
        %v3076 = vpop.f32.mrf.mxu0
        %v3077 = vadd.f32 %v2908, %v3076
        %v3078 = vpop.f32.mrf.mxu0
        %v3079 = vadd.f32 %v2910, %v3078
        %3080 = vmatmul.bf16.gmra.mxu0 %v1661
        %v3081 = vpop.f32.mrf.mxu0
        %v3082 = vadd.f32 %v2913, %v3081
        %v3083 = vpop.f32.mrf.mxu0
        %v3084 = vadd.f32 %v2915, %v3083
        %3085 = vmatmul.bf16.gmra.mxu0 %v1665
        %v3086 = vpop.f32.mrf.mxu0
        %v3087 = vadd.f32 %v2918, %v3086
        %v3088 = vpop.f32.mrf.mxu0
        %v3089 = vadd.f32 %v2920, %v3088
        %3090 = vmatmul.bf16.gmra.mxu0 %v1669
        %v3091 = vpop.f32.mrf.mxu0
        %v3092 = vadd.f32 %v2923, %v3091
        %v3093 = vpop.f32.mrf.mxu0
        %v3094 = vadd.f32 %v2925, %v3093
        %3095 = vmatmul.bf16.gmra.mxu0 %v1673
        %v3096 = vpop.f32.mrf.mxu0
        %v3097 = vadd.f32 %v2928, %v3096
        %v3098 = vpop.f32.mrf.mxu0
        %v3099 = vadd.f32 %v2930, %v3098
        %3100 = vmatmul.bf16.gmra.mxu0 %v1677
        %v3101 = vpop.f32.mrf.mxu0
        %v3102 = vadd.f32 %v2933, %v3101
        %v3103 = vpop.f32.mrf.mxu0
        %v3104 = vadd.f32 %v2935, %v3103
        %3105 = vmatmul.bf16.gmra.mxu0 %v1681
        %v3106 = vpop.f32.mrf.mxu0
        %v3107 = vadd.f32 %v2938, %v3106
        %v3108 = vpop.f32.mrf.mxu0
        %v3109 = vadd.f32 %v2940, %v3108
        %3110 = vmatmul.bf16.gmra.mxu0 %v1685
        %v3111 = vpop.f32.mrf.mxu0
        %v3112 = vadd.f32 %v2943, %v3111
        %v3113 = vpop.f32.mrf.mxu0
        %v3114 = vadd.f32 %v2945, %v3113
        %3115 = vmatmul.bf16.gmra.mxu0 %v1689
        %v3116 = vpop.f32.mrf.mxu0
        %v3117 = vadd.f32 %v2948, %v3116
        %v3118 = vpop.f32.mrf.mxu0
        %v3119 = vadd.f32 %v2950, %v3118
        %3120 = vmatmul.bf16.gmra.mxu0 %v1693
        %v3121 = vpop.f32.mrf.mxu0
        %v3122 = vadd.f32 %v2953, %v3121
        %v3123 = vpop.f32.mrf.mxu0
        %v3124 = vadd.f32 %v2955, %v3123
        %3125 = vmatmul.bf16.gmra.mxu0 %v1697
        %v3126 = vpop.f32.mrf.mxu0
        %v3127 = vadd.f32 %v2958, %v3126
        %v3128 = vpop.f32.mrf.mxu0
        %v3129 = vadd.f32 %v2960, %v3128
        %3130 = vmatmul.bf16.gmra.mxu0 %v1701
        %v3131 = vpop.f32.mrf.mxu0
        %v3132 = vadd.f32 %v2963, %v3131
        %v3133 = vpop.f32.mrf.mxu0
        %v3134 = vadd.f32 %v2965, %v3133
        %3135 = vmatmul.bf16.gmra.mxu0 %v1705
        %v3136 = vpop.f32.mrf.mxu0
        %v3137 = vadd.f32 %v2968, %v3136
        %v3138 = vpop.f32.mrf.mxu0
        %v3139 = vadd.f32 %v2970, %v3138
        %3140 = vmatmul.bf16.gmra.mxu0 %v1709
        %v3141 = vpop.f32.mrf.mxu0
        %v3142 = vadd.f32 %v2973, %v3141
        %v3143 = vpop.f32.mrf.mxu0
        %v3144 = vadd.f32 %v2975, %v3143
        %3145 = vmatmul.bf16.gmra.mxu0 %v1713
        %v3146 = vpop.f32.mrf.mxu0
        %v3147 = vadd.f32 %v2978, %v3146
        %v3148 = vpop.f32.mrf.mxu0
        %v3149 = vadd.f32 %v2980, %v3148
        %3150 = vmatmul.bf16.gmra.mxu0 %v1717
        %v3151 = vpop.f32.mrf.mxu0
        %v3152 = vadd.f32 %v2983, %v3151
        %v3153 = vpop.f32.mrf.mxu0
        %v3154 = vadd.f32 %v2985, %v3153
        %3155 = vmatmul.bf16.gmra.mxu0 %v1721
        %v3156 = vpop.f32.mrf.mxu0
        %v3157 = vadd.f32 %v2988, %v3156
        %v3158 = vpop.f32.mrf.mxu0
        %v3159 = vadd.f32 %v2990, %v3158
        %3160 = vmatmul.bf16.gmra.mxu0 %v1725
        %v3161 = vpop.f32.mrf.mxu0
        %v3162 = vadd.f32 %v2993, %v3161
        %v3163 = vpop.f32.mrf.mxu0
        %v3164 = vadd.f32 %v2995, %v3163
        %3165 = vmatmul.bf16.gmra.mxu0 %v1729
        %v3166 = vpop.f32.mrf.mxu0
        %v3167 = vadd.f32 %v2998, %v3166
        %v3168 = vpop.f32.mrf.mxu0
        %v3169 = vadd.f32 %v3000, %v3168
        %3170 = vmatmul.bf16.gmra.mxu0 %v1733
        %v3171 = vpop.f32.mrf.mxu0
        %v3172 = vadd.f32 %v3003, %v3171
        %v3173 = vpop.f32.mrf.mxu0
        %v3174 = vadd.f32 %v3005, %v3173
        %3175 = vmatmul.bf16.gmra.mxu0 %v1737
        %v3176 = vpop.f32.mrf.mxu0
        %v3177 = vadd.f32 %v3008, %v3176
        %v3178 = vpop.f32.mrf.mxu0
        %v3179 = vadd.f32 %v3010, %v3178
        %3180 = vmatmul.bf16.gmra.mxu0 %v1741
        %v3181 = vpop.f32.mrf.mxu0
        %v3182 = vadd.f32 %v3013, %v3181
        %v3183 = vpop.f32.mrf.mxu0
        %v3184 = vadd.f32 %v3015, %v3183
        %3185 = vdwg.mxu0
        %3186 = vmatpush.bf16.msra.mxu0 %v2283
        %3187 = vmatpush.bf16.msra.mxu0 %v2279
        %3188 = vmatpush.bf16.msra.mxu0 %v2275
        %3189 = vmatpush.bf16.msra.mxu0 %v2271
        %3190 = vmatpush.bf16.msra.mxu0 %v2267
        %3191 = vmatpush.bf16.msra.mxu0 %v2263
        %3192 = vmatpush.bf16.msra.mxu0 %v2259
        %3193 = vmatpush.bf16.msra.mxu0 %v2255
        %3194 = vmatmul.bf16.gmra.mxu0 %v1614
        %v3195 = vpop.f32.mrf.mxu0
        %v3196 = vadd.f32 0.0, %v3195
        %v3197 = vpop.f32.mrf.mxu0
        %v3198 = vadd.f32 0.0, %v3197
        %3199 = vmatmul.bf16.gmra.mxu0 %v1618
        %v3200 = vpop.f32.mrf.mxu0
        %v3201 = vadd.f32 0.0, %v3200
        %v3202 = vpop.f32.mrf.mxu0
        %v3203 = vadd.f32 0.0, %v3202
        %3204 = vmatmul.bf16.gmra.mxu0 %v1622
        %v3205 = vpop.f32.mrf.mxu0
        %v3206 = vadd.f32 0.0, %v3205
        %v3207 = vpop.f32.mrf.mxu0
        %v3208 = vadd.f32 0.0, %v3207
        %3209 = vmatmul.bf16.gmra.mxu0 %v1626
        %v3210 = vpop.f32.mrf.mxu0
        %v3211 = vadd.f32 0.0, %v3210
        %v3212 = vpop.f32.mrf.mxu0
        %v3213 = vadd.f32 0.0, %v3212
        %3214 = vmatmul.bf16.gmra.mxu0 %v1630
        %v3215 = vpop.f32.mrf.mxu0
        %v3216 = vadd.f32 0.0, %v3215
        %v3217 = vpop.f32.mrf.mxu0
        %v3218 = vadd.f32 0.0, %v3217
        %3219 = vmatmul.bf16.gmra.mxu0 %v1634
        %v3220 = vpop.f32.mrf.mxu0
        %v3221 = vadd.f32 0.0, %v3220
        %v3222 = vpop.f32.mrf.mxu0
        %v3223 = vadd.f32 0.0, %v3222
        %3224 = vmatmul.bf16.gmra.mxu0 %v1638
        %v3225 = vpop.f32.mrf.mxu0
        %v3226 = vadd.f32 0.0, %v3225
        %v3227 = vpop.f32.mrf.mxu0
        %v3228 = vadd.f32 0.0, %v3227
        %3229 = vmatmul.bf16.gmra.mxu0 %v1642
        %v3230 = vpop.f32.mrf.mxu0
        %v3231 = vadd.f32 0.0, %v3230
        %v3232 = vpop.f32.mrf.mxu0
        %v3233 = vadd.f32 0.0, %v3232
        %3234 = vmatmul.bf16.gmra.mxu0 %v1646
        %v3235 = vpop.f32.mrf.mxu0
        %v3236 = vadd.f32 0.0, %v3235
        %v3237 = vpop.f32.mrf.mxu0
        %v3238 = vadd.f32 0.0, %v3237
        %3239 = vmatmul.bf16.gmra.mxu0 %v1650
        %v3240 = vpop.f32.mrf.mxu0
        %v3241 = vadd.f32 0.0, %v3240
        %v3242 = vpop.f32.mrf.mxu0
        %v3243 = vadd.f32 0.0, %v3242
        %3244 = vmatmul.bf16.gmra.mxu0 %v1654
        %v3245 = vpop.f32.mrf.mxu0
        %v3246 = vadd.f32 0.0, %v3245
        %v3247 = vpop.f32.mrf.mxu0
        %v3248 = vadd.f32 0.0, %v3247
        %3249 = vmatmul.bf16.gmra.mxu0 %v1658
        %v3250 = vpop.f32.mrf.mxu0
        %v3251 = vadd.f32 0.0, %v3250
        %v3252 = vpop.f32.mrf.mxu0
        %v3253 = vadd.f32 0.0, %v3252
        %3254 = vmatmul.bf16.gmra.mxu0 %v1662
        %v3255 = vpop.f32.mrf.mxu0
        %v3256 = vadd.f32 0.0, %v3255
        %v3257 = vpop.f32.mrf.mxu0
        %v3258 = vadd.f32 0.0, %v3257
        %3259 = vmatmul.bf16.gmra.mxu0 %v1666
        %v3260 = vpop.f32.mrf.mxu0
        %v3261 = vadd.f32 0.0, %v3260
        %v3262 = vpop.f32.mrf.mxu0
        %v3263 = vadd.f32 0.0, %v3262
        %3264 = vmatmul.bf16.gmra.mxu0 %v1670
        %v3265 = vpop.f32.mrf.mxu0
        %v3266 = vadd.f32 0.0, %v3265
        %v3267 = vpop.f32.mrf.mxu0
        %v3268 = vadd.f32 0.0, %v3267
        %3269 = vmatmul.bf16.gmra.mxu0 %v1674
        %v3270 = vpop.f32.mrf.mxu0
        %v3271 = vadd.f32 0.0, %v3270
        %v3272 = vpop.f32.mrf.mxu0
        %v3273 = vadd.f32 0.0, %v3272
        %3274 = vmatmul.bf16.gmra.mxu0 %v1678
        %v3275 = vpop.f32.mrf.mxu0
        %v3276 = vadd.f32 0.0, %v3275
        %v3277 = vpop.f32.mrf.mxu0
        %v3278 = vadd.f32 0.0, %v3277
        %3279 = vmatmul.bf16.gmra.mxu0 %v1682
        %v3280 = vpop.f32.mrf.mxu0
        %v3281 = vadd.f32 0.0, %v3280
        %v3282 = vpop.f32.mrf.mxu0
        %v3283 = vadd.f32 0.0, %v3282
        %3284 = vmatmul.bf16.gmra.mxu0 %v1686
        %v3285 = vpop.f32.mrf.mxu0
        %v3286 = vadd.f32 0.0, %v3285
        %v3287 = vpop.f32.mrf.mxu0
        %v3288 = vadd.f32 0.0, %v3287
        %3289 = vmatmul.bf16.gmra.mxu0 %v1690
        %v3290 = vpop.f32.mrf.mxu0
        %v3291 = vadd.f32 0.0, %v3290
        %v3292 = vpop.f32.mrf.mxu0
        %v3293 = vadd.f32 0.0, %v3292
        %3294 = vmatmul.bf16.gmra.mxu0 %v1694
        %v3295 = vpop.f32.mrf.mxu0
        %v3296 = vadd.f32 0.0, %v3295
        %v3297 = vpop.f32.mrf.mxu0
        %v3298 = vadd.f32 0.0, %v3297
        %3299 = vmatmul.bf16.gmra.mxu0 %v1698
        %v3300 = vpop.f32.mrf.mxu0
        %v3301 = vadd.f32 0.0, %v3300
        %v3302 = vpop.f32.mrf.mxu0
        %v3303 = vadd.f32 0.0, %v3302
        %3304 = vmatmul.bf16.gmra.mxu0 %v1702
        %v3305 = vpop.f32.mrf.mxu0
        %v3306 = vadd.f32 0.0, %v3305
        %v3307 = vpop.f32.mrf.mxu0
        %v3308 = vadd.f32 0.0, %v3307
        %3309 = vmatmul.bf16.gmra.mxu0 %v1706
        %v3310 = vpop.f32.mrf.mxu0
        %v3311 = vadd.f32 0.0, %v3310
        %v3312 = vpop.f32.mrf.mxu0
        %v3313 = vadd.f32 0.0, %v3312
        %3314 = vmatmul.bf16.gmra.mxu0 %v1710
        %v3315 = vpop.f32.mrf.mxu0
        %v3316 = vadd.f32 0.0, %v3315
        %v3317 = vpop.f32.mrf.mxu0
        %v3318 = vadd.f32 0.0, %v3317
        %3319 = vmatmul.bf16.gmra.mxu0 %v1714
        %v3320 = vpop.f32.mrf.mxu0
        %v3321 = vadd.f32 0.0, %v3320
        %v3322 = vpop.f32.mrf.mxu0
        %v3323 = vadd.f32 0.0, %v3322
        %3324 = vmatmul.bf16.gmra.mxu0 %v1718
        %v3325 = vpop.f32.mrf.mxu0
        %v3326 = vadd.f32 0.0, %v3325
        %v3327 = vpop.f32.mrf.mxu0
        %v3328 = vadd.f32 0.0, %v3327
        %3329 = vmatmul.bf16.gmra.mxu0 %v1722
        %v3330 = vpop.f32.mrf.mxu0
        %v3331 = vadd.f32 0.0, %v3330
        %v3332 = vpop.f32.mrf.mxu0
        %v3333 = vadd.f32 0.0, %v3332
        %3334 = vmatmul.bf16.gmra.mxu0 %v1726
        %v3335 = vpop.f32.mrf.mxu0
        %v3336 = vadd.f32 0.0, %v3335
        %v3337 = vpop.f32.mrf.mxu0
        %v3338 = vadd.f32 0.0, %v3337
        %3339 = vmatmul.bf16.gmra.mxu0 %v1730
        %v3340 = vpop.f32.mrf.mxu0
        %v3341 = vadd.f32 0.0, %v3340
        %v3342 = vpop.f32.mrf.mxu0
        %v3343 = vadd.f32 0.0, %v3342
        %3344 = vmatmul.bf16.gmra.mxu0 %v1734
        %v3345 = vpop.f32.mrf.mxu0
        %v3346 = vadd.f32 0.0, %v3345
        %v3347 = vpop.f32.mrf.mxu0
        %v3348 = vadd.f32 0.0, %v3347
        %3349 = vmatmul.bf16.gmra.mxu0 %v1738
        %v3350 = vpop.f32.mrf.mxu0
        %v3351 = vadd.f32 0.0, %v3350
        %v3352 = vpop.f32.mrf.mxu0
        %v3353 = vadd.f32 0.0, %v3352
        %3354 = vdwg.mxu0
        %3355 = vmatpush.bf16.msra.mxu0 %v2315
        %3356 = vmatpush.bf16.msra.mxu0 %v2311
        %3357 = vmatpush.bf16.msra.mxu0 %v2307
        %3358 = vmatpush.bf16.msra.mxu0 %v2303
        %3359 = vmatpush.bf16.msra.mxu0 %v2299
        %3360 = vmatpush.bf16.msra.mxu0 %v2295
        %3361 = vmatpush.bf16.msra.mxu0 %v2291
        %3362 = vmatpush.bf16.msra.mxu0 %v2287
        %3363 = vmatmul.bf16.gmra.mxu0 %v1615
        %v3364 = vpop.f32.mrf.mxu0
        %v3365 = vadd.f32 %v3196, %v3364
        %v3366 = vpop.f32.mrf.mxu0
        %v3367 = vadd.f32 %v3198, %v3366
        %3368 = vmatmul.bf16.gmra.mxu0 %v1619
        %v3369 = vpop.f32.mrf.mxu0
        %v3370 = vadd.f32 %v3201, %v3369
        %v3371 = vpop.f32.mrf.mxu0
        %v3372 = vadd.f32 %v3203, %v3371
        %3373 = vmatmul.bf16.gmra.mxu0 %v1623
        %v3374 = vpop.f32.mrf.mxu0
        %v3375 = vadd.f32 %v3206, %v3374
        %v3376 = vpop.f32.mrf.mxu0
        %v3377 = vadd.f32 %v3208, %v3376
        %3378 = vmatmul.bf16.gmra.mxu0 %v1627
        %v3379 = vpop.f32.mrf.mxu0
        %v3380 = vadd.f32 %v3211, %v3379
        %v3381 = vpop.f32.mrf.mxu0
        %v3382 = vadd.f32 %v3213, %v3381
        %3383 = vmatmul.bf16.gmra.mxu0 %v1631
        %v3384 = vpop.f32.mrf.mxu0
        %v3385 = vadd.f32 %v3216, %v3384
        %v3386 = vpop.f32.mrf.mxu0
        %v3387 = vadd.f32 %v3218, %v3386
        %3388 = vmatmul.bf16.gmra.mxu0 %v1635
        %v3389 = vpop.f32.mrf.mxu0
        %v3390 = vadd.f32 %v3221, %v3389
        %v3391 = vpop.f32.mrf.mxu0
        %v3392 = vadd.f32 %v3223, %v3391
        %3393 = vmatmul.bf16.gmra.mxu0 %v1639
        %v3394 = vpop.f32.mrf.mxu0
        %v3395 = vadd.f32 %v3226, %v3394
        %v3396 = vpop.f32.mrf.mxu0
        %v3397 = vadd.f32 %v3228, %v3396
        %3398 = vmatmul.bf16.gmra.mxu0 %v1643
        %v3399 = vpop.f32.mrf.mxu0
        %v3400 = vadd.f32 %v3231, %v3399
        %v3401 = vpop.f32.mrf.mxu0
        %v3402 = vadd.f32 %v3233, %v3401
        %3403 = vmatmul.bf16.gmra.mxu0 %v1647
        %v3404 = vpop.f32.mrf.mxu0
        %v3405 = vadd.f32 %v3236, %v3404
        %v3406 = vpop.f32.mrf.mxu0
        %v3407 = vadd.f32 %v3238, %v3406
        %3408 = vmatmul.bf16.gmra.mxu0 %v1651
        %v3409 = vpop.f32.mrf.mxu0
        %v3410 = vadd.f32 %v3241, %v3409
        %v3411 = vpop.f32.mrf.mxu0
        %v3412 = vadd.f32 %v3243, %v3411
        %3413 = vmatmul.bf16.gmra.mxu0 %v1655
        %v3414 = vpop.f32.mrf.mxu0
        %v3415 = vadd.f32 %v3246, %v3414
        %v3416 = vpop.f32.mrf.mxu0
        %v3417 = vadd.f32 %v3248, %v3416
        %3418 = vmatmul.bf16.gmra.mxu0 %v1659
        %v3419 = vpop.f32.mrf.mxu0
        %v3420 = vadd.f32 %v3251, %v3419
        %v3421 = vpop.f32.mrf.mxu0
        %v3422 = vadd.f32 %v3253, %v3421
        %3423 = vmatmul.bf16.gmra.mxu0 %v1663
        %v3424 = vpop.f32.mrf.mxu0
        %v3425 = vadd.f32 %v3256, %v3424
        %v3426 = vpop.f32.mrf.mxu0
        %v3427 = vadd.f32 %v3258, %v3426
        %3428 = vmatmul.bf16.gmra.mxu0 %v1667
        %v3429 = vpop.f32.mrf.mxu0
        %v3430 = vadd.f32 %v3261, %v3429
        %v3431 = vpop.f32.mrf.mxu0
        %v3432 = vadd.f32 %v3263, %v3431
        %3433 = vmatmul.bf16.gmra.mxu0 %v1671
        %v3434 = vpop.f32.mrf.mxu0
        %v3435 = vadd.f32 %v3266, %v3434
        %v3436 = vpop.f32.mrf.mxu0
        %v3437 = vadd.f32 %v3268, %v3436
        %3438 = vmatmul.bf16.gmra.mxu0 %v1675
        %v3439 = vpop.f32.mrf.mxu0
        %v3440 = vadd.f32 %v3271, %v3439
        %v3441 = vpop.f32.mrf.mxu0
        %v3442 = vadd.f32 %v3273, %v3441
        %3443 = vmatmul.bf16.gmra.mxu0 %v1679
        %v3444 = vpop.f32.mrf.mxu0
        %v3445 = vadd.f32 %v3276, %v3444
        %v3446 = vpop.f32.mrf.mxu0
        %v3447 = vadd.f32 %v3278, %v3446
        %3448 = vmatmul.bf16.gmra.mxu0 %v1683
        %v3449 = vpop.f32.mrf.mxu0
        %v3450 = vadd.f32 %v3281, %v3449
        %v3451 = vpop.f32.mrf.mxu0
        %v3452 = vadd.f32 %v3283, %v3451
        %3453 = vmatmul.bf16.gmra.mxu0 %v1687
        %v3454 = vpop.f32.mrf.mxu0
        %v3455 = vadd.f32 %v3286, %v3454
        %v3456 = vpop.f32.mrf.mxu0
        %v3457 = vadd.f32 %v3288, %v3456
        %3458 = vmatmul.bf16.gmra.mxu0 %v1691
        %v3459 = vpop.f32.mrf.mxu0
        %v3460 = vadd.f32 %v3291, %v3459
        %v3461 = vpop.f32.mrf.mxu0
        %v3462 = vadd.f32 %v3293, %v3461
        %3463 = vmatmul.bf16.gmra.mxu0 %v1695
        %v3464 = vpop.f32.mrf.mxu0
        %v3465 = vadd.f32 %v3296, %v3464
        %v3466 = vpop.f32.mrf.mxu0
        %v3467 = vadd.f32 %v3298, %v3466
        %3468 = vmatmul.bf16.gmra.mxu0 %v1699
        %v3469 = vpop.f32.mrf.mxu0
        %v3470 = vadd.f32 %v3301, %v3469
        %v3471 = vpop.f32.mrf.mxu0
        %v3472 = vadd.f32 %v3303, %v3471
        %3473 = vmatmul.bf16.gmra.mxu0 %v1703
        %v3474 = vpop.f32.mrf.mxu0
        %v3475 = vadd.f32 %v3306, %v3474
        %v3476 = vpop.f32.mrf.mxu0
        %v3477 = vadd.f32 %v3308, %v3476
        %3478 = vmatmul.bf16.gmra.mxu0 %v1707
        %v3479 = vpop.f32.mrf.mxu0
        %v3480 = vadd.f32 %v3311, %v3479
        %v3481 = vpop.f32.mrf.mxu0
        %v3482 = vadd.f32 %v3313, %v3481
        %3483 = vmatmul.bf16.gmra.mxu0 %v1711
        %v3484 = vpop.f32.mrf.mxu0
        %v3485 = vadd.f32 %v3316, %v3484
        %v3486 = vpop.f32.mrf.mxu0
        %v3487 = vadd.f32 %v3318, %v3486
        %3488 = vmatmul.bf16.gmra.mxu0 %v1715
        %v3489 = vpop.f32.mrf.mxu0
        %v3490 = vadd.f32 %v3321, %v3489
        %v3491 = vpop.f32.mrf.mxu0
        %v3492 = vadd.f32 %v3323, %v3491
        %3493 = vmatmul.bf16.gmra.mxu0 %v1719
        %v3494 = vpop.f32.mrf.mxu0
        %v3495 = vadd.f32 %v3326, %v3494
        %v3496 = vpop.f32.mrf.mxu0
        %v3497 = vadd.f32 %v3328, %v3496
        %3498 = vmatmul.bf16.gmra.mxu0 %v1723
        %v3499 = vpop.f32.mrf.mxu0
        %v3500 = vadd.f32 %v3331, %v3499
        %v3501 = vpop.f32.mrf.mxu0
        %v3502 = vadd.f32 %v3333, %v3501
        %3503 = vmatmul.bf16.gmra.mxu0 %v1727
        %v3504 = vpop.f32.mrf.mxu0
        %v3505 = vadd.f32 %v3336, %v3504
        %v3506 = vpop.f32.mrf.mxu0
        %v3507 = vadd.f32 %v3338, %v3506
        %3508 = vmatmul.bf16.gmra.mxu0 %v1731
        %v3509 = vpop.f32.mrf.mxu0
        %v3510 = vadd.f32 %v3341, %v3509
        %v3511 = vpop.f32.mrf.mxu0
        %v3512 = vadd.f32 %v3343, %v3511
        %3513 = vmatmul.bf16.gmra.mxu0 %v1735
        %v3514 = vpop.f32.mrf.mxu0
        %v3515 = vadd.f32 %v3346, %v3514
        %v3516 = vpop.f32.mrf.mxu0
        %v3517 = vadd.f32 %v3348, %v3516
        %3518 = vmatmul.bf16.gmra.mxu0 %v1739
        %v3519 = vpop.f32.mrf.mxu0
        %v3520 = vadd.f32 %v3351, %v3519
        %v3521 = vpop.f32.mrf.mxu0
        %v3522 = vadd.f32 %v3353, %v3521
        %3523 = vdwg.mxu0
        %3524 = vmatpush.bf16.msra.mxu0 %v2347
        %3525 = vmatpush.bf16.msra.mxu0 %v2343
        %3526 = vmatpush.bf16.msra.mxu0 %v2339
        %3527 = vmatpush.bf16.msra.mxu0 %v2335
        %3528 = vmatpush.bf16.msra.mxu0 %v2331
        %3529 = vmatpush.bf16.msra.mxu0 %v2327
        %3530 = vmatpush.bf16.msra.mxu0 %v2323
        %3531 = vmatpush.bf16.msra.mxu0 %v2319
        %3532 = vmatmul.bf16.gmra.mxu0 %v1616
        %v3533 = vpop.f32.mrf.mxu0
        %v3534 = vadd.f32 %v3365, %v3533
        %v3535 = vpop.f32.mrf.mxu0
        %v3536 = vadd.f32 %v3367, %v3535
        %3537 = vmatmul.bf16.gmra.mxu0 %v1620
        %v3538 = vpop.f32.mrf.mxu0
        %v3539 = vadd.f32 %v3370, %v3538
        %v3540 = vpop.f32.mrf.mxu0
        %v3541 = vadd.f32 %v3372, %v3540
        %3542 = vmatmul.bf16.gmra.mxu0 %v1624
        %v3543 = vpop.f32.mrf.mxu0
        %v3544 = vadd.f32 %v3375, %v3543
        %v3545 = vpop.f32.mrf.mxu0
        %v3546 = vadd.f32 %v3377, %v3545
        %3547 = vmatmul.bf16.gmra.mxu0 %v1628
        %v3548 = vpop.f32.mrf.mxu0
        %v3549 = vadd.f32 %v3380, %v3548
        %v3550 = vpop.f32.mrf.mxu0
        %v3551 = vadd.f32 %v3382, %v3550
        %3552 = vmatmul.bf16.gmra.mxu0 %v1632
        %v3553 = vpop.f32.mrf.mxu0
        %v3554 = vadd.f32 %v3385, %v3553
        %v3555 = vpop.f32.mrf.mxu0
        %v3556 = vadd.f32 %v3387, %v3555
        %3557 = vmatmul.bf16.gmra.mxu0 %v1636
        %v3558 = vpop.f32.mrf.mxu0
        %v3559 = vadd.f32 %v3390, %v3558
        %v3560 = vpop.f32.mrf.mxu0
        %v3561 = vadd.f32 %v3392, %v3560
        %3562 = vmatmul.bf16.gmra.mxu0 %v1640
        %v3563 = vpop.f32.mrf.mxu0
        %v3564 = vadd.f32 %v3395, %v3563
        %v3565 = vpop.f32.mrf.mxu0
        %v3566 = vadd.f32 %v3397, %v3565
        %3567 = vmatmul.bf16.gmra.mxu0 %v1644
        %v3568 = vpop.f32.mrf.mxu0
        %v3569 = vadd.f32 %v3400, %v3568
        %v3570 = vpop.f32.mrf.mxu0
        %v3571 = vadd.f32 %v3402, %v3570
        %3572 = vmatmul.bf16.gmra.mxu0 %v1648
        %v3573 = vpop.f32.mrf.mxu0
        %v3574 = vadd.f32 %v3405, %v3573
        %v3575 = vpop.f32.mrf.mxu0
        %v3576 = vadd.f32 %v3407, %v3575
        %3577 = vmatmul.bf16.gmra.mxu0 %v1652
        %v3578 = vpop.f32.mrf.mxu0
        %v3579 = vadd.f32 %v3410, %v3578
        %v3580 = vpop.f32.mrf.mxu0
        %v3581 = vadd.f32 %v3412, %v3580
        %3582 = vmatmul.bf16.gmra.mxu0 %v1656
        %v3583 = vpop.f32.mrf.mxu0
        %v3584 = vadd.f32 %v3415, %v3583
        %v3585 = vpop.f32.mrf.mxu0
        %v3586 = vadd.f32 %v3417, %v3585
        %3587 = vmatmul.bf16.gmra.mxu0 %v1660
        %v3588 = vpop.f32.mrf.mxu0
        %v3589 = vadd.f32 %v3420, %v3588
        %v3590 = vpop.f32.mrf.mxu0
        %v3591 = vadd.f32 %v3422, %v3590
        %3592 = vmatmul.bf16.gmra.mxu0 %v1664
        %v3593 = vpop.f32.mrf.mxu0
        %v3594 = vadd.f32 %v3425, %v3593
        %v3595 = vpop.f32.mrf.mxu0
        %v3596 = vadd.f32 %v3427, %v3595
        %3597 = vmatmul.bf16.gmra.mxu0 %v1668
        %v3598 = vpop.f32.mrf.mxu0
        %v3599 = vadd.f32 %v3430, %v3598
        %v3600 = vpop.f32.mrf.mxu0
        %v3601 = vadd.f32 %v3432, %v3600
        %3602 = vmatmul.bf16.gmra.mxu0 %v1672
        %v3603 = vpop.f32.mrf.mxu0
        %v3604 = vadd.f32 %v3435, %v3603
        %v3605 = vpop.f32.mrf.mxu0
        %v3606 = vadd.f32 %v3437, %v3605
        %3607 = vmatmul.bf16.gmra.mxu0 %v1676
        %v3608 = vpop.f32.mrf.mxu0
        %v3609 = vadd.f32 %v3440, %v3608
        %v3610 = vpop.f32.mrf.mxu0
        %v3611 = vadd.f32 %v3442, %v3610
        %3612 = vmatmul.bf16.gmra.mxu0 %v1680
        %v3613 = vpop.f32.mrf.mxu0
        %v3614 = vadd.f32 %v3445, %v3613
        %v3615 = vpop.f32.mrf.mxu0
        %v3616 = vadd.f32 %v3447, %v3615
        %3617 = vmatmul.bf16.gmra.mxu0 %v1684
        %v3618 = vpop.f32.mrf.mxu0
        %v3619 = vadd.f32 %v3450, %v3618
        %v3620 = vpop.f32.mrf.mxu0
        %v3621 = vadd.f32 %v3452, %v3620
        %3622 = vmatmul.bf16.gmra.mxu0 %v1688
        %v3623 = vpop.f32.mrf.mxu0
        %v3624 = vadd.f32 %v3455, %v3623
        %v3625 = vpop.f32.mrf.mxu0
        %v3626 = vadd.f32 %v3457, %v3625
        %3627 = vmatmul.bf16.gmra.mxu0 %v1692
        %v3628 = vpop.f32.mrf.mxu0
        %v3629 = vadd.f32 %v3460, %v3628
        %v3630 = vpop.f32.mrf.mxu0
        %v3631 = vadd.f32 %v3462, %v3630
        %3632 = vmatmul.bf16.gmra.mxu0 %v1696
        %v3633 = vpop.f32.mrf.mxu0
        %v3634 = vadd.f32 %v3465, %v3633
        %v3635 = vpop.f32.mrf.mxu0
        %v3636 = vadd.f32 %v3467, %v3635
        %3637 = vmatmul.bf16.gmra.mxu0 %v1700
        %v3638 = vpop.f32.mrf.mxu0
        %v3639 = vadd.f32 %v3470, %v3638
        %v3640 = vpop.f32.mrf.mxu0
        %v3641 = vadd.f32 %v3472, %v3640
        %3642 = vmatmul.bf16.gmra.mxu0 %v1704
        %v3643 = vpop.f32.mrf.mxu0
        %v3644 = vadd.f32 %v3475, %v3643
        %v3645 = vpop.f32.mrf.mxu0
        %v3646 = vadd.f32 %v3477, %v3645
        %3647 = vmatmul.bf16.gmra.mxu0 %v1708
        %v3648 = vpop.f32.mrf.mxu0
        %v3649 = vadd.f32 %v3480, %v3648
        %v3650 = vpop.f32.mrf.mxu0
        %v3651 = vadd.f32 %v3482, %v3650
        %3652 = vmatmul.bf16.gmra.mxu0 %v1712
        %v3653 = vpop.f32.mrf.mxu0
        %v3654 = vadd.f32 %v3485, %v3653
        %v3655 = vpop.f32.mrf.mxu0
        %v3656 = vadd.f32 %v3487, %v3655
        %3657 = vmatmul.bf16.gmra.mxu0 %v1716
        %v3658 = vpop.f32.mrf.mxu0
        %v3659 = vadd.f32 %v3490, %v3658
        %v3660 = vpop.f32.mrf.mxu0
        %v3661 = vadd.f32 %v3492, %v3660
        %3662 = vmatmul.bf16.gmra.mxu0 %v1720
        %v3663 = vpop.f32.mrf.mxu0
        %v3664 = vadd.f32 %v3495, %v3663
        %v3665 = vpop.f32.mrf.mxu0
        %v3666 = vadd.f32 %v3497, %v3665
        %3667 = vmatmul.bf16.gmra.mxu0 %v1724
        %v3668 = vpop.f32.mrf.mxu0
        %v3669 = vadd.f32 %v3500, %v3668
        %v3670 = vpop.f32.mrf.mxu0
        %v3671 = vadd.f32 %v3502, %v3670
        %3672 = vmatmul.bf16.gmra.mxu0 %v1728
        %v3673 = vpop.f32.mrf.mxu0
        %v3674 = vadd.f32 %v3505, %v3673
        %v3675 = vpop.f32.mrf.mxu0
        %v3676 = vadd.f32 %v3507, %v3675
        %3677 = vmatmul.bf16.gmra.mxu0 %v1732
        %v3678 = vpop.f32.mrf.mxu0
        %v3679 = vadd.f32 %v3510, %v3678
        %v3680 = vpop.f32.mrf.mxu0
        %v3681 = vadd.f32 %v3512, %v3680
        %3682 = vmatmul.bf16.gmra.mxu0 %v1736
        %v3683 = vpop.f32.mrf.mxu0
        %v3684 = vadd.f32 %v3515, %v3683
        %v3685 = vpop.f32.mrf.mxu0
        %v3686 = vadd.f32 %v3517, %v3685
        %3687 = vmatmul.bf16.gmra.mxu0 %v1740
        %v3688 = vpop.f32.mrf.mxu0
        %v3689 = vadd.f32 %v3520, %v3688
        %v3690 = vpop.f32.mrf.mxu0
        %v3691 = vadd.f32 %v3522, %v3690
        %3692 = vdwg.mxu0
        %3693 = vmatpush.bf16.msra.mxu0 %v2379
        %3694 = vmatpush.bf16.msra.mxu0 %v2375
        %3695 = vmatpush.bf16.msra.mxu0 %v2371
        %3696 = vmatpush.bf16.msra.mxu0 %v2367
        %3697 = vmatpush.bf16.msra.mxu0 %v2363
        %3698 = vmatpush.bf16.msra.mxu0 %v2359
        %3699 = vmatpush.bf16.msra.mxu0 %v2355
        %3700 = vmatpush.bf16.msra.mxu0 %v2351
        %3701 = vmatmul.bf16.gmra.mxu0 %v1617
        %v3702 = vpop.f32.mrf.mxu0
        %v3703 = vadd.f32 %v3534, %v3702
        %v3704 = vpop.f32.mrf.mxu0
        %v3705 = vadd.f32 %v3536, %v3704
        %3706 = vmatmul.bf16.gmra.mxu0 %v1621
        %v3707 = vpop.f32.mrf.mxu0
        %v3708 = vadd.f32 %v3539, %v3707
        %v3709 = vpop.f32.mrf.mxu0
        %v3710 = vadd.f32 %v3541, %v3709
        %3711 = vmatmul.bf16.gmra.mxu0 %v1625
        %v3712 = vpop.f32.mrf.mxu0
        %v3713 = vadd.f32 %v3544, %v3712
        %v3714 = vpop.f32.mrf.mxu0
        %v3715 = vadd.f32 %v3546, %v3714
        %3716 = vmatmul.bf16.gmra.mxu0 %v1629
        %v3717 = vpop.f32.mrf.mxu0
        %v3718 = vadd.f32 %v3549, %v3717
        %v3719 = vpop.f32.mrf.mxu0
        %v3720 = vadd.f32 %v3551, %v3719
        %3721 = vmatmul.bf16.gmra.mxu0 %v1633
        %v3722 = vpop.f32.mrf.mxu0
        %v3723 = vadd.f32 %v3554, %v3722
        %v3724 = vpop.f32.mrf.mxu0
        %v3725 = vadd.f32 %v3556, %v3724
        %3726 = vmatmul.bf16.gmra.mxu0 %v1637
        %v3727 = vpop.f32.mrf.mxu0
        %v3728 = vadd.f32 %v3559, %v3727
        %v3729 = vpop.f32.mrf.mxu0
        %v3730 = vadd.f32 %v3561, %v3729
        %3731 = vmatmul.bf16.gmra.mxu0 %v1641
        %v3732 = vpop.f32.mrf.mxu0
        %v3733 = vadd.f32 %v3564, %v3732
        %v3734 = vpop.f32.mrf.mxu0
        %v3735 = vadd.f32 %v3566, %v3734
        %3736 = vmatmul.bf16.gmra.mxu0 %v1645
        %v3737 = vpop.f32.mrf.mxu0
        %v3738 = vadd.f32 %v3569, %v3737
        %v3739 = vpop.f32.mrf.mxu0
        %v3740 = vadd.f32 %v3571, %v3739
        %3741 = vmatmul.bf16.gmra.mxu0 %v1649
        %v3742 = vpop.f32.mrf.mxu0
        %v3743 = vadd.f32 %v3574, %v3742
        %v3744 = vpop.f32.mrf.mxu0
        %v3745 = vadd.f32 %v3576, %v3744
        %3746 = vmatmul.bf16.gmra.mxu0 %v1653
        %v3747 = vpop.f32.mrf.mxu0
        %v3748 = vadd.f32 %v3579, %v3747
        %v3749 = vpop.f32.mrf.mxu0
        %v3750 = vadd.f32 %v3581, %v3749
        %3751 = vmatmul.bf16.gmra.mxu0 %v1657
        %v3752 = vpop.f32.mrf.mxu0
        %v3753 = vadd.f32 %v3584, %v3752
        %v3754 = vpop.f32.mrf.mxu0
        %v3755 = vadd.f32 %v3586, %v3754
        %3756 = vmatmul.bf16.gmra.mxu0 %v1661
        %v3757 = vpop.f32.mrf.mxu0
        %v3758 = vadd.f32 %v3589, %v3757
        %v3759 = vpop.f32.mrf.mxu0
        %v3760 = vadd.f32 %v3591, %v3759
        %3761 = vmatmul.bf16.gmra.mxu0 %v1665
        %v3762 = vpop.f32.mrf.mxu0
        %v3763 = vadd.f32 %v3594, %v3762
        %v3764 = vpop.f32.mrf.mxu0
        %v3765 = vadd.f32 %v3596, %v3764
        %3766 = vmatmul.bf16.gmra.mxu0 %v1669
        %v3767 = vpop.f32.mrf.mxu0
        %v3768 = vadd.f32 %v3599, %v3767
        %v3769 = vpop.f32.mrf.mxu0
        %v3770 = vadd.f32 %v3601, %v3769
        %3771 = vmatmul.bf16.gmra.mxu0 %v1673
        %v3772 = vpop.f32.mrf.mxu0
        %v3773 = vadd.f32 %v3604, %v3772
        %v3774 = vpop.f32.mrf.mxu0
        %v3775 = vadd.f32 %v3606, %v3774
        %3776 = vmatmul.bf16.gmra.mxu0 %v1677
        %v3777 = vpop.f32.mrf.mxu0
        %v3778 = vadd.f32 %v3609, %v3777
        %v3779 = vpop.f32.mrf.mxu0
        %v3780 = vadd.f32 %v3611, %v3779
        %3781 = vmatmul.bf16.gmra.mxu0 %v1681
        %v3782 = vpop.f32.mrf.mxu0
        %v3783 = vadd.f32 %v3614, %v3782
        %v3784 = vpop.f32.mrf.mxu0
        %v3785 = vadd.f32 %v3616, %v3784
        %3786 = vmatmul.bf16.gmra.mxu0 %v1685
        %v3787 = vpop.f32.mrf.mxu0
        %v3788 = vadd.f32 %v3619, %v3787
        %v3789 = vpop.f32.mrf.mxu0
        %v3790 = vadd.f32 %v3621, %v3789
        %3791 = vmatmul.bf16.gmra.mxu0 %v1689
        %v3792 = vpop.f32.mrf.mxu0
        %v3793 = vadd.f32 %v3624, %v3792
        %v3794 = vpop.f32.mrf.mxu0
        %v3795 = vadd.f32 %v3626, %v3794
        %3796 = vmatmul.bf16.gmra.mxu0 %v1693
        %v3797 = vpop.f32.mrf.mxu0
        %v3798 = vadd.f32 %v3629, %v3797
        %v3799 = vpop.f32.mrf.mxu0
        %v3800 = vadd.f32 %v3631, %v3799
        %3801 = vmatmul.bf16.gmra.mxu0 %v1697
        %v3802 = vpop.f32.mrf.mxu0
        %v3803 = vadd.f32 %v3634, %v3802
        %v3804 = vpop.f32.mrf.mxu0
        %v3805 = vadd.f32 %v3636, %v3804
        %3806 = vmatmul.bf16.gmra.mxu0 %v1701
        %v3807 = vpop.f32.mrf.mxu0
        %v3808 = vadd.f32 %v3639, %v3807
        %v3809 = vpop.f32.mrf.mxu0
        %v3810 = vadd.f32 %v3641, %v3809
        %3811 = vmatmul.bf16.gmra.mxu0 %v1705
        %v3812 = vpop.f32.mrf.mxu0
        %v3813 = vadd.f32 %v3644, %v3812
        %v3814 = vpop.f32.mrf.mxu0
        %v3815 = vadd.f32 %v3646, %v3814
        %3816 = vmatmul.bf16.gmra.mxu0 %v1709
        %v3817 = vpop.f32.mrf.mxu0
        %v3818 = vadd.f32 %v3649, %v3817
        %v3819 = vpop.f32.mrf.mxu0
        %v3820 = vadd.f32 %v3651, %v3819
        %3821 = vmatmul.bf16.gmra.mxu0 %v1713
        %v3822 = vpop.f32.mrf.mxu0
        %v3823 = vadd.f32 %v3654, %v3822
        %v3824 = vpop.f32.mrf.mxu0
        %v3825 = vadd.f32 %v3656, %v3824
        %3826 = vmatmul.bf16.gmra.mxu0 %v1717
        %v3827 = vpop.f32.mrf.mxu0
        %v3828 = vadd.f32 %v3659, %v3827
        %v3829 = vpop.f32.mrf.mxu0
        %v3830 = vadd.f32 %v3661, %v3829
        %3831 = vmatmul.bf16.gmra.mxu0 %v1721
        %v3832 = vpop.f32.mrf.mxu0
        %v3833 = vadd.f32 %v3664, %v3832
        %v3834 = vpop.f32.mrf.mxu0
        %v3835 = vadd.f32 %v3666, %v3834
        %3836 = vmatmul.bf16.gmra.mxu0 %v1725
        %v3837 = vpop.f32.mrf.mxu0
        %v3838 = vadd.f32 %v3669, %v3837
        %v3839 = vpop.f32.mrf.mxu0
        %v3840 = vadd.f32 %v3671, %v3839
        %3841 = vmatmul.bf16.gmra.mxu0 %v1729
        %v3842 = vpop.f32.mrf.mxu0
        %v3843 = vadd.f32 %v3674, %v3842
        %v3844 = vpop.f32.mrf.mxu0
        %v3845 = vadd.f32 %v3676, %v3844
        %3846 = vmatmul.bf16.gmra.mxu0 %v1733
        %v3847 = vpop.f32.mrf.mxu0
        %v3848 = vadd.f32 %v3679, %v3847
        %v3849 = vpop.f32.mrf.mxu0
        %v3850 = vadd.f32 %v3681, %v3849
        %3851 = vmatmul.bf16.gmra.mxu0 %v1737
        %v3852 = vpop.f32.mrf.mxu0
        %v3853 = vadd.f32 %v3684, %v3852
        %v3854 = vpop.f32.mrf.mxu0
        %v3855 = vadd.f32 %v3686, %v3854
        %3856 = vmatmul.bf16.gmra.mxu0 %v1741
        %v3857 = vpop.f32.mrf.mxu0
        %v3858 = vadd.f32 %v3689, %v3857
        %v3859 = vpop.f32.mrf.mxu0
        %v3860 = vadd.f32 %v3691, %v3859
        %3861 = vdwg.mxu0
        %3862 = vmatpush.bf16.msra.mxu0 %v2284
        %3863 = vmatpush.bf16.msra.mxu0 %v2280
        %3864 = vmatpush.bf16.msra.mxu0 %v2276
        %3865 = vmatpush.bf16.msra.mxu0 %v2272
        %3866 = vmatpush.bf16.msra.mxu0 %v2268
        %3867 = vmatpush.bf16.msra.mxu0 %v2264
        %3868 = vmatpush.bf16.msra.mxu0 %v2260
        %3869 = vmatpush.bf16.msra.mxu0 %v2256
        %3870 = vmatmul.bf16.gmra.mxu0 %v1614
        %v3871 = vpop.f32.mrf.mxu0
        %v3872 = vadd.f32 0.0, %v3871
        %v3873 = vpop.f32.mrf.mxu0
        %v3874 = vadd.f32 0.0, %v3873
        %3875 = vmatmul.bf16.gmra.mxu0 %v1618
        %v3876 = vpop.f32.mrf.mxu0
        %v3877 = vadd.f32 0.0, %v3876
        %v3878 = vpop.f32.mrf.mxu0
        %v3879 = vadd.f32 0.0, %v3878
        %3880 = vmatmul.bf16.gmra.mxu0 %v1622
        %v3881 = vpop.f32.mrf.mxu0
        %v3882 = vadd.f32 0.0, %v3881
        %v3883 = vpop.f32.mrf.mxu0
        %v3884 = vadd.f32 0.0, %v3883
        %3885 = vmatmul.bf16.gmra.mxu0 %v1626
        %v3886 = vpop.f32.mrf.mxu0
        %v3887 = vadd.f32 0.0, %v3886
        %v3888 = vpop.f32.mrf.mxu0
        %v3889 = vadd.f32 0.0, %v3888
        %3890 = vmatmul.bf16.gmra.mxu0 %v1630
        %v3891 = vpop.f32.mrf.mxu0
        %v3892 = vadd.f32 0.0, %v3891
        %v3893 = vpop.f32.mrf.mxu0
        %v3894 = vadd.f32 0.0, %v3893
        %3895 = vmatmul.bf16.gmra.mxu0 %v1634
        %v3896 = vpop.f32.mrf.mxu0
        %v3897 = vadd.f32 0.0, %v3896
        %v3898 = vpop.f32.mrf.mxu0
        %v3899 = vadd.f32 0.0, %v3898
        %3900 = vmatmul.bf16.gmra.mxu0 %v1638
        %v3901 = vpop.f32.mrf.mxu0
        %v3902 = vadd.f32 0.0, %v3901
        %v3903 = vpop.f32.mrf.mxu0
        %v3904 = vadd.f32 0.0, %v3903
        %3905 = vmatmul.bf16.gmra.mxu0 %v1642
        %v3906 = vpop.f32.mrf.mxu0
        %v3907 = vadd.f32 0.0, %v3906
        %v3908 = vpop.f32.mrf.mxu0
        %v3909 = vadd.f32 0.0, %v3908
        %3910 = vmatmul.bf16.gmra.mxu0 %v1646
        %v3911 = vpop.f32.mrf.mxu0
        %v3912 = vadd.f32 0.0, %v3911
        %v3913 = vpop.f32.mrf.mxu0
        %v3914 = vadd.f32 0.0, %v3913
        %3915 = vmatmul.bf16.gmra.mxu0 %v1650
        %v3916 = vpop.f32.mrf.mxu0
        %v3917 = vadd.f32 0.0, %v3916
        %v3918 = vpop.f32.mrf.mxu0
        %v3919 = vadd.f32 0.0, %v3918
        %3920 = vmatmul.bf16.gmra.mxu0 %v1654
        %v3921 = vpop.f32.mrf.mxu0
        %v3922 = vadd.f32 0.0, %v3921
        %v3923 = vpop.f32.mrf.mxu0
        %v3924 = vadd.f32 0.0, %v3923
        %3925 = vmatmul.bf16.gmra.mxu0 %v1658
        %v3926 = vpop.f32.mrf.mxu0
        %v3927 = vadd.f32 0.0, %v3926
        %v3928 = vpop.f32.mrf.mxu0
        %v3929 = vadd.f32 0.0, %v3928
        %3930 = vmatmul.bf16.gmra.mxu0 %v1662
        %v3931 = vpop.f32.mrf.mxu0
        %v3932 = vadd.f32 0.0, %v3931
        %v3933 = vpop.f32.mrf.mxu0
        %v3934 = vadd.f32 0.0, %v3933
        %3935 = vmatmul.bf16.gmra.mxu0 %v1666
        %v3936 = vpop.f32.mrf.mxu0
        %v3937 = vadd.f32 0.0, %v3936
        %v3938 = vpop.f32.mrf.mxu0
        %v3939 = vadd.f32 0.0, %v3938
        %3940 = vmatmul.bf16.gmra.mxu0 %v1670
        %v3941 = vpop.f32.mrf.mxu0
        %v3942 = vadd.f32 0.0, %v3941
        %v3943 = vpop.f32.mrf.mxu0
        %v3944 = vadd.f32 0.0, %v3943
        %3945 = vmatmul.bf16.gmra.mxu0 %v1674
        %v3946 = vpop.f32.mrf.mxu0
        %v3947 = vadd.f32 0.0, %v3946
        %v3948 = vpop.f32.mrf.mxu0
        %v3949 = vadd.f32 0.0, %v3948
        %3950 = vmatmul.bf16.gmra.mxu0 %v1678
        %v3951 = vpop.f32.mrf.mxu0
        %v3952 = vadd.f32 0.0, %v3951
        %v3953 = vpop.f32.mrf.mxu0
        %v3954 = vadd.f32 0.0, %v3953
        %3955 = vmatmul.bf16.gmra.mxu0 %v1682
        %v3956 = vpop.f32.mrf.mxu0
        %v3957 = vadd.f32 0.0, %v3956
        %v3958 = vpop.f32.mrf.mxu0
        %v3959 = vadd.f32 0.0, %v3958
        %3960 = vmatmul.bf16.gmra.mxu0 %v1686
        %v3961 = vpop.f32.mrf.mxu0
        %v3962 = vadd.f32 0.0, %v3961
        %v3963 = vpop.f32.mrf.mxu0
        %v3964 = vadd.f32 0.0, %v3963
        %3965 = vmatmul.bf16.gmra.mxu0 %v1690
        %v3966 = vpop.f32.mrf.mxu0
        %v3967 = vadd.f32 0.0, %v3966
        %v3968 = vpop.f32.mrf.mxu0
        %v3969 = vadd.f32 0.0, %v3968
        %3970 = vmatmul.bf16.gmra.mxu0 %v1694
        %v3971 = vpop.f32.mrf.mxu0
        %v3972 = vadd.f32 0.0, %v3971
        %v3973 = vpop.f32.mrf.mxu0
        %v3974 = vadd.f32 0.0, %v3973
        %3975 = vmatmul.bf16.gmra.mxu0 %v1698
        %v3976 = vpop.f32.mrf.mxu0
        %v3977 = vadd.f32 0.0, %v3976
        %v3978 = vpop.f32.mrf.mxu0
        %v3979 = vadd.f32 0.0, %v3978
        %3980 = vmatmul.bf16.gmra.mxu0 %v1702
        %v3981 = vpop.f32.mrf.mxu0
        %v3982 = vadd.f32 0.0, %v3981
        %v3983 = vpop.f32.mrf.mxu0
        %v3984 = vadd.f32 0.0, %v3983
        %3985 = vmatmul.bf16.gmra.mxu0 %v1706
        %v3986 = vpop.f32.mrf.mxu0
        %v3987 = vadd.f32 0.0, %v3986
        %v3988 = vpop.f32.mrf.mxu0
        %v3989 = vadd.f32 0.0, %v3988
        %3990 = vmatmul.bf16.gmra.mxu0 %v1710
        %v3991 = vpop.f32.mrf.mxu0
        %v3992 = vadd.f32 0.0, %v3991
        %v3993 = vpop.f32.mrf.mxu0
        %v3994 = vadd.f32 0.0, %v3993
        %3995 = vmatmul.bf16.gmra.mxu0 %v1714
        %v3996 = vpop.f32.mrf.mxu0
        %v3997 = vadd.f32 0.0, %v3996
        %v3998 = vpop.f32.mrf.mxu0
        %v3999 = vadd.f32 0.0, %v3998
        %4000 = vmatmul.bf16.gmra.mxu0 %v1718
        %v4001 = vpop.f32.mrf.mxu0
        %v4002 = vadd.f32 0.0, %v4001
        %v4003 = vpop.f32.mrf.mxu0
        %v4004 = vadd.f32 0.0, %v4003
        %4005 = vmatmul.bf16.gmra.mxu0 %v1722
        %v4006 = vpop.f32.mrf.mxu0
        %v4007 = vadd.f32 0.0, %v4006
        %v4008 = vpop.f32.mrf.mxu0
        %v4009 = vadd.f32 0.0, %v4008
        %4010 = vmatmul.bf16.gmra.mxu0 %v1726
        %v4011 = vpop.f32.mrf.mxu0
        %v4012 = vadd.f32 0.0, %v4011
        %v4013 = vpop.f32.mrf.mxu0
        %v4014 = vadd.f32 0.0, %v4013
        %4015 = vmatmul.bf16.gmra.mxu0 %v1730
        %v4016 = vpop.f32.mrf.mxu0
        %v4017 = vadd.f32 0.0, %v4016
        %v4018 = vpop.f32.mrf.mxu0
        %v4019 = vadd.f32 0.0, %v4018
        %4020 = vmatmul.bf16.gmra.mxu0 %v1734
        %v4021 = vpop.f32.mrf.mxu0
        %v4022 = vadd.f32 0.0, %v4021
        %v4023 = vpop.f32.mrf.mxu0
        %v4024 = vadd.f32 0.0, %v4023
        %4025 = vmatmul.bf16.gmra.mxu0 %v1738
        %v4026 = vpop.f32.mrf.mxu0
        %v4027 = vadd.f32 0.0, %v4026
        %v4028 = vpop.f32.mrf.mxu0
        %v4029 = vadd.f32 0.0, %v4028
        %4030 = vdwg.mxu0
        %4031 = vmatpush.bf16.msra.mxu0 %v2316
        %4032 = vmatpush.bf16.msra.mxu0 %v2312
        %4033 = vmatpush.bf16.msra.mxu0 %v2308
        %4034 = vmatpush.bf16.msra.mxu0 %v2304
        %4035 = vmatpush.bf16.msra.mxu0 %v2300
        %4036 = vmatpush.bf16.msra.mxu0 %v2296
        %4037 = vmatpush.bf16.msra.mxu0 %v2292
        %4038 = vmatpush.bf16.msra.mxu0 %v2288
        %4039 = vmatmul.bf16.gmra.mxu0 %v1615
        %v4040 = vpop.f32.mrf.mxu0
        %v4041 = vadd.f32 %v3872, %v4040
        %v4042 = vpop.f32.mrf.mxu0
        %v4043 = vadd.f32 %v3874, %v4042
        %4044 = vmatmul.bf16.gmra.mxu0 %v1619
        %v4045 = vpop.f32.mrf.mxu0
        %v4046 = vadd.f32 %v3877, %v4045
        %v4047 = vpop.f32.mrf.mxu0
        %v4048 = vadd.f32 %v3879, %v4047
        %4049 = vmatmul.bf16.gmra.mxu0 %v1623
        %v4050 = vpop.f32.mrf.mxu0
        %v4051 = vadd.f32 %v3882, %v4050
        %v4052 = vpop.f32.mrf.mxu0
        %v4053 = vadd.f32 %v3884, %v4052
        %4054 = vmatmul.bf16.gmra.mxu0 %v1627
        %v4055 = vpop.f32.mrf.mxu0
        %v4056 = vadd.f32 %v3887, %v4055
        %v4057 = vpop.f32.mrf.mxu0
        %v4058 = vadd.f32 %v3889, %v4057
        %4059 = vmatmul.bf16.gmra.mxu0 %v1631
        %v4060 = vpop.f32.mrf.mxu0
        %v4061 = vadd.f32 %v3892, %v4060
        %v4062 = vpop.f32.mrf.mxu0
        %v4063 = vadd.f32 %v3894, %v4062
        %4064 = vmatmul.bf16.gmra.mxu0 %v1635
        %v4065 = vpop.f32.mrf.mxu0
        %v4066 = vadd.f32 %v3897, %v4065
        %v4067 = vpop.f32.mrf.mxu0
        %v4068 = vadd.f32 %v3899, %v4067
        %4069 = vmatmul.bf16.gmra.mxu0 %v1639
        %v4070 = vpop.f32.mrf.mxu0
        %v4071 = vadd.f32 %v3902, %v4070
        %v4072 = vpop.f32.mrf.mxu0
        %v4073 = vadd.f32 %v3904, %v4072
        %4074 = vmatmul.bf16.gmra.mxu0 %v1643
        %v4075 = vpop.f32.mrf.mxu0
        %v4076 = vadd.f32 %v3907, %v4075
        %v4077 = vpop.f32.mrf.mxu0
        %v4078 = vadd.f32 %v3909, %v4077
        %4079 = vmatmul.bf16.gmra.mxu0 %v1647
        %v4080 = vpop.f32.mrf.mxu0
        %v4081 = vadd.f32 %v3912, %v4080
        %v4082 = vpop.f32.mrf.mxu0
        %v4083 = vadd.f32 %v3914, %v4082
        %4084 = vmatmul.bf16.gmra.mxu0 %v1651
        %v4085 = vpop.f32.mrf.mxu0
        %v4086 = vadd.f32 %v3917, %v4085
        %v4087 = vpop.f32.mrf.mxu0
        %v4088 = vadd.f32 %v3919, %v4087
        %4089 = vmatmul.bf16.gmra.mxu0 %v1655
        %v4090 = vpop.f32.mrf.mxu0
        %v4091 = vadd.f32 %v3922, %v4090
        %v4092 = vpop.f32.mrf.mxu0
        %v4093 = vadd.f32 %v3924, %v4092
        %4094 = vmatmul.bf16.gmra.mxu0 %v1659
        %v4095 = vpop.f32.mrf.mxu0
        %v4096 = vadd.f32 %v3927, %v4095
        %v4097 = vpop.f32.mrf.mxu0
        %v4098 = vadd.f32 %v3929, %v4097
        %4099 = vmatmul.bf16.gmra.mxu0 %v1663
        %v4100 = vpop.f32.mrf.mxu0
        %v4101 = vadd.f32 %v3932, %v4100
        %v4102 = vpop.f32.mrf.mxu0
        %v4103 = vadd.f32 %v3934, %v4102
        %4104 = vmatmul.bf16.gmra.mxu0 %v1667
        %v4105 = vpop.f32.mrf.mxu0
        %v4106 = vadd.f32 %v3937, %v4105
        %v4107 = vpop.f32.mrf.mxu0
        %v4108 = vadd.f32 %v3939, %v4107
        %4109 = vmatmul.bf16.gmra.mxu0 %v1671
        %v4110 = vpop.f32.mrf.mxu0
        %v4111 = vadd.f32 %v3942, %v4110
        %v4112 = vpop.f32.mrf.mxu0
        %v4113 = vadd.f32 %v3944, %v4112
        %4114 = vmatmul.bf16.gmra.mxu0 %v1675
        %v4115 = vpop.f32.mrf.mxu0
        %v4116 = vadd.f32 %v3947, %v4115
        %v4117 = vpop.f32.mrf.mxu0
        %v4118 = vadd.f32 %v3949, %v4117
        %4119 = vmatmul.bf16.gmra.mxu0 %v1679
        %v4120 = vpop.f32.mrf.mxu0
        %v4121 = vadd.f32 %v3952, %v4120
        %v4122 = vpop.f32.mrf.mxu0
        %v4123 = vadd.f32 %v3954, %v4122
        %4124 = vmatmul.bf16.gmra.mxu0 %v1683
        %v4125 = vpop.f32.mrf.mxu0
        %v4126 = vadd.f32 %v3957, %v4125
        %v4127 = vpop.f32.mrf.mxu0
        %v4128 = vadd.f32 %v3959, %v4127
        %4129 = vmatmul.bf16.gmra.mxu0 %v1687
        %v4130 = vpop.f32.mrf.mxu0
        %v4131 = vadd.f32 %v3962, %v4130
        %v4132 = vpop.f32.mrf.mxu0
        %v4133 = vadd.f32 %v3964, %v4132
        %4134 = vmatmul.bf16.gmra.mxu0 %v1691
        %v4135 = vpop.f32.mrf.mxu0
        %v4136 = vadd.f32 %v3967, %v4135
        %v4137 = vpop.f32.mrf.mxu0
        %v4138 = vadd.f32 %v3969, %v4137
        %4139 = vmatmul.bf16.gmra.mxu0 %v1695
        %v4140 = vpop.f32.mrf.mxu0
        %v4141 = vadd.f32 %v3972, %v4140
        %v4142 = vpop.f32.mrf.mxu0
        %v4143 = vadd.f32 %v3974, %v4142
        %4144 = vmatmul.bf16.gmra.mxu0 %v1699
        %v4145 = vpop.f32.mrf.mxu0
        %v4146 = vadd.f32 %v3977, %v4145
        %v4147 = vpop.f32.mrf.mxu0
        %v4148 = vadd.f32 %v3979, %v4147
        %4149 = vmatmul.bf16.gmra.mxu0 %v1703
        %v4150 = vpop.f32.mrf.mxu0
        %v4151 = vadd.f32 %v3982, %v4150
        %v4152 = vpop.f32.mrf.mxu0
        %v4153 = vadd.f32 %v3984, %v4152
        %4154 = vmatmul.bf16.gmra.mxu0 %v1707
        %v4155 = vpop.f32.mrf.mxu0
        %v4156 = vadd.f32 %v3987, %v4155
        %v4157 = vpop.f32.mrf.mxu0
        %v4158 = vadd.f32 %v3989, %v4157
        %4159 = vmatmul.bf16.gmra.mxu0 %v1711
        %v4160 = vpop.f32.mrf.mxu0
        %v4161 = vadd.f32 %v3992, %v4160
        %v4162 = vpop.f32.mrf.mxu0
        %v4163 = vadd.f32 %v3994, %v4162
        %4164 = vmatmul.bf16.gmra.mxu0 %v1715
        %v4165 = vpop.f32.mrf.mxu0
        %v4166 = vadd.f32 %v3997, %v4165
        %v4167 = vpop.f32.mrf.mxu0
        %v4168 = vadd.f32 %v3999, %v4167
        %4169 = vmatmul.bf16.gmra.mxu0 %v1719
        %v4170 = vpop.f32.mrf.mxu0
        %v4171 = vadd.f32 %v4002, %v4170
        %v4172 = vpop.f32.mrf.mxu0
        %v4173 = vadd.f32 %v4004, %v4172
        %4174 = vmatmul.bf16.gmra.mxu0 %v1723
        %v4175 = vpop.f32.mrf.mxu0
        %v4176 = vadd.f32 %v4007, %v4175
        %v4177 = vpop.f32.mrf.mxu0
        %v4178 = vadd.f32 %v4009, %v4177
        %4179 = vmatmul.bf16.gmra.mxu0 %v1727
        %v4180 = vpop.f32.mrf.mxu0
        %v4181 = vadd.f32 %v4012, %v4180
        %v4182 = vpop.f32.mrf.mxu0
        %v4183 = vadd.f32 %v4014, %v4182
        %4184 = vmatmul.bf16.gmra.mxu0 %v1731
        %v4185 = vpop.f32.mrf.mxu0
        %v4186 = vadd.f32 %v4017, %v4185
        %v4187 = vpop.f32.mrf.mxu0
        %v4188 = vadd.f32 %v4019, %v4187
        %4189 = vmatmul.bf16.gmra.mxu0 %v1735
        %v4190 = vpop.f32.mrf.mxu0
        %v4191 = vadd.f32 %v4022, %v4190
        %v4192 = vpop.f32.mrf.mxu0
        %v4193 = vadd.f32 %v4024, %v4192
        %4194 = vmatmul.bf16.gmra.mxu0 %v1739
        %v4195 = vpop.f32.mrf.mxu0
        %v4196 = vadd.f32 %v4027, %v4195
        %v4197 = vpop.f32.mrf.mxu0
        %v4198 = vadd.f32 %v4029, %v4197
        %4199 = vdwg.mxu0
        %4200 = vmatpush.bf16.msra.mxu0 %v2348
        %4201 = vmatpush.bf16.msra.mxu0 %v2344
        %4202 = vmatpush.bf16.msra.mxu0 %v2340
        %4203 = vmatpush.bf16.msra.mxu0 %v2336
        %4204 = vmatpush.bf16.msra.mxu0 %v2332
        %4205 = vmatpush.bf16.msra.mxu0 %v2328
        %4206 = vmatpush.bf16.msra.mxu0 %v2324
        %4207 = vmatpush.bf16.msra.mxu0 %v2320
        %4208 = vmatmul.bf16.gmra.mxu0 %v1616
        %v4209 = vpop.f32.mrf.mxu0
        %v4210 = vadd.f32 %v4041, %v4209
        %v4211 = vpop.f32.mrf.mxu0
        %v4212 = vadd.f32 %v4043, %v4211
        %4213 = vmatmul.bf16.gmra.mxu0 %v1620
        %v4214 = vpop.f32.mrf.mxu0
        %v4215 = vadd.f32 %v4046, %v4214
        %v4216 = vpop.f32.mrf.mxu0
        %v4217 = vadd.f32 %v4048, %v4216
        %4218 = vmatmul.bf16.gmra.mxu0 %v1624
        %v4219 = vpop.f32.mrf.mxu0
        %v4220 = vadd.f32 %v4051, %v4219
        %v4221 = vpop.f32.mrf.mxu0
        %v4222 = vadd.f32 %v4053, %v4221
        %4223 = vmatmul.bf16.gmra.mxu0 %v1628
        %v4224 = vpop.f32.mrf.mxu0
        %v4225 = vadd.f32 %v4056, %v4224
        %v4226 = vpop.f32.mrf.mxu0
        %v4227 = vadd.f32 %v4058, %v4226
        %4228 = vmatmul.bf16.gmra.mxu0 %v1632
        %v4229 = vpop.f32.mrf.mxu0
        %v4230 = vadd.f32 %v4061, %v4229
        %v4231 = vpop.f32.mrf.mxu0
        %v4232 = vadd.f32 %v4063, %v4231
        %4233 = vmatmul.bf16.gmra.mxu0 %v1636
        %v4234 = vpop.f32.mrf.mxu0
        %v4235 = vadd.f32 %v4066, %v4234
        %v4236 = vpop.f32.mrf.mxu0
        %v4237 = vadd.f32 %v4068, %v4236
        %4238 = vmatmul.bf16.gmra.mxu0 %v1640
        %v4239 = vpop.f32.mrf.mxu0
        %v4240 = vadd.f32 %v4071, %v4239
        %v4241 = vpop.f32.mrf.mxu0
        %v4242 = vadd.f32 %v4073, %v4241
        %4243 = vmatmul.bf16.gmra.mxu0 %v1644
        %v4244 = vpop.f32.mrf.mxu0
        %v4245 = vadd.f32 %v4076, %v4244
        %v4246 = vpop.f32.mrf.mxu0
        %v4247 = vadd.f32 %v4078, %v4246
        %4248 = vmatmul.bf16.gmra.mxu0 %v1648
        %v4249 = vpop.f32.mrf.mxu0
        %v4250 = vadd.f32 %v4081, %v4249
        %v4251 = vpop.f32.mrf.mxu0
        %v4252 = vadd.f32 %v4083, %v4251
        %4253 = vmatmul.bf16.gmra.mxu0 %v1652
        %v4254 = vpop.f32.mrf.mxu0
        %v4255 = vadd.f32 %v4086, %v4254
        %v4256 = vpop.f32.mrf.mxu0
        %v4257 = vadd.f32 %v4088, %v4256
        %4258 = vmatmul.bf16.gmra.mxu0 %v1656
        %v4259 = vpop.f32.mrf.mxu0
        %v4260 = vadd.f32 %v4091, %v4259
        %v4261 = vpop.f32.mrf.mxu0
        %v4262 = vadd.f32 %v4093, %v4261
        %4263 = vmatmul.bf16.gmra.mxu0 %v1660
        %v4264 = vpop.f32.mrf.mxu0
        %v4265 = vadd.f32 %v4096, %v4264
        %v4266 = vpop.f32.mrf.mxu0
        %v4267 = vadd.f32 %v4098, %v4266
        %4268 = vmatmul.bf16.gmra.mxu0 %v1664
        %v4269 = vpop.f32.mrf.mxu0
        %v4270 = vadd.f32 %v4101, %v4269
        %v4271 = vpop.f32.mrf.mxu0
        %v4272 = vadd.f32 %v4103, %v4271
        %4273 = vmatmul.bf16.gmra.mxu0 %v1668
        %v4274 = vpop.f32.mrf.mxu0
        %v4275 = vadd.f32 %v4106, %v4274
        %v4276 = vpop.f32.mrf.mxu0
        %v4277 = vadd.f32 %v4108, %v4276
        %4278 = vmatmul.bf16.gmra.mxu0 %v1672
        %v4279 = vpop.f32.mrf.mxu0
        %v4280 = vadd.f32 %v4111, %v4279
        %v4281 = vpop.f32.mrf.mxu0
        %v4282 = vadd.f32 %v4113, %v4281
        %4283 = vmatmul.bf16.gmra.mxu0 %v1676
        %v4284 = vpop.f32.mrf.mxu0
        %v4285 = vadd.f32 %v4116, %v4284
        %v4286 = vpop.f32.mrf.mxu0
        %v4287 = vadd.f32 %v4118, %v4286
        %4288 = vmatmul.bf16.gmra.mxu0 %v1680
        %v4289 = vpop.f32.mrf.mxu0
        %v4290 = vadd.f32 %v4121, %v4289
        %v4291 = vpop.f32.mrf.mxu0
        %v4292 = vadd.f32 %v4123, %v4291
        %4293 = vmatmul.bf16.gmra.mxu0 %v1684
        %v4294 = vpop.f32.mrf.mxu0
        %v4295 = vadd.f32 %v4126, %v4294
        %v4296 = vpop.f32.mrf.mxu0
        %v4297 = vadd.f32 %v4128, %v4296
        %4298 = vmatmul.bf16.gmra.mxu0 %v1688
        %v4299 = vpop.f32.mrf.mxu0
        %v4300 = vadd.f32 %v4131, %v4299
        %v4301 = vpop.f32.mrf.mxu0
        %v4302 = vadd.f32 %v4133, %v4301
        %4303 = vmatmul.bf16.gmra.mxu0 %v1692
        %v4304 = vpop.f32.mrf.mxu0
        %v4305 = vadd.f32 %v4136, %v4304
        %v4306 = vpop.f32.mrf.mxu0
        %v4307 = vadd.f32 %v4138, %v4306
        %4308 = vmatmul.bf16.gmra.mxu0 %v1696
        %v4309 = vpop.f32.mrf.mxu0
        %v4310 = vadd.f32 %v4141, %v4309
        %v4311 = vpop.f32.mrf.mxu0
        %v4312 = vadd.f32 %v4143, %v4311
        %4313 = vmatmul.bf16.gmra.mxu0 %v1700
        %v4314 = vpop.f32.mrf.mxu0
        %v4315 = vadd.f32 %v4146, %v4314
        %v4316 = vpop.f32.mrf.mxu0
        %v4317 = vadd.f32 %v4148, %v4316
        %4318 = vmatmul.bf16.gmra.mxu0 %v1704
        %v4319 = vpop.f32.mrf.mxu0
        %v4320 = vadd.f32 %v4151, %v4319
        %v4321 = vpop.f32.mrf.mxu0
        %v4322 = vadd.f32 %v4153, %v4321
        %4323 = vmatmul.bf16.gmra.mxu0 %v1708
        %v4324 = vpop.f32.mrf.mxu0
        %v4325 = vadd.f32 %v4156, %v4324
        %v4326 = vpop.f32.mrf.mxu0
        %v4327 = vadd.f32 %v4158, %v4326
        %4328 = vmatmul.bf16.gmra.mxu0 %v1712
        %v4329 = vpop.f32.mrf.mxu0
        %v4330 = vadd.f32 %v4161, %v4329
        %v4331 = vpop.f32.mrf.mxu0
        %v4332 = vadd.f32 %v4163, %v4331
        %4333 = vmatmul.bf16.gmra.mxu0 %v1716
        %v4334 = vpop.f32.mrf.mxu0
        %v4335 = vadd.f32 %v4166, %v4334
        %v4336 = vpop.f32.mrf.mxu0
        %v4337 = vadd.f32 %v4168, %v4336
        %4338 = vmatmul.bf16.gmra.mxu0 %v1720
        %v4339 = vpop.f32.mrf.mxu0
        %v4340 = vadd.f32 %v4171, %v4339
        %v4341 = vpop.f32.mrf.mxu0
        %v4342 = vadd.f32 %v4173, %v4341
        %4343 = vmatmul.bf16.gmra.mxu0 %v1724
        %v4344 = vpop.f32.mrf.mxu0
        %v4345 = vadd.f32 %v4176, %v4344
        %v4346 = vpop.f32.mrf.mxu0
        %v4347 = vadd.f32 %v4178, %v4346
        %4348 = vmatmul.bf16.gmra.mxu0 %v1728
        %v4349 = vpop.f32.mrf.mxu0
        %v4350 = vadd.f32 %v4181, %v4349
        %v4351 = vpop.f32.mrf.mxu0
        %v4352 = vadd.f32 %v4183, %v4351
        %4353 = vmatmul.bf16.gmra.mxu0 %v1732
        %v4354 = vpop.f32.mrf.mxu0
        %v4355 = vadd.f32 %v4186, %v4354
        %v4356 = vpop.f32.mrf.mxu0
        %v4357 = vadd.f32 %v4188, %v4356
        %4358 = vmatmul.bf16.gmra.mxu0 %v1736
        %v4359 = vpop.f32.mrf.mxu0
        %v4360 = vadd.f32 %v4191, %v4359
        %v4361 = vpop.f32.mrf.mxu0
        %v4362 = vadd.f32 %v4193, %v4361
        %4363 = vmatmul.bf16.gmra.mxu0 %v1740
        %v4364 = vpop.f32.mrf.mxu0
        %v4365 = vadd.f32 %v4196, %v4364
        %v4366 = vpop.f32.mrf.mxu0
        %v4367 = vadd.f32 %v4198, %v4366
        %4368 = vdwg.mxu0
        %4369 = vmatpush.bf16.msra.mxu0 %v2380
        %4370 = vmatpush.bf16.msra.mxu0 %v2376
        %4371 = vmatpush.bf16.msra.mxu0 %v2372
        %4372 = vmatpush.bf16.msra.mxu0 %v2368
        %4373 = vmatpush.bf16.msra.mxu0 %v2364
        %4374 = vmatpush.bf16.msra.mxu0 %v2360
        %4375 = vmatpush.bf16.msra.mxu0 %v2356
        %4376 = vmatpush.bf16.msra.mxu0 %v2352
        %4377 = vmatmul.bf16.gmra.mxu0 %v1617
        %v4378 = vpop.f32.mrf.mxu0
        %v4379 = vadd.f32 %v4210, %v4378
        %v4380 = vpop.f32.mrf.mxu0
        %v4381 = vadd.f32 %v4212, %v4380
        %4382 = vmatmul.bf16.gmra.mxu0 %v1621
        %v4383 = vpop.f32.mrf.mxu0
        %v4384 = vadd.f32 %v4215, %v4383
        %v4385 = vpop.f32.mrf.mxu0
        %v4386 = vadd.f32 %v4217, %v4385
        %4387 = vmatmul.bf16.gmra.mxu0 %v1625
        %v4388 = vpop.f32.mrf.mxu0
        %v4389 = vadd.f32 %v4220, %v4388
        %v4390 = vpop.f32.mrf.mxu0
        %v4391 = vadd.f32 %v4222, %v4390
        %4392 = vmatmul.bf16.gmra.mxu0 %v1629
        %v4393 = vpop.f32.mrf.mxu0
        %v4394 = vadd.f32 %v4225, %v4393
        %v4395 = vpop.f32.mrf.mxu0
        %v4396 = vadd.f32 %v4227, %v4395
        %4397 = vmatmul.bf16.gmra.mxu0 %v1633
        %v4398 = vpop.f32.mrf.mxu0
        %v4399 = vadd.f32 %v4230, %v4398
        %v4400 = vpop.f32.mrf.mxu0
        %v4401 = vadd.f32 %v4232, %v4400
        %4402 = vmatmul.bf16.gmra.mxu0 %v1637
        %v4403 = vpop.f32.mrf.mxu0
        %v4404 = vadd.f32 %v4235, %v4403
        %v4405 = vpop.f32.mrf.mxu0
        %v4406 = vadd.f32 %v4237, %v4405
        %4407 = vmatmul.bf16.gmra.mxu0 %v1641
        %v4408 = vpop.f32.mrf.mxu0
        %v4409 = vadd.f32 %v4240, %v4408
        %v4410 = vpop.f32.mrf.mxu0
        %v4411 = vadd.f32 %v4242, %v4410
        %4412 = vmatmul.bf16.gmra.mxu0 %v1645
        %v4413 = vpop.f32.mrf.mxu0
        %v4414 = vadd.f32 %v4245, %v4413
        %v4415 = vpop.f32.mrf.mxu0
        %v4416 = vadd.f32 %v4247, %v4415
        %4417 = vmatmul.bf16.gmra.mxu0 %v1649
        %v4418 = vpop.f32.mrf.mxu0
        %v4419 = vadd.f32 %v4250, %v4418
        %v4420 = vpop.f32.mrf.mxu0
        %v4421 = vadd.f32 %v4252, %v4420
        %4422 = vmatmul.bf16.gmra.mxu0 %v1653
        %v4423 = vpop.f32.mrf.mxu0
        %v4424 = vadd.f32 %v4255, %v4423
        %v4425 = vpop.f32.mrf.mxu0
        %v4426 = vadd.f32 %v4257, %v4425
        %4427 = vmatmul.bf16.gmra.mxu0 %v1657
        %v4428 = vpop.f32.mrf.mxu0
        %v4429 = vadd.f32 %v4260, %v4428
        %v4430 = vpop.f32.mrf.mxu0
        %v4431 = vadd.f32 %v4262, %v4430
        %4432 = vmatmul.bf16.gmra.mxu0 %v1661
        %v4433 = vpop.f32.mrf.mxu0
        %v4434 = vadd.f32 %v4265, %v4433
        %v4435 = vpop.f32.mrf.mxu0
        %v4436 = vadd.f32 %v4267, %v4435
        %4437 = vmatmul.bf16.gmra.mxu0 %v1665
        %v4438 = vpop.f32.mrf.mxu0
        %v4439 = vadd.f32 %v4270, %v4438
        %v4440 = vpop.f32.mrf.mxu0
        %v4441 = vadd.f32 %v4272, %v4440
        %4442 = vmatmul.bf16.gmra.mxu0 %v1669
        %v4443 = vpop.f32.mrf.mxu0
        %v4444 = vadd.f32 %v4275, %v4443
        %v4445 = vpop.f32.mrf.mxu0
        %v4446 = vadd.f32 %v4277, %v4445
        %4447 = vmatmul.bf16.gmra.mxu0 %v1673
        %v4448 = vpop.f32.mrf.mxu0
        %v4449 = vadd.f32 %v4280, %v4448
        %v4450 = vpop.f32.mrf.mxu0
        %v4451 = vadd.f32 %v4282, %v4450
        %4452 = vmatmul.bf16.gmra.mxu0 %v1677
        %v4453 = vpop.f32.mrf.mxu0
        %v4454 = vadd.f32 %v4285, %v4453
        %v4455 = vpop.f32.mrf.mxu0
        %v4456 = vadd.f32 %v4287, %v4455
        %4457 = vmatmul.bf16.gmra.mxu0 %v1681
        %v4458 = vpop.f32.mrf.mxu0
        %v4459 = vadd.f32 %v4290, %v4458
        %v4460 = vpop.f32.mrf.mxu0
        %v4461 = vadd.f32 %v4292, %v4460
        %4462 = vmatmul.bf16.gmra.mxu0 %v1685
        %v4463 = vpop.f32.mrf.mxu0
        %v4464 = vadd.f32 %v4295, %v4463
        %v4465 = vpop.f32.mrf.mxu0
        %v4466 = vadd.f32 %v4297, %v4465
        %4467 = vmatmul.bf16.gmra.mxu0 %v1689
        %v4468 = vpop.f32.mrf.mxu0
        %v4469 = vadd.f32 %v4300, %v4468
        %v4470 = vpop.f32.mrf.mxu0
        %v4471 = vadd.f32 %v4302, %v4470
        %4472 = vmatmul.bf16.gmra.mxu0 %v1693
        %v4473 = vpop.f32.mrf.mxu0
        %v4474 = vadd.f32 %v4305, %v4473
        %v4475 = vpop.f32.mrf.mxu0
        %v4476 = vadd.f32 %v4307, %v4475
        %4477 = vmatmul.bf16.gmra.mxu0 %v1697
        %v4478 = vpop.f32.mrf.mxu0
        %v4479 = vadd.f32 %v4310, %v4478
        %v4480 = vpop.f32.mrf.mxu0
        %v4481 = vadd.f32 %v4312, %v4480
        %4482 = vmatmul.bf16.gmra.mxu0 %v1701
        %v4483 = vpop.f32.mrf.mxu0
        %v4484 = vadd.f32 %v4315, %v4483
        %v4485 = vpop.f32.mrf.mxu0
        %v4486 = vadd.f32 %v4317, %v4485
        %4487 = vmatmul.bf16.gmra.mxu0 %v1705
        %v4488 = vpop.f32.mrf.mxu0
        %v4489 = vadd.f32 %v4320, %v4488
        %v4490 = vpop.f32.mrf.mxu0
        %v4491 = vadd.f32 %v4322, %v4490
        %4492 = vmatmul.bf16.gmra.mxu0 %v1709
        %v4493 = vpop.f32.mrf.mxu0
        %v4494 = vadd.f32 %v4325, %v4493
        %v4495 = vpop.f32.mrf.mxu0
        %v4496 = vadd.f32 %v4327, %v4495
        %4497 = vmatmul.bf16.gmra.mxu0 %v1713
        %v4498 = vpop.f32.mrf.mxu0
        %v4499 = vadd.f32 %v4330, %v4498
        %v4500 = vpop.f32.mrf.mxu0
        %v4501 = vadd.f32 %v4332, %v4500
        %4502 = vmatmul.bf16.gmra.mxu0 %v1717
        %v4503 = vpop.f32.mrf.mxu0
        %v4504 = vadd.f32 %v4335, %v4503
        %v4505 = vpop.f32.mrf.mxu0
        %v4506 = vadd.f32 %v4337, %v4505
        %4507 = vmatmul.bf16.gmra.mxu0 %v1721
        %v4508 = vpop.f32.mrf.mxu0
        %v4509 = vadd.f32 %v4340, %v4508
        %v4510 = vpop.f32.mrf.mxu0
        %v4511 = vadd.f32 %v4342, %v4510
        %4512 = vmatmul.bf16.gmra.mxu0 %v1725
        %v4513 = vpop.f32.mrf.mxu0
        %v4514 = vadd.f32 %v4345, %v4513
        %v4515 = vpop.f32.mrf.mxu0
        %v4516 = vadd.f32 %v4347, %v4515
        %4517 = vmatmul.bf16.gmra.mxu0 %v1729
        %v4518 = vpop.f32.mrf.mxu0
        %v4519 = vadd.f32 %v4350, %v4518
        %v4520 = vpop.f32.mrf.mxu0
        %v4521 = vadd.f32 %v4352, %v4520
        %4522 = vmatmul.bf16.gmra.mxu0 %v1733
        %v4523 = vpop.f32.mrf.mxu0
        %v4524 = vadd.f32 %v4355, %v4523
        %v4525 = vpop.f32.mrf.mxu0
        %v4526 = vadd.f32 %v4357, %v4525
        %4527 = vmatmul.bf16.gmra.mxu0 %v1737
        %v4528 = vpop.f32.mrf.mxu0
        %v4529 = vadd.f32 %v4360, %v4528
        %v4530 = vpop.f32.mrf.mxu0
        %v4531 = vadd.f32 %v4362, %v4530
        %4532 = vmatmul.bf16.gmra.mxu0 %v1741
        %v4533 = vpop.f32.mrf.mxu0
        %v4534 = vadd.f32 %v4365, %v4533
        %v4535 = vpop.f32.mrf.mxu0
        %v4536 = vadd.f32 %v4367, %v4535
        %4537 = vdwg.mxu0
        %4538 = vmatpush.bf16.msra.mxu0 %v2285
        %4539 = vmatpush.bf16.msra.mxu0 %v2281
        %4540 = vmatpush.bf16.msra.mxu0 %v2277
        %4541 = vmatpush.bf16.msra.mxu0 %v2273
        %4542 = vmatpush.bf16.msra.mxu0 %v2269
        %4543 = vmatpush.bf16.msra.mxu0 %v2265
        %4544 = vmatpush.bf16.msra.mxu0 %v2261
        %4545 = vmatpush.bf16.msra.mxu0 %v2257
        %4546 = vmatmul.bf16.gmra.mxu0 %v1614
        %v4547 = vpop.f32.mrf.mxu0
        %v4548 = vadd.f32 0.0, %v4547
        %v4549 = vpop.f32.mrf.mxu0
        %v4550 = vadd.f32 0.0, %v4549
        %4551 = vmatmul.bf16.gmra.mxu0 %v1618
        %v4552 = vpop.f32.mrf.mxu0
        %v4553 = vadd.f32 0.0, %v4552
        %v4554 = vpop.f32.mrf.mxu0
        %v4555 = vadd.f32 0.0, %v4554
        %4556 = vmatmul.bf16.gmra.mxu0 %v1622
        %v4557 = vpop.f32.mrf.mxu0
        %v4558 = vadd.f32 0.0, %v4557
        %v4559 = vpop.f32.mrf.mxu0
        %v4560 = vadd.f32 0.0, %v4559
        %4561 = vmatmul.bf16.gmra.mxu0 %v1626
        %v4562 = vpop.f32.mrf.mxu0
        %v4563 = vadd.f32 0.0, %v4562
        %v4564 = vpop.f32.mrf.mxu0
        %v4565 = vadd.f32 0.0, %v4564
        %4566 = vmatmul.bf16.gmra.mxu0 %v1630
        %v4567 = vpop.f32.mrf.mxu0
        %v4568 = vadd.f32 0.0, %v4567
        %v4569 = vpop.f32.mrf.mxu0
        %v4570 = vadd.f32 0.0, %v4569
        %4571 = vmatmul.bf16.gmra.mxu0 %v1634
        %v4572 = vpop.f32.mrf.mxu0
        %v4573 = vadd.f32 0.0, %v4572
        %v4574 = vpop.f32.mrf.mxu0
        %v4575 = vadd.f32 0.0, %v4574
        %4576 = vmatmul.bf16.gmra.mxu0 %v1638
        %v4577 = vpop.f32.mrf.mxu0
        %v4578 = vadd.f32 0.0, %v4577
        %v4579 = vpop.f32.mrf.mxu0
        %v4580 = vadd.f32 0.0, %v4579
        %4581 = vmatmul.bf16.gmra.mxu0 %v1642
        %v4582 = vpop.f32.mrf.mxu0
        %v4583 = vadd.f32 0.0, %v4582
        %v4584 = vpop.f32.mrf.mxu0
        %v4585 = vadd.f32 0.0, %v4584
        %4586 = vmatmul.bf16.gmra.mxu0 %v1646
        %v4587 = vpop.f32.mrf.mxu0
        %v4588 = vadd.f32 0.0, %v4587
        %v4589 = vpop.f32.mrf.mxu0
        %v4590 = vadd.f32 0.0, %v4589
        %4591 = vmatmul.bf16.gmra.mxu0 %v1650
        %v4592 = vpop.f32.mrf.mxu0
        %v4593 = vadd.f32 0.0, %v4592
        %v4594 = vpop.f32.mrf.mxu0
        %v4595 = vadd.f32 0.0, %v4594
        %4596 = vmatmul.bf16.gmra.mxu0 %v1654
        %v4597 = vpop.f32.mrf.mxu0
        %v4598 = vadd.f32 0.0, %v4597
        %v4599 = vpop.f32.mrf.mxu0
        %v4600 = vadd.f32 0.0, %v4599
        %4601 = vmatmul.bf16.gmra.mxu0 %v1658
        %v4602 = vpop.f32.mrf.mxu0
        %v4603 = vadd.f32 0.0, %v4602
        %v4604 = vpop.f32.mrf.mxu0
        %v4605 = vadd.f32 0.0, %v4604
        %4606 = vmatmul.bf16.gmra.mxu0 %v1662
        %v4607 = vpop.f32.mrf.mxu0
        %v4608 = vadd.f32 0.0, %v4607
        %v4609 = vpop.f32.mrf.mxu0
        %v4610 = vadd.f32 0.0, %v4609
        %4611 = vmatmul.bf16.gmra.mxu0 %v1666
        %v4612 = vpop.f32.mrf.mxu0
        %v4613 = vadd.f32 0.0, %v4612
        %v4614 = vpop.f32.mrf.mxu0
        %v4615 = vadd.f32 0.0, %v4614
        %4616 = vmatmul.bf16.gmra.mxu0 %v1670
        %v4617 = vpop.f32.mrf.mxu0
        %v4618 = vadd.f32 0.0, %v4617
        %v4619 = vpop.f32.mrf.mxu0
        %v4620 = vadd.f32 0.0, %v4619
        %4621 = vmatmul.bf16.gmra.mxu0 %v1674
        %v4622 = vpop.f32.mrf.mxu0
        %v4623 = vadd.f32 0.0, %v4622
        %v4624 = vpop.f32.mrf.mxu0
        %v4625 = vadd.f32 0.0, %v4624
        %4626 = vmatmul.bf16.gmra.mxu0 %v1678
        %v4627 = vpop.f32.mrf.mxu0
        %v4628 = vadd.f32 0.0, %v4627
        %v4629 = vpop.f32.mrf.mxu0
        %v4630 = vadd.f32 0.0, %v4629
        %4631 = vmatmul.bf16.gmra.mxu0 %v1682
        %v4632 = vpop.f32.mrf.mxu0
        %v4633 = vadd.f32 0.0, %v4632
        %v4634 = vpop.f32.mrf.mxu0
        %v4635 = vadd.f32 0.0, %v4634
        %4636 = vmatmul.bf16.gmra.mxu0 %v1686
        %v4637 = vpop.f32.mrf.mxu0
        %v4638 = vadd.f32 0.0, %v4637
        %v4639 = vpop.f32.mrf.mxu0
        %v4640 = vadd.f32 0.0, %v4639
        %4641 = vmatmul.bf16.gmra.mxu0 %v1690
        %v4642 = vpop.f32.mrf.mxu0
        %v4643 = vadd.f32 0.0, %v4642
        %v4644 = vpop.f32.mrf.mxu0
        %v4645 = vadd.f32 0.0, %v4644
        %4646 = vmatmul.bf16.gmra.mxu0 %v1694
        %v4647 = vpop.f32.mrf.mxu0
        %v4648 = vadd.f32 0.0, %v4647
        %v4649 = vpop.f32.mrf.mxu0
        %v4650 = vadd.f32 0.0, %v4649
        %4651 = vmatmul.bf16.gmra.mxu0 %v1698
        %v4652 = vpop.f32.mrf.mxu0
        %v4653 = vadd.f32 0.0, %v4652
        %v4654 = vpop.f32.mrf.mxu0
        %v4655 = vadd.f32 0.0, %v4654
        %4656 = vmatmul.bf16.gmra.mxu0 %v1702
        %v4657 = vpop.f32.mrf.mxu0
        %v4658 = vadd.f32 0.0, %v4657
        %v4659 = vpop.f32.mrf.mxu0
        %v4660 = vadd.f32 0.0, %v4659
        %4661 = vmatmul.bf16.gmra.mxu0 %v1706
        %v4662 = vpop.f32.mrf.mxu0
        %v4663 = vadd.f32 0.0, %v4662
        %v4664 = vpop.f32.mrf.mxu0
        %v4665 = vadd.f32 0.0, %v4664
        %4666 = vmatmul.bf16.gmra.mxu0 %v1710
        %v4667 = vpop.f32.mrf.mxu0
        %v4668 = vadd.f32 0.0, %v4667
        %v4669 = vpop.f32.mrf.mxu0
        %v4670 = vadd.f32 0.0, %v4669
        %4671 = vmatmul.bf16.gmra.mxu0 %v1714
        %v4672 = vpop.f32.mrf.mxu0
        %v4673 = vadd.f32 0.0, %v4672
        %v4674 = vpop.f32.mrf.mxu0
        %v4675 = vadd.f32 0.0, %v4674
        %4676 = vmatmul.bf16.gmra.mxu0 %v1718
        %v4677 = vpop.f32.mrf.mxu0
        %v4678 = vadd.f32 0.0, %v4677
        %v4679 = vpop.f32.mrf.mxu0
        %v4680 = vadd.f32 0.0, %v4679
        %4681 = vmatmul.bf16.gmra.mxu0 %v1722
        %v4682 = vpop.f32.mrf.mxu0
        %v4683 = vadd.f32 0.0, %v4682
        %v4684 = vpop.f32.mrf.mxu0
        %v4685 = vadd.f32 0.0, %v4684
        %4686 = vmatmul.bf16.gmra.mxu0 %v1726
        %v4687 = vpop.f32.mrf.mxu0
        %v4688 = vadd.f32 0.0, %v4687
        %v4689 = vpop.f32.mrf.mxu0
        %v4690 = vadd.f32 0.0, %v4689
        %4691 = vmatmul.bf16.gmra.mxu0 %v1730
        %v4692 = vpop.f32.mrf.mxu0
        %v4693 = vadd.f32 0.0, %v4692
        %v4694 = vpop.f32.mrf.mxu0
        %v4695 = vadd.f32 0.0, %v4694
        %4696 = vmatmul.bf16.gmra.mxu0 %v1734
        %v4697 = vpop.f32.mrf.mxu0
        %v4698 = vadd.f32 0.0, %v4697
        %v4699 = vpop.f32.mrf.mxu0
        %v4700 = vadd.f32 0.0, %v4699
        %4701 = vmatmul.bf16.gmra.mxu0 %v1738
        %v4702 = vpop.f32.mrf.mxu0
        %v4703 = vadd.f32 0.0, %v4702
        %v4704 = vpop.f32.mrf.mxu0
        %v4705 = vadd.f32 0.0, %v4704
        %4706 = vdwg.mxu0
        %4707 = vmatpush.bf16.msra.mxu0 %v2317
        %4708 = vmatpush.bf16.msra.mxu0 %v2313
        %4709 = vmatpush.bf16.msra.mxu0 %v2309
        %4710 = vmatpush.bf16.msra.mxu0 %v2305
        %4711 = vmatpush.bf16.msra.mxu0 %v2301
        %4712 = vmatpush.bf16.msra.mxu0 %v2297
        %4713 = vmatpush.bf16.msra.mxu0 %v2293
        %4714 = vmatpush.bf16.msra.mxu0 %v2289
        %4715 = vmatmul.bf16.gmra.mxu0 %v1615
        %v4716 = vpop.f32.mrf.mxu0
        %v4717 = vadd.f32 %v4548, %v4716
        %v4718 = vpop.f32.mrf.mxu0
        %v4719 = vadd.f32 %v4550, %v4718
        %4720 = vmatmul.bf16.gmra.mxu0 %v1619
        %v4721 = vpop.f32.mrf.mxu0
        %v4722 = vadd.f32 %v4553, %v4721
        %v4723 = vpop.f32.mrf.mxu0
        %v4724 = vadd.f32 %v4555, %v4723
        %4725 = vmatmul.bf16.gmra.mxu0 %v1623
        %v4726 = vpop.f32.mrf.mxu0
        %v4727 = vadd.f32 %v4558, %v4726
        %v4728 = vpop.f32.mrf.mxu0
        %v4729 = vadd.f32 %v4560, %v4728
        %4730 = vmatmul.bf16.gmra.mxu0 %v1627
        %v4731 = vpop.f32.mrf.mxu0
        %v4732 = vadd.f32 %v4563, %v4731
        %v4733 = vpop.f32.mrf.mxu0
        %v4734 = vadd.f32 %v4565, %v4733
        %4735 = vmatmul.bf16.gmra.mxu0 %v1631
        %v4736 = vpop.f32.mrf.mxu0
        %v4737 = vadd.f32 %v4568, %v4736
        %v4738 = vpop.f32.mrf.mxu0
        %v4739 = vadd.f32 %v4570, %v4738
        %4740 = vmatmul.bf16.gmra.mxu0 %v1635
        %v4741 = vpop.f32.mrf.mxu0
        %v4742 = vadd.f32 %v4573, %v4741
        %v4743 = vpop.f32.mrf.mxu0
        %v4744 = vadd.f32 %v4575, %v4743
        %4745 = vmatmul.bf16.gmra.mxu0 %v1639
        %v4746 = vpop.f32.mrf.mxu0
        %v4747 = vadd.f32 %v4578, %v4746
        %v4748 = vpop.f32.mrf.mxu0
        %v4749 = vadd.f32 %v4580, %v4748
        %4750 = vmatmul.bf16.gmra.mxu0 %v1643
        %v4751 = vpop.f32.mrf.mxu0
        %v4752 = vadd.f32 %v4583, %v4751
        %v4753 = vpop.f32.mrf.mxu0
        %v4754 = vadd.f32 %v4585, %v4753
        %4755 = vmatmul.bf16.gmra.mxu0 %v1647
        %v4756 = vpop.f32.mrf.mxu0
        %v4757 = vadd.f32 %v4588, %v4756
        %v4758 = vpop.f32.mrf.mxu0
        %v4759 = vadd.f32 %v4590, %v4758
        %4760 = vmatmul.bf16.gmra.mxu0 %v1651
        %v4761 = vpop.f32.mrf.mxu0
        %v4762 = vadd.f32 %v4593, %v4761
        %v4763 = vpop.f32.mrf.mxu0
        %v4764 = vadd.f32 %v4595, %v4763
        %4765 = vmatmul.bf16.gmra.mxu0 %v1655
        %v4766 = vpop.f32.mrf.mxu0
        %v4767 = vadd.f32 %v4598, %v4766
        %v4768 = vpop.f32.mrf.mxu0
        %v4769 = vadd.f32 %v4600, %v4768
        %4770 = vmatmul.bf16.gmra.mxu0 %v1659
        %v4771 = vpop.f32.mrf.mxu0
        %v4772 = vadd.f32 %v4603, %v4771
        %v4773 = vpop.f32.mrf.mxu0
        %v4774 = vadd.f32 %v4605, %v4773
        %4775 = vmatmul.bf16.gmra.mxu0 %v1663
        %v4776 = vpop.f32.mrf.mxu0
        %v4777 = vadd.f32 %v4608, %v4776
        %v4778 = vpop.f32.mrf.mxu0
        %v4779 = vadd.f32 %v4610, %v4778
        %4780 = vmatmul.bf16.gmra.mxu0 %v1667
        %v4781 = vpop.f32.mrf.mxu0
        %v4782 = vadd.f32 %v4613, %v4781
        %v4783 = vpop.f32.mrf.mxu0
        %v4784 = vadd.f32 %v4615, %v4783
        %4785 = vmatmul.bf16.gmra.mxu0 %v1671
        %v4786 = vpop.f32.mrf.mxu0
        %v4787 = vadd.f32 %v4618, %v4786
        %v4788 = vpop.f32.mrf.mxu0
        %v4789 = vadd.f32 %v4620, %v4788
        %4790 = vmatmul.bf16.gmra.mxu0 %v1675
        %v4791 = vpop.f32.mrf.mxu0
        %v4792 = vadd.f32 %v4623, %v4791
        %v4793 = vpop.f32.mrf.mxu0
        %v4794 = vadd.f32 %v4625, %v4793
        %4795 = vmatmul.bf16.gmra.mxu0 %v1679
        %v4796 = vpop.f32.mrf.mxu0
        %v4797 = vadd.f32 %v4628, %v4796
        %v4798 = vpop.f32.mrf.mxu0
        %v4799 = vadd.f32 %v4630, %v4798
        %4800 = vmatmul.bf16.gmra.mxu0 %v1683
        %v4801 = vpop.f32.mrf.mxu0
        %v4802 = vadd.f32 %v4633, %v4801
        %v4803 = vpop.f32.mrf.mxu0
        %v4804 = vadd.f32 %v4635, %v4803
        %4805 = vmatmul.bf16.gmra.mxu0 %v1687
        %v4806 = vpop.f32.mrf.mxu0
        %v4807 = vadd.f32 %v4638, %v4806
        %v4808 = vpop.f32.mrf.mxu0
        %v4809 = vadd.f32 %v4640, %v4808
        %4810 = vmatmul.bf16.gmra.mxu0 %v1691
        %v4811 = vpop.f32.mrf.mxu0
        %v4812 = vadd.f32 %v4643, %v4811
        %v4813 = vpop.f32.mrf.mxu0
        %v4814 = vadd.f32 %v4645, %v4813
        %4815 = vmatmul.bf16.gmra.mxu0 %v1695
        %v4816 = vpop.f32.mrf.mxu0
        %v4817 = vadd.f32 %v4648, %v4816
        %v4818 = vpop.f32.mrf.mxu0
        %v4819 = vadd.f32 %v4650, %v4818
        %4820 = vmatmul.bf16.gmra.mxu0 %v1699
        %v4821 = vpop.f32.mrf.mxu0
        %v4822 = vadd.f32 %v4653, %v4821
        %v4823 = vpop.f32.mrf.mxu0
        %v4824 = vadd.f32 %v4655, %v4823
        %4825 = vmatmul.bf16.gmra.mxu0 %v1703
        %v4826 = vpop.f32.mrf.mxu0
        %v4827 = vadd.f32 %v4658, %v4826
        %v4828 = vpop.f32.mrf.mxu0
        %v4829 = vadd.f32 %v4660, %v4828
        %4830 = vmatmul.bf16.gmra.mxu0 %v1707
        %v4831 = vpop.f32.mrf.mxu0
        %v4832 = vadd.f32 %v4663, %v4831
        %v4833 = vpop.f32.mrf.mxu0
        %v4834 = vadd.f32 %v4665, %v4833
        %4835 = vmatmul.bf16.gmra.mxu0 %v1711
        %v4836 = vpop.f32.mrf.mxu0
        %v4837 = vadd.f32 %v4668, %v4836
        %v4838 = vpop.f32.mrf.mxu0
        %v4839 = vadd.f32 %v4670, %v4838
        %4840 = vmatmul.bf16.gmra.mxu0 %v1715
        %v4841 = vpop.f32.mrf.mxu0
        %v4842 = vadd.f32 %v4673, %v4841
        %v4843 = vpop.f32.mrf.mxu0
        %v4844 = vadd.f32 %v4675, %v4843
        %4845 = vmatmul.bf16.gmra.mxu0 %v1719
        %v4846 = vpop.f32.mrf.mxu0
        %v4847 = vadd.f32 %v4678, %v4846
        %v4848 = vpop.f32.mrf.mxu0
        %v4849 = vadd.f32 %v4680, %v4848
        %4850 = vmatmul.bf16.gmra.mxu0 %v1723
        %v4851 = vpop.f32.mrf.mxu0
        %v4852 = vadd.f32 %v4683, %v4851
        %v4853 = vpop.f32.mrf.mxu0
        %v4854 = vadd.f32 %v4685, %v4853
        %4855 = vmatmul.bf16.gmra.mxu0 %v1727
        %v4856 = vpop.f32.mrf.mxu0
        %v4857 = vadd.f32 %v4688, %v4856
        %v4858 = vpop.f32.mrf.mxu0
        %v4859 = vadd.f32 %v4690, %v4858
        %4860 = vmatmul.bf16.gmra.mxu0 %v1731
        %v4861 = vpop.f32.mrf.mxu0
        %v4862 = vadd.f32 %v4693, %v4861
        %v4863 = vpop.f32.mrf.mxu0
        %v4864 = vadd.f32 %v4695, %v4863
        %4865 = vmatmul.bf16.gmra.mxu0 %v1735
        %v4866 = vpop.f32.mrf.mxu0
        %v4867 = vadd.f32 %v4698, %v4866
        %v4868 = vpop.f32.mrf.mxu0
        %v4869 = vadd.f32 %v4700, %v4868
        %4870 = vmatmul.bf16.gmra.mxu0 %v1739
        %v4871 = vpop.f32.mrf.mxu0
        %v4872 = vadd.f32 %v4703, %v4871
        %v4873 = vpop.f32.mrf.mxu0
        %v4874 = vadd.f32 %v4705, %v4873
        %4875 = vdwg.mxu0
        %4876 = vmatpush.bf16.msra.mxu0 %v2349
        %4877 = vmatpush.bf16.msra.mxu0 %v2345
        %4878 = vmatpush.bf16.msra.mxu0 %v2341
        %4879 = vmatpush.bf16.msra.mxu0 %v2337
        %4880 = vmatpush.bf16.msra.mxu0 %v2333
        %4881 = vmatpush.bf16.msra.mxu0 %v2329
        %4882 = vmatpush.bf16.msra.mxu0 %v2325
        %4883 = vmatpush.bf16.msra.mxu0 %v2321
        %4884 = vmatmul.bf16.gmra.mxu0 %v1616
        %v4885 = vpop.f32.mrf.mxu0
        %v4886 = vadd.f32 %v4717, %v4885
        %v4887 = vpop.f32.mrf.mxu0
        %v4888 = vadd.f32 %v4719, %v4887
        %4889 = vmatmul.bf16.gmra.mxu0 %v1620
        %v4890 = vpop.f32.mrf.mxu0
        %v4891 = vadd.f32 %v4722, %v4890
        %v4892 = vpop.f32.mrf.mxu0
        %v4893 = vadd.f32 %v4724, %v4892
        %4894 = vmatmul.bf16.gmra.mxu0 %v1624
        %v4895 = vpop.f32.mrf.mxu0
        %v4896 = vadd.f32 %v4727, %v4895
        %v4897 = vpop.f32.mrf.mxu0
        %v4898 = vadd.f32 %v4729, %v4897
        %4899 = vmatmul.bf16.gmra.mxu0 %v1628
        %v4900 = vpop.f32.mrf.mxu0
        %v4901 = vadd.f32 %v4732, %v4900
        %v4902 = vpop.f32.mrf.mxu0
        %v4903 = vadd.f32 %v4734, %v4902
        %4904 = vmatmul.bf16.gmra.mxu0 %v1632
        %v4905 = vpop.f32.mrf.mxu0
        %v4906 = vadd.f32 %v4737, %v4905
        %v4907 = vpop.f32.mrf.mxu0
        %v4908 = vadd.f32 %v4739, %v4907
        %4909 = vmatmul.bf16.gmra.mxu0 %v1636
        %v4910 = vpop.f32.mrf.mxu0
        %v4911 = vadd.f32 %v4742, %v4910
        %v4912 = vpop.f32.mrf.mxu0
        %v4913 = vadd.f32 %v4744, %v4912
        %4914 = vmatmul.bf16.gmra.mxu0 %v1640
        %v4915 = vpop.f32.mrf.mxu0
        %v4916 = vadd.f32 %v4747, %v4915
        %v4917 = vpop.f32.mrf.mxu0
        %v4918 = vadd.f32 %v4749, %v4917
        %4919 = vmatmul.bf16.gmra.mxu0 %v1644
        %v4920 = vpop.f32.mrf.mxu0
        %v4921 = vadd.f32 %v4752, %v4920
        %v4922 = vpop.f32.mrf.mxu0
        %v4923 = vadd.f32 %v4754, %v4922
        %4924 = vmatmul.bf16.gmra.mxu0 %v1648
        %v4925 = vpop.f32.mrf.mxu0
        %v4926 = vadd.f32 %v4757, %v4925
        %v4927 = vpop.f32.mrf.mxu0
        %v4928 = vadd.f32 %v4759, %v4927
        %4929 = vmatmul.bf16.gmra.mxu0 %v1652
        %v4930 = vpop.f32.mrf.mxu0
        %v4931 = vadd.f32 %v4762, %v4930
        %v4932 = vpop.f32.mrf.mxu0
        %v4933 = vadd.f32 %v4764, %v4932
        %4934 = vmatmul.bf16.gmra.mxu0 %v1656
        %v4935 = vpop.f32.mrf.mxu0
        %v4936 = vadd.f32 %v4767, %v4935
        %v4937 = vpop.f32.mrf.mxu0
        %v4938 = vadd.f32 %v4769, %v4937
        %4939 = vmatmul.bf16.gmra.mxu0 %v1660
        %v4940 = vpop.f32.mrf.mxu0
        %v4941 = vadd.f32 %v4772, %v4940
        %v4942 = vpop.f32.mrf.mxu0
        %v4943 = vadd.f32 %v4774, %v4942
        %4944 = vmatmul.bf16.gmra.mxu0 %v1664
        %v4945 = vpop.f32.mrf.mxu0
        %v4946 = vadd.f32 %v4777, %v4945
        %v4947 = vpop.f32.mrf.mxu0
        %v4948 = vadd.f32 %v4779, %v4947
        %4949 = vmatmul.bf16.gmra.mxu0 %v1668
        %v4950 = vpop.f32.mrf.mxu0
        %v4951 = vadd.f32 %v4782, %v4950
        %v4952 = vpop.f32.mrf.mxu0
        %v4953 = vadd.f32 %v4784, %v4952
        %4954 = vmatmul.bf16.gmra.mxu0 %v1672
        %v4955 = vpop.f32.mrf.mxu0
        %v4956 = vadd.f32 %v4787, %v4955
        %v4957 = vpop.f32.mrf.mxu0
        %v4958 = vadd.f32 %v4789, %v4957
        %4959 = vmatmul.bf16.gmra.mxu0 %v1676
        %v4960 = vpop.f32.mrf.mxu0
        %v4961 = vadd.f32 %v4792, %v4960
        %v4962 = vpop.f32.mrf.mxu0
        %v4963 = vadd.f32 %v4794, %v4962
        %4964 = vmatmul.bf16.gmra.mxu0 %v1680
        %v4965 = vpop.f32.mrf.mxu0
        %v4966 = vadd.f32 %v4797, %v4965
        %v4967 = vpop.f32.mrf.mxu0
        %v4968 = vadd.f32 %v4799, %v4967
        %4969 = vmatmul.bf16.gmra.mxu0 %v1684
        %v4970 = vpop.f32.mrf.mxu0
        %v4971 = vadd.f32 %v4802, %v4970
        %v4972 = vpop.f32.mrf.mxu0
        %v4973 = vadd.f32 %v4804, %v4972
        %4974 = vmatmul.bf16.gmra.mxu0 %v1688
        %v4975 = vpop.f32.mrf.mxu0
        %v4976 = vadd.f32 %v4807, %v4975
        %v4977 = vpop.f32.mrf.mxu0
        %v4978 = vadd.f32 %v4809, %v4977
        %4979 = vmatmul.bf16.gmra.mxu0 %v1692
        %v4980 = vpop.f32.mrf.mxu0
        %v4981 = vadd.f32 %v4812, %v4980
        %v4982 = vpop.f32.mrf.mxu0
        %v4983 = vadd.f32 %v4814, %v4982
        %4984 = vmatmul.bf16.gmra.mxu0 %v1696
        %v4985 = vpop.f32.mrf.mxu0
        %v4986 = vadd.f32 %v4817, %v4985
        %v4987 = vpop.f32.mrf.mxu0
        %v4988 = vadd.f32 %v4819, %v4987
        %4989 = vmatmul.bf16.gmra.mxu0 %v1700
        %v4990 = vpop.f32.mrf.mxu0
        %v4991 = vadd.f32 %v4822, %v4990
        %v4992 = vpop.f32.mrf.mxu0
        %v4993 = vadd.f32 %v4824, %v4992
        %4994 = vmatmul.bf16.gmra.mxu0 %v1704
        %v4995 = vpop.f32.mrf.mxu0
        %v4996 = vadd.f32 %v4827, %v4995
        %v4997 = vpop.f32.mrf.mxu0
        %v4998 = vadd.f32 %v4829, %v4997
        %4999 = vmatmul.bf16.gmra.mxu0 %v1708
        %v5000 = vpop.f32.mrf.mxu0
        %v5001 = vadd.f32 %v4832, %v5000
        %v5002 = vpop.f32.mrf.mxu0
        %v5003 = vadd.f32 %v4834, %v5002
        %5004 = vmatmul.bf16.gmra.mxu0 %v1712
        %v5005 = vpop.f32.mrf.mxu0
        %v5006 = vadd.f32 %v4837, %v5005
        %v5007 = vpop.f32.mrf.mxu0
        %v5008 = vadd.f32 %v4839, %v5007
        %5009 = vmatmul.bf16.gmra.mxu0 %v1716
        %v5010 = vpop.f32.mrf.mxu0
        %v5011 = vadd.f32 %v4842, %v5010
        %v5012 = vpop.f32.mrf.mxu0
        %v5013 = vadd.f32 %v4844, %v5012
        %5014 = vmatmul.bf16.gmra.mxu0 %v1720
        %v5015 = vpop.f32.mrf.mxu0
        %v5016 = vadd.f32 %v4847, %v5015
        %v5017 = vpop.f32.mrf.mxu0
        %v5018 = vadd.f32 %v4849, %v5017
        %5019 = vmatmul.bf16.gmra.mxu0 %v1724
        %v5020 = vpop.f32.mrf.mxu0
        %v5021 = vadd.f32 %v4852, %v5020
        %v5022 = vpop.f32.mrf.mxu0
        %v5023 = vadd.f32 %v4854, %v5022
        %5024 = vmatmul.bf16.gmra.mxu0 %v1728
        %v5025 = vpop.f32.mrf.mxu0
        %v5026 = vadd.f32 %v4857, %v5025
        %v5027 = vpop.f32.mrf.mxu0
        %v5028 = vadd.f32 %v4859, %v5027
        %5029 = vmatmul.bf16.gmra.mxu0 %v1732
        %v5030 = vpop.f32.mrf.mxu0
        %v5031 = vadd.f32 %v4862, %v5030
        %v5032 = vpop.f32.mrf.mxu0
        %v5033 = vadd.f32 %v4864, %v5032
        %5034 = vmatmul.bf16.gmra.mxu0 %v1736
        %v5035 = vpop.f32.mrf.mxu0
        %v5036 = vadd.f32 %v4867, %v5035
        %v5037 = vpop.f32.mrf.mxu0
        %v5038 = vadd.f32 %v4869, %v5037
        %5039 = vmatmul.bf16.gmra.mxu0 %v1740
        %v5040 = vpop.f32.mrf.mxu0
        %v5041 = vadd.f32 %v4872, %v5040
        %v5042 = vpop.f32.mrf.mxu0
        %v5043 = vadd.f32 %v4874, %v5042
        %5044 = vdwg.mxu0
        %5045 = vmatpush.bf16.msra.mxu0 %v2381
        %5046 = vmatpush.bf16.msra.mxu0 %v2377
        %5047 = vmatpush.bf16.msra.mxu0 %v2373
        %5048 = vmatpush.bf16.msra.mxu0 %v2369
        %5049 = vmatpush.bf16.msra.mxu0 %v2365
        %5050 = vmatpush.bf16.msra.mxu0 %v2361
        %5051 = vmatpush.bf16.msra.mxu0 %v2357
        %5052 = vmatpush.bf16.msra.mxu0 %v2353
        %5053 = vmatmul.bf16.gmra.mxu0 %v1617
        %v5054 = vpop.f32.mrf.mxu0
        %v5055 = vadd.f32 %v4886, %v5054
        %v5056 = vpop.f32.mrf.mxu0
        %v5057 = vadd.f32 %v4888, %v5056
        %5058 = vmatmul.bf16.gmra.mxu0 %v1621
        %v5059 = vpop.f32.mrf.mxu0
        %v5060 = vadd.f32 %v4891, %v5059
        %v5061 = vpop.f32.mrf.mxu0
        %v5062 = vadd.f32 %v4893, %v5061
        %5063 = vmatmul.bf16.gmra.mxu0 %v1625
        %v5064 = vpop.f32.mrf.mxu0
        %v5065 = vadd.f32 %v4896, %v5064
        %v5066 = vpop.f32.mrf.mxu0
        %v5067 = vadd.f32 %v4898, %v5066
        %5068 = vmatmul.bf16.gmra.mxu0 %v1629
        %v5069 = vpop.f32.mrf.mxu0
        %v5070 = vadd.f32 %v4901, %v5069
        %v5071 = vpop.f32.mrf.mxu0
        %v5072 = vadd.f32 %v4903, %v5071
        %5073 = vmatmul.bf16.gmra.mxu0 %v1633
        %v5074 = vpop.f32.mrf.mxu0
        %v5075 = vadd.f32 %v4906, %v5074
        %v5076 = vpop.f32.mrf.mxu0
        %v5077 = vadd.f32 %v4908, %v5076
        %5078 = vmatmul.bf16.gmra.mxu0 %v1637
        %v5079 = vpop.f32.mrf.mxu0
        %v5080 = vadd.f32 %v4911, %v5079
        %v5081 = vpop.f32.mrf.mxu0
        %v5082 = vadd.f32 %v4913, %v5081
        %5083 = vmatmul.bf16.gmra.mxu0 %v1641
        %v5084 = vpop.f32.mrf.mxu0
        %v5085 = vadd.f32 %v4916, %v5084
        %v5086 = vpop.f32.mrf.mxu0
        %v5087 = vadd.f32 %v4918, %v5086
        %5088 = vmatmul.bf16.gmra.mxu0 %v1645
        %v5089 = vpop.f32.mrf.mxu0
        %v5090 = vadd.f32 %v4921, %v5089
        %v5091 = vpop.f32.mrf.mxu0
        %v5092 = vadd.f32 %v4923, %v5091
        %5093 = vmatmul.bf16.gmra.mxu0 %v1649
        %v5094 = vpop.f32.mrf.mxu0
        %v5095 = vadd.f32 %v4926, %v5094
        %v5096 = vpop.f32.mrf.mxu0
        %v5097 = vadd.f32 %v4928, %v5096
        %5098 = vmatmul.bf16.gmra.mxu0 %v1653
        %v5099 = vpop.f32.mrf.mxu0
        %v5100 = vadd.f32 %v4931, %v5099
        %v5101 = vpop.f32.mrf.mxu0
        %v5102 = vadd.f32 %v4933, %v5101
        %5103 = vmatmul.bf16.gmra.mxu0 %v1657
        %v5104 = vpop.f32.mrf.mxu0
        %v5105 = vadd.f32 %v4936, %v5104
        %v5106 = vpop.f32.mrf.mxu0
        %v5107 = vadd.f32 %v4938, %v5106
        %5108 = vmatmul.bf16.gmra.mxu0 %v1661
        %v5109 = vpop.f32.mrf.mxu0
        %v5110 = vadd.f32 %v4941, %v5109
        %v5111 = vpop.f32.mrf.mxu0
        %v5112 = vadd.f32 %v4943, %v5111
        %5113 = vmatmul.bf16.gmra.mxu0 %v1665
        %v5114 = vpop.f32.mrf.mxu0
        %v5115 = vadd.f32 %v4946, %v5114
        %v5116 = vpop.f32.mrf.mxu0
        %v5117 = vadd.f32 %v4948, %v5116
        %5118 = vmatmul.bf16.gmra.mxu0 %v1669
        %v5119 = vpop.f32.mrf.mxu0
        %v5120 = vadd.f32 %v4951, %v5119
        %v5121 = vpop.f32.mrf.mxu0
        %v5122 = vadd.f32 %v4953, %v5121
        %5123 = vmatmul.bf16.gmra.mxu0 %v1673
        %v5124 = vpop.f32.mrf.mxu0
        %v5125 = vadd.f32 %v4956, %v5124
        %v5126 = vpop.f32.mrf.mxu0
        %v5127 = vadd.f32 %v4958, %v5126
        %5128 = vmatmul.bf16.gmra.mxu0 %v1677
        %v5129 = vpop.f32.mrf.mxu0
        %v5130 = vadd.f32 %v4961, %v5129
        %v5131 = vpop.f32.mrf.mxu0
        %v5132 = vadd.f32 %v4963, %v5131
        %5133 = vmatmul.bf16.gmra.mxu0 %v1681
        %v5134 = vpop.f32.mrf.mxu0
        %v5135 = vadd.f32 %v4966, %v5134
        %v5136 = vpop.f32.mrf.mxu0
        %v5137 = vadd.f32 %v4968, %v5136
        %5138 = vmatmul.bf16.gmra.mxu0 %v1685
        %v5139 = vpop.f32.mrf.mxu0
        %v5140 = vadd.f32 %v4971, %v5139
        %v5141 = vpop.f32.mrf.mxu0
        %v5142 = vadd.f32 %v4973, %v5141
        %5143 = vmatmul.bf16.gmra.mxu0 %v1689
        %v5144 = vpop.f32.mrf.mxu0
        %v5145 = vadd.f32 %v4976, %v5144
        %v5146 = vpop.f32.mrf.mxu0
        %v5147 = vadd.f32 %v4978, %v5146
        %5148 = vmatmul.bf16.gmra.mxu0 %v1693
        %v5149 = vpop.f32.mrf.mxu0
        %v5150 = vadd.f32 %v4981, %v5149
        %v5151 = vpop.f32.mrf.mxu0
        %v5152 = vadd.f32 %v4983, %v5151
        %5153 = vmatmul.bf16.gmra.mxu0 %v1697
        %v5154 = vpop.f32.mrf.mxu0
        %v5155 = vadd.f32 %v4986, %v5154
        %v5156 = vpop.f32.mrf.mxu0
        %v5157 = vadd.f32 %v4988, %v5156
        %5158 = vmatmul.bf16.gmra.mxu0 %v1701
        %v5159 = vpop.f32.mrf.mxu0
        %v5160 = vadd.f32 %v4991, %v5159
        %v5161 = vpop.f32.mrf.mxu0
        %v5162 = vadd.f32 %v4993, %v5161
        %5163 = vmatmul.bf16.gmra.mxu0 %v1705
        %v5164 = vpop.f32.mrf.mxu0
        %v5165 = vadd.f32 %v4996, %v5164
        %v5166 = vpop.f32.mrf.mxu0
        %v5167 = vadd.f32 %v4998, %v5166
        %5168 = vmatmul.bf16.gmra.mxu0 %v1709
        %v5169 = vpop.f32.mrf.mxu0
        %v5170 = vadd.f32 %v5001, %v5169
        %v5171 = vpop.f32.mrf.mxu0
        %v5172 = vadd.f32 %v5003, %v5171
        %5173 = vmatmul.bf16.gmra.mxu0 %v1713
        %v5174 = vpop.f32.mrf.mxu0
        %v5175 = vadd.f32 %v5006, %v5174
        %v5176 = vpop.f32.mrf.mxu0
        %v5177 = vadd.f32 %v5008, %v5176
        %5178 = vmatmul.bf16.gmra.mxu0 %v1717
        %v5179 = vpop.f32.mrf.mxu0
        %v5180 = vadd.f32 %v5011, %v5179
        %v5181 = vpop.f32.mrf.mxu0
        %v5182 = vadd.f32 %v5013, %v5181
        %5183 = vmatmul.bf16.gmra.mxu0 %v1721
        %v5184 = vpop.f32.mrf.mxu0
        %v5185 = vadd.f32 %v5016, %v5184
        %v5186 = vpop.f32.mrf.mxu0
        %v5187 = vadd.f32 %v5018, %v5186
        %5188 = vmatmul.bf16.gmra.mxu0 %v1725
        %v5189 = vpop.f32.mrf.mxu0
        %v5190 = vadd.f32 %v5021, %v5189
        %v5191 = vpop.f32.mrf.mxu0
        %v5192 = vadd.f32 %v5023, %v5191
        %5193 = vmatmul.bf16.gmra.mxu0 %v1729
        %v5194 = vpop.f32.mrf.mxu0
        %v5195 = vadd.f32 %v5026, %v5194
        %v5196 = vpop.f32.mrf.mxu0
        %v5197 = vadd.f32 %v5028, %v5196
        %5198 = vmatmul.bf16.gmra.mxu0 %v1733
        %v5199 = vpop.f32.mrf.mxu0
        %v5200 = vadd.f32 %v5031, %v5199
        %v5201 = vpop.f32.mrf.mxu0
        %v5202 = vadd.f32 %v5033, %v5201
        %5203 = vmatmul.bf16.gmra.mxu0 %v1737
        %v5204 = vpop.f32.mrf.mxu0
        %v5205 = vadd.f32 %v5036, %v5204
        %v5206 = vpop.f32.mrf.mxu0
        %v5207 = vadd.f32 %v5038, %v5206
        %5208 = vmatmul.bf16.gmra.mxu0 %v1741
        %v5209 = vpop.f32.mrf.mxu0
        %v5210 = vadd.f32 %v5041, %v5209
        %v5211 = vpop.f32.mrf.mxu0
        %v5212 = vadd.f32 %v5043, %v5211
        %5213 = vdwg.mxu0
        %v5214 = vadd.f32 %v718, %v3027
        %v5215 = vadd.f32 %v719, %v3703
        %v5216 = vadd.f32 %v720, %v4379
        %v5217 = vadd.f32 %v721, %v5055
        %v5218 = vadd.f32 %v722, %v3029
        %v5219 = vadd.f32 %v723, %v3705
        %v5220 = vadd.f32 %v724, %v4381
        %v5221 = vadd.f32 %v725, %v5057
        %v5222 = vadd.f32 %v726, %v3032
        %v5223 = vadd.f32 %v727, %v3708
        %v5224 = vadd.f32 %v728, %v4384
        %v5225 = vadd.f32 %v729, %v5060
        %v5226 = vadd.f32 %v730, %v3034
        %v5227 = vadd.f32 %v731, %v3710
        %v5228 = vadd.f32 %v732, %v4386
        %v5229 = vadd.f32 %v733, %v5062
        %v5230 = vadd.f32 %v734, %v3037
        %v5231 = vadd.f32 %v735, %v3713
        %v5232 = vadd.f32 %v736, %v4389
        %v5233 = vadd.f32 %v737, %v5065
        %v5234 = vadd.f32 %v738, %v3039
        %v5235 = vadd.f32 %v739, %v3715
        %v5236 = vadd.f32 %v740, %v4391
        %v5237 = vadd.f32 %v741, %v5067
        %v5238 = vadd.f32 %v742, %v3042
        %v5239 = vadd.f32 %v743, %v3718
        %v5240 = vadd.f32 %v744, %v4394
        %v5241 = vadd.f32 %v745, %v5070
        %v5242 = vadd.f32 %v746, %v3044
        %v5243 = vadd.f32 %v747, %v3720
        %v5244 = vadd.f32 %v748, %v4396
        %v5245 = vadd.f32 %v749, %v5072
        %v5246 = vadd.f32 %v750, %v3047
        %v5247 = vadd.f32 %v751, %v3723
        %v5248 = vadd.f32 %v752, %v4399
        %v5249 = vadd.f32 %v753, %v5075
        %v5250 = vadd.f32 %v754, %v3049
        %v5251 = vadd.f32 %v755, %v3725
        %v5252 = vadd.f32 %v756, %v4401
        %v5253 = vadd.f32 %v757, %v5077
        %v5254 = vadd.f32 %v758, %v3052
        %v5255 = vadd.f32 %v759, %v3728
        %v5256 = vadd.f32 %v760, %v4404
        %v5257 = vadd.f32 %v761, %v5080
        %v5258 = vadd.f32 %v762, %v3054
        %v5259 = vadd.f32 %v763, %v3730
        %v5260 = vadd.f32 %v764, %v4406
        %v5261 = vadd.f32 %v765, %v5082
        %v5262 = vadd.f32 %v766, %v3057
        %v5263 = vadd.f32 %v767, %v3733
        %v5264 = vadd.f32 %v768, %v4409
        %v5265 = vadd.f32 %v769, %v5085
        %v5266 = vadd.f32 %v770, %v3059
        %v5267 = vadd.f32 %v771, %v3735
        %v5268 = vadd.f32 %v772, %v4411
        %v5269 = vadd.f32 %v773, %v5087
        %v5270 = vadd.f32 %v774, %v3062
        %v5271 = vadd.f32 %v775, %v3738
        %v5272 = vadd.f32 %v776, %v4414
        %v5273 = vadd.f32 %v777, %v5090
        %v5274 = vadd.f32 %v778, %v3064
        %v5275 = vadd.f32 %v779, %v3740
        %v5276 = vadd.f32 %v780, %v4416
        %v5277 = vadd.f32 %v781, %v5092
        %v5278 = vadd.f32 %v782, %v3067
        %v5279 = vadd.f32 %v783, %v3743
        %v5280 = vadd.f32 %v784, %v4419
        %v5281 = vadd.f32 %v785, %v5095
        %v5282 = vadd.f32 %v786, %v3069
        %v5283 = vadd.f32 %v787, %v3745
        %v5284 = vadd.f32 %v788, %v4421
        %v5285 = vadd.f32 %v789, %v5097
        %v5286 = vadd.f32 %v790, %v3072
        %v5287 = vadd.f32 %v791, %v3748
        %v5288 = vadd.f32 %v792, %v4424
        %v5289 = vadd.f32 %v793, %v5100
        %v5290 = vadd.f32 %v794, %v3074
        %v5291 = vadd.f32 %v795, %v3750
        %v5292 = vadd.f32 %v796, %v4426
        %v5293 = vadd.f32 %v797, %v5102
        %v5294 = vadd.f32 %v798, %v3077
        %v5295 = vadd.f32 %v799, %v3753
        %v5296 = vadd.f32 %v800, %v4429
        %v5297 = vadd.f32 %v801, %v5105
        %v5298 = vadd.f32 %v802, %v3079
        %v5299 = vadd.f32 %v803, %v3755
        %v5300 = vadd.f32 %v804, %v4431
        %v5301 = vadd.f32 %v805, %v5107
        %v5302 = vadd.f32 %v806, %v3082
        %v5303 = vadd.f32 %v807, %v3758
        %v5304 = vadd.f32 %v808, %v4434
        %v5305 = vadd.f32 %v809, %v5110
        %v5306 = vadd.f32 %v810, %v3084
        %v5307 = vadd.f32 %v811, %v3760
        %v5308 = vadd.f32 %v812, %v4436
        %v5309 = vadd.f32 %v813, %v5112
        %v5310 = vadd.f32 %v814, %v3087
        %v5311 = vadd.f32 %v815, %v3763
        %v5312 = vadd.f32 %v816, %v4439
        %v5313 = vadd.f32 %v817, %v5115
        %v5314 = vadd.f32 %v818, %v3089
        %v5315 = vadd.f32 %v819, %v3765
        %v5316 = vadd.f32 %v820, %v4441
        %v5317 = vadd.f32 %v821, %v5117
        %v5318 = vadd.f32 %v822, %v3092
        %v5319 = vadd.f32 %v823, %v3768
        %v5320 = vadd.f32 %v824, %v4444
        %v5321 = vadd.f32 %v825, %v5120
        %v5322 = vadd.f32 %v826, %v3094
        %v5323 = vadd.f32 %v827, %v3770
        %v5324 = vadd.f32 %v828, %v4446
        %v5325 = vadd.f32 %v829, %v5122
        %v5326 = vadd.f32 %v830, %v3097
        %v5327 = vadd.f32 %v831, %v3773
        %v5328 = vadd.f32 %v832, %v4449
        %v5329 = vadd.f32 %v833, %v5125
        %v5330 = vadd.f32 %v834, %v3099
        %v5331 = vadd.f32 %v835, %v3775
        %v5332 = vadd.f32 %v836, %v4451
        %v5333 = vadd.f32 %v837, %v5127
        %v5334 = vadd.f32 %v838, %v3102
        %v5335 = vadd.f32 %v839, %v3778
        %v5336 = vadd.f32 %v840, %v4454
        %v5337 = vadd.f32 %v841, %v5130
        %v5338 = vadd.f32 %v842, %v3104
        %v5339 = vadd.f32 %v843, %v3780
        %v5340 = vadd.f32 %v844, %v4456
        %v5341 = vadd.f32 %v845, %v5132
        %v5342 = vadd.f32 %v846, %v3107
        %v5343 = vadd.f32 %v847, %v3783
        %v5344 = vadd.f32 %v848, %v4459
        %v5345 = vadd.f32 %v849, %v5135
        %v5346 = vadd.f32 %v850, %v3109
        %v5347 = vadd.f32 %v851, %v3785
        %v5348 = vadd.f32 %v852, %v4461
        %v5349 = vadd.f32 %v853, %v5137
        %v5350 = vadd.f32 %v854, %v3112
        %v5351 = vadd.f32 %v855, %v3788
        %v5352 = vadd.f32 %v856, %v4464
        %v5353 = vadd.f32 %v857, %v5140
        %v5354 = vadd.f32 %v858, %v3114
        %v5355 = vadd.f32 %v859, %v3790
        %v5356 = vadd.f32 %v860, %v4466
        %v5357 = vadd.f32 %v861, %v5142
        %v5358 = vadd.f32 %v862, %v3117
        %v5359 = vadd.f32 %v863, %v3793
        %v5360 = vadd.f32 %v864, %v4469
        %v5361 = vadd.f32 %v865, %v5145
        %v5362 = vadd.f32 %v866, %v3119
        %v5363 = vadd.f32 %v867, %v3795
        %v5364 = vadd.f32 %v868, %v4471
        %v5365 = vadd.f32 %v869, %v5147
        %v5366 = vadd.f32 %v870, %v3122
        %v5367 = vadd.f32 %v871, %v3798
        %v5368 = vadd.f32 %v872, %v4474
        %v5369 = vadd.f32 %v873, %v5150
        %v5370 = vadd.f32 %v874, %v3124
        %v5371 = vadd.f32 %v875, %v3800
        %v5372 = vadd.f32 %v876, %v4476
        %v5373 = vadd.f32 %v877, %v5152
        %v5374 = vadd.f32 %v878, %v3127
        %v5375 = vadd.f32 %v879, %v3803
        %v5376 = vadd.f32 %v880, %v4479
        %v5377 = vadd.f32 %v881, %v5155
        %v5378 = vadd.f32 %v882, %v3129
        %v5379 = vadd.f32 %v883, %v3805
        %v5380 = vadd.f32 %v884, %v4481
        %v5381 = vadd.f32 %v885, %v5157
        %v5382 = vadd.f32 %v886, %v3132
        %v5383 = vadd.f32 %v887, %v3808
        %v5384 = vadd.f32 %v888, %v4484
        %v5385 = vadd.f32 %v889, %v5160
        %v5386 = vadd.f32 %v890, %v3134
        %v5387 = vadd.f32 %v891, %v3810
        %v5388 = vadd.f32 %v892, %v4486
        %v5389 = vadd.f32 %v893, %v5162
        %v5390 = vadd.f32 %v894, %v3137
        %v5391 = vadd.f32 %v895, %v3813
        %v5392 = vadd.f32 %v896, %v4489
        %v5393 = vadd.f32 %v897, %v5165
        %v5394 = vadd.f32 %v898, %v3139
        %v5395 = vadd.f32 %v899, %v3815
        %v5396 = vadd.f32 %v900, %v4491
        %v5397 = vadd.f32 %v901, %v5167
        %v5398 = vadd.f32 %v902, %v3142
        %v5399 = vadd.f32 %v903, %v3818
        %v5400 = vadd.f32 %v904, %v4494
        %v5401 = vadd.f32 %v905, %v5170
        %v5402 = vadd.f32 %v906, %v3144
        %v5403 = vadd.f32 %v907, %v3820
        %v5404 = vadd.f32 %v908, %v4496
        %v5405 = vadd.f32 %v909, %v5172
        %v5406 = vadd.f32 %v910, %v3147
        %v5407 = vadd.f32 %v911, %v3823
        %v5408 = vadd.f32 %v912, %v4499
        %v5409 = vadd.f32 %v913, %v5175
        %v5410 = vadd.f32 %v914, %v3149
        %v5411 = vadd.f32 %v915, %v3825
        %v5412 = vadd.f32 %v916, %v4501
        %v5413 = vadd.f32 %v917, %v5177
        %v5414 = vadd.f32 %v918, %v3152
        %v5415 = vadd.f32 %v919, %v3828
        %v5416 = vadd.f32 %v920, %v4504
        %v5417 = vadd.f32 %v921, %v5180
        %v5418 = vadd.f32 %v922, %v3154
        %v5419 = vadd.f32 %v923, %v3830
        %v5420 = vadd.f32 %v924, %v4506
        %v5421 = vadd.f32 %v925, %v5182
        %v5422 = vadd.f32 %v926, %v3157
        %v5423 = vadd.f32 %v927, %v3833
        %v5424 = vadd.f32 %v928, %v4509
        %v5425 = vadd.f32 %v929, %v5185
        %v5426 = vadd.f32 %v930, %v3159
        %v5427 = vadd.f32 %v931, %v3835
        %v5428 = vadd.f32 %v932, %v4511
        %v5429 = vadd.f32 %v933, %v5187
        %v5430 = vadd.f32 %v934, %v3162
        %v5431 = vadd.f32 %v935, %v3838
        %v5432 = vadd.f32 %v936, %v4514
        %v5433 = vadd.f32 %v937, %v5190
        %v5434 = vadd.f32 %v938, %v3164
        %v5435 = vadd.f32 %v939, %v3840
        %v5436 = vadd.f32 %v940, %v4516
        %v5437 = vadd.f32 %v941, %v5192
        %v5438 = vadd.f32 %v942, %v3167
        %v5439 = vadd.f32 %v943, %v3843
        %v5440 = vadd.f32 %v944, %v4519
        %v5441 = vadd.f32 %v945, %v5195
        %v5442 = vadd.f32 %v946, %v3169
        %v5443 = vadd.f32 %v947, %v3845
        %v5444 = vadd.f32 %v948, %v4521
        %v5445 = vadd.f32 %v949, %v5197
        %v5446 = vadd.f32 %v950, %v3172
        %v5447 = vadd.f32 %v951, %v3848
        %v5448 = vadd.f32 %v952, %v4524
        %v5449 = vadd.f32 %v953, %v5200
        %v5450 = vadd.f32 %v954, %v3174
        %v5451 = vadd.f32 %v955, %v3850
        %v5452 = vadd.f32 %v956, %v4526
        %v5453 = vadd.f32 %v957, %v5202
        %v5454 = vadd.f32 %v958, %v3177
        %v5455 = vadd.f32 %v959, %v3853
        %v5456 = vadd.f32 %v960, %v4529
        %v5457 = vadd.f32 %v961, %v5205
        %v5458 = vadd.f32 %v962, %v3179
        %v5459 = vadd.f32 %v963, %v3855
        %v5460 = vadd.f32 %v964, %v4531
        %v5461 = vadd.f32 %v965, %v5207
        %v5462 = vadd.f32 %v966, %v3182
        %v5463 = vadd.f32 %v967, %v3858
        %v5464 = vadd.f32 %v968, %v4534
        %v5465 = vadd.f32 %v969, %v5210
        %v5466 = vadd.f32 %v970, %v3184
        %v5467 = vadd.f32 %v971, %v3860
        %v5468 = vadd.f32 %v972, %v4536
        %v5469 = vadd.f32 %v973, %v5212
        %5470 = vst [vmem:[#allocation2] sm:$0xff] %v5214
        %5471 = vst [vmem:[#allocation2 + $0x8] sm:$0xff] %v5215
        %5472 = vst [vmem:[#allocation2 + $0x10] sm:$0xff] %v5216
        %5473 = vst [vmem:[#allocation2 + $0x18] sm:$0xff] %v5217
        %5474 = vst [vmem:[#allocation2 + $0x20] sm:$0xff] %v5218
        %5475 = vst [vmem:[#allocation2 + $0x28] sm:$0xff] %v5219
        %5476 = vst [vmem:[#allocation2 + $0x30] sm:$0xff] %v5220
        %5477 = vst [vmem:[#allocation2 + $0x38] sm:$0xff] %v5221
        %5478 = vst [vmem:[#allocation2 + $0x40] sm:$0xff] %v5222
        %5479 = vst [vmem:[#allocation2 + $0x48] sm:$0xff] %v5223
        %5480 = vst [vmem:[#allocation2 + $0x50] sm:$0xff] %v5224
        %5481 = vst [vmem:[#allocation2 + $0x58] sm:$0xff] %v5225
        %5482 = vst [vmem:[#allocation2 + $0x60] sm:$0xff] %v5226
        %5483 = vst [vmem:[#allocation2 + $0x68] sm:$0xff] %v5227
        %5484 = vst [vmem:[#allocation2 + $0x70] sm:$0xff] %v5228
        %5485 = vst [vmem:[#allocation2 + $0x78] sm:$0xff] %v5229
        %5486 = vst [vmem:[#allocation2 + $0x80] sm:$0xff] %v5230
        %5487 = vst [vmem:[#allocation2 + $0x88] sm:$0xff] %v5231
        %5488 = vst [vmem:[#allocation2 + $0x90] sm:$0xff] %v5232
        %5489 = vst [vmem:[#allocation2 + $0x98] sm:$0xff] %v5233
        %5490 = vst [vmem:[#allocation2 + $0xa0] sm:$0xff] %v5234
        %5491 = vst [vmem:[#allocation2 + $0xa8] sm:$0xff] %v5235
        %5492 = vst [vmem:[#allocation2 + $0xb0] sm:$0xff] %v5236
        %5493 = vst [vmem:[#allocation2 + $0xb8] sm:$0xff] %v5237
        %5494 = vst [vmem:[#allocation2 + $0xc0] sm:$0xff] %v5238
        %5495 = vst [vmem:[#allocation2 + $0xc8] sm:$0xff] %v5239
        %5496 = vst [vmem:[#allocation2 + $0xd0] sm:$0xff] %v5240
        %5497 = vst [vmem:[#allocation2 + $0xd8] sm:$0xff] %v5241
        %5498 = vst [vmem:[#allocation2 + $0xe0] sm:$0xff] %v5242
        %5499 = vst [vmem:[#allocation2 + $0xe8] sm:$0xff] %v5243
        %5500 = vst [vmem:[#allocation2 + $0xf0] sm:$0xff] %v5244
        %5501 = vst [vmem:[#allocation2 + $0xf8] sm:$0xff] %v5245
        %5502 = vst [vmem:[#allocation2 + $0x100] sm:$0xff] %v5246
        %5503 = vst [vmem:[#allocation2 + $0x108] sm:$0xff] %v5247
        %5504 = vst [vmem:[#allocation2 + $0x110] sm:$0xff] %v5248
        %5505 = vst [vmem:[#allocation2 + $0x118] sm:$0xff] %v5249
        %5506 = vst [vmem:[#allocation2 + $0x120] sm:$0xff] %v5250
        %5507 = vst [vmem:[#allocation2 + $0x128] sm:$0xff] %v5251
        %5508 = vst [vmem:[#allocation2 + $0x130] sm:$0xff] %v5252
        %5509 = vst [vmem:[#allocation2 + $0x138] sm:$0xff] %v5253
        %5510 = vst [vmem:[#allocation2 + $0x140] sm:$0xff] %v5254
        %5511 = vst [vmem:[#allocation2 + $0x148] sm:$0xff] %v5255
        %5512 = vst [vmem:[#allocation2 + $0x150] sm:$0xff] %v5256
        %5513 = vst [vmem:[#allocation2 + $0x158] sm:$0xff] %v5257
        %5514 = vst [vmem:[#allocation2 + $0x160] sm:$0xff] %v5258
        %5515 = vst [vmem:[#allocation2 + $0x168] sm:$0xff] %v5259
        %5516 = vst [vmem:[#allocation2 + $0x170] sm:$0xff] %v5260
        %5517 = vst [vmem:[#allocation2 + $0x178] sm:$0xff] %v5261
        %5518 = vst [vmem:[#allocation2 + $0x180] sm:$0xff] %v5262
        %5519 = vst [vmem:[#allocation2 + $0x188] sm:$0xff] %v5263
        %5520 = vst [vmem:[#allocation2 + $0x190] sm:$0xff] %v5264
        %5521 = vst [vmem:[#allocation2 + $0x198] sm:$0xff] %v5265
        %5522 = vst [vmem:[#allocation2 + $0x1a0] sm:$0xff] %v5266
        %5523 = vst [vmem:[#allocation2 + $0x1a8] sm:$0xff] %v5267
        %5524 = vst [vmem:[#allocation2 + $0x1b0] sm:$0xff] %v5268
        %5525 = vst [vmem:[#allocation2 + $0x1b8] sm:$0xff] %v5269
        %5526 = vst [vmem:[#allocation2 + $0x1c0] sm:$0xff] %v5270
        %5527 = vst [vmem:[#allocation2 + $0x1c8] sm:$0xff] %v5271
        %5528 = vst [vmem:[#allocation2 + $0x1d0] sm:$0xff] %v5272
        %5529 = vst [vmem:[#allocation2 + $0x1d8] sm:$0xff] %v5273
        %5530 = vst [vmem:[#allocation2 + $0x1e0] sm:$0xff] %v5274
        %5531 = vst [vmem:[#allocation2 + $0x1e8] sm:$0xff] %v5275
        %5532 = vst [vmem:[#allocation2 + $0x1f0] sm:$0xff] %v5276
        %5533 = vst [vmem:[#allocation2 + $0x1f8] sm:$0xff] %v5277
        %5534 = vst [vmem:[#allocation2 + $0x200] sm:$0xff] %v5278
        %5535 = vst [vmem:[#allocation2 + $0x208] sm:$0xff] %v5279
        %5536 = vst [vmem:[#allocation2 + $0x210] sm:$0xff] %v5280
        %5537 = vst [vmem:[#allocation2 + $0x218] sm:$0xff] %v5281
        %5538 = vst [vmem:[#allocation2 + $0x220] sm:$0xff] %v5282
        %5539 = vst [vmem:[#allocation2 + $0x228] sm:$0xff] %v5283
        %5540 = vst [vmem:[#allocation2 + $0x230] sm:$0xff] %v5284
        %5541 = vst [vmem:[#allocation2 + $0x238] sm:$0xff] %v5285
        %5542 = vst [vmem:[#allocation2 + $0x240] sm:$0xff] %v5286
        %5543 = vst [vmem:[#allocation2 + $0x248] sm:$0xff] %v5287
        %5544 = vst [vmem:[#allocation2 + $0x250] sm:$0xff] %v5288
        %5545 = vst [vmem:[#allocation2 + $0x258] sm:$0xff] %v5289
        %5546 = vst [vmem:[#allocation2 + $0x260] sm:$0xff] %v5290
        %5547 = vst [vmem:[#allocation2 + $0x268] sm:$0xff] %v5291
        %5548 = vst [vmem:[#allocation2 + $0x270] sm:$0xff] %v5292
        %5549 = vst [vmem:[#allocation2 + $0x278] sm:$0xff] %v5293
        %5550 = vst [vmem:[#allocation2 + $0x280] sm:$0xff] %v5294
        %5551 = vst [vmem:[#allocation2 + $0x288] sm:$0xff] %v5295
        %5552 = vst [vmem:[#allocation2 + $0x290] sm:$0xff] %v5296
        %5553 = vst [vmem:[#allocation2 + $0x298] sm:$0xff] %v5297
        %5554 = vst [vmem:[#allocation2 + $0x2a0] sm:$0xff] %v5298
        %5555 = vst [vmem:[#allocation2 + $0x2a8] sm:$0xff] %v5299
        %5556 = vst [vmem:[#allocation2 + $0x2b0] sm:$0xff] %v5300
        %5557 = vst [vmem:[#allocation2 + $0x2b8] sm:$0xff] %v5301
        %5558 = vst [vmem:[#allocation2 + $0x2c0] sm:$0xff] %v5302
        %5559 = vst [vmem:[#allocation2 + $0x2c8] sm:$0xff] %v5303
        %5560 = vst [vmem:[#allocation2 + $0x2d0] sm:$0xff] %v5304
        %5561 = vst [vmem:[#allocation2 + $0x2d8] sm:$0xff] %v5305
        %5562 = vst [vmem:[#allocation2 + $0x2e0] sm:$0xff] %v5306
        %5563 = vst [vmem:[#allocation2 + $0x2e8] sm:$0xff] %v5307
        %5564 = vst [vmem:[#allocation2 + $0x2f0] sm:$0xff] %v5308
        %5565 = vst [vmem:[#allocation2 + $0x2f8] sm:$0xff] %v5309
        %5566 = vst [vmem:[#allocation2 + $0x300] sm:$0xff] %v5310
        %5567 = vst [vmem:[#allocation2 + $0x308] sm:$0xff] %v5311
        %5568 = vst [vmem:[#allocation2 + $0x310] sm:$0xff] %v5312
        %5569 = vst [vmem:[#allocation2 + $0x318] sm:$0xff] %v5313
        %5570 = vst [vmem:[#allocation2 + $0x320] sm:$0xff] %v5314
        %5571 = vst [vmem:[#allocation2 + $0x328] sm:$0xff] %v5315
        %5572 = vst [vmem:[#allocation2 + $0x330] sm:$0xff] %v5316
        %5573 = vst [vmem:[#allocation2 + $0x338] sm:$0xff] %v5317
        %5574 = vst [vmem:[#allocation2 + $0x340] sm:$0xff] %v5318
        %5575 = vst [vmem:[#allocation2 + $0x348] sm:$0xff] %v5319
        %5576 = vst [vmem:[#allocation2 + $0x350] sm:$0xff] %v5320
        %5577 = vst [vmem:[#allocation2 + $0x358] sm:$0xff] %v5321
        %5578 = vst [vmem:[#allocation2 + $0x360] sm:$0xff] %v5322
        %5579 = vst [vmem:[#allocation2 + $0x368] sm:$0xff] %v5323
        %5580 = vst [vmem:[#allocation2 + $0x370] sm:$0xff] %v5324
        %5581 = vst [vmem:[#allocation2 + $0x378] sm:$0xff] %v5325
        %5582 = vst [vmem:[#allocation2 + $0x380] sm:$0xff] %v5326
        %5583 = vst [vmem:[#allocation2 + $0x388] sm:$0xff] %v5327
        %5584 = vst [vmem:[#allocation2 + $0x390] sm:$0xff] %v5328
        %5585 = vst [vmem:[#allocation2 + $0x398] sm:$0xff] %v5329
        %5586 = vst [vmem:[#allocation2 + $0x3a0] sm:$0xff] %v5330
        %5587 = vst [vmem:[#allocation2 + $0x3a8] sm:$0xff] %v5331
        %5588 = vst [vmem:[#allocation2 + $0x3b0] sm:$0xff] %v5332
        %5589 = vst [vmem:[#allocation2 + $0x3b8] sm:$0xff] %v5333
        %5590 = vst [vmem:[#allocation2 + $0x3c0] sm:$0xff] %v5334
        %5591 = vst [vmem:[#allocation2 + $0x3c8] sm:$0xff] %v5335
        %5592 = vst [vmem:[#allocation2 + $0x3d0] sm:$0xff] %v5336
        %5593 = vst [vmem:[#allocation2 + $0x3d8] sm:$0xff] %v5337
        %5594 = vst [vmem:[#allocation2 + $0x3e0] sm:$0xff] %v5338
        %5595 = vst [vmem:[#allocation2 + $0x3e8] sm:$0xff] %v5339
        %5596 = vst [vmem:[#allocation2 + $0x3f0] sm:$0xff] %v5340
        %5597 = vst [vmem:[#allocation2 + $0x3f8] sm:$0xff] %v5341
        %5598 = vst [vmem:[#allocation2 + $0x400] sm:$0xff] %v5342
        %5599 = vst [vmem:[#allocation2 + $0x408] sm:$0xff] %v5343
        %5600 = vst [vmem:[#allocation2 + $0x410] sm:$0xff] %v5344
        %5601 = vst [vmem:[#allocation2 + $0x418] sm:$0xff] %v5345
        %5602 = vst [vmem:[#allocation2 + $0x420] sm:$0xff] %v5346
        %5603 = vst [vmem:[#allocation2 + $0x428] sm:$0xff] %v5347
        %5604 = vst [vmem:[#allocation2 + $0x430] sm:$0xff] %v5348
        %5605 = vst [vmem:[#allocation2 + $0x438] sm:$0xff] %v5349
        %5606 = vst [vmem:[#allocation2 + $0x440] sm:$0xff] %v5350
        %5607 = vst [vmem:[#allocation2 + $0x448] sm:$0xff] %v5351
        %5608 = vst [vmem:[#allocation2 + $0x450] sm:$0xff] %v5352
        %5609 = vst [vmem:[#allocation2 + $0x458] sm:$0xff] %v5353
        %5610 = vst [vmem:[#allocation2 + $0x460] sm:$0xff] %v5354
        %5611 = vst [vmem:[#allocation2 + $0x468] sm:$0xff] %v5355
        %5612 = vst [vmem:[#allocation2 + $0x470] sm:$0xff] %v5356
        %5613 = vst [vmem:[#allocation2 + $0x478] sm:$0xff] %v5357
        %5614 = vst [vmem:[#allocation2 + $0x480] sm:$0xff] %v5358
        %5615 = vst [vmem:[#allocation2 + $0x488] sm:$0xff] %v5359
        %5616 = vst [vmem:[#allocation2 + $0x490] sm:$0xff] %v5360
        %5617 = vst [vmem:[#allocation2 + $0x498] sm:$0xff] %v5361
        %5618 = vst [vmem:[#allocation2 + $0x4a0] sm:$0xff] %v5362
        %5619 = vst [vmem:[#allocation2 + $0x4a8] sm:$0xff] %v5363
        %5620 = vst [vmem:[#allocation2 + $0x4b0] sm:$0xff] %v5364
        %5621 = vst [vmem:[#allocation2 + $0x4b8] sm:$0xff] %v5365
        %5622 = vst [vmem:[#allocation2 + $0x4c0] sm:$0xff] %v5366
        %5623 = vst [vmem:[#allocation2 + $0x4c8] sm:$0xff] %v5367
        %5624 = vst [vmem:[#allocation2 + $0x4d0] sm:$0xff] %v5368
        %5625 = vst [vmem:[#allocation2 + $0x4d8] sm:$0xff] %v5369
        %5626 = vst [vmem:[#allocation2 + $0x4e0] sm:$0xff] %v5370
        %5627 = vst [vmem:[#allocation2 + $0x4e8] sm:$0xff] %v5371
        %5628 = vst [vmem:[#allocation2 + $0x4f0] sm:$0xff] %v5372
        %5629 = vst [vmem:[#allocation2 + $0x4f8] sm:$0xff] %v5373
        %5630 = vst [vmem:[#allocation2 + $0x500] sm:$0xff] %v5374
        %5631 = vst [vmem:[#allocation2 + $0x508] sm:$0xff] %v5375
        %5632 = vst [vmem:[#allocation2 + $0x510] sm:$0xff] %v5376
        %5633 = vst [vmem:[#allocation2 + $0x518] sm:$0xff] %v5377
        %5634 = vst [vmem:[#allocation2 + $0x520] sm:$0xff] %v5378
        %5635 = vst [vmem:[#allocation2 + $0x528] sm:$0xff] %v5379
        %5636 = vst [vmem:[#allocation2 + $0x530] sm:$0xff] %v5380
        %5637 = vst [vmem:[#allocation2 + $0x538] sm:$0xff] %v5381
        %5638 = vst [vmem:[#allocation2 + $0x540] sm:$0xff] %v5382
        %5639 = vst [vmem:[#allocation2 + $0x548] sm:$0xff] %v5383
        %5640 = vst [vmem:[#allocation2 + $0x550] sm:$0xff] %v5384
        %5641 = vst [vmem:[#allocation2 + $0x558] sm:$0xff] %v5385
        %5642 = vst [vmem:[#allocation2 + $0x560] sm:$0xff] %v5386
        %5643 = vst [vmem:[#allocation2 + $0x568] sm:$0xff] %v5387
        %5644 = vst [vmem:[#allocation2 + $0x570] sm:$0xff] %v5388
        %5645 = vst [vmem:[#allocation2 + $0x578] sm:$0xff] %v5389
        %5646 = vst [vmem:[#allocation2 + $0x580] sm:$0xff] %v5390
        %5647 = vst [vmem:[#allocation2 + $0x588] sm:$0xff] %v5391
        %5648 = vst [vmem:[#allocation2 + $0x590] sm:$0xff] %v5392
        %5649 = vst [vmem:[#allocation2 + $0x598] sm:$0xff] %v5393
        %5650 = vst [vmem:[#allocation2 + $0x5a0] sm:$0xff] %v5394
        %5651 = vst [vmem:[#allocation2 + $0x5a8] sm:$0xff] %v5395
        %5652 = vst [vmem:[#allocation2 + $0x5b0] sm:$0xff] %v5396
        %5653 = vst [vmem:[#allocation2 + $0x5b8] sm:$0xff] %v5397
        %5654 = vst [vmem:[#allocation2 + $0x5c0] sm:$0xff] %v5398
        %5655 = vst [vmem:[#allocation2 + $0x5c8] sm:$0xff] %v5399
        %5656 = vst [vmem:[#allocation2 + $0x5d0] sm:$0xff] %v5400
        %5657 = vst [vmem:[#allocation2 + $0x5d8] sm:$0xff] %v5401
        %5658 = vst [vmem:[#allocation2 + $0x5e0] sm:$0xff] %v5402
        %5659 = vst [vmem:[#allocation2 + $0x5e8] sm:$0xff] %v5403
        %5660 = vst [vmem:[#allocation2 + $0x5f0] sm:$0xff] %v5404
        %5661 = vst [vmem:[#allocation2 + $0x5f8] sm:$0xff] %v5405
        %5662 = vst [vmem:[#allocation2 + $0x600] sm:$0xff] %v5406
        %5663 = vst [vmem:[#allocation2 + $0x608] sm:$0xff] %v5407
        %5664 = vst [vmem:[#allocation2 + $0x610] sm:$0xff] %v5408
        %5665 = vst [vmem:[#allocation2 + $0x618] sm:$0xff] %v5409
        %5666 = vst [vmem:[#allocation2 + $0x620] sm:$0xff] %v5410
        %5667 = vst [vmem:[#allocation2 + $0x628] sm:$0xff] %v5411
        %5668 = vst [vmem:[#allocation2 + $0x630] sm:$0xff] %v5412
        %5669 = vst [vmem:[#allocation2 + $0x638] sm:$0xff] %v5413
        %5670 = vst [vmem:[#allocation2 + $0x640] sm:$0xff] %v5414
        %5671 = vst [vmem:[#allocation2 + $0x648] sm:$0xff] %v5415
        %5672 = vst [vmem:[#allocation2 + $0x650] sm:$0xff] %v5416
        %5673 = vst [vmem:[#allocation2 + $0x658] sm:$0xff] %v5417
        %5674 = vst [vmem:[#allocation2 + $0x660] sm:$0xff] %v5418
        %5675 = vst [vmem:[#allocation2 + $0x668] sm:$0xff] %v5419
        %5676 = vst [vmem:[#allocation2 + $0x670] sm:$0xff] %v5420
        %5677 = vst [vmem:[#allocation2 + $0x678] sm:$0xff] %v5421
        %5678 = vst [vmem:[#allocation2 + $0x680] sm:$0xff] %v5422
        %5679 = vst [vmem:[#allocation2 + $0x688] sm:$0xff] %v5423
        %5680 = vst [vmem:[#allocation2 + $0x690] sm:$0xff] %v5424
        %5681 = vst [vmem:[#allocation2 + $0x698] sm:$0xff] %v5425
        %5682 = vst [vmem:[#allocation2 + $0x6a0] sm:$0xff] %v5426
        %5683 = vst [vmem:[#allocation2 + $0x6a8] sm:$0xff] %v5427
        %5684 = vst [vmem:[#allocation2 + $0x6b0] sm:$0xff] %v5428
        %5685 = vst [vmem:[#allocation2 + $0x6b8] sm:$0xff] %v5429
        %5686 = vst [vmem:[#allocation2 + $0x6c0] sm:$0xff] %v5430
        %5687 = vst [vmem:[#allocation2 + $0x6c8] sm:$0xff] %v5431
        %5688 = vst [vmem:[#allocation2 + $0x6d0] sm:$0xff] %v5432
        %5689 = vst [vmem:[#allocation2 + $0x6d8] sm:$0xff] %v5433
        %5690 = vst [vmem:[#allocation2 + $0x6e0] sm:$0xff] %v5434
        %5691 = vst [vmem:[#allocation2 + $0x6e8] sm:$0xff] %v5435
        %5692 = vst [vmem:[#allocation2 + $0x6f0] sm:$0xff] %v5436
        %5693 = vst [vmem:[#allocation2 + $0x6f8] sm:$0xff] %v5437
        %5694 = vst [vmem:[#allocation2 + $0x700] sm:$0xff] %v5438
        %5695 = vst [vmem:[#allocation2 + $0x708] sm:$0xff] %v5439
        %5696 = vst [vmem:[#allocation2 + $0x710] sm:$0xff] %v5440
        %5697 = vst [vmem:[#allocation2 + $0x718] sm:$0xff] %v5441
        %5698 = vst [vmem:[#allocation2 + $0x720] sm:$0xff] %v5442
        %5699 = vst [vmem:[#allocation2 + $0x728] sm:$0xff] %v5443
        %5700 = vst [vmem:[#allocation2 + $0x730] sm:$0xff] %v5444
        %5701 = vst [vmem:[#allocation2 + $0x738] sm:$0xff] %v5445
        %5702 = vst [vmem:[#allocation2 + $0x740] sm:$0xff] %v5446
        %5703 = vst [vmem:[#allocation2 + $0x748] sm:$0xff] %v5447
        %5704 = vst [vmem:[#allocation2 + $0x750] sm:$0xff] %v5448
        %5705 = vst [vmem:[#allocation2 + $0x758] sm:$0xff] %v5449
        %5706 = vst [vmem:[#allocation2 + $0x760] sm:$0xff] %v5450
        %5707 = vst [vmem:[#allocation2 + $0x768] sm:$0xff] %v5451
        %5708 = vst [vmem:[#allocation2 + $0x770] sm:$0xff] %v5452
        %5709 = vst [vmem:[#allocation2 + $0x778] sm:$0xff] %v5453
        %5710 = vst [vmem:[#allocation2 + $0x780] sm:$0xff] %v5454
        %5711 = vst [vmem:[#allocation2 + $0x788] sm:$0xff] %v5455
        %5712 = vst [vmem:[#allocation2 + $0x790] sm:$0xff] %v5456
        %5713 = vst [vmem:[#allocation2 + $0x798] sm:$0xff] %v5457
        %5714 = vst [vmem:[#allocation2 + $0x7a0] sm:$0xff] %v5458
        %5715 = vst [vmem:[#allocation2 + $0x7a8] sm:$0xff] %v5459
        %5716 = vst [vmem:[#allocation2 + $0x7b0] sm:$0xff] %v5460
        %5717 = vst [vmem:[#allocation2 + $0x7b8] sm:$0xff] %v5461
        %5718 = vst [vmem:[#allocation2 + $0x7c0] sm:$0xff] %v5462
        %5719 = vst [vmem:[#allocation2 + $0x7c8] sm:$0xff] %v5463
        %5720 = vst [vmem:[#allocation2 + $0x7d0] sm:$0xff] %v5464
        %5721 = vst [vmem:[#allocation2 + $0x7d8] sm:$0xff] %v5465
        %5722 = vst [vmem:[#allocation2 + $0x7e0] sm:$0xff] %v5466
        %5723 = vst [vmem:[#allocation2 + $0x7e8] sm:$0xff] %v5467
        %5724 = vst [vmem:[#allocation2 + $0x7f0] sm:$0xff] %v5468
        %5725 = vst [vmem:[#allocation2 + $0x7f8] sm:$0xff] %v5469
        %p5726 = scmp.eq.s32.totalorder %s40, 1
        // Predicated region
        $region57: #{tpu_custom_call.1} parent=35 // pred_check
          %p5727 = pneg %p5726
        $region58: #{tpu_custom_call.1} parent=35 // pred_check_branch
          %5729 = sbr.rel (%p5727) target = $region60
        $region59: #{tpu_custom_call.1} parent=35 // pred_region
          %v5730 = vld [vmem:[#allocation2] sm:$0xff]
          %v5731 = vld [vmem:[#allocation2 + $0x8] sm:$0xff]
          %v5732 = vld [vmem:[#allocation2 + $0x10] sm:$0xff]
          %v5733 = vld [vmem:[#allocation2 + $0x18] sm:$0xff]
          %v5734 = vld [vmem:[#allocation2 + $0x20] sm:$0xff]
          %v5735 = vld [vmem:[#allocation2 + $0x28] sm:$0xff]
          %v5736 = vld [vmem:[#allocation2 + $0x30] sm:$0xff]
          %v5737 = vld [vmem:[#allocation2 + $0x38] sm:$0xff]
          %v5738 = vld [vmem:[#allocation2 + $0x40] sm:$0xff]
          %v5739 = vld [vmem:[#allocation2 + $0x48] sm:$0xff]
          %v5740 = vld [vmem:[#allocation2 + $0x50] sm:$0xff]
          %v5741 = vld [vmem:[#allocation2 + $0x58] sm:$0xff]
          %v5742 = vld [vmem:[#allocation2 + $0x60] sm:$0xff]
          %v5743 = vld [vmem:[#allocation2 + $0x68] sm:$0xff]
          %v5744 = vld [vmem:[#allocation2 + $0x70] sm:$0xff]
          %v5745 = vld [vmem:[#allocation2 + $0x78] sm:$0xff]
          %v5746 = vld [vmem:[#allocation2 + $0x80] sm:$0xff]
          %v5747 = vld [vmem:[#allocation2 + $0x88] sm:$0xff]
          %v5748 = vld [vmem:[#allocation2 + $0x90] sm:$0xff]
          %v5749 = vld [vmem:[#allocation2 + $0x98] sm:$0xff]
          %v5750 = vld [vmem:[#allocation2 + $0xa0] sm:$0xff]
          %v5751 = vld [vmem:[#allocation2 + $0xa8] sm:$0xff]
          %v5752 = vld [vmem:[#allocation2 + $0xb0] sm:$0xff]
          %v5753 = vld [vmem:[#allocation2 + $0xb8] sm:$0xff]
          %v5754 = vld [vmem:[#allocation2 + $0xc0] sm:$0xff]
          %v5755 = vld [vmem:[#allocation2 + $0xc8] sm:$0xff]
          %v5756 = vld [vmem:[#allocation2 + $0xd0] sm:$0xff]
          %v5757 = vld [vmem:[#allocation2 + $0xd8] sm:$0xff]
          %v5758 = vld [vmem:[#allocation2 + $0xe0] sm:$0xff]
          %v5759 = vld [vmem:[#allocation2 + $0xe8] sm:$0xff]
          %v5760 = vld [vmem:[#allocation2 + $0xf0] sm:$0xff]
          %v5761 = vld [vmem:[#allocation2 + $0xf8] sm:$0xff]
          %v5762 = vld [vmem:[#allocation2 + $0x100] sm:$0xff]
          %v5763 = vld [vmem:[#allocation2 + $0x108] sm:$0xff]
          %v5764 = vld [vmem:[#allocation2 + $0x110] sm:$0xff]
          %v5765 = vld [vmem:[#allocation2 + $0x118] sm:$0xff]
          %v5766 = vld [vmem:[#allocation2 + $0x120] sm:$0xff]
          %v5767 = vld [vmem:[#allocation2 + $0x128] sm:$0xff]
          %v5768 = vld [vmem:[#allocation2 + $0x130] sm:$0xff]
          %v5769 = vld [vmem:[#allocation2 + $0x138] sm:$0xff]
          %v5770 = vld [vmem:[#allocation2 + $0x140] sm:$0xff]
          %v5771 = vld [vmem:[#allocation2 + $0x148] sm:$0xff]
          %v5772 = vld [vmem:[#allocation2 + $0x150] sm:$0xff]
          %v5773 = vld [vmem:[#allocation2 + $0x158] sm:$0xff]
          %v5774 = vld [vmem:[#allocation2 + $0x160] sm:$0xff]
          %v5775 = vld [vmem:[#allocation2 + $0x168] sm:$0xff]
          %v5776 = vld [vmem:[#allocation2 + $0x170] sm:$0xff]
          %v5777 = vld [vmem:[#allocation2 + $0x178] sm:$0xff]
          %v5778 = vld [vmem:[#allocation2 + $0x180] sm:$0xff]
          %v5779 = vld [vmem:[#allocation2 + $0x188] sm:$0xff]
          %v5780 = vld [vmem:[#allocation2 + $0x190] sm:$0xff]
          %v5781 = vld [vmem:[#allocation2 + $0x198] sm:$0xff]
          %v5782 = vld [vmem:[#allocation2 + $0x1a0] sm:$0xff]
          %v5783 = vld [vmem:[#allocation2 + $0x1a8] sm:$0xff]
          %v5784 = vld [vmem:[#allocation2 + $0x1b0] sm:$0xff]
          %v5785 = vld [vmem:[#allocation2 + $0x1b8] sm:$0xff]
          %v5786 = vld [vmem:[#allocation2 + $0x1c0] sm:$0xff]
          %v5787 = vld [vmem:[#allocation2 + $0x1c8] sm:$0xff]
          %v5788 = vld [vmem:[#allocation2 + $0x1d0] sm:$0xff]
          %v5789 = vld [vmem:[#allocation2 + $0x1d8] sm:$0xff]
          %v5790 = vld [vmem:[#allocation2 + $0x1e0] sm:$0xff]
          %v5791 = vld [vmem:[#allocation2 + $0x1e8] sm:$0xff]
          %v5792 = vld [vmem:[#allocation2 + $0x1f0] sm:$0xff]
          %v5793 = vld [vmem:[#allocation2 + $0x1f8] sm:$0xff]
          %v5794 = vld [vmem:[#allocation2 + $0x200] sm:$0xff]
          %v5795 = vld [vmem:[#allocation2 + $0x208] sm:$0xff]
          %v5796 = vld [vmem:[#allocation2 + $0x210] sm:$0xff]
          %v5797 = vld [vmem:[#allocation2 + $0x218] sm:$0xff]
          %v5798 = vld [vmem:[#allocation2 + $0x220] sm:$0xff]
          %v5799 = vld [vmem:[#allocation2 + $0x228] sm:$0xff]
          %v5800 = vld [vmem:[#allocation2 + $0x230] sm:$0xff]
          %v5801 = vld [vmem:[#allocation2 + $0x238] sm:$0xff]
          %v5802 = vld [vmem:[#allocation2 + $0x240] sm:$0xff]
          %v5803 = vld [vmem:[#allocation2 + $0x248] sm:$0xff]
          %v5804 = vld [vmem:[#allocation2 + $0x250] sm:$0xff]
          %v5805 = vld [vmem:[#allocation2 + $0x258] sm:$0xff]
          %v5806 = vld [vmem:[#allocation2 + $0x260] sm:$0xff]
          %v5807 = vld [vmem:[#allocation2 + $0x268] sm:$0xff]
          %v5808 = vld [vmem:[#allocation2 + $0x270] sm:$0xff]
          %v5809 = vld [vmem:[#allocation2 + $0x278] sm:$0xff]
          %v5810 = vld [vmem:[#allocation2 + $0x280] sm:$0xff]
          %v5811 = vld [vmem:[#allocation2 + $0x288] sm:$0xff]
          %v5812 = vld [vmem:[#allocation2 + $0x290] sm:$0xff]
          %v5813 = vld [vmem:[#allocation2 + $0x298] sm:$0xff]
          %v5814 = vld [vmem:[#allocation2 + $0x2a0] sm:$0xff]
          %v5815 = vld [vmem:[#allocation2 + $0x2a8] sm:$0xff]
          %v5816 = vld [vmem:[#allocation2 + $0x2b0] sm:$0xff]
          %v5817 = vld [vmem:[#allocation2 + $0x2b8] sm:$0xff]
          %v5818 = vld [vmem:[#allocation2 + $0x2c0] sm:$0xff]
          %v5819 = vld [vmem:[#allocation2 + $0x2c8] sm:$0xff]
          %v5820 = vld [vmem:[#allocation2 + $0x2d0] sm:$0xff]
          %v5821 = vld [vmem:[#allocation2 + $0x2d8] sm:$0xff]
          %v5822 = vld [vmem:[#allocation2 + $0x2e0] sm:$0xff]
          %v5823 = vld [vmem:[#allocation2 + $0x2e8] sm:$0xff]
          %v5824 = vld [vmem:[#allocation2 + $0x2f0] sm:$0xff]
          %v5825 = vld [vmem:[#allocation2 + $0x2f8] sm:$0xff]
          %v5826 = vld [vmem:[#allocation2 + $0x300] sm:$0xff]
          %v5827 = vld [vmem:[#allocation2 + $0x308] sm:$0xff]
          %v5828 = vld [vmem:[#allocation2 + $0x310] sm:$0xff]
          %v5829 = vld [vmem:[#allocation2 + $0x318] sm:$0xff]
          %v5830 = vld [vmem:[#allocation2 + $0x320] sm:$0xff]
          %v5831 = vld [vmem:[#allocation2 + $0x328] sm:$0xff]
          %v5832 = vld [vmem:[#allocation2 + $0x330] sm:$0xff]
          %v5833 = vld [vmem:[#allocation2 + $0x338] sm:$0xff]
          %v5834 = vld [vmem:[#allocation2 + $0x340] sm:$0xff]
          %v5835 = vld [vmem:[#allocation2 + $0x348] sm:$0xff]
          %v5836 = vld [vmem:[#allocation2 + $0x350] sm:$0xff]
          %v5837 = vld [vmem:[#allocation2 + $0x358] sm:$0xff]
          %v5838 = vld [vmem:[#allocation2 + $0x360] sm:$0xff]
          %v5839 = vld [vmem:[#allocation2 + $0x368] sm:$0xff]
          %v5840 = vld [vmem:[#allocation2 + $0x370] sm:$0xff]
          %v5841 = vld [vmem:[#allocation2 + $0x378] sm:$0xff]
          %v5842 = vld [vmem:[#allocation2 + $0x380] sm:$0xff]
          %v5843 = vld [vmem:[#allocation2 + $0x388] sm:$0xff]
          %v5844 = vld [vmem:[#allocation2 + $0x390] sm:$0xff]
          %v5845 = vld [vmem:[#allocation2 + $0x398] sm:$0xff]
          %v5846 = vld [vmem:[#allocation2 + $0x3a0] sm:$0xff]
          %v5847 = vld [vmem:[#allocation2 + $0x3a8] sm:$0xff]
          %v5848 = vld [vmem:[#allocation2 + $0x3b0] sm:$0xff]
          %v5849 = vld [vmem:[#allocation2 + $0x3b8] sm:$0xff]
          %v5850 = vld [vmem:[#allocation2 + $0x3c0] sm:$0xff]
          %v5851 = vld [vmem:[#allocation2 + $0x3c8] sm:$0xff]
          %v5852 = vld [vmem:[#allocation2 + $0x3d0] sm:$0xff]
          %v5853 = vld [vmem:[#allocation2 + $0x3d8] sm:$0xff]
          %v5854 = vld [vmem:[#allocation2 + $0x3e0] sm:$0xff]
          %v5855 = vld [vmem:[#allocation2 + $0x3e8] sm:$0xff]
          %v5856 = vld [vmem:[#allocation2 + $0x3f0] sm:$0xff]
          %v5857 = vld [vmem:[#allocation2 + $0x3f8] sm:$0xff]
          %v5858 = vld [vmem:[#allocation2 + $0x400] sm:$0xff]
          %v5859 = vld [vmem:[#allocation2 + $0x408] sm:$0xff]
          %v5860 = vld [vmem:[#allocation2 + $0x410] sm:$0xff]
          %v5861 = vld [vmem:[#allocation2 + $0x418] sm:$0xff]
          %v5862 = vld [vmem:[#allocation2 + $0x420] sm:$0xff]
          %v5863 = vld [vmem:[#allocation2 + $0x428] sm:$0xff]
          %v5864 = vld [vmem:[#allocation2 + $0x430] sm:$0xff]
          %v5865 = vld [vmem:[#allocation2 + $0x438] sm:$0xff]
          %v5866 = vld [vmem:[#allocation2 + $0x440] sm:$0xff]
          %v5867 = vld [vmem:[#allocation2 + $0x448] sm:$0xff]
          %v5868 = vld [vmem:[#allocation2 + $0x450] sm:$0xff]
          %v5869 = vld [vmem:[#allocation2 + $0x458] sm:$0xff]
          %v5870 = vld [vmem:[#allocation2 + $0x460] sm:$0xff]
          %v5871 = vld [vmem:[#allocation2 + $0x468] sm:$0xff]
          %v5872 = vld [vmem:[#allocation2 + $0x470] sm:$0xff]
          %v5873 = vld [vmem:[#allocation2 + $0x478] sm:$0xff]
          %v5874 = vld [vmem:[#allocation2 + $0x480] sm:$0xff]
          %v5875 = vld [vmem:[#allocation2 + $0x488] sm:$0xff]
          %v5876 = vld [vmem:[#allocation2 + $0x490] sm:$0xff]
          %v5877 = vld [vmem:[#allocation2 + $0x498] sm:$0xff]
          %v5878 = vld [vmem:[#allocation2 + $0x4a0] sm:$0xff]
          %v5879 = vld [vmem:[#allocation2 + $0x4a8] sm:$0xff]
          %v5880 = vld [vmem:[#allocation2 + $0x4b0] sm:$0xff]
          %v5881 = vld [vmem:[#allocation2 + $0x4b8] sm:$0xff]
          %v5882 = vld [vmem:[#allocation2 + $0x4c0] sm:$0xff]
          %v5883 = vld [vmem:[#allocation2 + $0x4c8] sm:$0xff]
          %v5884 = vld [vmem:[#allocation2 + $0x4d0] sm:$0xff]
          %v5885 = vld [vmem:[#allocation2 + $0x4d8] sm:$0xff]
          %v5886 = vld [vmem:[#allocation2 + $0x4e0] sm:$0xff]
          %v5887 = vld [vmem:[#allocation2 + $0x4e8] sm:$0xff]
          %v5888 = vld [vmem:[#allocation2 + $0x4f0] sm:$0xff]
          %v5889 = vld [vmem:[#allocation2 + $0x4f8] sm:$0xff]
          %v5890 = vld [vmem:[#allocation2 + $0x500] sm:$0xff]
          %v5891 = vld [vmem:[#allocation2 + $0x508] sm:$0xff]
          %v5892 = vld [vmem:[#allocation2 + $0x510] sm:$0xff]
          %v5893 = vld [vmem:[#allocation2 + $0x518] sm:$0xff]
          %v5894 = vld [vmem:[#allocation2 + $0x520] sm:$0xff]
          %v5895 = vld [vmem:[#allocation2 + $0x528] sm:$0xff]
          %v5896 = vld [vmem:[#allocation2 + $0x530] sm:$0xff]
          %v5897 = vld [vmem:[#allocation2 + $0x538] sm:$0xff]
          %v5898 = vld [vmem:[#allocation2 + $0x540] sm:$0xff]
          %v5899 = vld [vmem:[#allocation2 + $0x548] sm:$0xff]
          %v5900 = vld [vmem:[#allocation2 + $0x550] sm:$0xff]
          %v5901 = vld [vmem:[#allocation2 + $0x558] sm:$0xff]
          %v5902 = vld [vmem:[#allocation2 + $0x560] sm:$0xff]
          %v5903 = vld [vmem:[#allocation2 + $0x568] sm:$0xff]
          %v5904 = vld [vmem:[#allocation2 + $0x570] sm:$0xff]
          %v5905 = vld [vmem:[#allocation2 + $0x578] sm:$0xff]
          %v5906 = vld [vmem:[#allocation2 + $0x580] sm:$0xff]
          %v5907 = vld [vmem:[#allocation2 + $0x588] sm:$0xff]
          %v5908 = vld [vmem:[#allocation2 + $0x590] sm:$0xff]
          %v5909 = vld [vmem:[#allocation2 + $0x598] sm:$0xff]
          %v5910 = vld [vmem:[#allocation2 + $0x5a0] sm:$0xff]
          %v5911 = vld [vmem:[#allocation2 + $0x5a8] sm:$0xff]
          %v5912 = vld [vmem:[#allocation2 + $0x5b0] sm:$0xff]
          %v5913 = vld [vmem:[#allocation2 + $0x5b8] sm:$0xff]
          %v5914 = vld [vmem:[#allocation2 + $0x5c0] sm:$0xff]
          %v5915 = vld [vmem:[#allocation2 + $0x5c8] sm:$0xff]
          %v5916 = vld [vmem:[#allocation2 + $0x5d0] sm:$0xff]
          %v5917 = vld [vmem:[#allocation2 + $0x5d8] sm:$0xff]
          %v5918 = vld [vmem:[#allocation2 + $0x5e0] sm:$0xff]
          %v5919 = vld [vmem:[#allocation2 + $0x5e8] sm:$0xff]
          %v5920 = vld [vmem:[#allocation2 + $0x5f0] sm:$0xff]
          %v5921 = vld [vmem:[#allocation2 + $0x5f8] sm:$0xff]
          %v5922 = vld [vmem:[#allocation2 + $0x600] sm:$0xff]
          %v5923 = vld [vmem:[#allocation2 + $0x608] sm:$0xff]
          %v5924 = vld [vmem:[#allocation2 + $0x610] sm:$0xff]
          %v5925 = vld [vmem:[#allocation2 + $0x618] sm:$0xff]
          %v5926 = vld [vmem:[#allocation2 + $0x620] sm:$0xff]
          %v5927 = vld [vmem:[#allocation2 + $0x628] sm:$0xff]
          %v5928 = vld [vmem:[#allocation2 + $0x630] sm:$0xff]
          %v5929 = vld [vmem:[#allocation2 + $0x638] sm:$0xff]
          %v5930 = vld [vmem:[#allocation2 + $0x640] sm:$0xff]
          %v5931 = vld [vmem:[#allocation2 + $0x648] sm:$0xff]
          %v5932 = vld [vmem:[#allocation2 + $0x650] sm:$0xff]
          %v5933 = vld [vmem:[#allocation2 + $0x658] sm:$0xff]
          %v5934 = vld [vmem:[#allocation2 + $0x660] sm:$0xff]
          %v5935 = vld [vmem:[#allocation2 + $0x668] sm:$0xff]
          %v5936 = vld [vmem:[#allocation2 + $0x670] sm:$0xff]
          %v5937 = vld [vmem:[#allocation2 + $0x678] sm:$0xff]
          %v5938 = vld [vmem:[#allocation2 + $0x680] sm:$0xff]
          %v5939 = vld [vmem:[#allocation2 + $0x688] sm:$0xff]
          %v5940 = vld [vmem:[#allocation2 + $0x690] sm:$0xff]
          %v5941 = vld [vmem:[#allocation2 + $0x698] sm:$0xff]
          %v5942 = vld [vmem:[#allocation2 + $0x6a0] sm:$0xff]
          %v5943 = vld [vmem:[#allocation2 + $0x6a8] sm:$0xff]
          %v5944 = vld [vmem:[#allocation2 + $0x6b0] sm:$0xff]
          %v5945 = vld [vmem:[#allocation2 + $0x6b8] sm:$0xff]
          %v5946 = vld [vmem:[#allocation2 + $0x6c0] sm:$0xff]
          %v5947 = vld [vmem:[#allocation2 + $0x6c8] sm:$0xff]
          %v5948 = vld [vmem:[#allocation2 + $0x6d0] sm:$0xff]
          %v5949 = vld [vmem:[#allocation2 + $0x6d8] sm:$0xff]
          %v5950 = vld [vmem:[#allocation2 + $0x6e0] sm:$0xff]
          %v5951 = vld [vmem:[#allocation2 + $0x6e8] sm:$0xff]
          %v5952 = vld [vmem:[#allocation2 + $0x6f0] sm:$0xff]
          %v5953 = vld [vmem:[#allocation2 + $0x6f8] sm:$0xff]
          %v5954 = vld [vmem:[#allocation2 + $0x700] sm:$0xff]
          %v5955 = vld [vmem:[#allocation2 + $0x708] sm:$0xff]
          %v5956 = vld [vmem:[#allocation2 + $0x710] sm:$0xff]
          %v5957 = vld [vmem:[#allocation2 + $0x718] sm:$0xff]
          %v5958 = vld [vmem:[#allocation2 + $0x720] sm:$0xff]
          %v5959 = vld [vmem:[#allocation2 + $0x728] sm:$0xff]
          %v5960 = vld [vmem:[#allocation2 + $0x730] sm:$0xff]
          %v5961 = vld [vmem:[#allocation2 + $0x738] sm:$0xff]
          %v5962 = vld [vmem:[#allocation2 + $0x740] sm:$0xff]
          %v5963 = vld [vmem:[#allocation2 + $0x748] sm:$0xff]
          %v5964 = vld [vmem:[#allocation2 + $0x750] sm:$0xff]
          %v5965 = vld [vmem:[#allocation2 + $0x758] sm:$0xff]
          %v5966 = vld [vmem:[#allocation2 + $0x760] sm:$0xff]
          %v5967 = vld [vmem:[#allocation2 + $0x768] sm:$0xff]
          %v5968 = vld [vmem:[#allocation2 + $0x770] sm:$0xff]
          %v5969 = vld [vmem:[#allocation2 + $0x778] sm:$0xff]
          %v5970 = vld [vmem:[#allocation2 + $0x780] sm:$0xff]
          %v5971 = vld [vmem:[#allocation2 + $0x788] sm:$0xff]
          %v5972 = vld [vmem:[#allocation2 + $0x790] sm:$0xff]
          %v5973 = vld [vmem:[#allocation2 + $0x798] sm:$0xff]
          %v5974 = vld [vmem:[#allocation2 + $0x7a0] sm:$0xff]
          %v5975 = vld [vmem:[#allocation2 + $0x7a8] sm:$0xff]
          %v5976 = vld [vmem:[#allocation2 + $0x7b0] sm:$0xff]
          %v5977 = vld [vmem:[#allocation2 + $0x7b8] sm:$0xff]
          %v5978 = vld [vmem:[#allocation2 + $0x7c0] sm:$0xff]
          %v5979 = vld [vmem:[#allocation2 + $0x7c8] sm:$0xff]
          %v5980 = vld [vmem:[#allocation2 + $0x7d0] sm:$0xff]
          %v5981 = vld [vmem:[#allocation2 + $0x7d8] sm:$0xff]
          %v5982 = vld [vmem:[#allocation2 + $0x7e0] sm:$0xff]
          %v5983 = vld [vmem:[#allocation2 + $0x7e8] sm:$0xff]
          %v5984 = vld [vmem:[#allocation2 + $0x7f0] sm:$0xff]
          %v5985 = vld [vmem:[#allocation2 + $0x7f8] sm:$0xff]
          %v5986 = vld [vmem:[%s383] sm:$0xff]
          %v5987 = vld [vmem:[%s383 + $0x8] sm:$0xff]
          %v5988 = vld [vmem:[%s383 + $0x10] sm:$0xff]
          %v5989 = vld [vmem:[%s383 + $0x18] sm:$0xff]
          %v5990 = vld [vmem:[%s383 + $0x20] sm:$0xff]
          %v5991 = vld [vmem:[%s383 + $0x28] sm:$0xff]
          %v5992 = vld [vmem:[%s383 + $0x30] sm:$0xff]
          %v5993 = vld [vmem:[%s383 + $0x38] sm:$0xff]
          %v5994 = vld [vmem:[%s383 + $0x40] sm:$0xff]
          %v5995 = vld [vmem:[%s383 + $0x48] sm:$0xff]
          %v5996 = vld [vmem:[%s383 + $0x50] sm:$0xff]
          %v5997 = vld [vmem:[%s383 + $0x58] sm:$0xff]
          %v5998 = vld [vmem:[%s383 + $0x60] sm:$0xff]
          %v5999 = vld [vmem:[%s383 + $0x68] sm:$0xff]
          %v6000 = vld [vmem:[%s383 + $0x70] sm:$0xff]
          %v6001 = vld [vmem:[%s383 + $0x78] sm:$0xff]
          %v6002 = vld [vmem:[%s383 + $0x80] sm:$0xff]
          %v6003 = vld [vmem:[%s383 + $0x88] sm:$0xff]
          %v6004 = vld [vmem:[%s383 + $0x90] sm:$0xff]
          %v6005 = vld [vmem:[%s383 + $0x98] sm:$0xff]
          %v6006 = vld [vmem:[%s383 + $0xa0] sm:$0xff]
          %v6007 = vld [vmem:[%s383 + $0xa8] sm:$0xff]
          %v6008 = vld [vmem:[%s383 + $0xb0] sm:$0xff]
          %v6009 = vld [vmem:[%s383 + $0xb8] sm:$0xff]
          %v6010 = vld [vmem:[%s383 + $0xc0] sm:$0xff]
          %v6011 = vld [vmem:[%s383 + $0xc8] sm:$0xff]
          %v6012 = vld [vmem:[%s383 + $0xd0] sm:$0xff]
          %v6013 = vld [vmem:[%s383 + $0xd8] sm:$0xff]
          %v6014 = vld [vmem:[%s383 + $0xe0] sm:$0xff]
          %v6015 = vld [vmem:[%s383 + $0xe8] sm:$0xff]
          %v6016 = vld [vmem:[%s383 + $0xf0] sm:$0xff]
          %v6017 = vld [vmem:[%s383 + $0xf8] sm:$0xff]
          %v6018 = vld [vmem:[%s383 + $0x100] sm:$0xff]
          %v6019 = vld [vmem:[%s383 + $0x108] sm:$0xff]
          %v6020 = vld [vmem:[%s383 + $0x110] sm:$0xff]
          %v6021 = vld [vmem:[%s383 + $0x118] sm:$0xff]
          %v6022 = vld [vmem:[%s383 + $0x120] sm:$0xff]
          %v6023 = vld [vmem:[%s383 + $0x128] sm:$0xff]
          %v6024 = vld [vmem:[%s383 + $0x130] sm:$0xff]
          %v6025 = vld [vmem:[%s383 + $0x138] sm:$0xff]
          %v6026 = vld [vmem:[%s383 + $0x140] sm:$0xff]
          %v6027 = vld [vmem:[%s383 + $0x148] sm:$0xff]
          %v6028 = vld [vmem:[%s383 + $0x150] sm:$0xff]
          %v6029 = vld [vmem:[%s383 + $0x158] sm:$0xff]
          %v6030 = vld [vmem:[%s383 + $0x160] sm:$0xff]
          %v6031 = vld [vmem:[%s383 + $0x168] sm:$0xff]
          %v6032 = vld [vmem:[%s383 + $0x170] sm:$0xff]
          %v6033 = vld [vmem:[%s383 + $0x178] sm:$0xff]
          %v6034 = vld [vmem:[%s383 + $0x180] sm:$0xff]
          %v6035 = vld [vmem:[%s383 + $0x188] sm:$0xff]
          %v6036 = vld [vmem:[%s383 + $0x190] sm:$0xff]
          %v6037 = vld [vmem:[%s383 + $0x198] sm:$0xff]
          %v6038 = vld [vmem:[%s383 + $0x1a0] sm:$0xff]
          %v6039 = vld [vmem:[%s383 + $0x1a8] sm:$0xff]
          %v6040 = vld [vmem:[%s383 + $0x1b0] sm:$0xff]
          %v6041 = vld [vmem:[%s383 + $0x1b8] sm:$0xff]
          %v6042 = vld [vmem:[%s383 + $0x1c0] sm:$0xff]
          %v6043 = vld [vmem:[%s383 + $0x1c8] sm:$0xff]
          %v6044 = vld [vmem:[%s383 + $0x1d0] sm:$0xff]
          %v6045 = vld [vmem:[%s383 + $0x1d8] sm:$0xff]
          %v6046 = vld [vmem:[%s383 + $0x1e0] sm:$0xff]
          %v6047 = vld [vmem:[%s383 + $0x1e8] sm:$0xff]
          %v6048 = vld [vmem:[%s383 + $0x1f0] sm:$0xff]
          %v6049 = vld [vmem:[%s383 + $0x1f8] sm:$0xff]
          %v6050 = vld [vmem:[%s393] sm:$0xff]
          %v6051 = vld [vmem:[%s393 + $0x8] sm:$0xff]
          %v6052 = vld [vmem:[%s393 + $0x10] sm:$0xff]
          %v6053 = vld [vmem:[%s393 + $0x18] sm:$0xff]
          %v6054 = vld [vmem:[%s393 + $0x20] sm:$0xff]
          %v6055 = vld [vmem:[%s393 + $0x28] sm:$0xff]
          %v6056 = vld [vmem:[%s393 + $0x30] sm:$0xff]
          %v6057 = vld [vmem:[%s393 + $0x38] sm:$0xff]
          %v6058 = vld [vmem:[%s393 + $0x40] sm:$0xff]
          %v6059 = vld [vmem:[%s393 + $0x48] sm:$0xff]
          %v6060 = vld [vmem:[%s393 + $0x50] sm:$0xff]
          %v6061 = vld [vmem:[%s393 + $0x58] sm:$0xff]
          %v6062 = vld [vmem:[%s393 + $0x60] sm:$0xff]
          %v6063 = vld [vmem:[%s393 + $0x68] sm:$0xff]
          %v6064 = vld [vmem:[%s393 + $0x70] sm:$0xff]
          %v6065 = vld [vmem:[%s393 + $0x78] sm:$0xff]
          %v6066 = vld [vmem:[%s393 + $0x80] sm:$0xff]
          %v6067 = vld [vmem:[%s393 + $0x88] sm:$0xff]
          %v6068 = vld [vmem:[%s393 + $0x90] sm:$0xff]
          %v6069 = vld [vmem:[%s393 + $0x98] sm:$0xff]
          %v6070 = vld [vmem:[%s393 + $0xa0] sm:$0xff]
          %v6071 = vld [vmem:[%s393 + $0xa8] sm:$0xff]
          %v6072 = vld [vmem:[%s393 + $0xb0] sm:$0xff]
          %v6073 = vld [vmem:[%s393 + $0xb8] sm:$0xff]
          %v6074 = vld [vmem:[%s393 + $0xc0] sm:$0xff]
          %v6075 = vld [vmem:[%s393 + $0xc8] sm:$0xff]
          %v6076 = vld [vmem:[%s393 + $0xd0] sm:$0xff]
          %v6077 = vld [vmem:[%s393 + $0xd8] sm:$0xff]
          %v6078 = vld [vmem:[%s393 + $0xe0] sm:$0xff]
          %v6079 = vld [vmem:[%s393 + $0xe8] sm:$0xff]
          %v6080 = vld [vmem:[%s393 + $0xf0] sm:$0xff]
          %v6081 = vld [vmem:[%s393 + $0xf8] sm:$0xff]
          %v6082 = vld [vmem:[%s393 + $0x100] sm:$0xff]
          %v6083 = vld [vmem:[%s393 + $0x108] sm:$0xff]
          %v6084 = vld [vmem:[%s393 + $0x110] sm:$0xff]
          %v6085 = vld [vmem:[%s393 + $0x118] sm:$0xff]
          %v6086 = vld [vmem:[%s393 + $0x120] sm:$0xff]
          %v6087 = vld [vmem:[%s393 + $0x128] sm:$0xff]
          %v6088 = vld [vmem:[%s393 + $0x130] sm:$0xff]
          %v6089 = vld [vmem:[%s393 + $0x138] sm:$0xff]
          %v6090 = vld [vmem:[%s393 + $0x140] sm:$0xff]
          %v6091 = vld [vmem:[%s393 + $0x148] sm:$0xff]
          %v6092 = vld [vmem:[%s393 + $0x150] sm:$0xff]
          %v6093 = vld [vmem:[%s393 + $0x158] sm:$0xff]
          %v6094 = vld [vmem:[%s393 + $0x160] sm:$0xff]
          %v6095 = vld [vmem:[%s393 + $0x168] sm:$0xff]
          %v6096 = vld [vmem:[%s393 + $0x170] sm:$0xff]
          %v6097 = vld [vmem:[%s393 + $0x178] sm:$0xff]
          %v6098 = vld [vmem:[%s393 + $0x180] sm:$0xff]
          %v6099 = vld [vmem:[%s393 + $0x188] sm:$0xff]
          %v6100 = vld [vmem:[%s393 + $0x190] sm:$0xff]
          %v6101 = vld [vmem:[%s393 + $0x198] sm:$0xff]
          %v6102 = vld [vmem:[%s393 + $0x1a0] sm:$0xff]
          %v6103 = vld [vmem:[%s393 + $0x1a8] sm:$0xff]
          %v6104 = vld [vmem:[%s393 + $0x1b0] sm:$0xff]
          %v6105 = vld [vmem:[%s393 + $0x1b8] sm:$0xff]
          %v6106 = vld [vmem:[%s393 + $0x1c0] sm:$0xff]
          %v6107 = vld [vmem:[%s393 + $0x1c8] sm:$0xff]
          %v6108 = vld [vmem:[%s393 + $0x1d0] sm:$0xff]
          %v6109 = vld [vmem:[%s393 + $0x1d8] sm:$0xff]
          %v6110 = vld [vmem:[%s393 + $0x1e0] sm:$0xff]
          %v6111 = vld [vmem:[%s393 + $0x1e8] sm:$0xff]
          %v6112 = vld [vmem:[%s393 + $0x1f0] sm:$0xff]
          %v6113 = vld [vmem:[%s393 + $0x1f8] sm:$0xff]
          %v6114 = vmul.f32 %v5730, %v5986
          %v6115 = vmul.f32 %v5734, %v5987
          %v6116 = vmul.f32 %v5738, %v5988
          %v6117 = vmul.f32 %v5742, %v5989
          %v6118 = vmul.f32 %v5746, %v5990
          %v6119 = vmul.f32 %v5750, %v5991
          %v6120 = vmul.f32 %v5754, %v5992
          %v6121 = vmul.f32 %v5758, %v5993
          %v6122 = vmul.f32 %v5762, %v5994
          %v6123 = vmul.f32 %v5766, %v5995
          %v6124 = vmul.f32 %v5770, %v5996
          %v6125 = vmul.f32 %v5774, %v5997
          %v6126 = vmul.f32 %v5778, %v5998
          %v6127 = vmul.f32 %v5782, %v5999
          %v6128 = vmul.f32 %v5786, %v6000
          %v6129 = vmul.f32 %v5790, %v6001
          %v6130 = vmul.f32 %v5794, %v6002
          %v6131 = vmul.f32 %v5798, %v6003
          %v6132 = vmul.f32 %v5802, %v6004
          %v6133 = vmul.f32 %v5806, %v6005
          %v6134 = vmul.f32 %v5810, %v6006
          %v6135 = vmul.f32 %v5814, %v6007
          %v6136 = vmul.f32 %v5818, %v6008
          %v6137 = vmul.f32 %v5822, %v6009
          %v6138 = vmul.f32 %v5826, %v6010
          %v6139 = vmul.f32 %v5830, %v6011
          %v6140 = vmul.f32 %v5834, %v6012
          %v6141 = vmul.f32 %v5838, %v6013
          %v6142 = vmul.f32 %v5842, %v6014
          %v6143 = vmul.f32 %v5846, %v6015
          %v6144 = vmul.f32 %v5850, %v6016
          %v6145 = vmul.f32 %v5854, %v6017
          %v6146 = vmul.f32 %v5858, %v6018
          %v6147 = vmul.f32 %v5862, %v6019
          %v6148 = vmul.f32 %v5866, %v6020
          %v6149 = vmul.f32 %v5870, %v6021
          %v6150 = vmul.f32 %v5874, %v6022
          %v6151 = vmul.f32 %v5878, %v6023
          %v6152 = vmul.f32 %v5882, %v6024
          %v6153 = vmul.f32 %v5886, %v6025
          %v6154 = vmul.f32 %v5890, %v6026
          %v6155 = vmul.f32 %v5894, %v6027
          %v6156 = vmul.f32 %v5898, %v6028
          %v6157 = vmul.f32 %v5902, %v6029
          %v6158 = vmul.f32 %v5906, %v6030
          %v6159 = vmul.f32 %v5910, %v6031
          %v6160 = vmul.f32 %v5914, %v6032
          %v6161 = vmul.f32 %v5918, %v6033
          %v6162 = vmul.f32 %v5922, %v6034
          %v6163 = vmul.f32 %v5926, %v6035
          %v6164 = vmul.f32 %v5930, %v6036
          %v6165 = vmul.f32 %v5934, %v6037
          %v6166 = vmul.f32 %v5938, %v6038
          %v6167 = vmul.f32 %v5942, %v6039
          %v6168 = vmul.f32 %v5946, %v6040
          %v6169 = vmul.f32 %v5950, %v6041
          %v6170 = vmul.f32 %v5954, %v6042
          %v6171 = vmul.f32 %v5958, %v6043
          %v6172 = vmul.f32 %v5962, %v6044
          %v6173 = vmul.f32 %v5966, %v6045
          %v6174 = vmul.f32 %v5970, %v6046
          %v6175 = vmul.f32 %v5974, %v6047
          %v6176 = vmul.f32 %v5978, %v6048
          %v6177 = vmul.f32 %v5982, %v6049
          %6178 = vrot.lane.b32.xlu0 %v5730, 64
          %v6179 = vpop.permute.xlu0 %6178
          %6180 = vrot.lane.b32.xlu0 %v5734, 64
          %v6181 = vpop.permute.xlu0 %6180
          %6182 = vrot.lane.b32.xlu0 %v5738, 64
          %v6183 = vpop.permute.xlu0 %6182
          %6184 = vrot.lane.b32.xlu0 %v5742, 64
          %v6185 = vpop.permute.xlu0 %6184
          %6186 = vrot.lane.b32.xlu0 %v5746, 64
          %v6187 = vpop.permute.xlu0 %6186
          %6188 = vrot.lane.b32.xlu0 %v5750, 64
          %v6189 = vpop.permute.xlu0 %6188
          %6190 = vrot.lane.b32.xlu0 %v5754, 64
          %v6191 = vpop.permute.xlu0 %6190
          %6192 = vrot.lane.b32.xlu0 %v5758, 64
          %v6193 = vpop.permute.xlu0 %6192
          %6194 = vrot.lane.b32.xlu0 %v5762, 64
          %v6195 = vpop.permute.xlu0 %6194
          %6196 = vrot.lane.b32.xlu0 %v5766, 64
          %v6197 = vpop.permute.xlu0 %6196
          %6198 = vrot.lane.b32.xlu0 %v5770, 64
          %v6199 = vpop.permute.xlu0 %6198
          %6200 = vrot.lane.b32.xlu0 %v5774, 64
          %v6201 = vpop.permute.xlu0 %6200
          %6202 = vrot.lane.b32.xlu0 %v5778, 64
          %v6203 = vpop.permute.xlu0 %6202
          %6204 = vrot.lane.b32.xlu0 %v5782, 64
          %v6205 = vpop.permute.xlu0 %6204
          %6206 = vrot.lane.b32.xlu0 %v5786, 64
          %v6207 = vpop.permute.xlu0 %6206
          %6208 = vrot.lane.b32.xlu0 %v5790, 64
          %v6209 = vpop.permute.xlu0 %6208
          %6210 = vrot.lane.b32.xlu0 %v5794, 64
          %v6211 = vpop.permute.xlu0 %6210
          %6212 = vrot.lane.b32.xlu0 %v5798, 64
          %v6213 = vpop.permute.xlu0 %6212
          %6214 = vrot.lane.b32.xlu0 %v5802, 64
          %v6215 = vpop.permute.xlu0 %6214
          %6216 = vrot.lane.b32.xlu0 %v5806, 64
          %v6217 = vpop.permute.xlu0 %6216
          %6218 = vrot.lane.b32.xlu0 %v5810, 64
          %v6219 = vpop.permute.xlu0 %6218
          %6220 = vrot.lane.b32.xlu0 %v5814, 64
          %v6221 = vpop.permute.xlu0 %6220
          %6222 = vrot.lane.b32.xlu0 %v5818, 64
          %v6223 = vpop.permute.xlu0 %6222
          %6224 = vrot.lane.b32.xlu0 %v5822, 64
          %v6225 = vpop.permute.xlu0 %6224
          %6226 = vrot.lane.b32.xlu0 %v5826, 64
          %v6227 = vpop.permute.xlu0 %6226
          %6228 = vrot.lane.b32.xlu0 %v5830, 64
          %v6229 = vpop.permute.xlu0 %6228
          %6230 = vrot.lane.b32.xlu0 %v5834, 64
          %v6231 = vpop.permute.xlu0 %6230
          %6232 = vrot.lane.b32.xlu0 %v5838, 64
          %v6233 = vpop.permute.xlu0 %6232
          %6234 = vrot.lane.b32.xlu0 %v5842, 64
          %v6235 = vpop.permute.xlu0 %6234
          %6236 = vrot.lane.b32.xlu0 %v5846, 64
          %v6237 = vpop.permute.xlu0 %6236
          %6238 = vrot.lane.b32.xlu0 %v5850, 64
          %v6239 = vpop.permute.xlu0 %6238
          %6240 = vrot.lane.b32.xlu0 %v5854, 64
          %v6241 = vpop.permute.xlu0 %6240
          %6242 = vrot.lane.b32.xlu0 %v5858, 64
          %v6243 = vpop.permute.xlu0 %6242
          %6244 = vrot.lane.b32.xlu0 %v5862, 64
          %v6245 = vpop.permute.xlu0 %6244
          %6246 = vrot.lane.b32.xlu0 %v5866, 64
          %v6247 = vpop.permute.xlu0 %6246
          %6248 = vrot.lane.b32.xlu0 %v5870, 64
          %v6249 = vpop.permute.xlu0 %6248
          %6250 = vrot.lane.b32.xlu0 %v5874, 64
          %v6251 = vpop.permute.xlu0 %6250
          %6252 = vrot.lane.b32.xlu0 %v5878, 64
          %v6253 = vpop.permute.xlu0 %6252
          %6254 = vrot.lane.b32.xlu0 %v5882, 64
          %v6255 = vpop.permute.xlu0 %6254
          %6256 = vrot.lane.b32.xlu0 %v5886, 64
          %v6257 = vpop.permute.xlu0 %6256
          %6258 = vrot.lane.b32.xlu0 %v5890, 64
          %v6259 = vpop.permute.xlu0 %6258
          %6260 = vrot.lane.b32.xlu0 %v5894, 64
          %v6261 = vpop.permute.xlu0 %6260
          %6262 = vrot.lane.b32.xlu0 %v5898, 64
          %v6263 = vpop.permute.xlu0 %6262
          %6264 = vrot.lane.b32.xlu0 %v5902, 64
          %v6265 = vpop.permute.xlu0 %6264
          %6266 = vrot.lane.b32.xlu0 %v5906, 64
          %v6267 = vpop.permute.xlu0 %6266
          %6268 = vrot.lane.b32.xlu0 %v5910, 64
          %v6269 = vpop.permute.xlu0 %6268
          %6270 = vrot.lane.b32.xlu0 %v5914, 64
          %v6271 = vpop.permute.xlu0 %6270
          %6272 = vrot.lane.b32.xlu0 %v5918, 64
          %v6273 = vpop.permute.xlu0 %6272
          %6274 = vrot.lane.b32.xlu0 %v5922, 64
          %v6275 = vpop.permute.xlu0 %6274
          %6276 = vrot.lane.b32.xlu0 %v5926, 64
          %v6277 = vpop.permute.xlu0 %6276
          %6278 = vrot.lane.b32.xlu0 %v5930, 64
          %v6279 = vpop.permute.xlu0 %6278
          %6280 = vrot.lane.b32.xlu0 %v5934, 64
          %v6281 = vpop.permute.xlu0 %6280
          %6282 = vrot.lane.b32.xlu0 %v5938, 64
          %v6283 = vpop.permute.xlu0 %6282
          %6284 = vrot.lane.b32.xlu0 %v5942, 64
          %v6285 = vpop.permute.xlu0 %6284
          %6286 = vrot.lane.b32.xlu0 %v5946, 64
          %v6287 = vpop.permute.xlu0 %6286
          %6288 = vrot.lane.b32.xlu0 %v5950, 64
          %v6289 = vpop.permute.xlu0 %6288
          %6290 = vrot.lane.b32.xlu0 %v5954, 64
          %v6291 = vpop.permute.xlu0 %6290
          %6292 = vrot.lane.b32.xlu0 %v5958, 64
          %v6293 = vpop.permute.xlu0 %6292
          %6294 = vrot.lane.b32.xlu0 %v5962, 64
          %v6295 = vpop.permute.xlu0 %6294
          %6296 = vrot.lane.b32.xlu0 %v5966, 64
          %v6297 = vpop.permute.xlu0 %6296
          %6298 = vrot.lane.b32.xlu0 %v5970, 64
          %v6299 = vpop.permute.xlu0 %6298
          %6300 = vrot.lane.b32.xlu0 %v5974, 64
          %v6301 = vpop.permute.xlu0 %6300
          %6302 = vrot.lane.b32.xlu0 %v5978, 64
          %v6303 = vpop.permute.xlu0 %6302
          %6304 = vrot.lane.b32.xlu0 %v5982, 64
          %v6305 = vpop.permute.xlu0 %6304
          %v6306 = vmul.f32 %v6179, %v6050
          %v6307 = vmul.f32 %v6181, %v6051
          %v6308 = vmul.f32 %v6183, %v6052
          %v6309 = vmul.f32 %v6185, %v6053
          %v6310 = vmul.f32 %v6187, %v6054
          %v6311 = vmul.f32 %v6189, %v6055
          %v6312 = vmul.f32 %v6191, %v6056
          %v6313 = vmul.f32 %v6193, %v6057
          %v6314 = vmul.f32 %v6195, %v6058
          %v6315 = vmul.f32 %v6197, %v6059
          %v6316 = vmul.f32 %v6199, %v6060
          %v6317 = vmul.f32 %v6201, %v6061
          %v6318 = vmul.f32 %v6203, %v6062
          %v6319 = vmul.f32 %v6205, %v6063
          %v6320 = vmul.f32 %v6207, %v6064
          %v6321 = vmul.f32 %v6209, %v6065
          %v6322 = vmul.f32 %v6211, %v6066
          %v6323 = vmul.f32 %v6213, %v6067
          %v6324 = vmul.f32 %v6215, %v6068
          %v6325 = vmul.f32 %v6217, %v6069
          %v6326 = vmul.f32 %v6219, %v6070
          %v6327 = vmul.f32 %v6221, %v6071
          %v6328 = vmul.f32 %v6223, %v6072
          %v6329 = vmul.f32 %v6225, %v6073
          %v6330 = vmul.f32 %v6227, %v6074
          %v6331 = vmul.f32 %v6229, %v6075
          %v6332 = vmul.f32 %v6231, %v6076
          %v6333 = vmul.f32 %v6233, %v6077
          %v6334 = vmul.f32 %v6235, %v6078
          %v6335 = vmul.f32 %v6237, %v6079
          %v6336 = vmul.f32 %v6239, %v6080
          %v6337 = vmul.f32 %v6241, %v6081
          %v6338 = vmul.f32 %v6243, %v6082
          %v6339 = vmul.f32 %v6245, %v6083
          %v6340 = vmul.f32 %v6247, %v6084
          %v6341 = vmul.f32 %v6249, %v6085
          %v6342 = vmul.f32 %v6251, %v6086
          %v6343 = vmul.f32 %v6253, %v6087
          %v6344 = vmul.f32 %v6255, %v6088
          %v6345 = vmul.f32 %v6257, %v6089
          %v6346 = vmul.f32 %v6259, %v6090
          %v6347 = vmul.f32 %v6261, %v6091
          %v6348 = vmul.f32 %v6263, %v6092
          %v6349 = vmul.f32 %v6265, %v6093
          %v6350 = vmul.f32 %v6267, %v6094
          %v6351 = vmul.f32 %v6269, %v6095
          %v6352 = vmul.f32 %v6271, %v6096
          %v6353 = vmul.f32 %v6273, %v6097
          %v6354 = vmul.f32 %v6275, %v6098
          %v6355 = vmul.f32 %v6277, %v6099
          %v6356 = vmul.f32 %v6279, %v6100
          %v6357 = vmul.f32 %v6281, %v6101
          %v6358 = vmul.f32 %v6283, %v6102
          %v6359 = vmul.f32 %v6285, %v6103
          %v6360 = vmul.f32 %v6287, %v6104
          %v6361 = vmul.f32 %v6289, %v6105
          %v6362 = vmul.f32 %v6291, %v6106
          %v6363 = vmul.f32 %v6293, %v6107
          %v6364 = vmul.f32 %v6295, %v6108
          %v6365 = vmul.f32 %v6297, %v6109
          %v6366 = vmul.f32 %v6299, %v6110
          %v6367 = vmul.f32 %v6301, %v6111
          %v6368 = vmul.f32 %v6303, %v6112
          %v6369 = vmul.f32 %v6305, %v6113
          %v6370 = vadd.f32 %v6114, %v6306
          %v6371 = vadd.f32 %v6115, %v6307
          %v6372 = vadd.f32 %v6116, %v6308
          %v6373 = vadd.f32 %v6117, %v6309
          %v6374 = vadd.f32 %v6118, %v6310
          %v6375 = vadd.f32 %v6119, %v6311
          %v6376 = vadd.f32 %v6120, %v6312
          %v6377 = vadd.f32 %v6121, %v6313
          %v6378 = vadd.f32 %v6122, %v6314
          %v6379 = vadd.f32 %v6123, %v6315
          %v6380 = vadd.f32 %v6124, %v6316
          %v6381 = vadd.f32 %v6125, %v6317
          %v6382 = vadd.f32 %v6126, %v6318
          %v6383 = vadd.f32 %v6127, %v6319
          %v6384 = vadd.f32 %v6128, %v6320
          %v6385 = vadd.f32 %v6129, %v6321
          %v6386 = vadd.f32 %v6130, %v6322
          %v6387 = vadd.f32 %v6131, %v6323
          %v6388 = vadd.f32 %v6132, %v6324
          %v6389 = vadd.f32 %v6133, %v6325
          %v6390 = vadd.f32 %v6134, %v6326
          %v6391 = vadd.f32 %v6135, %v6327
          %v6392 = vadd.f32 %v6136, %v6328
          %v6393 = vadd.f32 %v6137, %v6329
          %v6394 = vadd.f32 %v6138, %v6330
          %v6395 = vadd.f32 %v6139, %v6331
          %v6396 = vadd.f32 %v6140, %v6332
          %v6397 = vadd.f32 %v6141, %v6333
          %v6398 = vadd.f32 %v6142, %v6334
          %v6399 = vadd.f32 %v6143, %v6335
          %v6400 = vadd.f32 %v6144, %v6336
          %v6401 = vadd.f32 %v6145, %v6337
          %v6402 = vadd.f32 %v6146, %v6338
          %v6403 = vadd.f32 %v6147, %v6339
          %v6404 = vadd.f32 %v6148, %v6340
          %v6405 = vadd.f32 %v6149, %v6341
          %v6406 = vadd.f32 %v6150, %v6342
          %v6407 = vadd.f32 %v6151, %v6343
          %v6408 = vadd.f32 %v6152, %v6344
          %v6409 = vadd.f32 %v6153, %v6345
          %v6410 = vadd.f32 %v6154, %v6346
          %v6411 = vadd.f32 %v6155, %v6347
          %v6412 = vadd.f32 %v6156, %v6348
          %v6413 = vadd.f32 %v6157, %v6349
          %v6414 = vadd.f32 %v6158, %v6350
          %v6415 = vadd.f32 %v6159, %v6351
          %v6416 = vadd.f32 %v6160, %v6352
          %v6417 = vadd.f32 %v6161, %v6353
          %v6418 = vadd.f32 %v6162, %v6354
          %v6419 = vadd.f32 %v6163, %v6355
          %v6420 = vadd.f32 %v6164, %v6356
          %v6421 = vadd.f32 %v6165, %v6357
          %v6422 = vadd.f32 %v6166, %v6358
          %v6423 = vadd.f32 %v6167, %v6359
          %v6424 = vadd.f32 %v6168, %v6360
          %v6425 = vadd.f32 %v6169, %v6361
          %v6426 = vadd.f32 %v6170, %v6362
          %v6427 = vadd.f32 %v6171, %v6363
          %v6428 = vadd.f32 %v6172, %v6364
          %v6429 = vadd.f32 %v6173, %v6365
          %v6430 = vadd.f32 %v6174, %v6366
          %v6431 = vadd.f32 %v6175, %v6367
          %v6432 = vadd.f32 %v6176, %v6368
          %v6433 = vadd.f32 %v6177, %v6369
          %v6434 = vpack.c.bf16 %v6370, %v6370
          %v6435 = vpack.c.bf16 %v6371, %v6371
          %v6436 = vpack.c.bf16 %v6372, %v6372
          %v6437 = vpack.c.bf16 %v6373, %v6373
          %v6438 = vpack.c.bf16 %v6374, %v6374
          %v6439 = vpack.c.bf16 %v6375, %v6375
          %v6440 = vpack.c.bf16 %v6376, %v6376
          %v6441 = vpack.c.bf16 %v6377, %v6377
          %v6442 = vpack.c.bf16 %v6378, %v6378
          %v6443 = vpack.c.bf16 %v6379, %v6379
          %v6444 = vpack.c.bf16 %v6380, %v6380
          %v6445 = vpack.c.bf16 %v6381, %v6381
          %v6446 = vpack.c.bf16 %v6382, %v6382
          %v6447 = vpack.c.bf16 %v6383, %v6383
          %v6448 = vpack.c.bf16 %v6384, %v6384
          %v6449 = vpack.c.bf16 %v6385, %v6385
          %v6450 = vpack.c.bf16 %v6386, %v6386
          %v6451 = vpack.c.bf16 %v6387, %v6387
          %v6452 = vpack.c.bf16 %v6388, %v6388
          %v6453 = vpack.c.bf16 %v6389, %v6389
          %v6454 = vpack.c.bf16 %v6390, %v6390
          %v6455 = vpack.c.bf16 %v6391, %v6391
          %v6456 = vpack.c.bf16 %v6392, %v6392
          %v6457 = vpack.c.bf16 %v6393, %v6393
          %v6458 = vpack.c.bf16 %v6394, %v6394
          %v6459 = vpack.c.bf16 %v6395, %v6395
          %v6460 = vpack.c.bf16 %v6396, %v6396
          %v6461 = vpack.c.bf16 %v6397, %v6397
          %v6462 = vpack.c.bf16 %v6398, %v6398
          %v6463 = vpack.c.bf16 %v6399, %v6399
          %v6464 = vpack.c.bf16 %v6400, %v6400
          %v6465 = vpack.c.bf16 %v6401, %v6401
          %v6466 = vpack.c.bf16 %v6402, %v6402
          %v6467 = vpack.c.bf16 %v6403, %v6403
          %v6468 = vpack.c.bf16 %v6404, %v6404
          %v6469 = vpack.c.bf16 %v6405, %v6405
          %v6470 = vpack.c.bf16 %v6406, %v6406
          %v6471 = vpack.c.bf16 %v6407, %v6407
          %v6472 = vpack.c.bf16 %v6408, %v6408
          %v6473 = vpack.c.bf16 %v6409, %v6409
          %v6474 = vpack.c.bf16 %v6410, %v6410
          %v6475 = vpack.c.bf16 %v6411, %v6411
          %v6476 = vpack.c.bf16 %v6412, %v6412
          %v6477 = vpack.c.bf16 %v6413, %v6413
          %v6478 = vpack.c.bf16 %v6414, %v6414
          %v6479 = vpack.c.bf16 %v6415, %v6415
          %v6480 = vpack.c.bf16 %v6416, %v6416
          %v6481 = vpack.c.bf16 %v6417, %v6417
          %v6482 = vpack.c.bf16 %v6418, %v6418
          %v6483 = vpack.c.bf16 %v6419, %v6419
          %v6484 = vpack.c.bf16 %v6420, %v6420
          %v6485 = vpack.c.bf16 %v6421, %v6421
          %v6486 = vpack.c.bf16 %v6422, %v6422
          %v6487 = vpack.c.bf16 %v6423, %v6423
          %v6488 = vpack.c.bf16 %v6424, %v6424
          %v6489 = vpack.c.bf16 %v6425, %v6425
          %v6490 = vpack.c.bf16 %v6426, %v6426
          %v6491 = vpack.c.bf16 %v6427, %v6427
          %v6492 = vpack.c.bf16 %v6428, %v6428
          %v6493 = vpack.c.bf16 %v6429, %v6429
          %v6494 = vpack.c.bf16 %v6430, %v6430
          %v6495 = vpack.c.bf16 %v6431, %v6431
          %v6496 = vpack.c.bf16 %v6432, %v6432
          %v6497 = vpack.c.bf16 %v6433, %v6433
          %6498 = vst [vmem:[%s433] sm:$0xf] %v6434
          %6499 = vst [vmem:[%s433 + $0x8] sm:$0xf] %v6435
          %6500 = vst [vmem:[%s433 + $0x10] sm:$0xf] %v6436
          %6501 = vst [vmem:[%s433 + $0x18] sm:$0xf] %v6437
          %6502 = vst [vmem:[%s433 + $0x20] sm:$0xf] %v6438
          %6503 = vst [vmem:[%s433 + $0x28] sm:$0xf] %v6439
          %6504 = vst [vmem:[%s433 + $0x30] sm:$0xf] %v6440
          %6505 = vst [vmem:[%s433 + $0x38] sm:$0xf] %v6441
          %6506 = vst [vmem:[%s433 + $0x40] sm:$0xf] %v6442
          %6507 = vst [vmem:[%s433 + $0x48] sm:$0xf] %v6443
          %6508 = vst [vmem:[%s433 + $0x50] sm:$0xf] %v6444
          %6509 = vst [vmem:[%s433 + $0x58] sm:$0xf] %v6445
          %6510 = vst [vmem:[%s433 + $0x60] sm:$0xf] %v6446
          %6511 = vst [vmem:[%s433 + $0x68] sm:$0xf] %v6447
          %6512 = vst [vmem:[%s433 + $0x70] sm:$0xf] %v6448
          %6513 = vst [vmem:[%s433 + $0x78] sm:$0xf] %v6449
          %6514 = vst [vmem:[%s433 + $0x80] sm:$0xf] %v6450
          %6515 = vst [vmem:[%s433 + $0x88] sm:$0xf] %v6451
          %6516 = vst [vmem:[%s433 + $0x90] sm:$0xf] %v6452
          %6517 = vst [vmem:[%s433 + $0x98] sm:$0xf] %v6453
          %6518 = vst [vmem:[%s433 + $0xa0] sm:$0xf] %v6454
          %6519 = vst [vmem:[%s433 + $0xa8] sm:$0xf] %v6455
          %6520 = vst [vmem:[%s433 + $0xb0] sm:$0xf] %v6456
          %6521 = vst [vmem:[%s433 + $0xb8] sm:$0xf] %v6457
          %6522 = vst [vmem:[%s433 + $0xc0] sm:$0xf] %v6458
          %6523 = vst [vmem:[%s433 + $0xc8] sm:$0xf] %v6459
          %6524 = vst [vmem:[%s433 + $0xd0] sm:$0xf] %v6460
          %6525 = vst [vmem:[%s433 + $0xd8] sm:$0xf] %v6461
          %6526 = vst [vmem:[%s433 + $0xe0] sm:$0xf] %v6462
          %6527 = vst [vmem:[%s433 + $0xe8] sm:$0xf] %v6463
          %6528 = vst [vmem:[%s433 + $0xf0] sm:$0xf] %v6464
          %6529 = vst [vmem:[%s433 + $0xf8] sm:$0xf] %v6465
          %6530 = vst [vmem:[%s433 + $0x100] sm:$0xf] %v6466
          %6531 = vst [vmem:[%s433 + $0x108] sm:$0xf] %v6467
          %6532 = vst [vmem:[%s433 + $0x110] sm:$0xf] %v6468
          %6533 = vst [vmem:[%s433 + $0x118] sm:$0xf] %v6469
          %6534 = vst [vmem:[%s433 + $0x120] sm:$0xf] %v6470
          %6535 = vst [vmem:[%s433 + $0x128] sm:$0xf] %v6471
          %6536 = vst [vmem:[%s433 + $0x130] sm:$0xf] %v6472
          %6537 = vst [vmem:[%s433 + $0x138] sm:$0xf] %v6473
          %6538 = vst [vmem:[%s433 + $0x140] sm:$0xf] %v6474
          %6539 = vst [vmem:[%s433 + $0x148] sm:$0xf] %v6475
          %6540 = vst [vmem:[%s433 + $0x150] sm:$0xf] %v6476
          %6541 = vst [vmem:[%s433 + $0x158] sm:$0xf] %v6477
          %6542 = vst [vmem:[%s433 + $0x160] sm:$0xf] %v6478
          %6543 = vst [vmem:[%s433 + $0x168] sm:$0xf] %v6479
          %6544 = vst [vmem:[%s433 + $0x170] sm:$0xf] %v6480
          %6545 = vst [vmem:[%s433 + $0x178] sm:$0xf] %v6481
          %6546 = vst [vmem:[%s433 + $0x180] sm:$0xf] %v6482
          %6547 = vst [vmem:[%s433 + $0x188] sm:$0xf] %v6483
          %6548 = vst [vmem:[%s433 + $0x190] sm:$0xf] %v6484
          %6549 = vst [vmem:[%s433 + $0x198] sm:$0xf] %v6485
          %6550 = vst [vmem:[%s433 + $0x1a0] sm:$0xf] %v6486
          %6551 = vst [vmem:[%s433 + $0x1a8] sm:$0xf] %v6487
          %6552 = vst [vmem:[%s433 + $0x1b0] sm:$0xf] %v6488
          %6553 = vst [vmem:[%s433 + $0x1b8] sm:$0xf] %v6489
          %6554 = vst [vmem:[%s433 + $0x1c0] sm:$0xf] %v6490
          %6555 = vst [vmem:[%s433 + $0x1c8] sm:$0xf] %v6491
          %6556 = vst [vmem:[%s433 + $0x1d0] sm:$0xf] %v6492
          %6557 = vst [vmem:[%s433 + $0x1d8] sm:$0xf] %v6493
          %6558 = vst [vmem:[%s433 + $0x1e0] sm:$0xf] %v6494
          %6559 = vst [vmem:[%s433 + $0x1e8] sm:$0xf] %v6495
          %6560 = vst [vmem:[%s433 + $0x1f0] sm:$0xf] %v6496
          %6561 = vst [vmem:[%s433 + $0x1f8] sm:$0xf] %v6497
          %v6562 = vmul.f32 %v5731, %v5986
          %v6563 = vmul.f32 %v5735, %v5987
          %v6564 = vmul.f32 %v5739, %v5988
          %v6565 = vmul.f32 %v5743, %v5989
          %v6566 = vmul.f32 %v5747, %v5990
          %v6567 = vmul.f32 %v5751, %v5991
          %v6568 = vmul.f32 %v5755, %v5992
          %v6569 = vmul.f32 %v5759, %v5993
          %v6570 = vmul.f32 %v5763, %v5994
          %v6571 = vmul.f32 %v5767, %v5995
          %v6572 = vmul.f32 %v5771, %v5996
          %v6573 = vmul.f32 %v5775, %v5997
          %v6574 = vmul.f32 %v5779, %v5998
          %v6575 = vmul.f32 %v5783, %v5999
          %v6576 = vmul.f32 %v5787, %v6000
          %v6577 = vmul.f32 %v5791, %v6001
          %v6578 = vmul.f32 %v5795, %v6002
          %v6579 = vmul.f32 %v5799, %v6003
          %v6580 = vmul.f32 %v5803, %v6004
          %v6581 = vmul.f32 %v5807, %v6005
          %v6582 = vmul.f32 %v5811, %v6006
          %v6583 = vmul.f32 %v5815, %v6007
          %v6584 = vmul.f32 %v5819, %v6008
          %v6585 = vmul.f32 %v5823, %v6009
          %v6586 = vmul.f32 %v5827, %v6010
          %v6587 = vmul.f32 %v5831, %v6011
          %v6588 = vmul.f32 %v5835, %v6012
          %v6589 = vmul.f32 %v5839, %v6013
          %v6590 = vmul.f32 %v5843, %v6014
          %v6591 = vmul.f32 %v5847, %v6015
          %v6592 = vmul.f32 %v5851, %v6016
          %v6593 = vmul.f32 %v5855, %v6017
          %v6594 = vmul.f32 %v5859, %v6018
          %v6595 = vmul.f32 %v5863, %v6019
          %v6596 = vmul.f32 %v5867, %v6020
          %v6597 = vmul.f32 %v5871, %v6021
          %v6598 = vmul.f32 %v5875, %v6022
          %v6599 = vmul.f32 %v5879, %v6023
          %v6600 = vmul.f32 %v5883, %v6024
          %v6601 = vmul.f32 %v5887, %v6025
          %v6602 = vmul.f32 %v5891, %v6026
          %v6603 = vmul.f32 %v5895, %v6027
          %v6604 = vmul.f32 %v5899, %v6028
          %v6605 = vmul.f32 %v5903, %v6029
          %v6606 = vmul.f32 %v5907, %v6030
          %v6607 = vmul.f32 %v5911, %v6031
          %v6608 = vmul.f32 %v5915, %v6032
          %v6609 = vmul.f32 %v5919, %v6033
          %v6610 = vmul.f32 %v5923, %v6034
          %v6611 = vmul.f32 %v5927, %v6035
          %v6612 = vmul.f32 %v5931, %v6036
          %v6613 = vmul.f32 %v5935, %v6037
          %v6614 = vmul.f32 %v5939, %v6038
          %v6615 = vmul.f32 %v5943, %v6039
          %v6616 = vmul.f32 %v5947, %v6040
          %v6617 = vmul.f32 %v5951, %v6041
          %v6618 = vmul.f32 %v5955, %v6042
          %v6619 = vmul.f32 %v5959, %v6043
          %v6620 = vmul.f32 %v5963, %v6044
          %v6621 = vmul.f32 %v5967, %v6045
          %v6622 = vmul.f32 %v5971, %v6046
          %v6623 = vmul.f32 %v5975, %v6047
          %v6624 = vmul.f32 %v5979, %v6048
          %v6625 = vmul.f32 %v5983, %v6049
          %6626 = vrot.lane.b32.xlu0 %v5731, 64
          %v6627 = vpop.permute.xlu0 %6626
          %6628 = vrot.lane.b32.xlu0 %v5735, 64
          %v6629 = vpop.permute.xlu0 %6628
          %6630 = vrot.lane.b32.xlu0 %v5739, 64
          %v6631 = vpop.permute.xlu0 %6630
          %6632 = vrot.lane.b32.xlu0 %v5743, 64
          %v6633 = vpop.permute.xlu0 %6632
          %6634 = vrot.lane.b32.xlu0 %v5747, 64
          %v6635 = vpop.permute.xlu0 %6634
          %6636 = vrot.lane.b32.xlu0 %v5751, 64
          %v6637 = vpop.permute.xlu0 %6636
          %6638 = vrot.lane.b32.xlu0 %v5755, 64
          %v6639 = vpop.permute.xlu0 %6638
          %6640 = vrot.lane.b32.xlu0 %v5759, 64
          %v6641 = vpop.permute.xlu0 %6640
          %6642 = vrot.lane.b32.xlu0 %v5763, 64
          %v6643 = vpop.permute.xlu0 %6642
          %6644 = vrot.lane.b32.xlu0 %v5767, 64
          %v6645 = vpop.permute.xlu0 %6644
          %6646 = vrot.lane.b32.xlu0 %v5771, 64
          %v6647 = vpop.permute.xlu0 %6646
          %6648 = vrot.lane.b32.xlu0 %v5775, 64
          %v6649 = vpop.permute.xlu0 %6648
          %6650 = vrot.lane.b32.xlu0 %v5779, 64
          %v6651 = vpop.permute.xlu0 %6650
          %6652 = vrot.lane.b32.xlu0 %v5783, 64
          %v6653 = vpop.permute.xlu0 %6652
          %6654 = vrot.lane.b32.xlu0 %v5787, 64
          %v6655 = vpop.permute.xlu0 %6654
          %6656 = vrot.lane.b32.xlu0 %v5791, 64
          %v6657 = vpop.permute.xlu0 %6656
          %6658 = vrot.lane.b32.xlu0 %v5795, 64
          %v6659 = vpop.permute.xlu0 %6658
          %6660 = vrot.lane.b32.xlu0 %v5799, 64
          %v6661 = vpop.permute.xlu0 %6660
          %6662 = vrot.lane.b32.xlu0 %v5803, 64
          %v6663 = vpop.permute.xlu0 %6662
          %6664 = vrot.lane.b32.xlu0 %v5807, 64
          %v6665 = vpop.permute.xlu0 %6664
          %6666 = vrot.lane.b32.xlu0 %v5811, 64
          %v6667 = vpop.permute.xlu0 %6666
          %6668 = vrot.lane.b32.xlu0 %v5815, 64
          %v6669 = vpop.permute.xlu0 %6668
          %6670 = vrot.lane.b32.xlu0 %v5819, 64
          %v6671 = vpop.permute.xlu0 %6670
          %6672 = vrot.lane.b32.xlu0 %v5823, 64
          %v6673 = vpop.permute.xlu0 %6672
          %6674 = vrot.lane.b32.xlu0 %v5827, 64
          %v6675 = vpop.permute.xlu0 %6674
          %6676 = vrot.lane.b32.xlu0 %v5831, 64
          %v6677 = vpop.permute.xlu0 %6676
          %6678 = vrot.lane.b32.xlu0 %v5835, 64
          %v6679 = vpop.permute.xlu0 %6678
          %6680 = vrot.lane.b32.xlu0 %v5839, 64
          %v6681 = vpop.permute.xlu0 %6680
          %6682 = vrot.lane.b32.xlu0 %v5843, 64
          %v6683 = vpop.permute.xlu0 %6682
          %6684 = vrot.lane.b32.xlu0 %v5847, 64
          %v6685 = vpop.permute.xlu0 %6684
          %6686 = vrot.lane.b32.xlu0 %v5851, 64
          %v6687 = vpop.permute.xlu0 %6686
          %6688 = vrot.lane.b32.xlu0 %v5855, 64
          %v6689 = vpop.permute.xlu0 %6688
          %6690 = vrot.lane.b32.xlu0 %v5859, 64
          %v6691 = vpop.permute.xlu0 %6690
          %6692 = vrot.lane.b32.xlu0 %v5863, 64
          %v6693 = vpop.permute.xlu0 %6692
          %6694 = vrot.lane.b32.xlu0 %v5867, 64
          %v6695 = vpop.permute.xlu0 %6694
          %6696 = vrot.lane.b32.xlu0 %v5871, 64
          %v6697 = vpop.permute.xlu0 %6696
          %6698 = vrot.lane.b32.xlu0 %v5875, 64
          %v6699 = vpop.permute.xlu0 %6698
          %6700 = vrot.lane.b32.xlu0 %v5879, 64
          %v6701 = vpop.permute.xlu0 %6700
          %6702 = vrot.lane.b32.xlu0 %v5883, 64
          %v6703 = vpop.permute.xlu0 %6702
          %6704 = vrot.lane.b32.xlu0 %v5887, 64
          %v6705 = vpop.permute.xlu0 %6704
          %6706 = vrot.lane.b32.xlu0 %v5891, 64
          %v6707 = vpop.permute.xlu0 %6706
          %6708 = vrot.lane.b32.xlu0 %v5895, 64
          %v6709 = vpop.permute.xlu0 %6708
          %6710 = vrot.lane.b32.xlu0 %v5899, 64
          %v6711 = vpop.permute.xlu0 %6710
          %6712 = vrot.lane.b32.xlu0 %v5903, 64
          %v6713 = vpop.permute.xlu0 %6712
          %6714 = vrot.lane.b32.xlu0 %v5907, 64
          %v6715 = vpop.permute.xlu0 %6714
          %6716 = vrot.lane.b32.xlu0 %v5911, 64
          %v6717 = vpop.permute.xlu0 %6716
          %6718 = vrot.lane.b32.xlu0 %v5915, 64
          %v6719 = vpop.permute.xlu0 %6718
          %6720 = vrot.lane.b32.xlu0 %v5919, 64
          %v6721 = vpop.permute.xlu0 %6720
          %6722 = vrot.lane.b32.xlu0 %v5923, 64
          %v6723 = vpop.permute.xlu0 %6722
          %6724 = vrot.lane.b32.xlu0 %v5927, 64
          %v6725 = vpop.permute.xlu0 %6724
          %6726 = vrot.lane.b32.xlu0 %v5931, 64
          %v6727 = vpop.permute.xlu0 %6726
          %6728 = vrot.lane.b32.xlu0 %v5935, 64
          %v6729 = vpop.permute.xlu0 %6728
          %6730 = vrot.lane.b32.xlu0 %v5939, 64
          %v6731 = vpop.permute.xlu0 %6730
          %6732 = vrot.lane.b32.xlu0 %v5943, 64
          %v6733 = vpop.permute.xlu0 %6732
          %6734 = vrot.lane.b32.xlu0 %v5947, 64
          %v6735 = vpop.permute.xlu0 %6734
          %6736 = vrot.lane.b32.xlu0 %v5951, 64
          %v6737 = vpop.permute.xlu0 %6736
          %6738 = vrot.lane.b32.xlu0 %v5955, 64
          %v6739 = vpop.permute.xlu0 %6738
          %6740 = vrot.lane.b32.xlu0 %v5959, 64
          %v6741 = vpop.permute.xlu0 %6740
          %6742 = vrot.lane.b32.xlu0 %v5963, 64
          %v6743 = vpop.permute.xlu0 %6742
          %6744 = vrot.lane.b32.xlu0 %v5967, 64
          %v6745 = vpop.permute.xlu0 %6744
          %6746 = vrot.lane.b32.xlu0 %v5971, 64
          %v6747 = vpop.permute.xlu0 %6746
          %6748 = vrot.lane.b32.xlu0 %v5975, 64
          %v6749 = vpop.permute.xlu0 %6748
          %6750 = vrot.lane.b32.xlu0 %v5979, 64
          %v6751 = vpop.permute.xlu0 %6750
          %6752 = vrot.lane.b32.xlu0 %v5983, 64
          %v6753 = vpop.permute.xlu0 %6752
          %v6754 = vmul.f32 %v6627, %v6050
          %v6755 = vmul.f32 %v6629, %v6051
          %v6756 = vmul.f32 %v6631, %v6052
          %v6757 = vmul.f32 %v6633, %v6053
          %v6758 = vmul.f32 %v6635, %v6054
          %v6759 = vmul.f32 %v6637, %v6055
          %v6760 = vmul.f32 %v6639, %v6056
          %v6761 = vmul.f32 %v6641, %v6057
          %v6762 = vmul.f32 %v6643, %v6058
          %v6763 = vmul.f32 %v6645, %v6059
          %v6764 = vmul.f32 %v6647, %v6060
          %v6765 = vmul.f32 %v6649, %v6061
          %v6766 = vmul.f32 %v6651, %v6062
          %v6767 = vmul.f32 %v6653, %v6063
          %v6768 = vmul.f32 %v6655, %v6064
          %v6769 = vmul.f32 %v6657, %v6065
          %v6770 = vmul.f32 %v6659, %v6066
          %v6771 = vmul.f32 %v6661, %v6067
          %v6772 = vmul.f32 %v6663, %v6068
          %v6773 = vmul.f32 %v6665, %v6069
          %v6774 = vmul.f32 %v6667, %v6070
          %v6775 = vmul.f32 %v6669, %v6071
          %v6776 = vmul.f32 %v6671, %v6072
          %v6777 = vmul.f32 %v6673, %v6073
          %v6778 = vmul.f32 %v6675, %v6074
          %v6779 = vmul.f32 %v6677, %v6075
          %v6780 = vmul.f32 %v6679, %v6076
          %v6781 = vmul.f32 %v6681, %v6077
          %v6782 = vmul.f32 %v6683, %v6078
          %v6783 = vmul.f32 %v6685, %v6079
          %v6784 = vmul.f32 %v6687, %v6080
          %v6785 = vmul.f32 %v6689, %v6081
          %v6786 = vmul.f32 %v6691, %v6082
          %v6787 = vmul.f32 %v6693, %v6083
          %v6788 = vmul.f32 %v6695, %v6084
          %v6789 = vmul.f32 %v6697, %v6085
          %v6790 = vmul.f32 %v6699, %v6086
          %v6791 = vmul.f32 %v6701, %v6087
          %v6792 = vmul.f32 %v6703, %v6088
          %v6793 = vmul.f32 %v6705, %v6089
          %v6794 = vmul.f32 %v6707, %v6090
          %v6795 = vmul.f32 %v6709, %v6091
          %v6796 = vmul.f32 %v6711, %v6092
          %v6797 = vmul.f32 %v6713, %v6093
          %v6798 = vmul.f32 %v6715, %v6094
          %v6799 = vmul.f32 %v6717, %v6095
          %v6800 = vmul.f32 %v6719, %v6096
          %v6801 = vmul.f32 %v6721, %v6097
          %v6802 = vmul.f32 %v6723, %v6098
          %v6803 = vmul.f32 %v6725, %v6099
          %v6804 = vmul.f32 %v6727, %v6100
          %v6805 = vmul.f32 %v6729, %v6101
          %v6806 = vmul.f32 %v6731, %v6102
          %v6807 = vmul.f32 %v6733, %v6103
          %v6808 = vmul.f32 %v6735, %v6104
          %v6809 = vmul.f32 %v6737, %v6105
          %v6810 = vmul.f32 %v6739, %v6106
          %v6811 = vmul.f32 %v6741, %v6107
          %v6812 = vmul.f32 %v6743, %v6108
          %v6813 = vmul.f32 %v6745, %v6109
          %v6814 = vmul.f32 %v6747, %v6110
          %v6815 = vmul.f32 %v6749, %v6111
          %v6816 = vmul.f32 %v6751, %v6112
          %v6817 = vmul.f32 %v6753, %v6113
          %v6818 = vadd.f32 %v6562, %v6754
          %v6819 = vadd.f32 %v6563, %v6755
          %v6820 = vadd.f32 %v6564, %v6756
          %v6821 = vadd.f32 %v6565, %v6757
          %v6822 = vadd.f32 %v6566, %v6758
          %v6823 = vadd.f32 %v6567, %v6759
          %v6824 = vadd.f32 %v6568, %v6760
          %v6825 = vadd.f32 %v6569, %v6761
          %v6826 = vadd.f32 %v6570, %v6762
          %v6827 = vadd.f32 %v6571, %v6763
          %v6828 = vadd.f32 %v6572, %v6764
          %v6829 = vadd.f32 %v6573, %v6765
          %v6830 = vadd.f32 %v6574, %v6766
          %v6831 = vadd.f32 %v6575, %v6767
          %v6832 = vadd.f32 %v6576, %v6768
          %v6833 = vadd.f32 %v6577, %v6769
          %v6834 = vadd.f32 %v6578, %v6770
          %v6835 = vadd.f32 %v6579, %v6771
          %v6836 = vadd.f32 %v6580, %v6772
          %v6837 = vadd.f32 %v6581, %v6773
          %v6838 = vadd.f32 %v6582, %v6774
          %v6839 = vadd.f32 %v6583, %v6775
          %v6840 = vadd.f32 %v6584, %v6776
          %v6841 = vadd.f32 %v6585, %v6777
          %v6842 = vadd.f32 %v6586, %v6778
          %v6843 = vadd.f32 %v6587, %v6779
          %v6844 = vadd.f32 %v6588, %v6780
          %v6845 = vadd.f32 %v6589, %v6781
          %v6846 = vadd.f32 %v6590, %v6782
          %v6847 = vadd.f32 %v6591, %v6783
          %v6848 = vadd.f32 %v6592, %v6784
          %v6849 = vadd.f32 %v6593, %v6785
          %v6850 = vadd.f32 %v6594, %v6786
          %v6851 = vadd.f32 %v6595, %v6787
          %v6852 = vadd.f32 %v6596, %v6788
          %v6853 = vadd.f32 %v6597, %v6789
          %v6854 = vadd.f32 %v6598, %v6790
          %v6855 = vadd.f32 %v6599, %v6791
          %v6856 = vadd.f32 %v6600, %v6792
          %v6857 = vadd.f32 %v6601, %v6793
          %v6858 = vadd.f32 %v6602, %v6794
          %v6859 = vadd.f32 %v6603, %v6795
          %v6860 = vadd.f32 %v6604, %v6796
          %v6861 = vadd.f32 %v6605, %v6797
          %v6862 = vadd.f32 %v6606, %v6798
          %v6863 = vadd.f32 %v6607, %v6799
          %v6864 = vadd.f32 %v6608, %v6800
          %v6865 = vadd.f32 %v6609, %v6801
          %v6866 = vadd.f32 %v6610, %v6802
          %v6867 = vadd.f32 %v6611, %v6803
          %v6868 = vadd.f32 %v6612, %v6804
          %v6869 = vadd.f32 %v6613, %v6805
          %v6870 = vadd.f32 %v6614, %v6806
          %v6871 = vadd.f32 %v6615, %v6807
          %v6872 = vadd.f32 %v6616, %v6808
          %v6873 = vadd.f32 %v6617, %v6809
          %v6874 = vadd.f32 %v6618, %v6810
          %v6875 = vadd.f32 %v6619, %v6811
          %v6876 = vadd.f32 %v6620, %v6812
          %v6877 = vadd.f32 %v6621, %v6813
          %v6878 = vadd.f32 %v6622, %v6814
          %v6879 = vadd.f32 %v6623, %v6815
          %v6880 = vadd.f32 %v6624, %v6816
          %v6881 = vadd.f32 %v6625, %v6817
          %v6882 = vpack.c.bf16 %v6818, %v6818
          %v6883 = vpack.c.bf16 %v6819, %v6819
          %v6884 = vpack.c.bf16 %v6820, %v6820
          %v6885 = vpack.c.bf16 %v6821, %v6821
          %v6886 = vpack.c.bf16 %v6822, %v6822
          %v6887 = vpack.c.bf16 %v6823, %v6823
          %v6888 = vpack.c.bf16 %v6824, %v6824
          %v6889 = vpack.c.bf16 %v6825, %v6825
          %v6890 = vpack.c.bf16 %v6826, %v6826
          %v6891 = vpack.c.bf16 %v6827, %v6827
          %v6892 = vpack.c.bf16 %v6828, %v6828
          %v6893 = vpack.c.bf16 %v6829, %v6829
          %v6894 = vpack.c.bf16 %v6830, %v6830
          %v6895 = vpack.c.bf16 %v6831, %v6831
          %v6896 = vpack.c.bf16 %v6832, %v6832
          %v6897 = vpack.c.bf16 %v6833, %v6833
          %v6898 = vpack.c.bf16 %v6834, %v6834
          %v6899 = vpack.c.bf16 %v6835, %v6835
          %v6900 = vpack.c.bf16 %v6836, %v6836
          %v6901 = vpack.c.bf16 %v6837, %v6837
          %v6902 = vpack.c.bf16 %v6838, %v6838
          %v6903 = vpack.c.bf16 %v6839, %v6839
          %v6904 = vpack.c.bf16 %v6840, %v6840
          %v6905 = vpack.c.bf16 %v6841, %v6841
          %v6906 = vpack.c.bf16 %v6842, %v6842
          %v6907 = vpack.c.bf16 %v6843, %v6843
          %v6908 = vpack.c.bf16 %v6844, %v6844
          %v6909 = vpack.c.bf16 %v6845, %v6845
          %v6910 = vpack.c.bf16 %v6846, %v6846
          %v6911 = vpack.c.bf16 %v6847, %v6847
          %v6912 = vpack.c.bf16 %v6848, %v6848
          %v6913 = vpack.c.bf16 %v6849, %v6849
          %v6914 = vpack.c.bf16 %v6850, %v6850
          %v6915 = vpack.c.bf16 %v6851, %v6851
          %v6916 = vpack.c.bf16 %v6852, %v6852
          %v6917 = vpack.c.bf16 %v6853, %v6853
          %v6918 = vpack.c.bf16 %v6854, %v6854
          %v6919 = vpack.c.bf16 %v6855, %v6855
          %v6920 = vpack.c.bf16 %v6856, %v6856
          %v6921 = vpack.c.bf16 %v6857, %v6857
          %v6922 = vpack.c.bf16 %v6858, %v6858
          %v6923 = vpack.c.bf16 %v6859, %v6859
          %v6924 = vpack.c.bf16 %v6860, %v6860
          %v6925 = vpack.c.bf16 %v6861, %v6861
          %v6926 = vpack.c.bf16 %v6862, %v6862
          %v6927 = vpack.c.bf16 %v6863, %v6863
          %v6928 = vpack.c.bf16 %v6864, %v6864
          %v6929 = vpack.c.bf16 %v6865, %v6865
          %v6930 = vpack.c.bf16 %v6866, %v6866
          %v6931 = vpack.c.bf16 %v6867, %v6867
          %v6932 = vpack.c.bf16 %v6868, %v6868
          %v6933 = vpack.c.bf16 %v6869, %v6869
          %v6934 = vpack.c.bf16 %v6870, %v6870
          %v6935 = vpack.c.bf16 %v6871, %v6871
          %v6936 = vpack.c.bf16 %v6872, %v6872
          %v6937 = vpack.c.bf16 %v6873, %v6873
          %v6938 = vpack.c.bf16 %v6874, %v6874
          %v6939 = vpack.c.bf16 %v6875, %v6875
          %v6940 = vpack.c.bf16 %v6876, %v6876
          %v6941 = vpack.c.bf16 %v6877, %v6877
          %v6942 = vpack.c.bf16 %v6878, %v6878
          %v6943 = vpack.c.bf16 %v6879, %v6879
          %v6944 = vpack.c.bf16 %v6880, %v6880
          %v6945 = vpack.c.bf16 %v6881, %v6881
          %6946 = vst [vmem:[%s433 + $0x4] sm:$0xf] %v6882
          %6947 = vst [vmem:[%s433 + $0xc] sm:$0xf] %v6883
          %6948 = vst [vmem:[%s433 + $0x14] sm:$0xf] %v6884
          %6949 = vst [vmem:[%s433 + $0x1c] sm:$0xf] %v6885
          %6950 = vst [vmem:[%s433 + $0x24] sm:$0xf] %v6886
          %6951 = vst [vmem:[%s433 + $0x2c] sm:$0xf] %v6887
          %6952 = vst [vmem:[%s433 + $0x34] sm:$0xf] %v6888
          %6953 = vst [vmem:[%s433 + $0x3c] sm:$0xf] %v6889
          %6954 = vst [vmem:[%s433 + $0x44] sm:$0xf] %v6890
          %6955 = vst [vmem:[%s433 + $0x4c] sm:$0xf] %v6891
          %6956 = vst [vmem:[%s433 + $0x54] sm:$0xf] %v6892
          %6957 = vst [vmem:[%s433 + $0x5c] sm:$0xf] %v6893
          %6958 = vst [vmem:[%s433 + $0x64] sm:$0xf] %v6894
          %6959 = vst [vmem:[%s433 + $0x6c] sm:$0xf] %v6895
          %6960 = vst [vmem:[%s433 + $0x74] sm:$0xf] %v6896
          %6961 = vst [vmem:[%s433 + $0x7c] sm:$0xf] %v6897
          %6962 = vst [vmem:[%s433 + $0x84] sm:$0xf] %v6898
          %6963 = vst [vmem:[%s433 + $0x8c] sm:$0xf] %v6899
          %6964 = vst [vmem:[%s433 + $0x94] sm:$0xf] %v6900
          %6965 = vst [vmem:[%s433 + $0x9c] sm:$0xf] %v6901
          %6966 = vst [vmem:[%s433 + $0xa4] sm:$0xf] %v6902
          %6967 = vst [vmem:[%s433 + $0xac] sm:$0xf] %v6903
          %6968 = vst [vmem:[%s433 + $0xb4] sm:$0xf] %v6904
          %6969 = vst [vmem:[%s433 + $0xbc] sm:$0xf] %v6905
          %6970 = vst [vmem:[%s433 + $0xc4] sm:$0xf] %v6906
          %6971 = vst [vmem:[%s433 + $0xcc] sm:$0xf] %v6907
          %6972 = vst [vmem:[%s433 + $0xd4] sm:$0xf] %v6908
          %6973 = vst [vmem:[%s433 + $0xdc] sm:$0xf] %v6909
          %6974 = vst [vmem:[%s433 + $0xe4] sm:$0xf] %v6910
          %6975 = vst [vmem:[%s433 + $0xec] sm:$0xf] %v6911
          %6976 = vst [vmem:[%s433 + $0xf4] sm:$0xf] %v6912
          %6977 = vst [vmem:[%s433 + $0xfc] sm:$0xf] %v6913
          %6978 = vst [vmem:[%s433 + $0x104] sm:$0xf] %v6914
          %6979 = vst [vmem:[%s433 + $0x10c] sm:$0xf] %v6915
          %6980 = vst [vmem:[%s433 + $0x114] sm:$0xf] %v6916
          %6981 = vst [vmem:[%s433 + $0x11c] sm:$0xf] %v6917
          %6982 = vst [vmem:[%s433 + $0x124] sm:$0xf] %v6918
          %6983 = vst [vmem:[%s433 + $0x12c] sm:$0xf] %v6919
          %6984 = vst [vmem:[%s433 + $0x134] sm:$0xf] %v6920
          %6985 = vst [vmem:[%s433 + $0x13c] sm:$0xf] %v6921
          %6986 = vst [vmem:[%s433 + $0x144] sm:$0xf] %v6922
          %6987 = vst [vmem:[%s433 + $0x14c] sm:$0xf] %v6923
          %6988 = vst [vmem:[%s433 + $0x154] sm:$0xf] %v6924
          %6989 = vst [vmem:[%s433 + $0x15c] sm:$0xf] %v6925
          %6990 = vst [vmem:[%s433 + $0x164] sm:$0xf] %v6926
          %6991 = vst [vmem:[%s433 + $0x16c] sm:$0xf] %v6927
          %6992 = vst [vmem:[%s433 + $0x174] sm:$0xf] %v6928
          %6993 = vst [vmem:[%s433 + $0x17c] sm:$0xf] %v6929
          %6994 = vst [vmem:[%s433 + $0x184] sm:$0xf] %v6930
          %6995 = vst [vmem:[%s433 + $0x18c] sm:$0xf] %v6931
          %6996 = vst [vmem:[%s433 + $0x194] sm:$0xf] %v6932
          %6997 = vst [vmem:[%s433 + $0x19c] sm:$0xf] %v6933
          %6998 = vst [vmem:[%s433 + $0x1a4] sm:$0xf] %v6934
          %6999 = vst [vmem:[%s433 + $0x1ac] sm:$0xf] %v6935
          %7000 = vst [vmem:[%s433 + $0x1b4] sm:$0xf] %v6936
          %7001 = vst [vmem:[%s433 + $0x1bc] sm:$0xf] %v6937
          %7002 = vst [vmem:[%s433 + $0x1c4] sm:$0xf] %v6938
          %7003 = vst [vmem:[%s433 + $0x1cc] sm:$0xf] %v6939
          %7004 = vst [vmem:[%s433 + $0x1d4] sm:$0xf] %v6940
          %7005 = vst [vmem:[%s433 + $0x1dc] sm:$0xf] %v6941
          %7006 = vst [vmem:[%s433 + $0x1e4] sm:$0xf] %v6942
          %7007 = vst [vmem:[%s433 + $0x1ec] sm:$0xf] %v6943
          %7008 = vst [vmem:[%s433 + $0x1f4] sm:$0xf] %v6944
          %7009 = vst [vmem:[%s433 + $0x1fc] sm:$0xf] %v6945
          %v7010 = vmul.f32 %v5732, %v5986
          %v7011 = vmul.f32 %v5736, %v5987
          %v7012 = vmul.f32 %v5740, %v5988
          %v7013 = vmul.f32 %v5744, %v5989
          %v7014 = vmul.f32 %v5748, %v5990
          %v7015 = vmul.f32 %v5752, %v5991
          %v7016 = vmul.f32 %v5756, %v5992
          %v7017 = vmul.f32 %v5760, %v5993
          %v7018 = vmul.f32 %v5764, %v5994
          %v7019 = vmul.f32 %v5768, %v5995
          %v7020 = vmul.f32 %v5772, %v5996
          %v7021 = vmul.f32 %v5776, %v5997
          %v7022 = vmul.f32 %v5780, %v5998
          %v7023 = vmul.f32 %v5784, %v5999
          %v7024 = vmul.f32 %v5788, %v6000
          %v7025 = vmul.f32 %v5792, %v6001
          %v7026 = vmul.f32 %v5796, %v6002
          %v7027 = vmul.f32 %v5800, %v6003
          %v7028 = vmul.f32 %v5804, %v6004
          %v7029 = vmul.f32 %v5808, %v6005
          %v7030 = vmul.f32 %v5812, %v6006
          %v7031 = vmul.f32 %v5816, %v6007
          %v7032 = vmul.f32 %v5820, %v6008
          %v7033 = vmul.f32 %v5824, %v6009
          %v7034 = vmul.f32 %v5828, %v6010
          %v7035 = vmul.f32 %v5832, %v6011
          %v7036 = vmul.f32 %v5836, %v6012
          %v7037 = vmul.f32 %v5840, %v6013
          %v7038 = vmul.f32 %v5844, %v6014
          %v7039 = vmul.f32 %v5848, %v6015
          %v7040 = vmul.f32 %v5852, %v6016
          %v7041 = vmul.f32 %v5856, %v6017
          %v7042 = vmul.f32 %v5860, %v6018
          %v7043 = vmul.f32 %v5864, %v6019
          %v7044 = vmul.f32 %v5868, %v6020
          %v7045 = vmul.f32 %v5872, %v6021
          %v7046 = vmul.f32 %v5876, %v6022
          %v7047 = vmul.f32 %v5880, %v6023
          %v7048 = vmul.f32 %v5884, %v6024
          %v7049 = vmul.f32 %v5888, %v6025
          %v7050 = vmul.f32 %v5892, %v6026
          %v7051 = vmul.f32 %v5896, %v6027
          %v7052 = vmul.f32 %v5900, %v6028
          %v7053 = vmul.f32 %v5904, %v6029
          %v7054 = vmul.f32 %v5908, %v6030
          %v7055 = vmul.f32 %v5912, %v6031
          %v7056 = vmul.f32 %v5916, %v6032
          %v7057 = vmul.f32 %v5920, %v6033
          %v7058 = vmul.f32 %v5924, %v6034
          %v7059 = vmul.f32 %v5928, %v6035
          %v7060 = vmul.f32 %v5932, %v6036
          %v7061 = vmul.f32 %v5936, %v6037
          %v7062 = vmul.f32 %v5940, %v6038
          %v7063 = vmul.f32 %v5944, %v6039
          %v7064 = vmul.f32 %v5948, %v6040
          %v7065 = vmul.f32 %v5952, %v6041
          %v7066 = vmul.f32 %v5956, %v6042
          %v7067 = vmul.f32 %v5960, %v6043
          %v7068 = vmul.f32 %v5964, %v6044
          %v7069 = vmul.f32 %v5968, %v6045
          %v7070 = vmul.f32 %v5972, %v6046
          %v7071 = vmul.f32 %v5976, %v6047
          %v7072 = vmul.f32 %v5980, %v6048
          %v7073 = vmul.f32 %v5984, %v6049
          %7074 = vrot.lane.b32.xlu0 %v5732, 64
          %v7075 = vpop.permute.xlu0 %7074
          %7076 = vrot.lane.b32.xlu0 %v5736, 64
          %v7077 = vpop.permute.xlu0 %7076
          %7078 = vrot.lane.b32.xlu0 %v5740, 64
          %v7079 = vpop.permute.xlu0 %7078
          %7080 = vrot.lane.b32.xlu0 %v5744, 64
          %v7081 = vpop.permute.xlu0 %7080
          %7082 = vrot.lane.b32.xlu0 %v5748, 64
          %v7083 = vpop.permute.xlu0 %7082
          %7084 = vrot.lane.b32.xlu0 %v5752, 64
          %v7085 = vpop.permute.xlu0 %7084
          %7086 = vrot.lane.b32.xlu0 %v5756, 64
          %v7087 = vpop.permute.xlu0 %7086
          %7088 = vrot.lane.b32.xlu0 %v5760, 64
          %v7089 = vpop.permute.xlu0 %7088
          %7090 = vrot.lane.b32.xlu0 %v5764, 64
          %v7091 = vpop.permute.xlu0 %7090
          %7092 = vrot.lane.b32.xlu0 %v5768, 64
          %v7093 = vpop.permute.xlu0 %7092
          %7094 = vrot.lane.b32.xlu0 %v5772, 64
          %v7095 = vpop.permute.xlu0 %7094
          %7096 = vrot.lane.b32.xlu0 %v5776, 64
          %v7097 = vpop.permute.xlu0 %7096
          %7098 = vrot.lane.b32.xlu0 %v5780, 64
          %v7099 = vpop.permute.xlu0 %7098
          %7100 = vrot.lane.b32.xlu0 %v5784, 64
          %v7101 = vpop.permute.xlu0 %7100
          %7102 = vrot.lane.b32.xlu0 %v5788, 64
          %v7103 = vpop.permute.xlu0 %7102
          %7104 = vrot.lane.b32.xlu0 %v5792, 64
          %v7105 = vpop.permute.xlu0 %7104
          %7106 = vrot.lane.b32.xlu0 %v5796, 64
          %v7107 = vpop.permute.xlu0 %7106
          %7108 = vrot.lane.b32.xlu0 %v5800, 64
          %v7109 = vpop.permute.xlu0 %7108
          %7110 = vrot.lane.b32.xlu0 %v5804, 64
          %v7111 = vpop.permute.xlu0 %7110
          %7112 = vrot.lane.b32.xlu0 %v5808, 64
          %v7113 = vpop.permute.xlu0 %7112
          %7114 = vrot.lane.b32.xlu0 %v5812, 64
          %v7115 = vpop.permute.xlu0 %7114
          %7116 = vrot.lane.b32.xlu0 %v5816, 64
          %v7117 = vpop.permute.xlu0 %7116
          %7118 = vrot.lane.b32.xlu0 %v5820, 64
          %v7119 = vpop.permute.xlu0 %7118
          %7120 = vrot.lane.b32.xlu0 %v5824, 64
          %v7121 = vpop.permute.xlu0 %7120
          %7122 = vrot.lane.b32.xlu0 %v5828, 64
          %v7123 = vpop.permute.xlu0 %7122
          %7124 = vrot.lane.b32.xlu0 %v5832, 64
          %v7125 = vpop.permute.xlu0 %7124
          %7126 = vrot.lane.b32.xlu0 %v5836, 64
          %v7127 = vpop.permute.xlu0 %7126
          %7128 = vrot.lane.b32.xlu0 %v5840, 64
          %v7129 = vpop.permute.xlu0 %7128
          %7130 = vrot.lane.b32.xlu0 %v5844, 64
          %v7131 = vpop.permute.xlu0 %7130
          %7132 = vrot.lane.b32.xlu0 %v5848, 64
          %v7133 = vpop.permute.xlu0 %7132
          %7134 = vrot.lane.b32.xlu0 %v5852, 64
          %v7135 = vpop.permute.xlu0 %7134
          %7136 = vrot.lane.b32.xlu0 %v5856, 64
          %v7137 = vpop.permute.xlu0 %7136
          %7138 = vrot.lane.b32.xlu0 %v5860, 64
          %v7139 = vpop.permute.xlu0 %7138
          %7140 = vrot.lane.b32.xlu0 %v5864, 64
          %v7141 = vpop.permute.xlu0 %7140
          %7142 = vrot.lane.b32.xlu0 %v5868, 64
          %v7143 = vpop.permute.xlu0 %7142
          %7144 = vrot.lane.b32.xlu0 %v5872, 64
          %v7145 = vpop.permute.xlu0 %7144
          %7146 = vrot.lane.b32.xlu0 %v5876, 64
          %v7147 = vpop.permute.xlu0 %7146
          %7148 = vrot.lane.b32.xlu0 %v5880, 64
          %v7149 = vpop.permute.xlu0 %7148
          %7150 = vrot.lane.b32.xlu0 %v5884, 64
          %v7151 = vpop.permute.xlu0 %7150
          %7152 = vrot.lane.b32.xlu0 %v5888, 64
          %v7153 = vpop.permute.xlu0 %7152
          %7154 = vrot.lane.b32.xlu0 %v5892, 64
          %v7155 = vpop.permute.xlu0 %7154
          %7156 = vrot.lane.b32.xlu0 %v5896, 64
          %v7157 = vpop.permute.xlu0 %7156
          %7158 = vrot.lane.b32.xlu0 %v5900, 64
          %v7159 = vpop.permute.xlu0 %7158
          %7160 = vrot.lane.b32.xlu0 %v5904, 64
          %v7161 = vpop.permute.xlu0 %7160
          %7162 = vrot.lane.b32.xlu0 %v5908, 64
          %v7163 = vpop.permute.xlu0 %7162
          %7164 = vrot.lane.b32.xlu0 %v5912, 64
          %v7165 = vpop.permute.xlu0 %7164
          %7166 = vrot.lane.b32.xlu0 %v5916, 64
          %v7167 = vpop.permute.xlu0 %7166
          %7168 = vrot.lane.b32.xlu0 %v5920, 64
          %v7169 = vpop.permute.xlu0 %7168
          %7170 = vrot.lane.b32.xlu0 %v5924, 64
          %v7171 = vpop.permute.xlu0 %7170
          %7172 = vrot.lane.b32.xlu0 %v5928, 64
          %v7173 = vpop.permute.xlu0 %7172
          %7174 = vrot.lane.b32.xlu0 %v5932, 64
          %v7175 = vpop.permute.xlu0 %7174
          %7176 = vrot.lane.b32.xlu0 %v5936, 64
          %v7177 = vpop.permute.xlu0 %7176
          %7178 = vrot.lane.b32.xlu0 %v5940, 64
          %v7179 = vpop.permute.xlu0 %7178
          %7180 = vrot.lane.b32.xlu0 %v5944, 64
          %v7181 = vpop.permute.xlu0 %7180
          %7182 = vrot.lane.b32.xlu0 %v5948, 64
          %v7183 = vpop.permute.xlu0 %7182
          %7184 = vrot.lane.b32.xlu0 %v5952, 64
          %v7185 = vpop.permute.xlu0 %7184
          %7186 = vrot.lane.b32.xlu0 %v5956, 64
          %v7187 = vpop.permute.xlu0 %7186
          %7188 = vrot.lane.b32.xlu0 %v5960, 64
          %v7189 = vpop.permute.xlu0 %7188
          %7190 = vrot.lane.b32.xlu0 %v5964, 64
          %v7191 = vpop.permute.xlu0 %7190
          %7192 = vrot.lane.b32.xlu0 %v5968, 64
          %v7193 = vpop.permute.xlu0 %7192
          %7194 = vrot.lane.b32.xlu0 %v5972, 64
          %v7195 = vpop.permute.xlu0 %7194
          %7196 = vrot.lane.b32.xlu0 %v5976, 64
          %v7197 = vpop.permute.xlu0 %7196
          %7198 = vrot.lane.b32.xlu0 %v5980, 64
          %v7199 = vpop.permute.xlu0 %7198
          %7200 = vrot.lane.b32.xlu0 %v5984, 64
          %v7201 = vpop.permute.xlu0 %7200
          %v7202 = vmul.f32 %v7075, %v6050
          %v7203 = vmul.f32 %v7077, %v6051
          %v7204 = vmul.f32 %v7079, %v6052
          %v7205 = vmul.f32 %v7081, %v6053
          %v7206 = vmul.f32 %v7083, %v6054
          %v7207 = vmul.f32 %v7085, %v6055
          %v7208 = vmul.f32 %v7087, %v6056
          %v7209 = vmul.f32 %v7089, %v6057
          %v7210 = vmul.f32 %v7091, %v6058
          %v7211 = vmul.f32 %v7093, %v6059
          %v7212 = vmul.f32 %v7095, %v6060
          %v7213 = vmul.f32 %v7097, %v6061
          %v7214 = vmul.f32 %v7099, %v6062
          %v7215 = vmul.f32 %v7101, %v6063
          %v7216 = vmul.f32 %v7103, %v6064
          %v7217 = vmul.f32 %v7105, %v6065
          %v7218 = vmul.f32 %v7107, %v6066
          %v7219 = vmul.f32 %v7109, %v6067
          %v7220 = vmul.f32 %v7111, %v6068
          %v7221 = vmul.f32 %v7113, %v6069
          %v7222 = vmul.f32 %v7115, %v6070
          %v7223 = vmul.f32 %v7117, %v6071
          %v7224 = vmul.f32 %v7119, %v6072
          %v7225 = vmul.f32 %v7121, %v6073
          %v7226 = vmul.f32 %v7123, %v6074
          %v7227 = vmul.f32 %v7125, %v6075
          %v7228 = vmul.f32 %v7127, %v6076
          %v7229 = vmul.f32 %v7129, %v6077
          %v7230 = vmul.f32 %v7131, %v6078
          %v7231 = vmul.f32 %v7133, %v6079
          %v7232 = vmul.f32 %v7135, %v6080
          %v7233 = vmul.f32 %v7137, %v6081
          %v7234 = vmul.f32 %v7139, %v6082
          %v7235 = vmul.f32 %v7141, %v6083
          %v7236 = vmul.f32 %v7143, %v6084
          %v7237 = vmul.f32 %v7145, %v6085
          %v7238 = vmul.f32 %v7147, %v6086
          %v7239 = vmul.f32 %v7149, %v6087
          %v7240 = vmul.f32 %v7151, %v6088
          %v7241 = vmul.f32 %v7153, %v6089
          %v7242 = vmul.f32 %v7155, %v6090
          %v7243 = vmul.f32 %v7157, %v6091
          %v7244 = vmul.f32 %v7159, %v6092
          %v7245 = vmul.f32 %v7161, %v6093
          %v7246 = vmul.f32 %v7163, %v6094
          %v7247 = vmul.f32 %v7165, %v6095
          %v7248 = vmul.f32 %v7167, %v6096
          %v7249 = vmul.f32 %v7169, %v6097
          %v7250 = vmul.f32 %v7171, %v6098
          %v7251 = vmul.f32 %v7173, %v6099
          %v7252 = vmul.f32 %v7175, %v6100
          %v7253 = vmul.f32 %v7177, %v6101
          %v7254 = vmul.f32 %v7179, %v6102
          %v7255 = vmul.f32 %v7181, %v6103
          %v7256 = vmul.f32 %v7183, %v6104
          %v7257 = vmul.f32 %v7185, %v6105
          %v7258 = vmul.f32 %v7187, %v6106
          %v7259 = vmul.f32 %v7189, %v6107
          %v7260 = vmul.f32 %v7191, %v6108
          %v7261 = vmul.f32 %v7193, %v6109
          %v7262 = vmul.f32 %v7195, %v6110
          %v7263 = vmul.f32 %v7197, %v6111
          %v7264 = vmul.f32 %v7199, %v6112
          %v7265 = vmul.f32 %v7201, %v6113
          %v7266 = vadd.f32 %v7010, %v7202
          %v7267 = vadd.f32 %v7011, %v7203
          %v7268 = vadd.f32 %v7012, %v7204
          %v7269 = vadd.f32 %v7013, %v7205
          %v7270 = vadd.f32 %v7014, %v7206
          %v7271 = vadd.f32 %v7015, %v7207
          %v7272 = vadd.f32 %v7016, %v7208
          %v7273 = vadd.f32 %v7017, %v7209
          %v7274 = vadd.f32 %v7018, %v7210
          %v7275 = vadd.f32 %v7019, %v7211
          %v7276 = vadd.f32 %v7020, %v7212
          %v7277 = vadd.f32 %v7021, %v7213
          %v7278 = vadd.f32 %v7022, %v7214
          %v7279 = vadd.f32 %v7023, %v7215
          %v7280 = vadd.f32 %v7024, %v7216
          %v7281 = vadd.f32 %v7025, %v7217
          %v7282 = vadd.f32 %v7026, %v7218
          %v7283 = vadd.f32 %v7027, %v7219
          %v7284 = vadd.f32 %v7028, %v7220
          %v7285 = vadd.f32 %v7029, %v7221
          %v7286 = vadd.f32 %v7030, %v7222
          %v7287 = vadd.f32 %v7031, %v7223
          %v7288 = vadd.f32 %v7032, %v7224
          %v7289 = vadd.f32 %v7033, %v7225
          %v7290 = vadd.f32 %v7034, %v7226
          %v7291 = vadd.f32 %v7035, %v7227
          %v7292 = vadd.f32 %v7036, %v7228
          %v7293 = vadd.f32 %v7037, %v7229
          %v7294 = vadd.f32 %v7038, %v7230
          %v7295 = vadd.f32 %v7039, %v7231
          %v7296 = vadd.f32 %v7040, %v7232
          %v7297 = vadd.f32 %v7041, %v7233
          %v7298 = vadd.f32 %v7042, %v7234
          %v7299 = vadd.f32 %v7043, %v7235
          %v7300 = vadd.f32 %v7044, %v7236
          %v7301 = vadd.f32 %v7045, %v7237
          %v7302 = vadd.f32 %v7046, %v7238
          %v7303 = vadd.f32 %v7047, %v7239
          %v7304 = vadd.f32 %v7048, %v7240
          %v7305 = vadd.f32 %v7049, %v7241
          %v7306 = vadd.f32 %v7050, %v7242
          %v7307 = vadd.f32 %v7051, %v7243
          %v7308 = vadd.f32 %v7052, %v7244
          %v7309 = vadd.f32 %v7053, %v7245
          %v7310 = vadd.f32 %v7054, %v7246
          %v7311 = vadd.f32 %v7055, %v7247
          %v7312 = vadd.f32 %v7056, %v7248
          %v7313 = vadd.f32 %v7057, %v7249
          %v7314 = vadd.f32 %v7058, %v7250
          %v7315 = vadd.f32 %v7059, %v7251
          %v7316 = vadd.f32 %v7060, %v7252
          %v7317 = vadd.f32 %v7061, %v7253
          %v7318 = vadd.f32 %v7062, %v7254
          %v7319 = vadd.f32 %v7063, %v7255
          %v7320 = vadd.f32 %v7064, %v7256
          %v7321 = vadd.f32 %v7065, %v7257
          %v7322 = vadd.f32 %v7066, %v7258
          %v7323 = vadd.f32 %v7067, %v7259
          %v7324 = vadd.f32 %v7068, %v7260
          %v7325 = vadd.f32 %v7069, %v7261
          %v7326 = vadd.f32 %v7070, %v7262
          %v7327 = vadd.f32 %v7071, %v7263
          %v7328 = vadd.f32 %v7072, %v7264
          %v7329 = vadd.f32 %v7073, %v7265
          %v7330 = vpack.c.bf16 %v7266, %v7266
          %v7331 = vpack.c.bf16 %v7267, %v7267
          %v7332 = vpack.c.bf16 %v7268, %v7268
          %v7333 = vpack.c.bf16 %v7269, %v7269
          %v7334 = vpack.c.bf16 %v7270, %v7270
          %v7335 = vpack.c.bf16 %v7271, %v7271
          %v7336 = vpack.c.bf16 %v7272, %v7272
          %v7337 = vpack.c.bf16 %v7273, %v7273
          %v7338 = vpack.c.bf16 %v7274, %v7274
          %v7339 = vpack.c.bf16 %v7275, %v7275
          %v7340 = vpack.c.bf16 %v7276, %v7276
          %v7341 = vpack.c.bf16 %v7277, %v7277
          %v7342 = vpack.c.bf16 %v7278, %v7278
          %v7343 = vpack.c.bf16 %v7279, %v7279
          %v7344 = vpack.c.bf16 %v7280, %v7280
          %v7345 = vpack.c.bf16 %v7281, %v7281
          %v7346 = vpack.c.bf16 %v7282, %v7282
          %v7347 = vpack.c.bf16 %v7283, %v7283
          %v7348 = vpack.c.bf16 %v7284, %v7284
          %v7349 = vpack.c.bf16 %v7285, %v7285
          %v7350 = vpack.c.bf16 %v7286, %v7286
          %v7351 = vpack.c.bf16 %v7287, %v7287
          %v7352 = vpack.c.bf16 %v7288, %v7288
          %v7353 = vpack.c.bf16 %v7289, %v7289
          %v7354 = vpack.c.bf16 %v7290, %v7290
          %v7355 = vpack.c.bf16 %v7291, %v7291
          %v7356 = vpack.c.bf16 %v7292, %v7292
          %v7357 = vpack.c.bf16 %v7293, %v7293
          %v7358 = vpack.c.bf16 %v7294, %v7294
          %v7359 = vpack.c.bf16 %v7295, %v7295
          %v7360 = vpack.c.bf16 %v7296, %v7296
          %v7361 = vpack.c.bf16 %v7297, %v7297
          %v7362 = vpack.c.bf16 %v7298, %v7298
          %v7363 = vpack.c.bf16 %v7299, %v7299
          %v7364 = vpack.c.bf16 %v7300, %v7300
          %v7365 = vpack.c.bf16 %v7301, %v7301
          %v7366 = vpack.c.bf16 %v7302, %v7302
          %v7367 = vpack.c.bf16 %v7303, %v7303
          %v7368 = vpack.c.bf16 %v7304, %v7304
          %v7369 = vpack.c.bf16 %v7305, %v7305
          %v7370 = vpack.c.bf16 %v7306, %v7306
          %v7371 = vpack.c.bf16 %v7307, %v7307
          %v7372 = vpack.c.bf16 %v7308, %v7308
          %v7373 = vpack.c.bf16 %v7309, %v7309
          %v7374 = vpack.c.bf16 %v7310, %v7310
          %v7375 = vpack.c.bf16 %v7311, %v7311
          %v7376 = vpack.c.bf16 %v7312, %v7312
          %v7377 = vpack.c.bf16 %v7313, %v7313
          %v7378 = vpack.c.bf16 %v7314, %v7314
          %v7379 = vpack.c.bf16 %v7315, %v7315
          %v7380 = vpack.c.bf16 %v7316, %v7316
          %v7381 = vpack.c.bf16 %v7317, %v7317
          %v7382 = vpack.c.bf16 %v7318, %v7318
          %v7383 = vpack.c.bf16 %v7319, %v7319
          %v7384 = vpack.c.bf16 %v7320, %v7320
          %v7385 = vpack.c.bf16 %v7321, %v7321
          %v7386 = vpack.c.bf16 %v7322, %v7322
          %v7387 = vpack.c.bf16 %v7323, %v7323
          %v7388 = vpack.c.bf16 %v7324, %v7324
          %v7389 = vpack.c.bf16 %v7325, %v7325
          %v7390 = vpack.c.bf16 %v7326, %v7326
          %v7391 = vpack.c.bf16 %v7327, %v7327
          %v7392 = vpack.c.bf16 %v7328, %v7328
          %v7393 = vpack.c.bf16 %v7329, %v7329
          %7394 = vst [vmem:[%s440] sm:$0xf] %v7330
          %7395 = vst [vmem:[%s440 + $0x4] sm:$0xf] %v7331
          %7396 = vst [vmem:[%s440 + $0x8] sm:$0xf] %v7332
          %7397 = vst [vmem:[%s440 + $0xc] sm:$0xf] %v7333
          %7398 = vst [vmem:[%s440 + $0x10] sm:$0xf] %v7334
          %7399 = vst [vmem:[%s440 + $0x14] sm:$0xf] %v7335
          %7400 = vst [vmem:[%s440 + $0x18] sm:$0xf] %v7336
          %7401 = vst [vmem:[%s440 + $0x1c] sm:$0xf] %v7337
          %7402 = vst [vmem:[%s440 + $0x20] sm:$0xf] %v7338
          %7403 = vst [vmem:[%s440 + $0x24] sm:$0xf] %v7339
          %7404 = vst [vmem:[%s440 + $0x28] sm:$0xf] %v7340
          %7405 = vst [vmem:[%s440 + $0x2c] sm:$0xf] %v7341
          %7406 = vst [vmem:[%s440 + $0x30] sm:$0xf] %v7342
          %7407 = vst [vmem:[%s440 + $0x34] sm:$0xf] %v7343
          %7408 = vst [vmem:[%s440 + $0x38] sm:$0xf] %v7344
          %7409 = vst [vmem:[%s440 + $0x3c] sm:$0xf] %v7345
          %7410 = vst [vmem:[%s440 + $0x40] sm:$0xf] %v7346
          %7411 = vst [vmem:[%s440 + $0x44] sm:$0xf] %v7347
          %7412 = vst [vmem:[%s440 + $0x48] sm:$0xf] %v7348
          %7413 = vst [vmem:[%s440 + $0x4c] sm:$0xf] %v7349
          %7414 = vst [vmem:[%s440 + $0x50] sm:$0xf] %v7350
          %7415 = vst [vmem:[%s440 + $0x54] sm:$0xf] %v7351
          %7416 = vst [vmem:[%s440 + $0x58] sm:$0xf] %v7352
          %7417 = vst [vmem:[%s440 + $0x5c] sm:$0xf] %v7353
          %7418 = vst [vmem:[%s440 + $0x60] sm:$0xf] %v7354
          %7419 = vst [vmem:[%s440 + $0x64] sm:$0xf] %v7355
          %7420 = vst [vmem:[%s440 + $0x68] sm:$0xf] %v7356
          %7421 = vst [vmem:[%s440 + $0x6c] sm:$0xf] %v7357
          %7422 = vst [vmem:[%s440 + $0x70] sm:$0xf] %v7358
          %7423 = vst [vmem:[%s440 + $0x74] sm:$0xf] %v7359
          %7424 = vst [vmem:[%s440 + $0x78] sm:$0xf] %v7360
          %7425 = vst [vmem:[%s440 + $0x7c] sm:$0xf] %v7361
          %7426 = vst [vmem:[%s440 + $0x80] sm:$0xf] %v7362
          %7427 = vst [vmem:[%s440 + $0x84] sm:$0xf] %v7363
          %7428 = vst [vmem:[%s440 + $0x88] sm:$0xf] %v7364
          %7429 = vst [vmem:[%s440 + $0x8c] sm:$0xf] %v7365
          %7430 = vst [vmem:[%s440 + $0x90] sm:$0xf] %v7366
          %7431 = vst [vmem:[%s440 + $0x94] sm:$0xf] %v7367
          %7432 = vst [vmem:[%s440 + $0x98] sm:$0xf] %v7368
          %7433 = vst [vmem:[%s440 + $0x9c] sm:$0xf] %v7369
          %7434 = vst [vmem:[%s440 + $0xa0] sm:$0xf] %v7370
          %7435 = vst [vmem:[%s440 + $0xa4] sm:$0xf] %v7371
          %7436 = vst [vmem:[%s440 + $0xa8] sm:$0xf] %v7372
          %7437 = vst [vmem:[%s440 + $0xac] sm:$0xf] %v7373
          %7438 = vst [vmem:[%s440 + $0xb0] sm:$0xf] %v7374
          %7439 = vst [vmem:[%s440 + $0xb4] sm:$0xf] %v7375
          %7440 = vst [vmem:[%s440 + $0xb8] sm:$0xf] %v7376
          %7441 = vst [vmem:[%s440 + $0xbc] sm:$0xf] %v7377
          %7442 = vst [vmem:[%s440 + $0xc0] sm:$0xf] %v7378
          %7443 = vst [vmem:[%s440 + $0xc4] sm:$0xf] %v7379
          %7444 = vst [vmem:[%s440 + $0xc8] sm:$0xf] %v7380
          %7445 = vst [vmem:[%s440 + $0xcc] sm:$0xf] %v7381
          %7446 = vst [vmem:[%s440 + $0xd0] sm:$0xf] %v7382
          %7447 = vst [vmem:[%s440 + $0xd4] sm:$0xf] %v7383
          %7448 = vst [vmem:[%s440 + $0xd8] sm:$0xf] %v7384
          %7449 = vst [vmem:[%s440 + $0xdc] sm:$0xf] %v7385
          %7450 = vst [vmem:[%s440 + $0xe0] sm:$0xf] %v7386
          %7451 = vst [vmem:[%s440 + $0xe4] sm:$0xf] %v7387
          %7452 = vst [vmem:[%s440 + $0xe8] sm:$0xf] %v7388
          %7453 = vst [vmem:[%s440 + $0xec] sm:$0xf] %v7389
          %7454 = vst [vmem:[%s440 + $0xf0] sm:$0xf] %v7390
          %7455 = vst [vmem:[%s440 + $0xf4] sm:$0xf] %v7391
          %7456 = vst [vmem:[%s440 + $0xf8] sm:$0xf] %v7392
          %7457 = vst [vmem:[%s440 + $0xfc] sm:$0xf] %v7393
          %v7458 = vpack.c.bf16 %v5733, %v5733
          %v7459 = vpack.c.bf16 %v5737, %v5737
          %v7460 = vpack.c.bf16 %v5741, %v5741
          %v7461 = vpack.c.bf16 %v5745, %v5745
          %v7462 = vpack.c.bf16 %v5749, %v5749
          %v7463 = vpack.c.bf16 %v5753, %v5753
          %v7464 = vpack.c.bf16 %v5757, %v5757
          %v7465 = vpack.c.bf16 %v5761, %v5761
          %v7466 = vpack.c.bf16 %v5765, %v5765
          %v7467 = vpack.c.bf16 %v5769, %v5769
          %v7468 = vpack.c.bf16 %v5773, %v5773
          %v7469 = vpack.c.bf16 %v5777, %v5777
          %v7470 = vpack.c.bf16 %v5781, %v5781
          %v7471 = vpack.c.bf16 %v5785, %v5785
          %v7472 = vpack.c.bf16 %v5789, %v5789
          %v7473 = vpack.c.bf16 %v5793, %v5793
          %v7474 = vpack.c.bf16 %v5797, %v5797
          %v7475 = vpack.c.bf16 %v5801, %v5801
          %v7476 = vpack.c.bf16 %v5805, %v5805
          %v7477 = vpack.c.bf16 %v5809, %v5809
          %v7478 = vpack.c.bf16 %v5813, %v5813
          %v7479 = vpack.c.bf16 %v5817, %v5817
          %v7480 = vpack.c.bf16 %v5821, %v5821
          %v7481 = vpack.c.bf16 %v5825, %v5825
          %v7482 = vpack.c.bf16 %v5829, %v5829
          %v7483 = vpack.c.bf16 %v5833, %v5833
          %v7484 = vpack.c.bf16 %v5837, %v5837
          %v7485 = vpack.c.bf16 %v5841, %v5841
          %v7486 = vpack.c.bf16 %v5845, %v5845
          %v7487 = vpack.c.bf16 %v5849, %v5849
          %v7488 = vpack.c.bf16 %v5853, %v5853
          %v7489 = vpack.c.bf16 %v5857, %v5857
          %v7490 = vpack.c.bf16 %v5861, %v5861
          %v7491 = vpack.c.bf16 %v5865, %v5865
          %v7492 = vpack.c.bf16 %v5869, %v5869
          %v7493 = vpack.c.bf16 %v5873, %v5873
          %v7494 = vpack.c.bf16 %v5877, %v5877
          %v7495 = vpack.c.bf16 %v5881, %v5881
          %v7496 = vpack.c.bf16 %v5885, %v5885
          %v7497 = vpack.c.bf16 %v5889, %v5889
          %v7498 = vpack.c.bf16 %v5893, %v5893
          %v7499 = vpack.c.bf16 %v5897, %v5897
          %v7500 = vpack.c.bf16 %v5901, %v5901
          %v7501 = vpack.c.bf16 %v5905, %v5905
          %v7502 = vpack.c.bf16 %v5909, %v5909
          %v7503 = vpack.c.bf16 %v5913, %v5913
          %v7504 = vpack.c.bf16 %v5917, %v5917
          %v7505 = vpack.c.bf16 %v5921, %v5921
          %v7506 = vpack.c.bf16 %v5925, %v5925
          %v7507 = vpack.c.bf16 %v5929, %v5929
          %v7508 = vpack.c.bf16 %v5933, %v5933
          %v7509 = vpack.c.bf16 %v5937, %v5937
          %v7510 = vpack.c.bf16 %v5941, %v5941
          %v7511 = vpack.c.bf16 %v5945, %v5945
          %v7512 = vpack.c.bf16 %v5949, %v5949
          %v7513 = vpack.c.bf16 %v5953, %v5953
          %v7514 = vpack.c.bf16 %v5957, %v5957
          %v7515 = vpack.c.bf16 %v5961, %v5961
          %v7516 = vpack.c.bf16 %v5965, %v5965
          %v7517 = vpack.c.bf16 %v5969, %v5969
          %v7518 = vpack.c.bf16 %v5973, %v5973
          %v7519 = vpack.c.bf16 %v5977, %v5977
          %v7520 = vpack.c.bf16 %v5981, %v5981
          %v7521 = vpack.c.bf16 %v5985, %v5985
          %7522 = vst [vmem:[%s447] sm:$0xf] %v7458
          %7523 = vst [vmem:[%s447 + $0x4] sm:$0xf] %v7459
          %7524 = vst [vmem:[%s447 + $0x8] sm:$0xf] %v7460
          %7525 = vst [vmem:[%s447 + $0xc] sm:$0xf] %v7461
          %7526 = vst [vmem:[%s447 + $0x10] sm:$0xf] %v7462
          %7527 = vst [vmem:[%s447 + $0x14] sm:$0xf] %v7463
          %7528 = vst [vmem:[%s447 + $0x18] sm:$0xf] %v7464
          %7529 = vst [vmem:[%s447 + $0x1c] sm:$0xf] %v7465
          %7530 = vst [vmem:[%s447 + $0x20] sm:$0xf] %v7466
          %7531 = vst [vmem:[%s447 + $0x24] sm:$0xf] %v7467
          %7532 = vst [vmem:[%s447 + $0x28] sm:$0xf] %v7468
          %7533 = vst [vmem:[%s447 + $0x2c] sm:$0xf] %v7469
          %7534 = vst [vmem:[%s447 + $0x30] sm:$0xf] %v7470
          %7535 = vst [vmem:[%s447 + $0x34] sm:$0xf] %v7471
          %7536 = vst [vmem:[%s447 + $0x38] sm:$0xf] %v7472
          %7537 = vst [vmem:[%s447 + $0x3c] sm:$0xf] %v7473
          %7538 = vst [vmem:[%s447 + $0x40] sm:$0xf] %v7474
          %7539 = vst [vmem:[%s447 + $0x44] sm:$0xf] %v7475
          %7540 = vst [vmem:[%s447 + $0x48] sm:$0xf] %v7476
          %7541 = vst [vmem:[%s447 + $0x4c] sm:$0xf] %v7477
          %7542 = vst [vmem:[%s447 + $0x50] sm:$0xf] %v7478
          %7543 = vst [vmem:[%s447 + $0x54] sm:$0xf] %v7479
          %7544 = vst [vmem:[%s447 + $0x58] sm:$0xf] %v7480
          %7545 = vst [vmem:[%s447 + $0x5c] sm:$0xf] %v7481
          %7546 = vst [vmem:[%s447 + $0x60] sm:$0xf] %v7482
          %7547 = vst [vmem:[%s447 + $0x64] sm:$0xf] %v7483
          %7548 = vst [vmem:[%s447 + $0x68] sm:$0xf] %v7484
          %7549 = vst [vmem:[%s447 + $0x6c] sm:$0xf] %v7485
          %7550 = vst [vmem:[%s447 + $0x70] sm:$0xf] %v7486
          %7551 = vst [vmem:[%s447 + $0x74] sm:$0xf] %v7487
          %7552 = vst [vmem:[%s447 + $0x78] sm:$0xf] %v7488
          %7553 = vst [vmem:[%s447 + $0x7c] sm:$0xf] %v7489
          %7554 = vst [vmem:[%s447 + $0x80] sm:$0xf] %v7490
          %7555 = vst [vmem:[%s447 + $0x84] sm:$0xf] %v7491
          %7556 = vst [vmem:[%s447 + $0x88] sm:$0xf] %v7492
          %7557 = vst [vmem:[%s447 + $0x8c] sm:$0xf] %v7493
          %7558 = vst [vmem:[%s447 + $0x90] sm:$0xf] %v7494
          %7559 = vst [vmem:[%s447 + $0x94] sm:$0xf] %v7495
          %7560 = vst [vmem:[%s447 + $0x98] sm:$0xf] %v7496
          %7561 = vst [vmem:[%s447 + $0x9c] sm:$0xf] %v7497
          %7562 = vst [vmem:[%s447 + $0xa0] sm:$0xf] %v7498
          %7563 = vst [vmem:[%s447 + $0xa4] sm:$0xf] %v7499
          %7564 = vst [vmem:[%s447 + $0xa8] sm:$0xf] %v7500
          %7565 = vst [vmem:[%s447 + $0xac] sm:$0xf] %v7501
          %7566 = vst [vmem:[%s447 + $0xb0] sm:$0xf] %v7502
          %7567 = vst [vmem:[%s447 + $0xb4] sm:$0xf] %v7503
          %7568 = vst [vmem:[%s447 + $0xb8] sm:$0xf] %v7504
          %7569 = vst [vmem:[%s447 + $0xbc] sm:$0xf] %v7505
          %7570 = vst [vmem:[%s447 + $0xc0] sm:$0xf] %v7506
          %7571 = vst [vmem:[%s447 + $0xc4] sm:$0xf] %v7507
          %7572 = vst [vmem:[%s447 + $0xc8] sm:$0xf] %v7508
          %7573 = vst [vmem:[%s447 + $0xcc] sm:$0xf] %v7509
          %7574 = vst [vmem:[%s447 + $0xd0] sm:$0xf] %v7510
          %7575 = vst [vmem:[%s447 + $0xd4] sm:$0xf] %v7511
          %7576 = vst [vmem:[%s447 + $0xd8] sm:$0xf] %v7512
          %7577 = vst [vmem:[%s447 + $0xdc] sm:$0xf] %v7513
          %7578 = vst [vmem:[%s447 + $0xe0] sm:$0xf] %v7514
          %7579 = vst [vmem:[%s447 + $0xe4] sm:$0xf] %v7515
          %7580 = vst [vmem:[%s447 + $0xe8] sm:$0xf] %v7516
          %7581 = vst [vmem:[%s447 + $0xec] sm:$0xf] %v7517
          %7582 = vst [vmem:[%s447 + $0xf0] sm:$0xf] %v7518
          %7583 = vst [vmem:[%s447 + $0xf4] sm:$0xf] %v7519
          %7584 = vst [vmem:[%s447 + $0xf8] sm:$0xf] %v7520
          %7585 = vst [vmem:[%s447 + $0xfc] sm:$0xf] %v7521
        $region60: #{tpu_custom_call.1} parent=35 // pred_fallthru
          _
        %s7586 = sand.u32 %s170, 1
        %s7587 = scalar_lea.sflag [#allocation5], %s7586
        %s7588 = sand.u32 %s170, 1
        %s7589 = smul.addr %s7588, 512
        %s7590 = scalar_lea.vmem [#allocation11], %s7589
        %s7591 = sand.u32 %s33, 1
        %s7592 = scalar_lea.sflag [#allocation13], %s7591
        %s7593 = sand.u32 %s198, 1
        %s7594 = smul.addr %s7593, 256
        %s7595 = scalar_lea.vmem [#allocation12], %s7594
        %s7596 = sand.u32 %s33, 1
        %s7597 = scalar_lea.sflag [#allocation13], %s7596
        %s7598 = sand.u32 %s226, 1
        %s7599 = smul.addr %s7598, 256
        %s7600 = scalar_lea.vmem [#allocation14], %s7599
        // Predicated region
        $region61: #{tpu_custom_call.1} parent=35 // pred_check
          %p7601 = pneg %p180
        $region62: #{tpu_custom_call.1} parent=35 // pred_check_branch
          %7603 = sbr.rel (%p7601) target = $region64
        $region63: #{tpu_custom_call.1} parent=35 // pred_region
          %s7604 = smul.u32 64, %s38
          %s7605 = smul.u32 2, %s39
          %7607 = vsyncadd %s7587, 0
          %s7608 = smul.addr %s7604, 4
          %s7609 = sadd.s32 %s7605, %s7608
          %s7610 = smul.addr %s7609, 4
          %s7611 = scalar_lea.hbm %s4, %s7610
          %s7612 = sshll.u32 %s7590, 4
          %s7613 = int_to_ptr.vmem [resolvable:$true] %s7612
          %s7614 = sshll.u32 %s7611, 4
          %s7615 = int_to_ptr.hbm [resolvable:$true] %s7614
          %7620 = dma.vmem_to_hbm [thread:$0]  %s7613, 8192, %s7615, %s7587, 128, 256, 8
        $region64: #{tpu_custom_call.1} parent=35 // pred_fallthru
          _
        // Predicated region
        $region65: #{tpu_custom_call.1} parent=35 // pred_check
          %p7621 = pneg %p208
        $region66: #{tpu_custom_call.1} parent=35 // pred_check_branch
          %7623 = sbr.rel (%p7621) target = $region68
        $region67: #{tpu_custom_call.1} parent=35 // pred_region
          %s7624 = smul.u32 64, %s38
          %7626 = vsyncadd %s7592, 0
          %s7627 = smul.addr %s7624, 2
          %s7628 = sadd.s32 %s39, %s7627
          %s7629 = smul.addr %s7628, 4
          %s7630 = scalar_lea.hbm %s5, %s7629
          %s7631 = sshll.u32 %s7595, 4
          %s7632 = int_to_ptr.vmem [resolvable:$true] %s7631
          %s7633 = sshll.u32 %s7630, 4
          %s7634 = int_to_ptr.hbm [resolvable:$true] %s7633
          %7639 = dma.vmem_to_hbm [thread:$0]  %s7632, 4096, %s7634, %s7592, 64, 128, 4
        $region68: #{tpu_custom_call.1} parent=35 // pred_fallthru
          _
        // Predicated region
        $region69: #{tpu_custom_call.1} parent=35 // pred_check
          %p7640 = pneg %p236
        $region70: #{tpu_custom_call.1} parent=35 // pred_check_branch
          %7642 = sbr.rel (%p7640) target = $region72
        $region71: #{tpu_custom_call.1} parent=35 // pred_region
          %s7643 = smul.u32 64, %s38
          %7645 = vsyncadd %s7597, 0
          %s7646 = smul.addr %s7643, 2
          %s7647 = sadd.s32 %s39, %s7646
          %s7648 = smul.addr %s7647, 4
          %s7649 = scalar_lea.hbm %s6, %s7648
          %s7650 = sshll.u32 %s7600, 4
          %s7651 = int_to_ptr.vmem [resolvable:$true] %s7650
          %s7652 = sshll.u32 %s7649, 4
          %s7653 = int_to_ptr.hbm [resolvable:$true] %s7652
          %7658 = dma.vmem_to_hbm [thread:$0]  %s7651, 4096, %s7653, %s7597, 64, 128, 4
        $region72: #{tpu_custom_call.1} parent=35 // pred_fallthru
          _
      $region36: #{tpu_custom_call.1} parent=5 // pred_fallthru
        _
      %p7659 = scmp.le.s32.totalorder 2, %s28
      // Predicated region
      $region73: #{tpu_custom_call.1} parent=5 // pred_check
        %p7660 = pneg %p7659
      $region74: #{tpu_custom_call.1} parent=5 // pred_check_branch
        %7662 = sbr.rel (%p7660) target = $region76
      $region75: #{tpu_custom_call.1} parent=5 // pred_region
        %s7663 = ssub.s32 %s28, 2
        // Predicated region
        $region77: #{tpu_custom_call.1} parent=75 // pred_check
          %p7664 = pneg %p186
        $region78: #{tpu_custom_call.1} parent=75 // pred_check_branch
          %7666 = sbr.rel (%p7664) target = $region80
        $region79: #{tpu_custom_call.1} parent=75 // pred_region
          %s7667 = sand.u32 %s171, 1
          %s7668 = scalar_lea.sflag [#allocation5], %s7667
          %s7669 = sand.u32 %s171, 1
          %s7670 = smul.addr %s7669, 512
          %s7671 = scalar_lea.vmem [#allocation11], %s7670
          %7673 = dma.done %s7668, 8192
        $region80: #{tpu_custom_call.1} parent=75 // pred_fallthru
          _
        // Predicated region
        $region81: #{tpu_custom_call.1} parent=75 // pred_check
          %p7674 = pneg %p214
        $region82: #{tpu_custom_call.1} parent=75 // pred_check_branch
          %7676 = sbr.rel (%p7674) target = $region84
        $region83: #{tpu_custom_call.1} parent=75 // pred_region
          %s7677 = sand.u32 %s34, 1
          %s7678 = scalar_lea.sflag [#allocation13], %s7677
          %s7679 = sand.u32 %s199, 1
          %s7680 = smul.addr %s7679, 256
          %s7681 = scalar_lea.vmem [#allocation12], %s7680
          %7683 = dma.done %s7678, 4096
        $region84: #{tpu_custom_call.1} parent=75 // pred_fallthru
          _
        // Predicated region
        $region85: #{tpu_custom_call.1} parent=75 // pred_check
          %p7684 = pneg %p242
        $region86: #{tpu_custom_call.1} parent=75 // pred_check_branch
          %7686 = sbr.rel (%p7684) target = $region88
        $region87: #{tpu_custom_call.1} parent=75 // pred_region
          %s7687 = sand.u32 %s34, 1
          %s7688 = scalar_lea.sflag [#allocation13], %s7687
          %s7689 = sand.u32 %s227, 1
          %s7690 = smul.addr %s7689, 256
          %s7691 = scalar_lea.vmem [#allocation14], %s7690
          %7693 = dma.done %s7688, 4096
        $region88: #{tpu_custom_call.1} parent=75 // pred_fallthru
          _
      $region76: #{tpu_custom_call.1} parent=5 // pred_fallthru
        _
    $region6: #{tpu_custom_call.1} parent=1 // loop_footer
      %s32 = sadd.s32 1, %s28
    $region7: #{tpu_custom_call.1} parent=1 // loop_footer_branch
      %27 = sbr.rel target = $region3
    $region8: #{tpu_custom_call.1} parent=1 // loop_exit
      _
    %7694 = vsyncpa [#allocation4], 1
    %s7695 = scalar_lea.sflag [#allocation4], 1
    %7696 = vsyncpa %s7695, 1
    %7697 = vsyncpa [#allocation7], 1
    %s7698 = scalar_lea.sflag [#allocation7], 1
    %7699 = vsyncpa %s7698, 1
    %7700 = vsyncpa [#allocation10], 1
    %s7701 = scalar_lea.sflag [#allocation10], 1
    %7702 = vsyncpa %s7701, 1
    %7703 = vsyncpa [#allocation5], 1
    %s7704 = scalar_lea.sflag [#allocation5], 1
    %7705 = vsyncpa %s7704, 1
    %7706 = vsyncpa [#allocation13], 1
    %s7707 = scalar_lea.sflag [#allocation13], 1
    %7708 = vsyncpa %s7707, 1

</llo_original>
